<compile_context>
chip_gen: v7x
topology: tpu7x:2x2x1
jax: 0.10.0
libtpu: 0.0.40
codegen_flags: <defaults>
</compile_context>

<pallas_src>
import functools
import math

import jax
import jax.numpy as jnp
from jax import lax
from jax.experimental import pallas as pl
from jax.experimental.pallas import tpu as pltpu


def _whole(shape):
    """BlockSpec covering the whole array (grid=(1,) -> block index all-zero)."""
    zeros = (0,) * len(shape)
    return pl.BlockSpec(shape, lambda *_, _z=zeros: _z)


# --------------------------------------------------------------------------
# In-kernel helpers (run inside fused layer kernels, everything in VMEM)
# --------------------------------------------------------------------------
def _layernorm(x, g, b, eps):
    mu = jnp.mean(x, axis=-1, keepdims=True)
    var = jnp.mean(jnp.square(x - mu), axis=-1, keepdims=True)
    return (x - mu) * lax.rsqrt(var + eps) * g + b


def _mha(x_q, x_kv, lens_ref, *, B, Tq, Tk, H,
         wq_ref, bq_ref, q_off, wk_ref, bk_ref, k_off,
         wv_ref, bv_ref, v_off, wo_ref, causal, use_kpad):
    """Multi-head attention.

    Per-head projection weights are stacked on the leading axis of the weight
    refs (wq_ref[q_off + h] is (D_in, dh)), so no sub-128-lane activation
    slicing is needed.  q weights/biases are pre-scaled by 1/sqrt(dh) at init.
    Head outputs go through per-head output-projection slabs wo_ref[h]
    ((dh, D_out)) and are summed -> no lane-axis concatenate.
    Returns (B*Tq, D_out) f32 (output-projection bias NOT added here).
    """
    d_out = wo_ref.shape[-1]
    qs, ks, vs = [], [], []
    for h in range(H):
        qs.append((jnp.dot(x_q, wq_ref[q_off + h],
                           preferred_element_type=jnp.float32)
                   + bq_ref[q_off + h]).astype(jnp.bfloat16))
        ks.append((jnp.dot(x_kv, wk_ref[k_off + h],
                           preferred_element_type=jnp.float32)
                   + bk_ref[k_off + h]).astype(jnp.bfloat16))
        vs.append((jnp.dot(x_kv, wv_ref[v_off + h],
                           preferred_element_type=jnp.float32)
                   + bv_ref[v_off + h]).astype(jnp.bfloat16))

    kidx = lax.broadcasted_iota(jnp.int32, (Tq, Tk), 1)
    qidx = lax.broadcasted_iota(jnp.int32, (Tq, Tk), 0)

    blocks = []
    for b in range(B):                               # B is tiny & static
        mask = None
        if use_kpad:
            mask = kidx >= lens_ref[b]               # scalar SMEM read
        if causal:
            m = kidx > qidx
            mask = m if mask is None else (mask | m)
        acc = jnp.zeros((Tq, d_out), jnp.float32)
        for h in range(H):
            qb = qs[h][b * Tq:(b + 1) * Tq]          # aligned sublane slices
            kb = ks[h][b * Tk:(b + 1) * Tk]
            vb = vs[h][b * Tk:(b + 1) * Tk]
            s = lax.dot_general(qb, kb, (((1,), (1,)), ((), ())),
                                preferred_element_type=jnp.float32)
            if mask is not None:
                s = jnp.where(mask, jnp.float32(-1e9), s)
            s = s - jnp.max(s, axis=-1, keepdims=True)
            p = jnp.exp(s)
            p = p * pl.reciprocal(jnp.sum(p, axis=-1, keepdims=True), approx=True)
            ctx = jnp.dot(p.astype(jnp.bfloat16), vb,
                          preferred_element_type=jnp.float32)
            acc = acc + jnp.dot(ctx.astype(jnp.bfloat16), wo_ref[h],
                                preferred_element_type=jnp.float32)
        blocks.append(acc)
    return jnp.concatenate(blocks, axis=0)           # sublane concat, B pieces


# --------------------------------------------------------------------------
# Fused kernels
# --------------------------------------------------------------------------
def _patch_embed_kernel(x_ref, w_ref, b_ref, pos_ref, o_ref, *, B, N):
    """x @ W + b + pos, fused; writes each batch slab directly to o_ref."""
    y = jnp.dot(x_ref[...], w_ref[...],
                preferred_element_type=jnp.float32) + b_ref[...]
    pos = pos_ref[0:N, :].astype(jnp.float32)
    for b in range(B):
        o_ref[b * N:(b + 1) * N, :] = (y[b * N:(b + 1) * N] + pos).astype(o_ref.dtype)


def _encoder_layer_kernel(lens_ref, x_ref,
                          wqkv_ref, bqkv_ref, wo_ref, bo_ref,
                          ln1g_ref, ln1b_ref,
                          w1_ref, b1_ref, w2_ref, b2_ref,
                          ln2g_ref, ln2b_ref,
                          o_ref, *, B, T, H, eps):
    x = x_ref[...]                                            # (B*T, D) bf16
    attn = _mha(x, x, lens_ref, B=B, Tq=T, Tk=T, H=H,
                wq_ref=wqkv_ref, bq_ref=bqkv_ref, q_off=0,
                wk_ref=wqkv_ref, bk_ref=bqkv_ref, k_off=H,
                wv_ref=wqkv_ref, bv_ref=bqkv_ref, v_off=2 * H,
                wo_ref=wo_ref, causal=False, use_kpad=True)
    attn = attn + bo_ref[...]
    x1 = _layernorm(x.astype(jnp.float32) + attn,
                    ln1g_ref[...], ln1b_ref[...], eps)
    x1_bf = x1.astype(jnp.bfloat16)
    h1 = jnp.dot(x1_bf, w1_ref[...], preferred_element_type=jnp.float32) + b1_ref[...]
    h1 = jnp.maximum(h1, 0.0).astype(jnp.bfloat16)
    ffn = jnp.dot(h1, w2_ref[...], preferred_element_type=jnp.float32) + b2_ref[...]
    x2 = _layernorm(x1 + ffn, ln2g_ref[...], ln2b_ref[...], eps)
    o_ref[...] = x2.astype(o_ref.dtype)


def _decoder_layer_kernel(lens_ref, y_ref, mem_ref,
                          wqkv_ref, bqkv_ref, wo_ref, bo_ref,
                          ln1g_ref, ln1b_ref,
                          wqc_ref, bqc_ref, wkvc_ref, bkvc_ref, woc_ref, boc_ref,
                          ln2g_ref, ln2b_ref,
                          w1_ref, b1_ref, w2_ref, b2_ref,
                          ln3g_ref, ln3b_ref,
                          o_ref, *, B, Tq, Tk, H, eps):
    y = y_ref[...]                                            # (B*Tq, Dd) bf16
    mem = mem_ref[...]                                        # (B*Tk, De) bf16
    # causal self-attention over the caption (no key-pad mask)
    a = _mha(y, y, lens_ref, B=B, Tq=Tq, Tk=Tq, H=H,
             wq_ref=wqkv_ref, bq_ref=bqkv_ref, q_off=0,
             wk_ref=wqkv_ref, bk_ref=bqkv_ref, k_off=H,
             wv_ref=wqkv_ref, bv_ref=bqkv_ref, v_off=2 * H,
             wo_ref=wo_ref, causal=True, use_kpad=False)
    a = a + bo_ref[...]
    y1 = _layernorm(y.astype(jnp.float32) + a,
                    ln1g_ref[...], ln1b_ref[...], eps)
    y1_bf = y1.astype(jnp.bfloat16)
    # cross-attention over the encoder memory (key-pad mask from patch lens)
    c = _mha(y1_bf, mem, lens_ref, B=B, Tq=Tq, Tk=Tk, H=H,
             wq_ref=wqc_ref, bq_ref=bqc_ref, q_off=0,
             wk_ref=wkvc_ref, bk_ref=bkvc_ref, k_off=0,
             wv_ref=wkvc_ref, bv_ref=bkvc_ref, v_off=H,
             wo_ref=woc_ref, causal=False, use_kpad=True)
    c = c + boc_ref[...]
    y2 = _layernorm(y1 + c, ln2g_ref[...], ln2b_ref[...], eps)
    y2_bf = y2.astype(jnp.bfloat16)
    # FFN
    h1 = jnp.dot(y2_bf, w1_ref[...], preferred_element_type=jnp.float32) + b1_ref[...]
    h1 = jnp.maximum(h1, 0.0).astype(jnp.bfloat16)
    ffn = jnp.dot(h1, w2_ref[...], preferred_element_type=jnp.float32) + b2_ref[...]
    y3 = _layernorm(y2 + ffn, ln3g_ref[...], ln3b_ref[...], eps)
    o_ref[...] = y3.astype(o_ref.dtype)


def _proj_kernel(x_ref, w_ref, b_ref, o_ref):
    o_ref[...] = (jnp.dot(x_ref[...], w_ref[...],
                          preferred_element_type=jnp.float32)
                  + b_ref[...]).astype(o_ref.dtype)


# --------------------------------------------------------------------------
# Thin wrappers (one pallas_call per fused block)
# --------------------------------------------------------------------------
_ARB = pltpu.CompilerParams(dimension_semantics=("arbitrary",))


def pallas_patch_embed(x2, w, b, pos, *, B, N):
    D = w.shape[1]
    args = (x2, w, b, pos)
    return pl.pallas_call(
        functools.partial(_patch_embed_kernel, B=B, N=N),
        grid=(1,),
        in_specs=[_whole(a.shape) for a in args],
        out_specs=_whole((B * N, D)),
        out_shape=jax.ShapeDtypeStruct((B * N, D), jnp.bfloat16),
        compiler_params=_ARB,
    )(*args)


def pallas_encoder_layer(x2, lens, p, *, B, T, num_heads, eps=1e-5):
    D = x2.shape[-1]
    args = (x2, p["wqkv"], p["bqkv"], p["wo"], p["bo"],
            p["ln1_g"], p["ln1_b"],
            p["w1"], p["b1"], p["w2"], p["b2"],
            p["ln2_g"], p["ln2_b"])
    return pl.pallas_call(
        functools.partial(_encoder_layer_kernel, B=B, T=T, H=num_heads, eps=eps),
        grid_spec=pltpu.PrefetchScalarGridSpec(
            num_scalar_prefetch=1, grid=(1,),
            in_specs=[_whole(a.shape) for a in args],
            out_specs=_whole((B * T, D))),
        out_shape=jax.ShapeDtypeStruct((B * T, D), x2.dtype),
        compiler_params=_ARB,
    )(lens, *args)


def pallas_decoder_layer(y2, mem, lens, p, *, B, Tq, Tk, num_heads, eps=1e-5):
    Dd = y2.shape[-1]
    args = (y2, mem,
            p["wqkv"], p["bqkv"], p["wo"], p["bo"],
            p["ln1_g"], p["ln1_b"],
            p["wq_c"], p["bq_c"], p["wkv_c"], p["bkv_c"], p["wo_c"], p["bo_c"],
            p["ln2_g"], p["ln2_b"],
            p["w1"], p["b1"], p["w2"], p["b2"],
            p["ln3_g"], p["ln3_b"])
    return pl.pallas_call(
        functools.partial(_decoder_layer_kernel,
                          B=B, Tq=Tq, Tk=Tk, H=num_heads, eps=eps),
        grid_spec=pltpu.PrefetchScalarGridSpec(
            num_scalar_prefetch=1, grid=(1,),
            in_specs=[_whole(a.shape) for a in args],
            out_specs=_whole((B * Tq, Dd))),
        out_shape=jax.ShapeDtypeStruct((B * Tq, Dd), y2.dtype),
        compiler_params=_ARB,
    )(lens, *args)


def pallas_projection(x2, w, b):
    M = x2.shape[0]
    V = w.shape[1]
    args = (x2, w, b)
    return pl.pallas_call(
        _proj_kernel,
        grid=(1,),
        in_specs=[_whole(a.shape) for a in args],
        out_specs=_whole((M, V)),
        out_shape=jax.ShapeDtypeStruct((M, V), jnp.float32),
        compiler_params=_ARB,
    )(*args)


# --------------------------------------------------------------------------
# Forward pass glue
# --------------------------------------------------------------------------
def flick_forward(params, img_patches, patch_lens, caption_in, *,
                  enc_heads, dec_heads):
    enc = params["image_encoder"]
    B, N, P = img_patches.shape
    lens32 = patch_lens.astype(jnp.int32)

    x = pallas_patch_embed(img_patches.reshape(B * N, P).astype(jnp.bfloat16),
                           enc["patch_w"], enc["patch_b"], enc["pos"], B=B, N=N)
    for lp in enc["layers"]:
        x = pallas_encoder_layer(x, lens32, lp, B=B, T=N, num_heads=enc_heads)
    mem = x                                                   # (B*N, De) bf16

    dec = params["caption_decoder"]
    _, T = caption_in.shape
    # TODO(synk): token-embedding gather is data-dependent indexing and stays
    # in XLA glue; the positional add is fused into the same XLA op.
    y = (dec["tok_emb"][caption_in] + dec["pos"][:T][None]).reshape(B * T, -1)
    for lp in dec["layers"]:
        y = pallas_decoder_layer(y, mem, lens32, lp,
                                 B=B, Tq=T, Tk=N, num_heads=dec_heads)

    logits = pallas_projection(y, params["proj_w"], params["proj_b"])
    return logits.reshape(B, T, -1)


# --------------------------------------------------------------------------
# Parameter init: weights are stored in the exact kernel layout
# (per-head stacks, (1, N) biases, q pre-scaled) -> zero per-forward reshaping.
# --------------------------------------------------------------------------
def _ln_params(d):
    return jnp.ones((1, d), jnp.float32), jnp.zeros((1, d), jnp.float32)


def _dense(key, d_in, d_out, std=0.02):
    w = (std * jax.random.normal(key, (d_in, d_out), jnp.float32)).astype(jnp.bfloat16)
    b = jnp.zeros((1, d_out), jnp.float32)
    return w, b


def _head_stack(key, n, d_in, dh, std=0.02):
    return std * jax.random.normal(key, (n, d_in, dh), jnp.float32)


def _init_enc_layer(key, d, ffn, H):
    dh = d // H
    scale = 1.0 / math.sqrt(dh)
    ks = jax.random.split(key, 4)
    wqkv = _head_stack(ks[0], 3 * H, d, dh).at[:H].multiply(scale)   # fold scale into q
    bqkv = jnp.zeros((3 * H, 1, dh), jnp.float32)
    wo = _head_stack(ks[1], H, dh, d).astype(jnp.bfloat16)
    bo = jnp.zeros((1, d), jnp.float32)
    w1, b1 = _dense(ks[2], d, ffn)
    w2, b2 = _dense(ks[3], ffn, d)
    ln1_g, ln1_b = _ln_params(d)
    ln2_g, ln2_b = _ln_params(d)
    return dict(wqkv=wqkv.astype(jnp.bfloat16), bqkv=bqkv, wo=wo, bo=bo,
                ln1_g=ln1_g, ln1_b=ln1_b,
                w1=w1, b1=b1, w2=w2, b2=b2,
                ln2_g=ln2_g, ln2_b=ln2_b)


def _init_dec_layer(key, dd, de, ffn, H):
    dh = dd // H
    scale = 1.0 / math.sqrt(dh)
    ks = jax.random.split(key, 7)
    wqkv = _head_stack(ks[0], 3 * H, dd, dh).at[:H].multiply(scale)
    bqkv = jnp.zeros((3 * H, 1, dh), jnp.float32)
    wo = _head_stack(ks[1], H, dh, dd).astype(jnp.bfloat16)
    bo = jnp.zeros((1, dd), jnp.float32)
    wq_c = (_head_stack(ks[2], H, dd, dh) * scale).astype(jnp.bfloat16)
    bq_c = jnp.zeros((H, 1, dh), jnp.float32)
    wkv_c = _head_stack(ks[3], 2 * H, de, dh).astype(jnp.bfloat16)
    bkv_c = jnp.zeros((2 * H, 1, dh), jnp.float32)
    wo_c = _head_stack(ks[4], H, dh, dd).astype(jnp.bfloat16)
    bo_c = jnp.zeros((1, dd), jnp.float32)
    w1, b1 = _dense(ks[5], dd, ffn)
    w2, b2 = _dense(ks[6], ffn, dd)
    ln1_g, ln1_b = _ln_params(dd)
    ln2_g, ln2_b = _ln_params(dd)
    ln3_g, ln3_b = _ln_params(dd)
    return dict(wqkv=wqkv.astype(jnp.bfloat16), bqkv=bqkv, wo=wo, bo=bo,
                ln1_g=ln1_g, ln1_b=ln1_b,
                wq_c=wq_c, bq_c=bq_c, wkv_c=wkv_c, bkv_c=bkv_c,
                wo_c=wo_c, bo_c=bo_c,
                ln2_g=ln2_g, ln2_b=ln2_b,
                w1=w1, b1=b1, w2=w2, b2=b2,
                ln3_g=ln3_g, ln3_b=ln3_b)


def init_flick_params(key, *, img_embed_dim, patch_len, enc_heads, encoder_layers,
                      caption_embed_dim, vocab_size, dec_heads, decoder_layers,
                      max_patches, max_caption_len):
    k_enc, k_dec, k_proj = jax.random.split(key, 3)

    k_pe, k_pos, *k_layers = jax.random.split(k_enc, 2 + encoder_layers)
    patch_w, patch_b = _dense(k_pe, patch_len, img_embed_dim)
    enc = dict(
        patch_w=patch_w, patch_b=patch_b,
        pos=(0.02 * jax.random.normal(k_pos, (max_patches, img_embed_dim),
                                      jnp.float32)).astype(jnp.bfloat16),
        layers=[_init_enc_layer(k, img_embed_dim, 4 * img_embed_dim, enc_heads)
                for k in k_layers])

    k_tok, k_dpos, *k_dlayers = jax.random.split(k_dec, 2 + decoder_layers)
    dec = dict(
        tok_emb=(0.02 * jax.random.normal(k_tok, (vocab_size, caption_embed_dim),
                                          jnp.float32)).astype(jnp.bfloat16),
        pos=(0.02 * jax.random.normal(k_dpos, (max_caption_len, caption_embed_dim),
                                      jnp.float32)).astype(jnp.bfloat16),
        layers=[_init_dec_layer(k, caption_embed_dim, img_embed_dim,
                                4 * caption_embed_dim, dec_heads)
                for k in k_dlayers])

    proj_w, proj_b = _dense(k_proj, caption_embed_dim, vocab_size)
    return dict(image_encoder=enc, caption_decoder=dec,
                proj_w=proj_w, proj_b=proj_b)


# --------------------------------------------------------------------------
if __name__ == "__main__":
    IMG_EMBED_DIM = 32
    PATCH_LEN = 48
    ENC_HEADS = 2
    ENC_LAYERS = 2
    CAP_EMBED_DIM = 32
    VOCAB = 64
    DEC_LAYERS = 2
    DEC_HEADS = 2
    B, N_PATCH, T_CAP = 2, 16, 8

    root = jax.random.PRNGKey(0)
    k_params, k_img, k_cap = jax.random.split(root, 3)

    params = init_flick_params(
        k_params,
        img_embed_dim=IMG_EMBED_DIM, patch_len=PATCH_LEN,
        enc_heads=ENC_HEADS, encoder_layers=ENC_LAYERS,
        caption_embed_dim=CAP_EMBED_DIM, vocab_size=VOCAB,
        dec_heads=DEC_HEADS, decoder_layers=DEC_LAYERS,
        max_patches=N_PATCH, max_caption_len=T_CAP)

    img_patches = jax.random.normal(k_img, (B, N_PATCH, PATCH_LEN), jnp.float32)
    patch_lens = jnp.array([N_PATCH, N_PATCH - 5], jnp.int32)
    caption_in = jax.random.randint(k_cap, (B, T_CAP), 0, VOCAB, dtype=jnp.int32)

    fwd = jax.jit(functools.partial(flick_forward,
                                    enc_heads=ENC_HEADS, dec_heads=DEC_HEADS))
    logits = fwd(params, img_patches, patch_lens, caption_in)
    jax.block_until_ready(logits)

    assert logits.shape == (B, T_CAP, VOCAB), logits.shape
    assert bool(jnp.all(jnp.isfinite(logits)))
    print("KERNEL_OK")
</pallas_src>

<mosaic_0001>
module attributes {stable_mosaic.version = 11 : i64} {
  func.func @_patch_embed_kernel(%arg0: i32, %arg1: memref<32x48xbf16, #tpu.memory_space<vmem>>, %arg2: memref<48x32xbf16, #tpu.memory_space<vmem>>, %arg3: memref<1x32xf32, #tpu.memory_space<vmem>>, %arg4: memref<16x32xbf16, #tpu.memory_space<vmem>>, %arg5: memref<32x32xbf16, #tpu.memory_space<vmem>>) attributes {dimension_semantics = [#tpu.dimension_semantics<arbitrary>], iteration_bounds = array<i64: 1>, scalar_prefetch = 0 : i64, scratch_operands = 0 : i64, tpu.core_type = #tpu.core_type<tc>, window_params = [{pipeline_mode = #tpu.pipeline_mode<synchronous>, transform_indices = @transform_0, window_bounds = array<i64: 32, 48>}, {pipeline_mode = #tpu.pipeline_mode<synchronous>, transform_indices = @transform_1, window_bounds = array<i64: 48, 32>}, {pipeline_mode = #tpu.pipeline_mode<synchronous>, transform_indices = @transform_2, window_bounds = array<i64: 1, 32>}, {pipeline_mode = #tpu.pipeline_mode<synchronous>, transform_indices = @transform_3, window_bounds = array<i64: 16, 32>}, {pipeline_mode = #tpu.pipeline_mode<synchronous>, transform_indices = @transform_4, window_bounds = array<i64: 32, 32>}]} {
    %c0 = arith.constant 0 : index
    %c0_0 = arith.constant 0 : index
    %0 = vector.load %arg1[%c0, %c0_0] : memref<32x48xbf16, #tpu.memory_space<vmem>>, vector<32x48xbf16>
    %c0_1 = arith.constant 0 : index
    %c0_2 = arith.constant 0 : index
    %1 = vector.load %arg2[%c0_1, %c0_2] : memref<48x32xbf16, #tpu.memory_space<vmem>>, vector<48x32xbf16>
    %cst = arith.constant dense<0.000000e+00> : vector<32x32xf32>
    %2 = tpu.matmul %0, %1, %cst {dimension_numbers = #tpu.dot_dimension_numbers<[1], [0], [0], [1], [0, 0, 1, 1], [], []>} : vector<32x48xbf16>, vector<48x32xbf16>, vector<32x32xf32> -> vector<32x32xf32>
    %c0_3 = arith.constant 0 : index
    %c0_4 = arith.constant 0 : index
    %3 = vector.load %arg3[%c0_3, %c0_4] : memref<1x32xf32, #tpu.memory_space<vmem>>, vector<1x32xf32>
    %4 = vector.broadcast %3 : vector<1x32xf32> to vector<32x32xf32>
    %5 = arith.addf %2, %4 : vector<32x32xf32>
    %c0_5 = arith.constant 0 : index
    %c0_6 = arith.constant 0 : index
    %6 = vector.load %arg4[%c0_5, %c0_6] : memref<16x32xbf16, #tpu.memory_space<vmem>>, vector<16x32xbf16>
    %7 = arith.extf %6 : vector<16x32xbf16> to vector<16x32xf32>
    %8 = vector.extract_strided_slice %5 {offsets = [0, 0], sizes = [16, 32], strides = [1, 1]} : vector<32x32xf32> to vector<16x32xf32>
    %9 = arith.addf %8, %7 : vector<16x32xf32>
    %10 = arith.truncf %9 : vector<16x32xf32> to vector<16x32xbf16>
    %c0_7 = arith.constant 0 : index
    %c0_8 = arith.constant 0 : index
    %11 = vector.load %arg5[%c0_7, %c0_8] : memref<32x32xbf16, #tpu.memory_space<vmem>>, vector<16x32xbf16>
    tpu.vector_store %arg5[%c0_7, %c0_8], %10 {strides = array<i32>} : memref<32x32xbf16, #tpu.memory_space<vmem>>, vector<16x32xbf16>,
    %12 = vector.extract_strided_slice %5 {offsets = [16, 0], sizes = [16, 32], strides = [1, 1]} : vector<32x32xf32> to vector<16x32xf32>
    %13 = arith.addf %12, %7 : vector<16x32xf32>
    %14 = arith.truncf %13 : vector<16x32xf32> to vector<16x32xbf16>
    %c16 = arith.constant 16 : index
    %c0_9 = arith.constant 0 : index
    %15 = vector.load %arg5[%c16, %c0_9] : memref<32x32xbf16, #tpu.memory_space<vmem>>, vector<16x32xbf16>
    tpu.vector_store %arg5[%c16, %c0_9], %14 {strides = array<i32>} : memref<32x32xbf16, #tpu.memory_space<vmem>>, vector<16x32xbf16>,
    return
  }
  func.func @transform_0(%arg0: i32) -> (i32, i32) {
    %c0_i32 = arith.constant 0 : i32
    %c0_i32_0 = arith.constant 0 : i32
    %c0_i32_1 = arith.constant 0 : i32
    return %c0_i32, %c0_i32_0 : i32, i32
  }
  func.func @transform_1(%arg0: i32) -> (i32, i32) {
    %c0_i32 = arith.constant 0 : i32
    %c0_i32_0 = arith.constant 0 : i32
    %c0_i32_1 = arith.constant 0 : i32
    return %c0_i32, %c0_i32_0 : i32, i32
  }
  func.func @transform_2(%arg0: i32) -> (i32, i32) {
    %c0_i32 = arith.constant 0 : i32
    %c0_i32_0 = arith.constant 0 : i32
    %c0_i32_1 = arith.constant 0 : i32
    return %c0_i32, %c0_i32_0 : i32, i32
  }
  func.func @transform_3(%arg0: i32) -> (i32, i32) {
    %c0_i32 = arith.constant 0 : i32
    %c0_i32_0 = arith.constant 0 : i32
    %c0_i32_1 = arith.constant 0 : i32
    return %c0_i32, %c0_i32_0 : i32, i32
  }
  func.func @transform_4(%arg0: i32) -> (i32, i32) {
    %c0_i32 = arith.constant 0 : i32
    %c0_i32_0 = arith.constant 0 : i32
    %c0_i32_1 = arith.constant 0 : i32
    return %c0_i32, %c0_i32_0 : i32, i32
  }
}

module attributes {stable_mosaic.version = 11 : i64} {
  func.func @_encoder_layer_kernel(%arg0: i32, %arg1: memref<2xi32, #tpu.memory_space<smem>>, %arg2: memref<32x32xbf16, #tpu.memory_space<vmem>>, %arg3: memref<6x32x16xbf16, #tpu.memory_space<vmem>>, %arg4: memref<6x1x16xf32, #tpu.memory_space<vmem>>, %arg5: memref<2x16x32xbf16, #tpu.memory_space<vmem>>, %arg6: memref<1x32xf32, #tpu.memory_space<vmem>>, %arg7: memref<1x32xf32, #tpu.memory_space<vmem>>, %arg8: memref<1x32xf32, #tpu.memory_space<vmem>>, %arg9: memref<32x128xbf16, #tpu.memory_space<vmem>>, %arg10: memref<1x128xf32, #tpu.memory_space<vmem>>, %arg11: memref<128x32xbf16, #tpu.memory_space<vmem>>, %arg12: memref<1x32xf32, #tpu.memory_space<vmem>>, %arg13: memref<1x32xf32, #tpu.memory_space<vmem>>, %arg14: memref<1x32xf32, #tpu.memory_space<vmem>>, %arg15: memref<32x32xbf16, #tpu.memory_space<vmem>>) attributes {dimension_semantics = [#tpu.dimension_semantics<arbitrary>], iteration_bounds = array<i64: 1>, scalar_prefetch = 1 : i64, scratch_operands = 0 : i64, tpu.core_type = #tpu.core_type<tc>, window_params = [{pipeline_mode = #tpu.pipeline_mode<synchronous>, transform_indices = @transform_0, window_bounds = array<i64: 32, 32>}, {pipeline_mode = #tpu.pipeline_mode<synchronous>, transform_indices = @transform_1, window_bounds = array<i64: 6, 32, 16>}, {pipeline_mode = #tpu.pipeline_mode<synchronous>, transform_indices = @transform_2, window_bounds = array<i64: 6, 1, 16>}, {pipeline_mode = #tpu.pipeline_mode<synchronous>, transform_indices = @transform_3, window_bounds = array<i64: 2, 16, 32>}, {pipeline_mode = #tpu.pipeline_mode<synchronous>, transform_indices = @transform_4, window_bounds = array<i64: 1, 32>}, {pipeline_mode = #tpu.pipeline_mode<synchronous>, transform_indices = @transform_5, window_bounds = array<i64: 1, 32>}, {pipeline_mode = #tpu.pipeline_mode<synchronous>, transform_indices = @transform_6, window_bounds = array<i64: 1, 32>}, {pipeline_mode = #tpu.pipeline_mode<synchronous>, transform_indices = @transform_7, window_bounds = array<i64: 32, 128>}, {pipeline_mode = #tpu.pipeline_mode<synchronous>, transform_indices = @transform_8, window_bounds = array<i64: 1, 128>}, {pipeline_mode = #tpu.pipeline_mode<synchronous>, transform_indices = @transform_9, window_bounds = array<i64: 128, 32>}, {pipeline_mode = #tpu.pipeline_mode<synchronous>, transform_indices = @transform_10, window_bounds = array<i64: 1, 32>}, {pipeline_mode = #tpu.pipeline_mode<synchronous>, transform_indices = @transform_11, window_bounds = array<i64: 1, 32>}, {pipeline_mode = #tpu.pipeline_mode<synchronous>, transform_indices = @transform_12, window_bounds = array<i64: 1, 32>}, {pipeline_mode = #tpu.pipeline_mode<synchronous>, transform_indices = @transform_13, window_bounds = array<i64: 32, 32>}]} {
    %c0 = arith.constant 0 : index
    %c0_0 = arith.constant 0 : index
    %0 = vector.load %arg2[%c0, %c0_0] : memref<32x32xbf16, #tpu.memory_space<vmem>>, vector<32x32xbf16>
    %c0_1 = arith.constant 0 : index
    %c0_2 = arith.constant 0 : index
    %c0_3 = arith.constant 0 : index
    %1 = vector.load %arg3[%c0_1, %c0_2, %c0_3] : memref<6x32x16xbf16, #tpu.memory_space<vmem>>, vector<1x32x16xbf16>
    %2 = vector.shape_cast %1 : vector<1x32x16xbf16> to vector<32x16xbf16>
    %cst = arith.constant dense<0.000000e+00> : vector<32x16xf32>
    %3 = tpu.matmul %0, %2, %cst {dimension_numbers = #tpu.dot_dimension_numbers<[1], [0], [0], [1], [0, 0, 1, 1], [], []>} : vector<32x32xbf16>, vector<32x16xbf16>, vector<32x16xf32> -> vector<32x16xf32>
    %c0_4 = arith.constant 0 : index
    %c0_5 = arith.constant 0 : index
    %c0_6 = arith.constant 0 : index
    %4 = vector.load %arg4[%c0_4, %c0_5, %c0_6] : memref<6x1x16xf32, #tpu.memory_space<vmem>>, vector<1x1x16xf32>
    %5 = vector.shape_cast %4 : vector<1x1x16xf32> to vector<1x16xf32>
    %6 = vector.broadcast %5 : vector<1x16xf32> to vector<32x16xf32>
    %7 = arith.addf %3, %6 : vector<32x16xf32>
    %8 = arith.truncf %7 : vector<32x16xf32> to vector<32x16xbf16>
    %c2 = arith.constant 2 : index
    %c0_7 = arith.constant 0 : index
    %c0_8 = arith.constant 0 : index
    %9 = vector.load %arg3[%c2, %c0_7, %c0_8] : memref<6x32x16xbf16, #tpu.memory_space<vmem>>, vector<1x32x16xbf16>
    %10 = vector.shape_cast %9 : vector<1x32x16xbf16> to vector<32x16xbf16>
    %cst_9 = arith.constant dense<0.000000e+00> : vector<32x16xf32>
    %11 = tpu.matmul %0, %10, %cst_9 {dimension_numbers = #tpu.dot_dimension_numbers<[1], [0], [0], [1], [0, 0, 1, 1], [], []>} : vector<32x32xbf16>, vector<32x16xbf16>, vector<32x16xf32> -> vector<32x16xf32>
    %c2_10 = arith.constant 2 : index
    %c0_11 = arith.constant 0 : index
    %c0_12 = arith.constant 0 : index
    %12 = vector.load %arg4[%c2_10, %c0_11, %c0_12] : memref<6x1x16xf32, #tpu.memory_space<vmem>>, vector<1x1x16xf32>
    %13 = vector.shape_cast %12 : vector<1x1x16xf32> to vector<1x16xf32>
    %14 = vector.broadcast %13 : vector<1x16xf32> to vector<32x16xf32>
    %15 = arith.addf %11, %14 : vector<32x16xf32>
    %16 = arith.truncf %15 : vector<32x16xf32> to vector<32x16xbf16>
    %c4 = arith.constant 4 : index
    %c0_13 = arith.constant 0 : index
    %c0_14 = arith.constant 0 : index
    %17 = vector.load %arg3[%c4, %c0_13, %c0_14] : memref<6x32x16xbf16, #tpu.memory_space<vmem>>, vector<1x32x16xbf16>
    %18 = vector.shape_cast %17 : vector<1x32x16xbf16> to vector<32x16xbf16>
    %cst_15 = arith.constant dense<0.000000e+00> : vector<32x16xf32>
    %19 = tpu.matmul %0, %18, %cst_15 {dimension_numbers = #tpu.dot_dimension_numbers<[1], [0], [0], [1], [0, 0, 1, 1], [], []>} : vector<32x32xbf16>, vector<32x16xbf16>, vector<32x16xf32> -> vector<32x16xf32>
    %c4_16 = arith.constant 4 : index
    %c0_17 = arith.constant 0 : index
    %c0_18 = arith.constant 0 : index
    %20 = vector.load %arg4[%c4_16, %c0_17, %c0_18] : memref<6x1x16xf32, #tpu.memory_space<vmem>>, vector<1x1x16xf32>
    %21 = vector.shape_cast %20 : vector<1x1x16xf32> to vector<1x16xf32>
    %22 = vector.broadcast %21 : vector<1x16xf32> to vector<32x16xf32>
    %23 = arith.addf %19, %22 : vector<32x16xf32>
    %24 = arith.truncf %23 : vector<32x16xf32> to vector<32x16xbf16>
    %c1 = arith.constant 1 : index
    %c0_19 = arith.constant 0 : index
    %c0_20 = arith.constant 0 : index
    %25 = vector.load %arg3[%c1, %c0_19, %c0_20] : memref<6x32x16xbf16, #tpu.memory_space<vmem>>, vector<1x32x16xbf16>
    %26 = vector.shape_cast %25 : vector<1x32x16xbf16> to vector<32x16xbf16>
    %cst_21 = arith.constant dense<0.000000e+00> : vector<32x16xf32>
    %27 = tpu.matmul %0, %26, %cst_21 {dimension_numbers = #tpu.dot_dimension_numbers<[1], [0], [0], [1], [0, 0, 1, 1], [], []>} : vector<32x32xbf16>, vector<32x16xbf16>, vector<32x16xf32> -> vector<32x16xf32>
    %c1_22 = arith.constant 1 : index
    %c0_23 = arith.constant 0 : index
    %c0_24 = arith.constant 0 : index
    %28 = vector.load %arg4[%c1_22, %c0_23, %c0_24] : memref<6x1x16xf32, #tpu.memory_space<vmem>>, vector<1x1x16xf32>
    %29 = vector.shape_cast %28 : vector<1x1x16xf32> to vector<1x16xf32>
    %30 = vector.broadcast %29 : vector<1x16xf32> to vector<32x16xf32>
    %31 = arith.addf %27, %30 : vector<32x16xf32>
    %32 = arith.truncf %31 : vector<32x16xf32> to vector<32x16xbf16>
    %c3 = arith.constant 3 : index
    %c0_25 = arith.constant 0 : index
    %c0_26 = arith.constant 0 : index
    %33 = vector.load %arg3[%c3, %c0_25, %c0_26] : memref<6x32x16xbf16, #tpu.memory_space<vmem>>, vector<1x32x16xbf16>
    %34 = vector.shape_cast %33 : vector<1x32x16xbf16> to vector<32x16xbf16>
    %cst_27 = arith.constant dense<0.000000e+00> : vector<32x16xf32>
    %35 = tpu.matmul %0, %34, %cst_27 {dimension_numbers = #tpu.dot_dimension_numbers<[1], [0], [0], [1], [0, 0, 1, 1], [], []>} : vector<32x32xbf16>, vector<32x16xbf16>, vector<32x16xf32> -> vector<32x16xf32>
    %c3_28 = arith.constant 3 : index
    %c0_29 = arith.constant 0 : index
    %c0_30 = arith.constant 0 : index
    %36 = vector.load %arg4[%c3_28, %c0_29, %c0_30] : memref<6x1x16xf32, #tpu.memory_space<vmem>>, vector<1x1x16xf32>
    %37 = vector.shape_cast %36 : vector<1x1x16xf32> to vector<1x16xf32>
    %38 = vector.broadcast %37 : vector<1x16xf32> to vector<32x16xf32>
    %39 = arith.addf %35, %38 : vector<32x16xf32>
    %40 = arith.truncf %39 : vector<32x16xf32> to vector<32x16xbf16>
    %c5 = arith.constant 5 : index
    %c0_31 = arith.constant 0 : index
    %c0_32 = arith.constant 0 : index
    %41 = vector.load %arg3[%c5, %c0_31, %c0_32] : memref<6x32x16xbf16, #tpu.memory_space<vmem>>, vector<1x32x16xbf16>
    %42 = vector.shape_cast %41 : vector<1x32x16xbf16> to vector<32x16xbf16>
    %cst_33 = arith.constant dense<0.000000e+00> : vector<32x16xf32>
    %43 = tpu.matmul %0, %42, %cst_33 {dimension_numbers = #tpu.dot_dimension_numbers<[1], [0], [0], [1], [0, 0, 1, 1], [], []>} : vector<32x32xbf16>, vector<32x16xbf16>, vector<32x16xf32> -> vector<32x16xf32>
    %c5_34 = arith.constant 5 : index
    %c0_35 = arith.constant 0 : index
    %c0_36 = arith.constant 0 : index
    %44 = vector.load %arg4[%c5_34, %c0_35, %c0_36] : memref<6x1x16xf32, #tpu.memory_space<vmem>>, vector<1x1x16xf32>
    %45 = vector.shape_cast %44 : vector<1x1x16xf32> to vector<1x16xf32>
    %46 = vector.broadcast %45 : vector<1x16xf32> to vector<32x16xf32>
    %47 = arith.addf %43, %46 : vector<32x16xf32>
    %48 = arith.truncf %47 : vector<32x16xf32> to vector<32x16xbf16>
    %49 = tpu.iota {dimensions = array<i32: 1>} : vector<16x16xi32>
    %c0_37 = arith.constant 0 : index
    %50 = memref.load %arg1[%c0_37] : memref<2xi32, #tpu.memory_space<smem>>
    %51 = vector.broadcast %50 : i32 to vector<16x16xi32>
    %52 = arith.cmpi sge, %49, %51 : vector<16x16xi32>
    %cst_38 = arith.constant 0.000000e+00 : f32
    %53 = vector.broadcast %cst_38 : f32 to vector<16x32xf32>
    %54 = vector.extract_strided_slice %8 {offsets = [0, 0], sizes = [16, 16], strides = [1, 1]} : vector<32x16xbf16> to vector<16x16xbf16>
    %55 = vector.extract_strided_slice %16 {offsets = [0, 0], sizes = [16, 16], strides = [1, 1]} : vector<32x16xbf16> to vector<16x16xbf16>
    %56 = vector.extract_strided_slice %24 {offsets = [0, 0], sizes = [16, 16], strides = [1, 1]} : vector<32x16xbf16> to vector<16x16xbf16>
    %cst_39 = arith.constant dense<0.000000e+00> : vector<16x16xf32>
    %57 = tpu.matmul %54, %55, %cst_39 {dimension_numbers = #tpu.dot_dimension_numbers<[1], [1], [0], [0], [0, 0, 1, 0], [], []>} : vector<16x16xbf16>, vector<16x16xbf16>, vector<16x16xf32> -> vector<16x16xf32>
    %cst_40 = arith.constant -1.000000e+09 : f32
    %58 = vector.broadcast %cst_40 : f32 to vector<16x16xf32>
    %59 = arith.select %52, %58, %57 : vector<16x16xi1>, vector<16x16xf32>
    %cst_41 = arith.constant dense<0xFF800000> : vector<16xf32>
    %60 = vector.multi_reduction <maximumf>, %59, %cst_41 [1] : vector<16x16xf32> to vector<16xf32>
    %61 = vector.shape_cast %60 : vector<16xf32> to vector<16x1xf32>
    %62 = vector.broadcast %61 : vector<16x1xf32> to vector<16x16xf32>
    %63 = arith.subf %59, %62 : vector<16x16xf32>
    %64 = math.exp %63 : vector<16x16xf32>
    %cst_42 = arith.constant dense<0.000000e+00> : vector<16xf32>
    %65 = vector.multi_reduction <add>, %64, %cst_42 [1] : vector<16x16xf32> to vector<16xf32>
    %66 = vector.shape_cast %65 : vector<16xf32> to vector<16x1xf32>
    %67 = tpu.reciprocal %66 {approx = true} : vector<16x1xf32> -> vector<16x1xf32>
    %68 = vector.broadcast %67 : vector<16x1xf32> to vector<16x16xf32>
    %69 = arith.mulf %64, %68 : vector<16x16xf32>
    %70 = arith.truncf %69 : vector<16x16xf32> to vector<16x16xbf16>
    %cst_43 = arith.constant dense<0.000000e+00> : vector<16x16xf32>
    %71 = tpu.matmul %70, %56, %cst_43 {dimension_numbers = #tpu.dot_dimension_numbers<[1], [0], [0], [1], [0, 0, 1, 1], [], []>} : vector<16x16xbf16>, vector<16x16xbf16>, vector<16x16xf32> -> vector<16x16xf32>
    %72 = arith.truncf %71 : vector<16x16xf32> to vector<16x16xbf16>
    %c0_44 = arith.constant 0 : index
    %c0_45 = arith.constant 0 : index
    %c0_46 = arith.constant 0 : index
    %73 = vector.load %arg5[%c0_44, %c0_45, %c0_46] : memref<2x16x32xbf16, #tpu.memory_space<vmem>>, vector<1x16x32xbf16>
    %74 = vector.shape_cast %73 : vector<1x16x32xbf16> to vector<16x32xbf16>
    %cst_47 = arith.constant dense<0.000000e+00> : vector<16x32xf32>
    %75 = tpu.matmul %72, %74, %cst_47 {dimension_numbers = #tpu.dot_dimension_numbers<[1], [0], [0], [1], [0, 0, 1, 1], [], []>} : vector<16x16xbf16>, vector<16x32xbf16>, vector<16x32xf32> -> vector<16x32xf32>
    %76 = arith.addf %53, %75 : vector<16x32xf32>
    %77 = vector.extract_strided_slice %32 {offsets = [0, 0], sizes = [16, 16], strides = [1, 1]} : vector<32x16xbf16> to vector<16x16xbf16>
    %78 = vector.extract_strided_slice %40 {offsets = [0, 0], sizes = [16, 16], strides = [1, 1]} : vector<32x16xbf16> to vector<16x16xbf16>
    %79 = vector.extract_strided_slice %48 {offsets = [0, 0], sizes = [16, 16], strides = [1, 1]} : vector<32x16xbf16> to vector<16x16xbf16>
    %cst_48 = arith.constant dense<0.000000e+00> : vector<16x16xf32>
    %80 = tpu.matmul %77, %78, %cst_48 {dimension_numbers = #tpu.dot_dimension_numbers<[1], [1], [0], [0], [0, 0, 1, 0], [], []>} : vector<16x16xbf16>, vector<16x16xbf16>, vector<16x16xf32> -> vector<16x16xf32>
    %cst_49 = arith.constant -1.000000e+09 : f32
    %81 = vector.broadcast %cst_49 : f32 to vector<16x16xf32>
    %82 = arith.select %52, %81, %80 : vector<16x16xi1>, vector<16x16xf32>
    %cst_50 = arith.constant dense<0xFF800000> : vector<16xf32>
    %83 = vector.multi_reduction <maximumf>, %82, %cst_50 [1] : vector<16x16xf32> to vector<16xf32>
    %84 = vector.shape_cast %83 : vector<16xf32> to vector<16x1xf32>
    %85 = vector.broadcast %84 : vector<16x1xf32> to vector<16x16xf32>
    %86 = arith.subf %82, %85 : vector<16x16xf32>
    %87 = math.exp %86 : vector<16x16xf32>
    %cst_51 = arith.constant dense<0.000000e+00> : vector<16xf32>
    %88 = vector.multi_reduction <add>, %87, %cst_51 [1] : vector<16x16xf32> to vector<16xf32>
    %89 = vector.shape_cast %88 : vector<16xf32> to vector<16x1xf32>
    %90 = tpu.reciprocal %89 {approx = true} : vector<16x1xf32> -> vector<16x1xf32>
    %91 = vector.broadcast %90 : vector<16x1xf32> to vector<16x16xf32>
    %92 = arith.mulf %87, %91 : vector<16x16xf32>
    %93 = arith.truncf %92 : vector<16x16xf32> to vector<16x16xbf16>
    %cst_52 = arith.constant dense<0.000000e+00> : vector<16x16xf32>
    %94 = tpu.matmul %93, %79, %cst_52 {dimension_numbers = #tpu.dot_dimension_numbers<[1], [0], [0], [1], [0, 0, 1, 1], [], []>} : vector<16x16xbf16>, vector<16x16xbf16>, vector<16x16xf32> -> vector<16x16xf32>
    %95 = arith.truncf %94 : vector<16x16xf32> to vector<16x16xbf16>
    %c1_53 = arith.constant 1 : index
    %c0_54 = arith.constant 0 : index
    %c0_55 = arith.constant 0 : index
    %96 = vector.load %arg5[%c1_53, %c0_54, %c0_55] : memref<2x16x32xbf16, #tpu.memory_space<vmem>>, vector<1x16x32xbf16>
    %97 = vector.shape_cast %96 : vector<1x16x32xbf16> to vector<16x32xbf16>
    %cst_56 = arith.constant dense<0.000000e+00> : vector<16x32xf32>
    %98 = tpu.matmul %95, %97, %cst_56 {dimension_numbers = #tpu.dot_dimension_numbers<[1], [0], [0], [1], [0, 0, 1, 1], [], []>} : vector<16x16xbf16>, vector<16x32xbf16>, vector<16x32xf32> -> vector<16x32xf32>
    %99 = arith.addf %76, %98 : vector<16x32xf32>
    %c1_57 = arith.constant 1 : index
    %100 = memref.load %arg1[%c1_57] : memref<2xi32, #tpu.memory_space<smem>>
    %101 = vector.broadcast %100 : i32 to vector<16x16xi32>
    %102 = arith.cmpi sge, %49, %101 : vector<16x16xi32>
    %cst_58 = arith.constant 0.000000e+00 : f32
    %103 = vector.broadcast %cst_58 : f32 to vector<16x32xf32>
    %104 = vector.extract_strided_slice %8 {offsets = [16, 0], sizes = [16, 16], strides = [1, 1]} : vector<32x16xbf16> to vector<16x16xbf16>
    %105 = vector.extract_strided_slice %16 {offsets = [16, 0], sizes = [16, 16], strides = [1, 1]} : vector<32x16xbf16> to vector<16x16xbf16>
    %106 = vector.extract_strided_slice %24 {offsets = [16, 0], sizes = [16, 16], strides = [1, 1]} : vector<32x16xbf16> to vector<16x16xbf16>
    %cst_59 = arith.constant dense<0.000000e+00> : vector<16x16xf32>
    %107 = tpu.matmul %104, %105, %cst_59 {dimension_numbers = #tpu.dot_dimension_numbers<[1], [1], [0], [0], [0, 0, 1, 0], [], []>} : vector<16x16xbf16>, vector<16x16xbf16>, vector<16x16xf32> -> vector<16x16xf32>
    %cst_60 = arith.constant -1.000000e+09 : f32
    %108 = vector.broadcast %cst_60 : f32 to vector<16x16xf32>
    %109 = arith.select %102, %108, %107 : vector<16x16xi1>, vector<16x16xf32>
    %cst_61 = arith.constant dense<0xFF800000> : vector<16xf32>
    %110 = vector.multi_reduction <maximumf>, %109, %cst_61 [1] : vector<16x16xf32> to vector<16xf32>
    %111 = vector.shape_cast %110 : vector<16xf32> to vector<16x1xf32>
    %112 = vector.broadcast %111 : vector<16x1xf32> to vector<16x16xf32>
    %113 = arith.subf %109, %112 : vector<16x16xf32>
    %114 = math.exp %113 : vector<16x16xf32>
    %cst_62 = arith.constant dense<0.000000e+00> : vector<16xf32>
    %115 = vector.multi_reduction <add>, %114, %cst_62 [1] : vector<16x16xf32> to vector<16xf32>
    %116 = vector.shape_cast %115 : vector<16xf32> to vector<16x1xf32>
    %117 = tpu.reciprocal %116 {approx = true} : vector<16x1xf32> -> vector<16x1xf32>
    %118 = vector.broadcast %117 : vector<16x1xf32> to vector<16x16xf32>
    %119 = arith.mulf %114, %118 : vector<16x16xf32>
    %120 = arith.truncf %119 : vector<16x16xf32> to vector<16x16xbf16>
    %cst_63 = arith.constant dense<0.000000e+00> : vector<16x16xf32>
    %121 = tpu.matmul %120, %106, %cst_63 {dimension_numbers = #tpu.dot_dimension_numbers<[1], [0], [0], [1], [0, 0, 1, 1], [], []>} : vector<16x16xbf16>, vector<16x16xbf16>, vector<16x16xf32> -> vector<16x16xf32>
    %122 = arith.truncf %121 : vector<16x16xf32> to vector<16x16xbf16>
    %c0_64 = arith.constant 0 : index
    %c0_65 = arith.constant 0 : index
    %c0_66 = arith.constant 0 : index
    %123 = vector.load %arg5[%c0_64, %c0_65, %c0_66] : memref<2x16x32xbf16, #tpu.memory_space<vmem>>, vector<1x16x32xbf16>
    %124 = vector.shape_cast %123 : vector<1x16x32xbf16> to vector<16x32xbf16>
    %cst_67 = arith.constant dense<0.000000e+00> : vector<16x32xf32>
    %125 = tpu.matmul %122, %124, %cst_67 {dimension_numbers = #tpu.dot_dimension_numbers<[1], [0], [0], [1], [0, 0, 1, 1], [], []>} : vector<16x16xbf16>, vector<16x32xbf16>, vector<16x32xf32> -> vector<16x32xf32>
    %126 = arith.addf %103, %125 : vector<16x32xf32>
    %127 = vector.extract_strided_slice %32 {offsets = [16, 0], sizes = [16, 16], strides = [1, 1]} : vector<32x16xbf16> to vector<16x16xbf16>
    %128 = vector.extract_strided_slice %40 {offsets = [16, 0], sizes = [16, 16], strides = [1, 1]} : vector<32x16xbf16> to vector<16x16xbf16>
    %129 = vector.extract_strided_slice %48 {offsets = [16, 0], sizes = [16, 16], strides = [1, 1]} : vector<32x16xbf16> to vector<16x16xbf16>
    %cst_68 = arith.constant dense<0.000000e+00> : vector<16x16xf32>
    %130 = tpu.matmul %127, %128, %cst_68 {dimension_numbers = #tpu.dot_dimension_numbers<[1], [1], [0], [0], [0, 0, 1, 0], [], []>} : vector<16x16xbf16>, vector<16x16xbf16>, vector<16x16xf32> -> vector<16x16xf32>
    %cst_69 = arith.constant -1.000000e+09 : f32
    %131 = vector.broadcast %cst_69 : f32 to vector<16x16xf32>
    %132 = arith.select %102, %131, %130 : vector<16x16xi1>, vector<16x16xf32>
    %cst_70 = arith.constant dense<0xFF800000> : vector<16xf32>
    %133 = vector.multi_reduction <maximumf>, %132, %cst_70 [1] : vector<16x16xf32> to vector<16xf32>
    %134 = vector.shape_cast %133 : vector<16xf32> to vector<16x1xf32>
    %135 = vector.broadcast %134 : vector<16x1xf32> to vector<16x16xf32>
    %136 = arith.subf %132, %135 : vector<16x16xf32>
    %137 = math.exp %136 : vector<16x16xf32>
    %cst_71 = arith.constant dense<0.000000e+00> : vector<16xf32>
    %138 = vector.multi_reduction <add>, %137, %cst_71 [1] : vector<16x16xf32> to vector<16xf32>
    %139 = vector.shape_cast %138 : vector<16xf32> to vector<16x1xf32>
    %140 = tpu.reciprocal %139 {approx = true} : vector<16x1xf32> -> vector<16x1xf32>
    %141 = vector.broadcast %140 : vector<16x1xf32> to vector<16x16xf32>
    %142 = arith.mulf %137, %141 : vector<16x16xf32>
    %143 = arith.truncf %142 : vector<16x16xf32> to vector<16x16xbf16>
    %cst_72 = arith.constant dense<0.000000e+00> : vector<16x16xf32>
    %144 = tpu.matmul %143, %129, %cst_72 {dimension_numbers = #tpu.dot_dimension_numbers<[1], [0], [0], [1], [0, 0, 1, 1], [], []>} : vector<16x16xbf16>, vector<16x16xbf16>, vector<16x16xf32> -> vector<16x16xf32>
    %145 = arith.truncf %144 : vector<16x16xf32> to vector<16x16xbf16>
    %c1_73 = arith.constant 1 : index
    %c0_74 = arith.constant 0 : index
    %c0_75 = arith.constant 0 : index
    %146 = vector.load %arg5[%c1_73, %c0_74, %c0_75] : memref<2x16x32xbf16, #tpu.memory_space<vmem>>, vector<1x16x32xbf16>
    %147 = vector.shape_cast %146 : vector<1x16x32xbf16> to vector<16x32xbf16>
    %cst_76 = arith.constant dense<0.000000e+00> : vector<16x32xf32>
    %148 = tpu.matmul %145, %147, %cst_76 {dimension_numbers = #tpu.dot_dimension_numbers<[1], [0], [0], [1], [0, 0, 1, 1], [], []>} : vector<16x16xbf16>, vector<16x32xbf16>, vector<16x32xf32> -> vector<16x32xf32>
    %149 = arith.addf %126, %148 : vector<16x32xf32>
    %150 = tpu.concatenate %99, %149 in 0 : vector<16x32xf32>, vector<16x32xf32> -> vector<32x32xf32>
    %c0_77 = arith.constant 0 : index
    %c0_78 = arith.constant 0 : index
    %151 = vector.load %arg6[%c0_77, %c0_78] : memref<1x32xf32, #tpu.memory_space<vmem>>, vector<1x32xf32>
    %152 = vector.broadcast %151 : vector<1x32xf32> to vector<32x32xf32>
    %153 = arith.addf %150, %152 : vector<32x32xf32>
    %154 = arith.extf %0 : vector<32x32xbf16> to vector<32x32xf32>
    %155 = arith.addf %154, %153 : vector<32x32xf32>
    %c0_79 = arith.constant 0 : index
    %c0_80 = arith.constant 0 : index
    %156 = vector.load %arg7[%c0_79, %c0_80] : memref<1x32xf32, #tpu.memory_space<vmem>>, vector<1x32xf32>
    %c0_81 = arith.constant 0 : index
    %c0_82 = arith.constant 0 : index
    %157 = vector.load %arg8[%c0_81, %c0_82] : memref<1x32xf32, #tpu.memory_space<vmem>>, vector<1x32xf32>
    %cst_83 = arith.constant dense<0.000000e+00> : vector<32xf32>
    %158 = vector.multi_reduction <add>, %155, %cst_83 [1] : vector<32x32xf32> to vector<32xf32>
    %159 = vector.shape_cast %158 : vector<32xf32> to vector<32x1xf32>
    %cst_84 = arith.constant 3.200000e+01 : f32
    %160 = vector.broadcast %cst_84 : f32 to vector<32x1xf32>
    %161 = arith.divf %159, %160 : vector<32x1xf32>
    %162 = vector.broadcast %161 : vector<32x1xf32> to vector<32x32xf32>
    %163 = arith.subf %155, %162 : vector<32x32xf32>
    %164 = arith.mulf %163, %163 : vector<32x32xf32>
    %cst_85 = arith.constant dense<0.000000e+00> : vector<32xf32>
    %165 = vector.multi_reduction <add>, %164, %cst_85 [1] : vector<32x32xf32> to vector<32xf32>
    %166 = vector.shape_cast %165 : vector<32xf32> to vector<32x1xf32>
    %cst_86 = arith.constant 3.200000e+01 : f32
    %167 = vector.broadcast %cst_86 : f32 to vector<32x1xf32>
    %168 = arith.divf %166, %167 : vector<32x1xf32>
    %169 = vector.broadcast %161 : vector<32x1xf32> to vector<32x32xf32>
    %170 = arith.subf %155, %169 : vector<32x32xf32>
    %cst_87 = arith.constant 9.99999974E-6 : f32
    %171 = vector.broadcast %cst_87 : f32 to vector<32x1xf32>
    %172 = arith.addf %168, %171 : vector<32x1xf32>
    %173 = math.rsqrt %172 : vector<32x1xf32>
    %174 = vector.broadcast %173 : vector<32x1xf32> to vector<32x32xf32>
    %175 = arith.mulf %170, %174 : vector<32x32xf32>
    %176 = vector.broadcast %156 : vector<1x32xf32> to vector<32x32xf32>
    %177 = arith.mulf %175, %176 : vector<32x32xf32>
    %178 = vector.broadcast %157 : vector<1x32xf32> to vector<32x32xf32>
    %179 = arith.addf %177, %178 : vector<32x32xf32>
    %180 = arith.truncf %179 : vector<32x32xf32> to vector<32x32xbf16>
    %c0_88 = arith.constant 0 : index
    %c0_89 = arith.constant 0 : index
    %181 = vector.load %arg9[%c0_88, %c0_89] : memref<32x128xbf16, #tpu.memory_space<vmem>>, vector<32x128xbf16>
    %cst_90 = arith.constant dense<0.000000e+00> : vector<32x128xf32>
    %182 = tpu.matmul %180, %181, %cst_90 {dimension_numbers = #tpu.dot_dimension_numbers<[1], [0], [0], [1], [0, 0, 1, 1], [], []>} : vector<32x32xbf16>, vector<32x128xbf16>, vector<32x128xf32> -> vector<32x128xf32>
    %c0_91 = arith.constant 0 : index
    %c0_92 = arith.constant 0 : index
    %183 = vector.load %arg10[%c0_91, %c0_92] : memref<1x128xf32, #tpu.memory_space<vmem>>, vector<1x128xf32>
    %184 = vector.broadcast %183 : vector<1x128xf32> to vector<32x128xf32>
    %185 = arith.addf %182, %184 : vector<32x128xf32>
    %cst_93 = arith.constant 0.000000e+00 : f32
    %186 = vector.broadcast %cst_93 : f32 to vector<32x128xf32>
    %187 = arith.maximumf %185, %186 : vector<32x128xf32>
    %188 = arith.truncf %187 : vector<32x128xf32> to vector<32x128xbf16>
    %c0_94 = arith.constant 0 : index
    %c0_95 = arith.constant 0 : index
    %189 = vector.load %arg11[%c0_94, %c0_95] : memref<128x32xbf16, #tpu.memory_space<vmem>>, vector<128x32xbf16>
    %cst_96 = arith.constant dense<0.000000e+00> : vector<32x32xf32>
    %190 = tpu.matmul %188, %189, %cst_96 {dimension_numbers = #tpu.dot_dimension_numbers<[1], [0], [0], [1], [0, 0, 1, 1], [], []>} : vector<32x128xbf16>, vector<128x32xbf16>, vector<32x32xf32> -> vector<32x32xf32>
    %c0_97 = arith.constant 0 : index
    %c0_98 = arith.constant 0 : index
    %191 = vector.load %arg12[%c0_97, %c0_98] : memref<1x32xf32, #tpu.memory_space<vmem>>, vector<1x32xf32>
    %192 = vector.broadcast %191 : vector<1x32xf32> to vector<32x32xf32>
    %193 = arith.addf %190, %192 : vector<32x32xf32>
    %194 = arith.addf %179, %193 : vector<32x32xf32>
    %c0_99 = arith.constant 0 : index
    %c0_100 = arith.constant 0 : index
    %195 = vector.load %arg13[%c0_99, %c0_100] : memref<1x32xf32, #tpu.memory_space<vmem>>, vector<1x32xf32>
    %c0_101 = arith.constant 0 : index
    %c0_102 = arith.constant 0 : index
    %196 = vector.load %arg14[%c0_101, %c0_102] : memref<1x32xf32, #tpu.memory_space<vmem>>, vector<1x32xf32>
    %cst_103 = arith.constant dense<0.000000e+00> : vector<32xf32>
    %197 = vector.multi_reduction <add>, %194, %cst_103 [1] : vector<32x32xf32> to vector<32xf32>
    %198 = vector.shape_cast %197 : vector<32xf32> to vector<32x1xf32>
    %cst_104 = arith.constant 3.200000e+01 : f32
    %199 = vector.broadcast %cst_104 : f32 to vector<32x1xf32>
    %200 = arith.divf %198, %199 : vector<32x1xf32>
    %201 = vector.broadcast %200 : vector<32x1xf32> to vector<32x32xf32>
    %202 = arith.subf %194, %201 : vector<32x32xf32>
    %203 = arith.mulf %202, %202 : vector<32x32xf32>
    %cst_105 = arith.constant dense<0.000000e+00> : vector<32xf32>
    %204 = vector.multi_reduction <add>, %203, %cst_105 [1] : vector<32x32xf32> to vector<32xf32>
    %205 = vector.shape_cast %204 : vector<32xf32> to vector<32x1xf32>
    %cst_106 = arith.constant 3.200000e+01 : f32
    %206 = vector.broadcast %cst_106 : f32 to vector<32x1xf32>
    %207 = arith.divf %205, %206 : vector<32x1xf32>
    %208 = vector.broadcast %200 : vector<32x1xf32> to vector<32x32xf32>
    %209 = arith.subf %194, %208 : vector<32x32xf32>
    %cst_107 = arith.constant 9.99999974E-6 : f32
    %210 = vector.broadcast %cst_107 : f32 to vector<32x1xf32>
    %211 = arith.addf %207, %210 : vector<32x1xf32>
    %212 = math.rsqrt %211 : vector<32x1xf32>
    %213 = vector.broadcast %212 : vector<32x1xf32> to vector<32x32xf32>
    %214 = arith.mulf %209, %213 : vector<32x32xf32>
    %215 = vector.broadcast %195 : vector<1x32xf32> to vector<32x32xf32>
    %216 = arith.mulf %214, %215 : vector<32x32xf32>
    %217 = vector.broadcast %196 : vector<1x32xf32> to vector<32x32xf32>
    %218 = arith.addf %216, %217 : vector<32x32xf32>
    %219 = arith.truncf %218 : vector<32x32xf32> to vector<32x32xbf16>
    %c0_108 = arith.constant 0 : index
    %c0_109 = arith.constant 0 : index
    %220 = vector.load %arg15[%c0_108, %c0_109] : memref<32x32xbf16, #tpu.memory_space<vmem>>, vector<32x32xbf16>
    tpu.vector_store %arg15[%c0_108, %c0_109], %219 {strides = array<i32>} : memref<32x32xbf16, #tpu.memory_space<vmem>>, vector<32x32xbf16>,
    return
  }
  func.func @transform_0(%arg0: i32, %arg1: memref<2xi32, #tpu.memory_space<smem>>) -> (i32, i32) {
    %c0_i32 = arith.constant 0 : i32
    %c0_i32_0 = arith.constant 0 : i32
    %c0_i32_1 = arith.constant 0 : i32
    return %c0_i32, %c0_i32_0 : i32, i32
  }
  func.func @transform_1(%arg0: i32, %arg1: memref<2xi32, #tpu.memory_space<smem>>) -> (i32, i32, i32) {
    %c0_i32 = arith.constant 0 : i32
    %c0_i32_0 = arith.constant 0 : i32
    %c0_i32_1 = arith.constant 0 : i32
    %c0_i32_2 = arith.constant 0 : i32
    return %c0_i32, %c0_i32_0, %c0_i32_1 : i32, i32, i32
  }
  func.func @transform_2(%arg0: i32, %arg1: memref<2xi32, #tpu.memory_space<smem>>) -> (i32, i32, i32) {
    %c0_i32 = arith.constant 0 : i32
    %c0_i32_0 = arith.constant 0 : i32
    %c0_i32_1 = arith.constant 0 : i32
    %c0_i32_2 = arith.constant 0 : i32
    return %c0_i32, %c0_i32_0, %c0_i32_1 : i32, i32, i32
  }
  func.func @transform_3(%arg0: i32, %arg1: memref<2xi32, #tpu.memory_space<smem>>) -> (i32, i32, i32) {
    %c0_i32 = arith.constant 0 : i32
    %c0_i32_0 = arith.constant 0 : i32
    %c0_i32_1 = arith.constant 0 : i32
    %c0_i32_2 = arith.constant 0 : i32
    return %c0_i32, %c0_i32_0, %c0_i32_1 : i32, i32, i32
  }
  func.func @transform_4(%arg0: i32, %arg1: memref<2xi32, #tpu.memory_space<smem>>) -> (i32, i32) {
    %c0_i32 = arith.constant 0 : i32
    %c0_i32_0 = arith.constant 0 : i32
    %c0_i32_1 = arith.constant 0 : i32
    return %c0_i32, %c0_i32_0 : i32, i32
  }
  func.func @transform_5(%arg0: i32, %arg1: memref<2xi32, #tpu.memory_space<smem>>) -> (i32, i32) {
    %c0_i32 = arith.constant 0 : i32
    %c0_i32_0 = arith.constant 0 : i32
    %c0_i32_1 = arith.constant 0 : i32
    return %c0_i32, %c0_i32_0 : i32, i32
  }
  func.func @transform_6(%arg0: i32, %arg1: memref<2xi32, #tpu.memory_space<smem>>) -> (i32, i32) {
    %c0_i32 = arith.constant 0 : i32
    %c0_i32_0 = arith.constant 0 : i32
    %c0_i32_1 = arith.constant 0 : i32
    return %c0_i32, %c0_i32_0 : i32, i32
  }
  func.func @transform_7(%arg0: i32, %arg1: memref<2xi32, #tpu.memory_space<smem>>) -> (i32, i32) {
    %c0_i32 = arith.constant 0 : i32
    %c0_i32_0 = arith.constant 0 : i32
    %c0_i32_1 = arith.constant 0 : i32
    return %c0_i32, %c0_i32_0 : i32, i32
  }
  func.func @transform_8(%arg0: i32, %arg1: memref<2xi32, #tpu.memory_space<smem>>) -> (i32, i32) {
    %c0_i32 = arith.constant 0 : i32
    %c0_i32_0 = arith.constant 0 : i32
    %c0_i32_1 = arith.constant 0 : i32
    return %c0_i32, %c0_i32_0 : i32, i32
  }
  func.func @transform_9(%arg0: i32, %arg1: memref<2xi32, #tpu.memory_space<smem>>) -> (i32, i32) {
    %c0_i32 = arith.constant 0 : i32
    %c0_i32_0 = arith.constant 0 : i32
    %c0_i32_1 = arith.constant 0 : i32
    return %c0_i32, %c0_i32_0 : i32, i32
  }
  func.func @transform_10(%arg0: i32, %arg1: memref<2xi32, #tpu.memory_space<smem>>) -> (i32, i32) {
    %c0_i32 = arith.constant 0 : i32
    %c0_i32_0 = arith.constant 0 : i32
    %c0_i32_1 = arith.constant 0 : i32
    return %c0_i32, %c0_i32_0 : i32, i32
  }
  func.func @transform_11(%arg0: i32, %arg1: memref<2xi32, #tpu.memory_space<smem>>) -> (i32, i32) {
    %c0_i32 = arith.constant 0 : i32
    %c0_i32_0 = arith.constant 0 : i32
    %c0_i32_1 = arith.constant 0 : i32
    return %c0_i32, %c0_i32_0 : i32, i32
  }
  func.func @transform_12(%arg0: i32, %arg1: memref<2xi32, #tpu.memory_space<smem>>) -> (i32, i32) {
    %c0_i32 = arith.constant 0 : i32
    %c0_i32_0 = arith.constant 0 : i32
    %c0_i32_1 = arith.constant 0 : i32
    return %c0_i32, %c0_i32_0 : i32, i32
  }
  func.func @transform_13(%arg0: i32, %arg1: memref<2xi32, #tpu.memory_space<smem>>) -> (i32, i32) {
    %c0_i32 = arith.constant 0 : i32
    %c0_i32_0 = arith.constant 0 : i32
    %c0_i32_1 = arith.constant 0 : i32
    return %c0_i32, %c0_i32_0 : i32, i32
  }
}

module attributes {stable_mosaic.version = 11 : i64} {
  func.func @_proj_kernel(%arg0: i32, %arg1: memref<16x32xbf16, #tpu.memory_space<vmem>>, %arg2: memref<32x64xbf16, #tpu.memory_space<vmem>>, %arg3: memref<1x64xf32, #tpu.memory_space<vmem>>, %arg4: memref<16x64xf32, #tpu.memory_space<vmem>>) attributes {dimension_semantics = [#tpu.dimension_semantics<arbitrary>], iteration_bounds = array<i64: 1>, scalar_prefetch = 0 : i64, scratch_operands = 0 : i64, tpu.core_type = #tpu.core_type<tc>, window_params = [{pipeline_mode = #tpu.pipeline_mode<synchronous>, transform_indices = @transform_0, window_bounds = array<i64: 16, 32>}, {pipeline_mode = #tpu.pipeline_mode<synchronous>, transform_indices = @transform_1, window_bounds = array<i64: 32, 64>}, {pipeline_mode = #tpu.pipeline_mode<synchronous>, transform_indices = @transform_2, window_bounds = array<i64: 1, 64>}, {pipeline_mode = #tpu.pipeline_mode<synchronous>, transform_indices = @transform_3, window_bounds = array<i64: 16, 64>}]} {
    %c0 = arith.constant 0 : index
    %c0_0 = arith.constant 0 : index
    %0 = vector.load %arg1[%c0, %c0_0] : memref<16x32xbf16, #tpu.memory_space<vmem>>, vector<16x32xbf16>
    %c0_1 = arith.constant 0 : index
    %c0_2 = arith.constant 0 : index
    %1 = vector.load %arg2[%c0_1, %c0_2] : memref<32x64xbf16, #tpu.memory_space<vmem>>, vector<32x64xbf16>
    %cst = arith.constant dense<0.000000e+00> : vector<16x64xf32>
    %2 = tpu.matmul %0, %1, %cst {dimension_numbers = #tpu.dot_dimension_numbers<[1], [0], [0], [1], [0, 0, 1, 1], [], []>} : vector<16x32xbf16>, vector<32x64xbf16>, vector<16x64xf32> -> vector<16x64xf32>
    %c0_3 = arith.constant 0 : index
    %c0_4 = arith.constant 0 : index
    %3 = vector.load %arg3[%c0_3, %c0_4] : memref<1x64xf32, #tpu.memory_space<vmem>>, vector<1x64xf32>
    %4 = vector.broadcast %3 : vector<1x64xf32> to vector<16x64xf32>
    %5 = arith.addf %2, %4 : vector<16x64xf32>
    %c0_5 = arith.constant 0 : index
    %c0_6 = arith.constant 0 : index
    %6 = vector.load %arg4[%c0_5, %c0_6] : memref<16x64xf32, #tpu.memory_space<vmem>>, vector<16x64xf32>
    tpu.vector_store %arg4[%c0_5, %c0_6], %5 {strides = array<i32>} : memref<16x64xf32, #tpu.memory_space<vmem>>, vector<16x64xf32>,
    return
  }
  func.func @transform_0(%arg0: i32) -> (i32, i32) {
    %c0_i32 = arith.constant 0 : i32
    %c0_i32_0 = arith.constant 0 : i32
    %c0_i32_1 = arith.constant 0 : i32
    return %c0_i32, %c0_i32_0 : i32, i32
  }
  func.func @transform_1(%arg0: i32) -> (i32, i32) {
    %c0_i32 = arith.constant 0 : i32
    %c0_i32_0 = arith.constant 0 : i32
    %c0_i32_1 = arith.constant 0 : i32
    return %c0_i32, %c0_i32_0 : i32, i32
  }
  func.func @transform_2(%arg0: i32) -> (i32, i32) {
    %c0_i32 = arith.constant 0 : i32
    %c0_i32_0 = arith.constant 0 : i32
    %c0_i32_1 = arith.constant 0 : i32
    return %c0_i32, %c0_i32_0 : i32, i32
  }
  func.func @transform_3(%arg0: i32) -> (i32, i32) {
    %c0_i32 = arith.constant 0 : i32
    %c0_i32_0 = arith.constant 0 : i32
    %c0_i32_1 = arith.constant 0 : i32
    return %c0_i32, %c0_i32_0 : i32, i32
  }
}

module attributes {stable_mosaic.version = 11 : i64} {
  func.func @_decoder_layer_kernel(%arg0: i32, %arg1: memref<2xi32, #tpu.memory_space<smem>>, %arg2: memref<16x32xbf16, #tpu.memory_space<vmem>>, %arg3: memref<32x32xbf16, #tpu.memory_space<vmem>>, %arg4: memref<6x32x16xbf16, #tpu.memory_space<vmem>>, %arg5: memref<6x1x16xf32, #tpu.memory_space<vmem>>, %arg6: memref<2x16x32xbf16, #tpu.memory_space<vmem>>, %arg7: memref<1x32xf32, #tpu.memory_space<vmem>>, %arg8: memref<1x32xf32, #tpu.memory_space<vmem>>, %arg9: memref<1x32xf32, #tpu.memory_space<vmem>>, %arg10: memref<2x32x16xbf16, #tpu.memory_space<vmem>>, %arg11: memref<2x1x16xf32, #tpu.memory_space<vmem>>, %arg12: memref<4x32x16xbf16, #tpu.memory_space<vmem>>, %arg13: memref<4x1x16xf32, #tpu.memory_space<vmem>>, %arg14: memref<2x16x32xbf16, #tpu.memory_space<vmem>>, %arg15: memref<1x32xf32, #tpu.memory_space<vmem>>, %arg16: memref<1x32xf32, #tpu.memory_space<vmem>>, %arg17: memref<1x32xf32, #tpu.memory_space<vmem>>, %arg18: memref<32x128xbf16, #tpu.memory_space<vmem>>, %arg19: memref<1x128xf32, #tpu.memory_space<vmem>>, %arg20: memref<128x32xbf16, #tpu.memory_space<vmem>>, %arg21: memref<1x32xf32, #tpu.memory_space<vmem>>, %arg22: memref<1x32xf32, #tpu.memory_space<vmem>>, %arg23: memref<1x32xf32, #tpu.memory_space<vmem>>, %arg24: memref<16x32xbf16, #tpu.memory_space<vmem>>) attributes {dimension_semantics = [#tpu.dimension_semantics<arbitrary>], iteration_bounds = array<i64: 1>, scalar_prefetch = 1 : i64, scratch_operands = 0 : i64, tpu.core_type = #tpu.core_type<tc>, window_params = [{pipeline_mode = #tpu.pipeline_mode<synchronous>, transform_indices = @transform_0, window_bounds = array<i64: 16, 32>}, {pipeline_mode = #tpu.pipeline_mode<synchronous>, transform_indices = @transform_1, window_bounds = array<i64: 32, 32>}, {pipeline_mode = #tpu.pipeline_mode<synchronous>, transform_indices = @transform_2, window_bounds = array<i64: 6, 32, 16>}, {pipeline_mode = #tpu.pipeline_mode<synchronous>, transform_indices = @transform_3, window_bounds = array<i64: 6, 1, 16>}, {pipeline_mode = #tpu.pipeline_mode<synchronous>, transform_indices = @transform_4, window_bounds = array<i64: 2, 16, 32>}, {pipeline_mode = #tpu.pipeline_mode<synchronous>, transform_indices = @transform_5, window_bounds = array<i64: 1, 32>}, {pipeline_mode = #tpu.pipeline_mode<synchronous>, transform_indices = @transform_6, window_bounds = array<i64: 1, 32>}, {pipeline_mode = #tpu.pipeline_mode<synchronous>, transform_indices = @transform_7, window_bounds = array<i64: 1, 32>}, {pipeline_mode = #tpu.pipeline_mode<synchronous>, transform_indices = @transform_8, window_bounds = array<i64: 2, 32, 16>}, {pipeline_mode = #tpu.pipeline_mode<synchronous>, transform_indices = @transform_9, window_bounds = array<i64: 2, 1, 16>}, {pipeline_mode = #tpu.pipeline_mode<synchronous>, transform_indices = @transform_10, window_bounds = array<i64: 4, 32, 16>}, {pipeline_mode = #tpu.pipeline_mode<synchronous>, transform_indices = @transform_11, window_bounds = array<i64: 4, 1, 16>}, {pipeline_mode = #tpu.pipeline_mode<synchronous>, transform_indices = @transform_12, window_bounds = array<i64: 2, 16, 32>}, {pipeline_mode = #tpu.pipeline_mode<synchronous>, transform_indices = @transform_13, window_bounds = array<i64: 1, 32>}, {pipeline_mode = #tpu.pipeline_mode<synchronous>, transform_indices = @transform_14, window_bounds = array<i64: 1, 32>}, {pipeline_mode = #tpu.pipeline_mode<synchronous>, transform_indices = @transform_15, window_bounds = array<i64: 1, 32>}, {pipeline_mode = #tpu.pipeline_mode<synchronous>, transform_indices = @transform_16, window_bounds = array<i64: 32, 128>}, {pipeline_mode = #tpu.pipeline_mode<synchronous>, transform_indices = @transform_17, window_bounds = array<i64: 1, 128>}, {pipeline_mode = #tpu.pipeline_mode<synchronous>, transform_indices = @transform_18, window_bounds = array<i64: 128, 32>}, {pipeline_mode = #tpu.pipeline_mode<synchronous>, transform_indices = @transform_19, window_bounds = array<i64: 1, 32>}, {pipeline_mode = #tpu.pipeline_mode<synchronous>, transform_indices = @transform_20, window_bounds = array<i64: 1, 32>}, {pipeline_mode = #tpu.pipeline_mode<synchronous>, transform_indices = @transform_21, window_bounds = array<i64: 1, 32>}, {pipeline_mode = #tpu.pipeline_mode<synchronous>, transform_indices = @transform_22, window_bounds = array<i64: 16, 32>}]} {
    %c0 = arith.constant 0 : index
    %c0_0 = arith.constant 0 : index
    %0 = vector.load %arg2[%c0, %c0_0] : memref<16x32xbf16, #tpu.memory_space<vmem>>, vector<16x32xbf16>
    %c0_1 = arith.constant 0 : index
    %c0_2 = arith.constant 0 : index
    %1 = vector.load %arg3[%c0_1, %c0_2] : memref<32x32xbf16, #tpu.memory_space<vmem>>, vector<32x32xbf16>
    %c0_3 = arith.constant 0 : index
    %c0_4 = arith.constant 0 : index
    %c0_5 = arith.constant 0 : index
    %2 = vector.load %arg4[%c0_3, %c0_4, %c0_5] : memref<6x32x16xbf16, #tpu.memory_space<vmem>>, vector<1x32x16xbf16>
    %3 = vector.shape_cast %2 : vector<1x32x16xbf16> to vector<32x16xbf16>
    %cst = arith.constant dense<0.000000e+00> : vector<16x16xf32>
    %4 = tpu.matmul %0, %3, %cst {dimension_numbers = #tpu.dot_dimension_numbers<[1], [0], [0], [1], [0, 0, 1, 1], [], []>} : vector<16x32xbf16>, vector<32x16xbf16>, vector<16x16xf32> -> vector<16x16xf32>
    %c0_6 = arith.constant 0 : index
    %c0_7 = arith.constant 0 : index
    %c0_8 = arith.constant 0 : index
    %5 = vector.load %arg5[%c0_6, %c0_7, %c0_8] : memref<6x1x16xf32, #tpu.memory_space<vmem>>, vector<1x1x16xf32>
    %6 = vector.shape_cast %5 : vector<1x1x16xf32> to vector<1x16xf32>
    %7 = vector.broadcast %6 : vector<1x16xf32> to vector<16x16xf32>
    %8 = arith.addf %4, %7 : vector<16x16xf32>
    %9 = arith.truncf %8 : vector<16x16xf32> to vector<16x16xbf16>
    %c2 = arith.constant 2 : index
    %c0_9 = arith.constant 0 : index
    %c0_10 = arith.constant 0 : index
    %10 = vector.load %arg4[%c2, %c0_9, %c0_10] : memref<6x32x16xbf16, #tpu.memory_space<vmem>>, vector<1x32x16xbf16>
    %11 = vector.shape_cast %10 : vector<1x32x16xbf16> to vector<32x16xbf16>
    %cst_11 = arith.constant dense<0.000000e+00> : vector<16x16xf32>
    %12 = tpu.matmul %0, %11, %cst_11 {dimension_numbers = #tpu.dot_dimension_numbers<[1], [0], [0], [1], [0, 0, 1, 1], [], []>} : vector<16x32xbf16>, vector<32x16xbf16>, vector<16x16xf32> -> vector<16x16xf32>
    %c2_12 = arith.constant 2 : index
    %c0_13 = arith.constant 0 : index
    %c0_14 = arith.constant 0 : index
    %13 = vector.load %arg5[%c2_12, %c0_13, %c0_14] : memref<6x1x16xf32, #tpu.memory_space<vmem>>, vector<1x1x16xf32>
    %14 = vector.shape_cast %13 : vector<1x1x16xf32> to vector<1x16xf32>
    %15 = vector.broadcast %14 : vector<1x16xf32> to vector<16x16xf32>
    %16 = arith.addf %12, %15 : vector<16x16xf32>
    %17 = arith.truncf %16 : vector<16x16xf32> to vector<16x16xbf16>
    %c4 = arith.constant 4 : index
    %c0_15 = arith.constant 0 : index
    %c0_16 = arith.constant 0 : index
    %18 = vector.load %arg4[%c4, %c0_15, %c0_16] : memref<6x32x16xbf16, #tpu.memory_space<vmem>>, vector<1x32x16xbf16>
    %19 = vector.shape_cast %18 : vector<1x32x16xbf16> to vector<32x16xbf16>
    %cst_17 = arith.constant dense<0.000000e+00> : vector<16x16xf32>
    %20 = tpu.matmul %0, %19, %cst_17 {dimension_numbers = #tpu.dot_dimension_numbers<[1], [0], [0], [1], [0, 0, 1, 1], [], []>} : vector<16x32xbf16>, vector<32x16xbf16>, vector<16x16xf32> -> vector<16x16xf32>
    %c4_18 = arith.constant 4 : index
    %c0_19 = arith.constant 0 : index
    %c0_20 = arith.constant 0 : index
    %21 = vector.load %arg5[%c4_18, %c0_19, %c0_20] : memref<6x1x16xf32, #tpu.memory_space<vmem>>, vector<1x1x16xf32>
    %22 = vector.shape_cast %21 : vector<1x1x16xf32> to vector<1x16xf32>
    %23 = vector.broadcast %22 : vector<1x16xf32> to vector<16x16xf32>
    %24 = arith.addf %20, %23 : vector<16x16xf32>
    %25 = arith.truncf %24 : vector<16x16xf32> to vector<16x16xbf16>
    %c1 = arith.constant 1 : index
    %c0_21 = arith.constant 0 : index
    %c0_22 = arith.constant 0 : index
    %26 = vector.load %arg4[%c1, %c0_21, %c0_22] : memref<6x32x16xbf16, #tpu.memory_space<vmem>>, vector<1x32x16xbf16>
    %27 = vector.shape_cast %26 : vector<1x32x16xbf16> to vector<32x16xbf16>
    %cst_23 = arith.constant dense<0.000000e+00> : vector<16x16xf32>
    %28 = tpu.matmul %0, %27, %cst_23 {dimension_numbers = #tpu.dot_dimension_numbers<[1], [0], [0], [1], [0, 0, 1, 1], [], []>} : vector<16x32xbf16>, vector<32x16xbf16>, vector<16x16xf32> -> vector<16x16xf32>
    %c1_24 = arith.constant 1 : index
    %c0_25 = arith.constant 0 : index
    %c0_26 = arith.constant 0 : index
    %29 = vector.load %arg5[%c1_24, %c0_25, %c0_26] : memref<6x1x16xf32, #tpu.memory_space<vmem>>, vector<1x1x16xf32>
    %30 = vector.shape_cast %29 : vector<1x1x16xf32> to vector<1x16xf32>
    %31 = vector.broadcast %30 : vector<1x16xf32> to vector<16x16xf32>
    %32 = arith.addf %28, %31 : vector<16x16xf32>
    %33 = arith.truncf %32 : vector<16x16xf32> to vector<16x16xbf16>
    %c3 = arith.constant 3 : index
    %c0_27 = arith.constant 0 : index
    %c0_28 = arith.constant 0 : index
    %34 = vector.load %arg4[%c3, %c0_27, %c0_28] : memref<6x32x16xbf16, #tpu.memory_space<vmem>>, vector<1x32x16xbf16>
    %35 = vector.shape_cast %34 : vector<1x32x16xbf16> to vector<32x16xbf16>
    %cst_29 = arith.constant dense<0.000000e+00> : vector<16x16xf32>
    %36 = tpu.matmul %0, %35, %cst_29 {dimension_numbers = #tpu.dot_dimension_numbers<[1], [0], [0], [1], [0, 0, 1, 1], [], []>} : vector<16x32xbf16>, vector<32x16xbf16>, vector<16x16xf32> -> vector<16x16xf32>
    %c3_30 = arith.constant 3 : index
    %c0_31 = arith.constant 0 : index
    %c0_32 = arith.constant 0 : index
    %37 = vector.load %arg5[%c3_30, %c0_31, %c0_32] : memref<6x1x16xf32, #tpu.memory_space<vmem>>, vector<1x1x16xf32>
    %38 = vector.shape_cast %37 : vector<1x1x16xf32> to vector<1x16xf32>
    %39 = vector.broadcast %38 : vector<1x16xf32> to vector<16x16xf32>
    %40 = arith.addf %36, %39 : vector<16x16xf32>
    %41 = arith.truncf %40 : vector<16x16xf32> to vector<16x16xbf16>
    %c5 = arith.constant 5 : index
    %c0_33 = arith.constant 0 : index
    %c0_34 = arith.constant 0 : index
    %42 = vector.load %arg4[%c5, %c0_33, %c0_34] : memref<6x32x16xbf16, #tpu.memory_space<vmem>>, vector<1x32x16xbf16>
    %43 = vector.shape_cast %42 : vector<1x32x16xbf16> to vector<32x16xbf16>
    %cst_35 = arith.constant dense<0.000000e+00> : vector<16x16xf32>
    %44 = tpu.matmul %0, %43, %cst_35 {dimension_numbers = #tpu.dot_dimension_numbers<[1], [0], [0], [1], [0, 0, 1, 1], [], []>} : vector<16x32xbf16>, vector<32x16xbf16>, vector<16x16xf32> -> vector<16x16xf32>
    %c5_36 = arith.constant 5 : index
    %c0_37 = arith.constant 0 : index
    %c0_38 = arith.constant 0 : index
    %45 = vector.load %arg5[%c5_36, %c0_37, %c0_38] : memref<6x1x16xf32, #tpu.memory_space<vmem>>, vector<1x1x16xf32>
    %46 = vector.shape_cast %45 : vector<1x1x16xf32> to vector<1x16xf32>
    %47 = vector.broadcast %46 : vector<1x16xf32> to vector<16x16xf32>
    %48 = arith.addf %44, %47 : vector<16x16xf32>
    %49 = arith.truncf %48 : vector<16x16xf32> to vector<16x16xbf16>
    %50 = tpu.iota {dimensions = array<i32: 1>} : vector<8x8xi32>
    %51 = tpu.iota {dimensions = array<i32: 0>} : vector<8x8xi32>
    %52 = arith.cmpi sgt, %50, %51 : vector<8x8xi32>
    %cst_39 = arith.constant 0.000000e+00 : f32
    %53 = vector.broadcast %cst_39 : f32 to vector<8x32xf32>
    %54 = vector.extract_strided_slice %9 {offsets = [0, 0], sizes = [8, 16], strides = [1, 1]} : vector<16x16xbf16> to vector<8x16xbf16>
    %55 = vector.extract_strided_slice %17 {offsets = [0, 0], sizes = [8, 16], strides = [1, 1]} : vector<16x16xbf16> to vector<8x16xbf16>
    %56 = vector.extract_strided_slice %25 {offsets = [0, 0], sizes = [8, 16], strides = [1, 1]} : vector<16x16xbf16> to vector<8x16xbf16>
    %cst_40 = arith.constant dense<0.000000e+00> : vector<8x8xf32>
    %57 = tpu.matmul %54, %55, %cst_40 {dimension_numbers = #tpu.dot_dimension_numbers<[1], [1], [0], [0], [0, 0, 1, 0], [], []>} : vector<8x16xbf16>, vector<8x16xbf16>, vector<8x8xf32> -> vector<8x8xf32>
    %cst_41 = arith.constant -1.000000e+09 : f32
    %58 = vector.broadcast %cst_41 : f32 to vector<8x8xf32>
    %59 = arith.select %52, %58, %57 : vector<8x8xi1>, vector<8x8xf32>
    %cst_42 = arith.constant dense<0xFF800000> : vector<8xf32>
    %60 = vector.multi_reduction <maximumf>, %59, %cst_42 [1] : vector<8x8xf32> to vector<8xf32>
    %61 = vector.shape_cast %60 : vector<8xf32> to vector<8x1xf32>
    %62 = vector.broadcast %61 : vector<8x1xf32> to vector<8x8xf32>
    %63 = arith.subf %59, %62 : vector<8x8xf32>
    %64 = math.exp %63 : vector<8x8xf32>
    %cst_43 = arith.constant dense<0.000000e+00> : vector<8xf32>
    %65 = vector.multi_reduction <add>, %64, %cst_43 [1] : vector<8x8xf32> to vector<8xf32>
    %66 = vector.shape_cast %65 : vector<8xf32> to vector<8x1xf32>
    %67 = tpu.reciprocal %66 {approx = true} : vector<8x1xf32> -> vector<8x1xf32>
    %68 = vector.broadcast %67 : vector<8x1xf32> to vector<8x8xf32>
    %69 = arith.mulf %64, %68 : vector<8x8xf32>
    %70 = arith.truncf %69 : vector<8x8xf32> to vector<8x8xbf16>
    %cst_44 = arith.constant dense<0.000000e+00> : vector<8x16xf32>
    %71 = tpu.matmul %70, %56, %cst_44 {dimension_numbers = #tpu.dot_dimension_numbers<[1], [0], [0], [1], [0, 0, 1, 1], [], []>} : vector<8x8xbf16>, vector<8x16xbf16>, vector<8x16xf32> -> vector<8x16xf32>
    %72 = arith.truncf %71 : vector<8x16xf32> to vector<8x16xbf16>
    %c0_45 = arith.constant 0 : index
    %c0_46 = arith.constant 0 : index
    %c0_47 = arith.constant 0 : index
    %73 = vector.load %arg6[%c0_45, %c0_46, %c0_47] : memref<2x16x32xbf16, #tpu.memory_space<vmem>>, vector<1x16x32xbf16>
    %74 = vector.shape_cast %73 : vector<1x16x32xbf16> to vector<16x32xbf16>
    %cst_48 = arith.constant dense<0.000000e+00> : vector<8x32xf32>
    %75 = tpu.matmul %72, %74, %cst_48 {dimension_numbers = #tpu.dot_dimension_numbers<[1], [0], [0], [1], [0, 0, 1, 1], [], []>} : vector<8x16xbf16>, vector<16x32xbf16>, vector<8x32xf32> -> vector<8x32xf32>
    %76 = arith.addf %53, %75 : vector<8x32xf32>
    %77 = vector.extract_strided_slice %33 {offsets = [0, 0], sizes = [8, 16], strides = [1, 1]} : vector<16x16xbf16> to vector<8x16xbf16>
    %78 = vector.extract_strided_slice %41 {offsets = [0, 0], sizes = [8, 16], strides = [1, 1]} : vector<16x16xbf16> to vector<8x16xbf16>
    %79 = vector.extract_strided_slice %49 {offsets = [0, 0], sizes = [8, 16], strides = [1, 1]} : vector<16x16xbf16> to vector<8x16xbf16>
    %cst_49 = arith.constant dense<0.000000e+00> : vector<8x8xf32>
    %80 = tpu.matmul %77, %78, %cst_49 {dimension_numbers = #tpu.dot_dimension_numbers<[1], [1], [0], [0], [0, 0, 1, 0], [], []>} : vector<8x16xbf16>, vector<8x16xbf16>, vector<8x8xf32> -> vector<8x8xf32>
    %cst_50 = arith.constant -1.000000e+09 : f32
    %81 = vector.broadcast %cst_50 : f32 to vector<8x8xf32>
    %82 = arith.select %52, %81, %80 : vector<8x8xi1>, vector<8x8xf32>
    %cst_51 = arith.constant dense<0xFF800000> : vector<8xf32>
    %83 = vector.multi_reduction <maximumf>, %82, %cst_51 [1] : vector<8x8xf32> to vector<8xf32>
    %84 = vector.shape_cast %83 : vector<8xf32> to vector<8x1xf32>
    %85 = vector.broadcast %84 : vector<8x1xf32> to vector<8x8xf32>
    %86 = arith.subf %82, %85 : vector<8x8xf32>
    %87 = math.exp %86 : vector<8x8xf32>
    %cst_52 = arith.constant dense<0.000000e+00> : vector<8xf32>
    %88 = vector.multi_reduction <add>, %87, %cst_52 [1] : vector<8x8xf32> to vector<8xf32>
    %89 = vector.shape_cast %88 : vector<8xf32> to vector<8x1xf32>
    %90 = tpu.reciprocal %89 {approx = true} : vector<8x1xf32> -> vector<8x1xf32>
    %91 = vector.broadcast %90 : vector<8x1xf32> to vector<8x8xf32>
    %92 = arith.mulf %87, %91 : vector<8x8xf32>
    %93 = arith.truncf %92 : vector<8x8xf32> to vector<8x8xbf16>
    %cst_53 = arith.constant dense<0.000000e+00> : vector<8x16xf32>
    %94 = tpu.matmul %93, %79, %cst_53 {dimension_numbers = #tpu.dot_dimension_numbers<[1], [0], [0], [1], [0, 0, 1, 1], [], []>} : vector<8x8xbf16>, vector<8x16xbf16>, vector<8x16xf32> -> vector<8x16xf32>
    %95 = arith.truncf %94 : vector<8x16xf32> to vector<8x16xbf16>
    %c1_54 = arith.constant 1 : index
    %c0_55 = arith.constant 0 : index
    %c0_56 = arith.constant 0 : index
    %96 = vector.load %arg6[%c1_54, %c0_55, %c0_56] : memref<2x16x32xbf16, #tpu.memory_space<vmem>>, vector<1x16x32xbf16>
    %97 = vector.shape_cast %96 : vector<1x16x32xbf16> to vector<16x32xbf16>
    %cst_57 = arith.constant dense<0.000000e+00> : vector<8x32xf32>
    %98 = tpu.matmul %95, %97, %cst_57 {dimension_numbers = #tpu.dot_dimension_numbers<[1], [0], [0], [1], [0, 0, 1, 1], [], []>} : vector<8x16xbf16>, vector<16x32xbf16>, vector<8x32xf32> -> vector<8x32xf32>
    %99 = arith.addf %76, %98 : vector<8x32xf32>
    %100 = arith.cmpi sgt, %50, %51 : vector<8x8xi32>
    %cst_58 = arith.constant 0.000000e+00 : f32
    %101 = vector.broadcast %cst_58 : f32 to vector<8x32xf32>
    %102 = vector.extract_strided_slice %9 {offsets = [8, 0], sizes = [8, 16], strides = [1, 1]} : vector<16x16xbf16> to vector<8x16xbf16>
    %103 = vector.extract_strided_slice %17 {offsets = [8, 0], sizes = [8, 16], strides = [1, 1]} : vector<16x16xbf16> to vector<8x16xbf16>
    %104 = vector.extract_strided_slice %25 {offsets = [8, 0], sizes = [8, 16], strides = [1, 1]} : vector<16x16xbf16> to vector<8x16xbf16>
    %cst_59 = arith.constant dense<0.000000e+00> : vector<8x8xf32>
    %105 = tpu.matmul %102, %103, %cst_59 {dimension_numbers = #tpu.dot_dimension_numbers<[1], [1], [0], [0], [0, 0, 1, 0], [], []>} : vector<8x16xbf16>, vector<8x16xbf16>, vector<8x8xf32> -> vector<8x8xf32>
    %cst_60 = arith.constant -1.000000e+09 : f32
    %106 = vector.broadcast %cst_60 : f32 to vector<8x8xf32>
    %107 = arith.select %100, %106, %105 : vector<8x8xi1>, vector<8x8xf32>
    %cst_61 = arith.constant dense<0xFF800000> : vector<8xf32>
    %108 = vector.multi_reduction <maximumf>, %107, %cst_61 [1] : vector<8x8xf32> to vector<8xf32>
    %109 = vector.shape_cast %108 : vector<8xf32> to vector<8x1xf32>
    %110 = vector.broadcast %109 : vector<8x1xf32> to vector<8x8xf32>
    %111 = arith.subf %107, %110 : vector<8x8xf32>
    %112 = math.exp %111 : vector<8x8xf32>
    %cst_62 = arith.constant dense<0.000000e+00> : vector<8xf32>
    %113 = vector.multi_reduction <add>, %112, %cst_62 [1] : vector<8x8xf32> to vector<8xf32>
    %114 = vector.shape_cast %113 : vector<8xf32> to vector<8x1xf32>
    %115 = tpu.reciprocal %114 {approx = true} : vector<8x1xf32> -> vector<8x1xf32>
    %116 = vector.broadcast %115 : vector<8x1xf32> to vector<8x8xf32>
    %117 = arith.mulf %112, %116 : vector<8x8xf32>
    %118 = arith.truncf %117 : vector<8x8xf32> to vector<8x8xbf16>
    %cst_63 = arith.constant dense<0.000000e+00> : vector<8x16xf32>
    %119 = tpu.matmul %118, %104, %cst_63 {dimension_numbers = #tpu.dot_dimension_numbers<[1], [0], [0], [1], [0, 0, 1, 1], [], []>} : vector<8x8xbf16>, vector<8x16xbf16>, vector<8x16xf32> -> vector<8x16xf32>
    %120 = arith.truncf %119 : vector<8x16xf32> to vector<8x16xbf16>
    %c0_64 = arith.constant 0 : index
    %c0_65 = arith.constant 0 : index
    %c0_66 = arith.constant 0 : index
    %121 = vector.load %arg6[%c0_64, %c0_65, %c0_66] : memref<2x16x32xbf16, #tpu.memory_space<vmem>>, vector<1x16x32xbf16>
    %122 = vector.shape_cast %121 : vector<1x16x32xbf16> to vector<16x32xbf16>
    %cst_67 = arith.constant dense<0.000000e+00> : vector<8x32xf32>
    %123 = tpu.matmul %120, %122, %cst_67 {dimension_numbers = #tpu.dot_dimension_numbers<[1], [0], [0], [1], [0, 0, 1, 1], [], []>} : vector<8x16xbf16>, vector<16x32xbf16>, vector<8x32xf32> -> vector<8x32xf32>
    %124 = arith.addf %101, %123 : vector<8x32xf32>
    %125 = vector.extract_strided_slice %33 {offsets = [8, 0], sizes = [8, 16], strides = [1, 1]} : vector<16x16xbf16> to vector<8x16xbf16>
    %126 = vector.extract_strided_slice %41 {offsets = [8, 0], sizes = [8, 16], strides = [1, 1]} : vector<16x16xbf16> to vector<8x16xbf16>
    %127 = vector.extract_strided_slice %49 {offsets = [8, 0], sizes = [8, 16], strides = [1, 1]} : vector<16x16xbf16> to vector<8x16xbf16>
    %cst_68 = arith.constant dense<0.000000e+00> : vector<8x8xf32>
    %128 = tpu.matmul %125, %126, %cst_68 {dimension_numbers = #tpu.dot_dimension_numbers<[1], [1], [0], [0], [0, 0, 1, 0], [], []>} : vector<8x16xbf16>, vector<8x16xbf16>, vector<8x8xf32> -> vector<8x8xf32>
    %cst_69 = arith.constant -1.000000e+09 : f32
    %129 = vector.broadcast %cst_69 : f32 to vector<8x8xf32>
    %130 = arith.select %100, %129, %128 : vector<8x8xi1>, vector<8x8xf32>
    %cst_70 = arith.constant dense<0xFF800000> : vector<8xf32>
    %131 = vector.multi_reduction <maximumf>, %130, %cst_70 [1] : vector<8x8xf32> to vector<8xf32>
    %132 = vector.shape_cast %131 : vector<8xf32> to vector<8x1xf32>
    %133 = vector.broadcast %132 : vector<8x1xf32> to vector<8x8xf32>
    %134 = arith.subf %130, %133 : vector<8x8xf32>
    %135 = math.exp %134 : vector<8x8xf32>
    %cst_71 = arith.constant dense<0.000000e+00> : vector<8xf32>
    %136 = vector.multi_reduction <add>, %135, %cst_71 [1] : vector<8x8xf32> to vector<8xf32>
    %137 = vector.shape_cast %136 : vector<8xf32> to vector<8x1xf32>
    %138 = tpu.reciprocal %137 {approx = true} : vector<8x1xf32> -> vector<8x1xf32>
    %139 = vector.broadcast %138 : vector<8x1xf32> to vector<8x8xf32>
    %140 = arith.mulf %135, %139 : vector<8x8xf32>
    %141 = arith.truncf %140 : vector<8x8xf32> to vector<8x8xbf16>
    %cst_72 = arith.constant dense<0.000000e+00> : vector<8x16xf32>
    %142 = tpu.matmul %141, %127, %cst_72 {dimension_numbers = #tpu.dot_dimension_numbers<[1], [0], [0], [1], [0, 0, 1, 1], [], []>} : vector<8x8xbf16>, vector<8x16xbf16>, vector<8x16xf32> -> vector<8x16xf32>
    %143 = arith.truncf %142 : vector<8x16xf32> to vector<8x16xbf16>
    %c1_73 = arith.constant 1 : index
    %c0_74 = arith.constant 0 : index
    %c0_75 = arith.constant 0 : index
    %144 = vector.load %arg6[%c1_73, %c0_74, %c0_75] : memref<2x16x32xbf16, #tpu.memory_space<vmem>>, vector<1x16x32xbf16>
    %145 = vector.shape_cast %144 : vector<1x16x32xbf16> to vector<16x32xbf16>
    %cst_76 = arith.constant dense<0.000000e+00> : vector<8x32xf32>
    %146 = tpu.matmul %143, %145, %cst_76 {dimension_numbers = #tpu.dot_dimension_numbers<[1], [0], [0], [1], [0, 0, 1, 1], [], []>} : vector<8x16xbf16>, vector<16x32xbf16>, vector<8x32xf32> -> vector<8x32xf32>
    %147 = arith.addf %124, %146 : vector<8x32xf32>
    %148 = tpu.concatenate %99, %147 in 0 : vector<8x32xf32>, vector<8x32xf32> -> vector<16x32xf32>
    %c0_77 = arith.constant 0 : index
    %c0_78 = arith.constant 0 : index
    %149 = vector.load %arg7[%c0_77, %c0_78] : memref<1x32xf32, #tpu.memory_space<vmem>>, vector<1x32xf32>
    %150 = vector.broadcast %149 : vector<1x32xf32> to vector<16x32xf32>
    %151 = arith.addf %148, %150 : vector<16x32xf32>
    %152 = arith.extf %0 : vector<16x32xbf16> to vector<16x32xf32>
    %153 = arith.addf %152, %151 : vector<16x32xf32>
    %c0_79 = arith.constant 0 : index
    %c0_80 = arith.constant 0 : index
    %154 = vector.load %arg8[%c0_79, %c0_80] : memref<1x32xf32, #tpu.memory_space<vmem>>, vector<1x32xf32>
    %c0_81 = arith.constant 0 : index
    %c0_82 = arith.constant 0 : index
    %155 = vector.load %arg9[%c0_81, %c0_82] : memref<1x32xf32, #tpu.memory_space<vmem>>, vector<1x32xf32>
    %cst_83 = arith.constant dense<0.000000e+00> : vector<16xf32>
    %156 = vector.multi_reduction <add>, %153, %cst_83 [1] : vector<16x32xf32> to vector<16xf32>
    %157 = vector.shape_cast %156 : vector<16xf32> to vector<16x1xf32>
    %cst_84 = arith.constant 3.200000e+01 : f32
    %158 = vector.broadcast %cst_84 : f32 to vector<16x1xf32>
    %159 = arith.divf %157, %158 : vector<16x1xf32>
    %160 = vector.broadcast %159 : vector<16x1xf32> to vector<16x32xf32>
    %161 = arith.subf %153, %160 : vector<16x32xf32>
    %162 = arith.mulf %161, %161 : vector<16x32xf32>
    %cst_85 = arith.constant dense<0.000000e+00> : vector<16xf32>
    %163 = vector.multi_reduction <add>, %162, %cst_85 [1] : vector<16x32xf32> to vector<16xf32>
    %164 = vector.shape_cast %163 : vector<16xf32> to vector<16x1xf32>
    %cst_86 = arith.constant 3.200000e+01 : f32
    %165 = vector.broadcast %cst_86 : f32 to vector<16x1xf32>
    %166 = arith.divf %164, %165 : vector<16x1xf32>
    %167 = vector.broadcast %159 : vector<16x1xf32> to vector<16x32xf32>
    %168 = arith.subf %153, %167 : vector<16x32xf32>
    %cst_87 = arith.constant 9.99999974E-6 : f32
    %169 = vector.broadcast %cst_87 : f32 to vector<16x1xf32>
    %170 = arith.addf %166, %169 : vector<16x1xf32>
    %171 = math.rsqrt %170 : vector<16x1xf32>
    %172 = vector.broadcast %171 : vector<16x1xf32> to vector<16x32xf32>
    %173 = arith.mulf %168, %172 : vector<16x32xf32>
    %174 = vector.broadcast %154 : vector<1x32xf32> to vector<16x32xf32>
    %175 = arith.mulf %173, %174 : vector<16x32xf32>
    %176 = vector.broadcast %155 : vector<1x32xf32> to vector<16x32xf32>
    %177 = arith.addf %175, %176 : vector<16x32xf32>
    %178 = arith.truncf %177 : vector<16x32xf32> to vector<16x32xbf16>
    %c0_88 = arith.constant 0 : index
    %c0_89 = arith.constant 0 : index
    %c0_90 = arith.constant 0 : index
    %179 = vector.load %arg10[%c0_88, %c0_89, %c0_90] : memref<2x32x16xbf16, #tpu.memory_space<vmem>>, vector<1x32x16xbf16>
    %180 = vector.shape_cast %179 : vector<1x32x16xbf16> to vector<32x16xbf16>
    %cst_91 = arith.constant dense<0.000000e+00> : vector<16x16xf32>
    %181 = tpu.matmul %178, %180, %cst_91 {dimension_numbers = #tpu.dot_dimension_numbers<[1], [0], [0], [1], [0, 0, 1, 1], [], []>} : vector<16x32xbf16>, vector<32x16xbf16>, vector<16x16xf32> -> vector<16x16xf32>
    %c0_92 = arith.constant 0 : index
    %c0_93 = arith.constant 0 : index
    %c0_94 = arith.constant 0 : index
    %182 = vector.load %arg11[%c0_92, %c0_93, %c0_94] : memref<2x1x16xf32, #tpu.memory_space<vmem>>, vector<1x1x16xf32>
    %183 = vector.shape_cast %182 : vector<1x1x16xf32> to vector<1x16xf32>
    %184 = vector.broadcast %183 : vector<1x16xf32> to vector<16x16xf32>
    %185 = arith.addf %181, %184 : vector<16x16xf32>
    %186 = arith.truncf %185 : vector<16x16xf32> to vector<16x16xbf16>
    %c0_95 = arith.constant 0 : index
    %c0_96 = arith.constant 0 : index
    %c0_97 = arith.constant 0 : index
    %187 = vector.load %arg12[%c0_95, %c0_96, %c0_97] : memref<4x32x16xbf16, #tpu.memory_space<vmem>>, vector<1x32x16xbf16>
    %188 = vector.shape_cast %187 : vector<1x32x16xbf16> to vector<32x16xbf16>
    %cst_98 = arith.constant dense<0.000000e+00> : vector<32x16xf32>
    %189 = tpu.matmul %1, %188, %cst_98 {dimension_numbers = #tpu.dot_dimension_numbers<[1], [0], [0], [1], [0, 0, 1, 1], [], []>} : vector<32x32xbf16>, vector<32x16xbf16>, vector<32x16xf32> -> vector<32x16xf32>
    %c0_99 = arith.constant 0 : index
    %c0_100 = arith.constant 0 : index
    %c0_101 = arith.constant 0 : index
    %190 = vector.load %arg13[%c0_99, %c0_100, %c0_101] : memref<4x1x16xf32, #tpu.memory_space<vmem>>, vector<1x1x16xf32>
    %191 = vector.shape_cast %190 : vector<1x1x16xf32> to vector<1x16xf32>
    %192 = vector.broadcast %191 : vector<1x16xf32> to vector<32x16xf32>
    %193 = arith.addf %189, %192 : vector<32x16xf32>
    %194 = arith.truncf %193 : vector<32x16xf32> to vector<32x16xbf16>
    %c2_102 = arith.constant 2 : index
    %c0_103 = arith.constant 0 : index
    %c0_104 = arith.constant 0 : index
    %195 = vector.load %arg12[%c2_102, %c0_103, %c0_104] : memref<4x32x16xbf16, #tpu.memory_space<vmem>>, vector<1x32x16xbf16>
    %196 = vector.shape_cast %195 : vector<1x32x16xbf16> to vector<32x16xbf16>
    %cst_105 = arith.constant dense<0.000000e+00> : vector<32x16xf32>
    %197 = tpu.matmul %1, %196, %cst_105 {dimension_numbers = #tpu.dot_dimension_numbers<[1], [0], [0], [1], [0, 0, 1, 1], [], []>} : vector<32x32xbf16>, vector<32x16xbf16>, vector<32x16xf32> -> vector<32x16xf32>
    %c2_106 = arith.constant 2 : index
    %c0_107 = arith.constant 0 : index
    %c0_108 = arith.constant 0 : index
    %198 = vector.load %arg13[%c2_106, %c0_107, %c0_108] : memref<4x1x16xf32, #tpu.memory_space<vmem>>, vector<1x1x16xf32>
    %199 = vector.shape_cast %198 : vector<1x1x16xf32> to vector<1x16xf32>
    %200 = vector.broadcast %199 : vector<1x16xf32> to vector<32x16xf32>
    %201 = arith.addf %197, %200 : vector<32x16xf32>
    %202 = arith.truncf %201 : vector<32x16xf32> to vector<32x16xbf16>
    %c1_109 = arith.constant 1 : index
    %c0_110 = arith.constant 0 : index
    %c0_111 = arith.constant 0 : index
    %203 = vector.load %arg10[%c1_109, %c0_110, %c0_111] : memref<2x32x16xbf16, #tpu.memory_space<vmem>>, vector<1x32x16xbf16>
    %204 = vector.shape_cast %203 : vector<1x32x16xbf16> to vector<32x16xbf16>
    %cst_112 = arith.constant dense<0.000000e+00> : vector<16x16xf32>
    %205 = tpu.matmul %178, %204, %cst_112 {dimension_numbers = #tpu.dot_dimension_numbers<[1], [0], [0], [1], [0, 0, 1, 1], [], []>} : vector<16x32xbf16>, vector<32x16xbf16>, vector<16x16xf32> -> vector<16x16xf32>
    %c1_113 = arith.constant 1 : index
    %c0_114 = arith.constant 0 : index
    %c0_115 = arith.constant 0 : index
    %206 = vector.load %arg11[%c1_113, %c0_114, %c0_115] : memref<2x1x16xf32, #tpu.memory_space<vmem>>, vector<1x1x16xf32>
    %207 = vector.shape_cast %206 : vector<1x1x16xf32> to vector<1x16xf32>
    %208 = vector.broadcast %207 : vector<1x16xf32> to vector<16x16xf32>
    %209 = arith.addf %205, %208 : vector<16x16xf32>
    %210 = arith.truncf %209 : vector<16x16xf32> to vector<16x16xbf16>
    %c1_116 = arith.constant 1 : index
    %c0_117 = arith.constant 0 : index
    %c0_118 = arith.constant 0 : index
    %211 = vector.load %arg12[%c1_116, %c0_117, %c0_118] : memref<4x32x16xbf16, #tpu.memory_space<vmem>>, vector<1x32x16xbf16>
    %212 = vector.shape_cast %211 : vector<1x32x16xbf16> to vector<32x16xbf16>
    %cst_119 = arith.constant dense<0.000000e+00> : vector<32x16xf32>
    %213 = tpu.matmul %1, %212, %cst_119 {dimension_numbers = #tpu.dot_dimension_numbers<[1], [0], [0], [1], [0, 0, 1, 1], [], []>} : vector<32x32xbf16>, vector<32x16xbf16>, vector<32x16xf32> -> vector<32x16xf32>
    %c1_120 = arith.constant 1 : index
    %c0_121 = arith.constant 0 : index
    %c0_122 = arith.constant 0 : index
    %214 = vector.load %arg13[%c1_120, %c0_121, %c0_122] : memref<4x1x16xf32, #tpu.memory_space<vmem>>, vector<1x1x16xf32>
    %215 = vector.shape_cast %214 : vector<1x1x16xf32> to vector<1x16xf32>
    %216 = vector.broadcast %215 : vector<1x16xf32> to vector<32x16xf32>
    %217 = arith.addf %213, %216 : vector<32x16xf32>
    %218 = arith.truncf %217 : vector<32x16xf32> to vector<32x16xbf16>
    %c3_123 = arith.constant 3 : index
    %c0_124 = arith.constant 0 : index
    %c0_125 = arith.constant 0 : index
    %219 = vector.load %arg12[%c3_123, %c0_124, %c0_125] : memref<4x32x16xbf16, #tpu.memory_space<vmem>>, vector<1x32x16xbf16>
    %220 = vector.shape_cast %219 : vector<1x32x16xbf16> to vector<32x16xbf16>
    %cst_126 = arith.constant dense<0.000000e+00> : vector<32x16xf32>
    %221 = tpu.matmul %1, %220, %cst_126 {dimension_numbers = #tpu.dot_dimension_numbers<[1], [0], [0], [1], [0, 0, 1, 1], [], []>} : vector<32x32xbf16>, vector<32x16xbf16>, vector<32x16xf32> -> vector<32x16xf32>
    %c3_127 = arith.constant 3 : index
    %c0_128 = arith.constant 0 : index
    %c0_129 = arith.constant 0 : index
    %222 = vector.load %arg13[%c3_127, %c0_128, %c0_129] : memref<4x1x16xf32, #tpu.memory_space<vmem>>, vector<1x1x16xf32>
    %223 = vector.shape_cast %222 : vector<1x1x16xf32> to vector<1x16xf32>
    %224 = vector.broadcast %223 : vector<1x16xf32> to vector<32x16xf32>
    %225 = arith.addf %221, %224 : vector<32x16xf32>
    %226 = arith.truncf %225 : vector<32x16xf32> to vector<32x16xbf16>
    %227 = tpu.iota {dimensions = array<i32: 1>} : vector<8x16xi32>
    %c0_130 = arith.constant 0 : index
    %228 = memref.load %arg1[%c0_130] : memref<2xi32, #tpu.memory_space<smem>>
    %229 = vector.broadcast %228 : i32 to vector<8x16xi32>
    %230 = arith.cmpi sge, %227, %229 : vector<8x16xi32>
    %cst_131 = arith.constant 0.000000e+00 : f32
    %231 = vector.broadcast %cst_131 : f32 to vector<8x32xf32>
    %232 = vector.extract_strided_slice %186 {offsets = [0, 0], sizes = [8, 16], strides = [1, 1]} : vector<16x16xbf16> to vector<8x16xbf16>
    %233 = vector.extract_strided_slice %194 {offsets = [0, 0], sizes = [16, 16], strides = [1, 1]} : vector<32x16xbf16> to vector<16x16xbf16>
    %234 = vector.extract_strided_slice %202 {offsets = [0, 0], sizes = [16, 16], strides = [1, 1]} : vector<32x16xbf16> to vector<16x16xbf16>
    %cst_132 = arith.constant dense<0.000000e+00> : vector<8x16xf32>
    %235 = tpu.matmul %232, %233, %cst_132 {dimension_numbers = #tpu.dot_dimension_numbers<[1], [1], [0], [0], [0, 0, 1, 0], [], []>} : vector<8x16xbf16>, vector<16x16xbf16>, vector<8x16xf32> -> vector<8x16xf32>
    %cst_133 = arith.constant -1.000000e+09 : f32
    %236 = vector.broadcast %cst_133 : f32 to vector<8x16xf32>
    %237 = arith.select %230, %236, %235 : vector<8x16xi1>, vector<8x16xf32>
    %cst_134 = arith.constant dense<0xFF800000> : vector<8xf32>
    %238 = vector.multi_reduction <maximumf>, %237, %cst_134 [1] : vector<8x16xf32> to vector<8xf32>
    %239 = vector.shape_cast %238 : vector<8xf32> to vector<8x1xf32>
    %240 = vector.broadcast %239 : vector<8x1xf32> to vector<8x16xf32>
    %241 = arith.subf %237, %240 : vector<8x16xf32>
    %242 = math.exp %241 : vector<8x16xf32>
    %cst_135 = arith.constant dense<0.000000e+00> : vector<8xf32>
    %243 = vector.multi_reduction <add>, %242, %cst_135 [1] : vector<8x16xf32> to vector<8xf32>
    %244 = vector.shape_cast %243 : vector<8xf32> to vector<8x1xf32>
    %245 = tpu.reciprocal %244 {approx = true} : vector<8x1xf32> -> vector<8x1xf32>
    %246 = vector.broadcast %245 : vector<8x1xf32> to vector<8x16xf32>
    %247 = arith.mulf %242, %246 : vector<8x16xf32>
    %248 = arith.truncf %247 : vector<8x16xf32> to vector<8x16xbf16>
    %cst_136 = arith.constant dense<0.000000e+00> : vector<8x16xf32>
    %249 = tpu.matmul %248, %234, %cst_136 {dimension_numbers = #tpu.dot_dimension_numbers<[1], [0], [0], [1], [0, 0, 1, 1], [], []>} : vector<8x16xbf16>, vector<16x16xbf16>, vector<8x16xf32> -> vector<8x16xf32>
    %250 = arith.truncf %249 : vector<8x16xf32> to vector<8x16xbf16>
    %c0_137 = arith.constant 0 : index
    %c0_138 = arith.constant 0 : index
    %c0_139 = arith.constant 0 : index
    %251 = vector.load %arg14[%c0_137, %c0_138, %c0_139] : memref<2x16x32xbf16, #tpu.memory_space<vmem>>, vector<1x16x32xbf16>
    %252 = vector.shape_cast %251 : vector<1x16x32xbf16> to vector<16x32xbf16>
    %cst_140 = arith.constant dense<0.000000e+00> : vector<8x32xf32>
    %253 = tpu.matmul %250, %252, %cst_140 {dimension_numbers = #tpu.dot_dimension_numbers<[1], [0], [0], [1], [0, 0, 1, 1], [], []>} : vector<8x16xbf16>, vector<16x32xbf16>, vector<8x32xf32> -> vector<8x32xf32>
    %254 = arith.addf %231, %253 : vector<8x32xf32>
    %255 = vector.extract_strided_slice %210 {offsets = [0, 0], sizes = [8, 16], strides = [1, 1]} : vector<16x16xbf16> to vector<8x16xbf16>
    %256 = vector.extract_strided_slice %218 {offsets = [0, 0], sizes = [16, 16], strides = [1, 1]} : vector<32x16xbf16> to vector<16x16xbf16>
    %257 = vector.extract_strided_slice %226 {offsets = [0, 0], sizes = [16, 16], strides = [1, 1]} : vector<32x16xbf16> to vector<16x16xbf16>
    %cst_141 = arith.constant dense<0.000000e+00> : vector<8x16xf32>
    %258 = tpu.matmul %255, %256, %cst_141 {dimension_numbers = #tpu.dot_dimension_numbers<[1], [1], [0], [0], [0, 0, 1, 0], [], []>} : vector<8x16xbf16>, vector<16x16xbf16>, vector<8x16xf32> -> vector<8x16xf32>
    %cst_142 = arith.constant -1.000000e+09 : f32
    %259 = vector.broadcast %cst_142 : f32 to vector<8x16xf32>
    %260 = arith.select %230, %259, %258 : vector<8x16xi1>, vector<8x16xf32>
    %cst_143 = arith.constant dense<0xFF800000> : vector<8xf32>
    %261 = vector.multi_reduction <maximumf>, %260, %cst_143 [1] : vector<8x16xf32> to vector<8xf32>
    %262 = vector.shape_cast %261 : vector<8xf32> to vector<8x1xf32>
    %263 = vector.broadcast %262 : vector<8x1xf32> to vector<8x16xf32>
    %264 = arith.subf %260, %263 : vector<8x16xf32>
    %265 = math.exp %264 : vector<8x16xf32>
    %cst_144 = arith.constant dense<0.000000e+00> : vector<8xf32>
    %266 = vector.multi_reduction <add>, %265, %cst_144 [1] : vector<8x16xf32> to vector<8xf32>
    %267 = vector.shape_cast %266 : vector<8xf32> to vector<8x1xf32>
    %268 = tpu.reciprocal %267 {approx = true} : vector<8x1xf32> -> vector<8x1xf32>
    %269 = vector.broadcast %268 : vector<8x1xf32> to vector<8x16xf32>
    %270 = arith.mulf %265, %269 : vector<8x16xf32>
    %271 = arith.truncf %270 : vector<8x16xf32> to vector<8x16xbf16>
    %cst_145 = arith.constant dense<0.000000e+00> : vector<8x16xf32>
    %272 = tpu.matmul %271, %257, %cst_145 {dimension_numbers = #tpu.dot_dimension_numbers<[1], [0], [0], [1], [0, 0, 1, 1], [], []>} : vector<8x16xbf16>, vector<16x16xbf16>, vector<8x16xf32> -> vector<8x16xf32>
    %273 = arith.truncf %272 : vector<8x16xf32> to vector<8x16xbf16>
    %c1_146 = arith.constant 1 : index
    %c0_147 = arith.constant 0 : index
    %c0_148 = arith.constant 0 : index
    %274 = vector.load %arg14[%c1_146, %c0_147, %c0_148] : memref<2x16x32xbf16, #tpu.memory_space<vmem>>, vector<1x16x32xbf16>
    %275 = vector.shape_cast %274 : vector<1x16x32xbf16> to vector<16x32xbf16>
    %cst_149 = arith.constant dense<0.000000e+00> : vector<8x32xf32>
    %276 = tpu.matmul %273, %275, %cst_149 {dimension_numbers = #tpu.dot_dimension_numbers<[1], [0], [0], [1], [0, 0, 1, 1], [], []>} : vector<8x16xbf16>, vector<16x32xbf16>, vector<8x32xf32> -> vector<8x32xf32>
    %277 = arith.addf %254, %276 : vector<8x32xf32>
    %c1_150 = arith.constant 1 : index
    %278 = memref.load %arg1[%c1_150] : memref<2xi32, #tpu.memory_space<smem>>
    %279 = vector.broadcast %278 : i32 to vector<8x16xi32>
    %280 = arith.cmpi sge, %227, %279 : vector<8x16xi32>
    %cst_151 = arith.constant 0.000000e+00 : f32
    %281 = vector.broadcast %cst_151 : f32 to vector<8x32xf32>
    %282 = vector.extract_strided_slice %186 {offsets = [8, 0], sizes = [8, 16], strides = [1, 1]} : vector<16x16xbf16> to vector<8x16xbf16>
    %283 = vector.extract_strided_slice %194 {offsets = [16, 0], sizes = [16, 16], strides = [1, 1]} : vector<32x16xbf16> to vector<16x16xbf16>
    %284 = vector.extract_strided_slice %202 {offsets = [16, 0], sizes = [16, 16], strides = [1, 1]} : vector<32x16xbf16> to vector<16x16xbf16>
    %cst_152 = arith.constant dense<0.000000e+00> : vector<8x16xf32>
    %285 = tpu.matmul %282, %283, %cst_152 {dimension_numbers = #tpu.dot_dimension_numbers<[1], [1], [0], [0], [0, 0, 1, 0], [], []>} : vector<8x16xbf16>, vector<16x16xbf16>, vector<8x16xf32> -> vector<8x16xf32>
    %cst_153 = arith.constant -1.000000e+09 : f32
    %286 = vector.broadcast %cst_153 : f32 to vector<8x16xf32>
    %287 = arith.select %280, %286, %285 : vector<8x16xi1>, vector<8x16xf32>
    %cst_154 = arith.constant dense<0xFF800000> : vector<8xf32>
    %288 = vector.multi_reduction <maximumf>, %287, %cst_154 [1] : vector<8x16xf32> to vector<8xf32>
    %289 = vector.shape_cast %288 : vector<8xf32> to vector<8x1xf32>
    %290 = vector.broadcast %289 : vector<8x1xf32> to vector<8x16xf32>
    %291 = arith.subf %287, %290 : vector<8x16xf32>
    %292 = math.exp %291 : vector<8x16xf32>
    %cst_155 = arith.constant dense<0.000000e+00> : vector<8xf32>
    %293 = vector.multi_reduction <add>, %292, %cst_155 [1] : vector<8x16xf32> to vector<8xf32>
    %294 = vector.shape_cast %293 : vector<8xf32> to vector<8x1xf32>
    %295 = tpu.reciprocal %294 {approx = true} : vector<8x1xf32> -> vector<8x1xf32>
    %296 = vector.broadcast %295 : vector<8x1xf32> to vector<8x16xf32>
    %297 = arith.mulf %292, %296 : vector<8x16xf32>
    %298 = arith.truncf %297 : vector<8x16xf32> to vector<8x16xbf16>
    %cst_156 = arith.constant dense<0.000000e+00> : vector<8x16xf32>
    %299 = tpu.matmul %298, %284, %cst_156 {dimension_numbers = #tpu.dot_dimension_numbers<[1], [0], [0], [1], [0, 0, 1, 1], [], []>} : vector<8x16xbf16>, vector<16x16xbf16>, vector<8x16xf32> -> vector<8x16xf32>
    %300 = arith.truncf %299 : vector<8x16xf32> to vector<8x16xbf16>
    %c0_157 = arith.constant 0 : index
    %c0_158 = arith.constant 0 : index
    %c0_159 = arith.constant 0 : index
    %301 = vector.load %arg14[%c0_157, %c0_158, %c0_159] : memref<2x16x32xbf16, #tpu.memory_space<vmem>>, vector<1x16x32xbf16>
    %302 = vector.shape_cast %301 : vector<1x16x32xbf16> to vector<16x32xbf16>
    %cst_160 = arith.constant dense<0.000000e+00> : vector<8x32xf32>
    %303 = tpu.matmul %300, %302, %cst_160 {dimension_numbers = #tpu.dot_dimension_numbers<[1], [0], [0], [1], [0, 0, 1, 1], [], []>} : vector<8x16xbf16>, vector<16x32xbf16>, vector<8x32xf32> -> vector<8x32xf32>
    %304 = arith.addf %281, %303 : vector<8x32xf32>
    %305 = vector.extract_strided_slice %210 {offsets = [8, 0], sizes = [8, 16], strides = [1, 1]} : vector<16x16xbf16> to vector<8x16xbf16>
    %306 = vector.extract_strided_slice %218 {offsets = [16, 0], sizes = [16, 16], strides = [1, 1]} : vector<32x16xbf16> to vector<16x16xbf16>
    %307 = vector.extract_strided_slice %226 {offsets = [16, 0], sizes = [16, 16], strides = [1, 1]} : vector<32x16xbf16> to vector<16x16xbf16>
    %cst_161 = arith.constant dense<0.000000e+00> : vector<8x16xf32>
    %308 = tpu.matmul %305, %306, %cst_161 {dimension_numbers = #tpu.dot_dimension_numbers<[1], [1], [0], [0], [0, 0, 1, 0], [], []>} : vector<8x16xbf16>, vector<16x16xbf16>, vector<8x16xf32> -> vector<8x16xf32>
    %cst_162 = arith.constant -1.000000e+09 : f32
    %309 = vector.broadcast %cst_162 : f32 to vector<8x16xf32>
    %310 = arith.select %280, %309, %308 : vector<8x16xi1>, vector<8x16xf32>
    %cst_163 = arith.constant dense<0xFF800000> : vector<8xf32>
    %311 = vector.multi_reduction <maximumf>, %310, %cst_163 [1] : vector<8x16xf32> to vector<8xf32>
    %312 = vector.shape_cast %311 : vector<8xf32> to vector<8x1xf32>
    %313 = vector.broadcast %312 : vector<8x1xf32> to vector<8x16xf32>
    %314 = arith.subf %310, %313 : vector<8x16xf32>
    %315 = math.exp %314 : vector<8x16xf32>
    %cst_164 = arith.constant dense<0.000000e+00> : vector<8xf32>
    %316 = vector.multi_reduction <add>, %315, %cst_164 [1] : vector<8x16xf32> to vector<8xf32>
    %317 = vector.shape_cast %316 : vector<8xf32> to vector<8x1xf32>
    %318 = tpu.reciprocal %317 {approx = true} : vector<8x1xf32> -> vector<8x1xf32>
    %319 = vector.broadcast %318 : vector<8x1xf32> to vector<8x16xf32>
    %320 = arith.mulf %315, %319 : vector<8x16xf32>
    %321 = arith.truncf %320 : vector<8x16xf32> to vector<8x16xbf16>
    %cst_165 = arith.constant dense<0.000000e+00> : vector<8x16xf32>
    %322 = tpu.matmul %321, %307, %cst_165 {dimension_numbers = #tpu.dot_dimension_numbers<[1], [0], [0], [1], [0, 0, 1, 1], [], []>} : vector<8x16xbf16>, vector<16x16xbf16>, vector<8x16xf32> -> vector<8x16xf32>
    %323 = arith.truncf %322 : vector<8x16xf32> to vector<8x16xbf16>
    %c1_166 = arith.constant 1 : index
    %c0_167 = arith.constant 0 : index
    %c0_168 = arith.constant 0 : index
    %324 = vector.load %arg14[%c1_166, %c0_167, %c0_168] : memref<2x16x32xbf16, #tpu.memory_space<vmem>>, vector<1x16x32xbf16>
    %325 = vector.shape_cast %324 : vector<1x16x32xbf16> to vector<16x32xbf16>
    %cst_169 = arith.constant dense<0.000000e+00> : vector<8x32xf32>
    %326 = tpu.matmul %323, %325, %cst_169 {dimension_numbers = #tpu.dot_dimension_numbers<[1], [0], [0], [1], [0, 0, 1, 1], [], []>} : vector<8x16xbf16>, vector<16x32xbf16>, vector<8x32xf32> -> vector<8x32xf32>
    %327 = arith.addf %304, %326 : vector<8x32xf32>
    %328 = tpu.concatenate %277, %327 in 0 : vector<8x32xf32>, vector<8x32xf32> -> vector<16x32xf32>
    %c0_170 = arith.constant 0 : index
    %c0_171 = arith.constant 0 : index
    %329 = vector.load %arg15[%c0_170, %c0_171] : memref<1x32xf32, #tpu.memory_space<vmem>>, vector<1x32xf32>
    %330 = vector.broadcast %329 : vector<1x32xf32> to vector<16x32xf32>
    %331 = arith.addf %328, %330 : vector<16x32xf32>
    %332 = arith.addf %177, %331 : vector<16x32xf32>
    %c0_172 = arith.constant 0 : index
    %c0_173 = arith.constant 0 : index
    %333 = vector.load %arg16[%c0_172, %c0_173] : memref<1x32xf32, #tpu.memory_space<vmem>>, vector<1x32xf32>
    %c0_174 = arith.constant 0 : index
    %c0_175 = arith.constant 0 : index
    %334 = vector.load %arg17[%c0_174, %c0_175] : memref<1x32xf32, #tpu.memory_space<vmem>>, vector<1x32xf32>
    %cst_176 = arith.constant dense<0.000000e+00> : vector<16xf32>
    %335 = vector.multi_reduction <add>, %332, %cst_176 [1] : vector<16x32xf32> to vector<16xf32>
    %336 = vector.shape_cast %335 : vector<16xf32> to vector<16x1xf32>
    %cst_177 = arith.constant 3.200000e+01 : f32
    %337 = vector.broadcast %cst_177 : f32 to vector<16x1xf32>
    %338 = arith.divf %336, %337 : vector<16x1xf32>
    %339 = vector.broadcast %338 : vector<16x1xf32> to vector<16x32xf32>
    %340 = arith.subf %332, %339 : vector<16x32xf32>
    %341 = arith.mulf %340, %340 : vector<16x32xf32>
    %cst_178 = arith.constant dense<0.000000e+00> : vector<16xf32>
    %342 = vector.multi_reduction <add>, %341, %cst_178 [1] : vector<16x32xf32> to vector<16xf32>
    %343 = vector.shape_cast %342 : vector<16xf32> to vector<16x1xf32>
    %cst_179 = arith.constant 3.200000e+01 : f32
    %344 = vector.broadcast %cst_179 : f32 to vector<16x1xf32>
    %345 = arith.divf %343, %344 : vector<16x1xf32>
    %346 = vector.broadcast %338 : vector<16x1xf32> to vector<16x32xf32>
    %347 = arith.subf %332, %346 : vector<16x32xf32>
    %cst_180 = arith.constant 9.99999974E-6 : f32
    %348 = vector.broadcast %cst_180 : f32 to vector<16x1xf32>
    %349 = arith.addf %345, %348 : vector<16x1xf32>
    %350 = math.rsqrt %349 : vector<16x1xf32>
    %351 = vector.broadcast %350 : vector<16x1xf32> to vector<16x32xf32>
    %352 = arith.mulf %347, %351 : vector<16x32xf32>
    %353 = vector.broadcast %333 : vector<1x32xf32> to vector<16x32xf32>
    %354 = arith.mulf %352, %353 : vector<16x32xf32>
    %355 = vector.broadcast %334 : vector<1x32xf32> to vector<16x32xf32>
    %356 = arith.addf %354, %355 : vector<16x32xf32>
    %357 = arith.truncf %356 : vector<16x32xf32> to vector<16x32xbf16>
    %c0_181 = arith.constant 0 : index
    %c0_182 = arith.constant 0 : index
    %358 = vector.load %arg18[%c0_181, %c0_182] : memref<32x128xbf16, #tpu.memory_space<vmem>>, vector<32x128xbf16>
    %cst_183 = arith.constant dense<0.000000e+00> : vector<16x128xf32>
    %359 = tpu.matmul %357, %358, %cst_183 {dimension_numbers = #tpu.dot_dimension_numbers<[1], [0], [0], [1], [0, 0, 1, 1], [], []>} : vector<16x32xbf16>, vector<32x128xbf16>, vector<16x128xf32> -> vector<16x128xf32>
    %c0_184 = arith.constant 0 : index
    %c0_185 = arith.constant 0 : index
    %360 = vector.load %arg19[%c0_184, %c0_185] : memref<1x128xf32, #tpu.memory_space<vmem>>, vector<1x128xf32>
    %361 = vector.broadcast %360 : vector<1x128xf32> to vector<16x128xf32>
    %362 = arith.addf %359, %361 : vector<16x128xf32>
    %cst_186 = arith.constant 0.000000e+00 : f32
    %363 = vector.broadcast %cst_186 : f32 to vector<16x128xf32>
    %364 = arith.maximumf %362, %363 : vector<16x128xf32>
    %365 = arith.truncf %364 : vector<16x128xf32> to vector<16x128xbf16>
    %c0_187 = arith.constant 0 : index
    %c0_188 = arith.constant 0 : index
    %366 = vector.load %arg20[%c0_187, %c0_188] : memref<128x32xbf16, #tpu.memory_space<vmem>>, vector<128x32xbf16>
    %cst_189 = arith.constant dense<0.000000e+00> : vector<16x32xf32>
    %367 = tpu.matmul %365, %366, %cst_189 {dimension_numbers = #tpu.dot_dimension_numbers<[1], [0], [0], [1], [0, 0, 1, 1], [], []>} : vector<16x128xbf16>, vector<128x32xbf16>, vector<16x32xf32> -> vector<16x32xf32>
    %c0_190 = arith.constant 0 : index
    %c0_191 = arith.constant 0 : index
    %368 = vector.load %arg21[%c0_190, %c0_191] : memref<1x32xf32, #tpu.memory_space<vmem>>, vector<1x32xf32>
    %369 = vector.broadcast %368 : vector<1x32xf32> to vector<16x32xf32>
    %370 = arith.addf %367, %369 : vector<16x32xf32>
    %371 = arith.addf %356, %370 : vector<16x32xf32>
    %c0_192 = arith.constant 0 : index
    %c0_193 = arith.constant 0 : index
    %372 = vector.load %arg22[%c0_192, %c0_193] : memref<1x32xf32, #tpu.memory_space<vmem>>, vector<1x32xf32>
    %c0_194 = arith.constant 0 : index
    %c0_195 = arith.constant 0 : index
    %373 = vector.load %arg23[%c0_194, %c0_195] : memref<1x32xf32, #tpu.memory_space<vmem>>, vector<1x32xf32>
    %cst_196 = arith.constant dense<0.000000e+00> : vector<16xf32>
    %374 = vector.multi_reduction <add>, %371, %cst_196 [1] : vector<16x32xf32> to vector<16xf32>
    %375 = vector.shape_cast %374 : vector<16xf32> to vector<16x1xf32>
    %cst_197 = arith.constant 3.200000e+01 : f32
    %376 = vector.broadcast %cst_197 : f32 to vector<16x1xf32>
    %377 = arith.divf %375, %376 : vector<16x1xf32>
    %378 = vector.broadcast %377 : vector<16x1xf32> to vector<16x32xf32>
    %379 = arith.subf %371, %378 : vector<16x32xf32>
    %380 = arith.mulf %379, %379 : vector<16x32xf32>
    %cst_198 = arith.constant dense<0.000000e+00> : vector<16xf32>
    %381 = vector.multi_reduction <add>, %380, %cst_198 [1] : vector<16x32xf32> to vector<16xf32>
    %382 = vector.shape_cast %381 : vector<16xf32> to vector<16x1xf32>
    %cst_199 = arith.constant 3.200000e+01 : f32
    %383 = vector.broadcast %cst_199 : f32 to vector<16x1xf32>
    %384 = arith.divf %382, %383 : vector<16x1xf32>
    %385 = vector.broadcast %377 : vector<16x1xf32> to vector<16x32xf32>
    %386 = arith.subf %371, %385 : vector<16x32xf32>
    %cst_200 = arith.constant 9.99999974E-6 : f32
    %387 = vector.broadcast %cst_200 : f32 to vector<16x1xf32>
    %388 = arith.addf %384, %387 : vector<16x1xf32>
    %389 = math.rsqrt %388 : vector<16x1xf32>
    %390 = vector.broadcast %389 : vector<16x1xf32> to vector<16x32xf32>
    %391 = arith.mulf %386, %390 : vector<16x32xf32>
    %392 = vector.broadcast %372 : vector<1x32xf32> to vector<16x32xf32>
    %393 = arith.mulf %391, %392 : vector<16x32xf32>
    %394 = vector.broadcast %373 : vector<1x32xf32> to vector<16x32xf32>
    %395 = arith.addf %393, %394 : vector<16x32xf32>
    %396 = arith.truncf %395 : vector<16x32xf32> to vector<16x32xbf16>
    %c0_201 = arith.constant 0 : index
    %c0_202 = arith.constant 0 : index
    %397 = vector.load %arg24[%c0_201, %c0_202] : memref<16x32xbf16, #tpu.memory_space<vmem>>, vector<16x32xbf16>
    tpu.vector_store %arg24[%c0_201, %c0_202], %396 {strides = array<i32>} : memref<16x32xbf16, #tpu.memory_space<vmem>>, vector<16x32xbf16>,
    return
  }
  func.func @transform_0(%arg0: i32, %arg1: memref<2xi32, #tpu.memory_space<smem>>) -> (i32, i32) {
    %c0_i32 = arith.constant 0 : i32
    %c0_i32_0 = arith.constant 0 : i32
    %c0_i32_1 = arith.constant 0 : i32
    return %c0_i32, %c0_i32_0 : i32, i32
  }
  func.func @transform_1(%arg0: i32, %arg1: memref<2xi32, #tpu.memory_space<smem>>) -> (i32, i32) {
    %c0_i32 = arith.constant 0 : i32
    %c0_i32_0 = arith.constant 0 : i32
    %c0_i32_1 = arith.constant 0 : i32
    return %c0_i32, %c0_i32_0 : i32, i32
  }
  func.func @transform_2(%arg0: i32, %arg1: memref<2xi32, #tpu.memory_space<smem>>) -> (i32, i32, i32) {
    %c0_i32 = arith.constant 0 : i32
    %c0_i32_0 = arith.constant 0 : i32
    %c0_i32_1 = arith.constant 0 : i32
    %c0_i32_2 = arith.constant 0 : i32
    return %c0_i32, %c0_i32_0, %c0_i32_1 : i32, i32, i32
  }
  func.func @transform_3(%arg0: i32, %arg1: memref<2xi32, #tpu.memory_space<smem>>) -> (i32, i32, i32) {
    %c0_i32 = arith.constant 0 : i32
    %c0_i32_0 = arith.constant 0 : i32
    %c0_i32_1 = arith.constant 0 : i32
    %c0_i32_2 = arith.constant 0 : i32
    return %c0_i32, %c0_i32_0, %c0_i32_1 : i32, i32, i32
  }
  func.func @transform_4(%arg0: i32, %arg1: memref<2xi32, #tpu.memory_space<smem>>) -> (i32, i32, i32) {
    %c0_i32 = arith.constant 0 : i32
    %c0_i32_0 = arith.constant 0 : i32
    %c0_i32_1 = arith.constant 0 : i32
    %c0_i32_2 = arith.constant 0 : i32
    return %c0_i32, %c0_i32_0, %c0_i32_1 : i32, i32, i32
  }
  func.func @transform_5(%arg0: i32, %arg1: memref<2xi32, #tpu.memory_space<smem>>) -> (i32, i32) {
    %c0_i32 = arith.constant 0 : i32
    %c0_i32_0 = arith.constant 0 : i32
    %c0_i32_1 = arith.constant 0 : i32
    return %c0_i32, %c0_i32_0 : i32, i32
  }
  func.func @transform_6(%arg0: i32, %arg1: memref<2xi32, #tpu.memory_space<smem>>) -> (i32, i32) {
    %c0_i32 = arith.constant 0 : i32
    %c0_i32_0 = arith.constant 0 : i32
    %c0_i32_1 = arith.constant 0 : i32
    return %c0_i32, %c0_i32_0 : i32, i32
  }
  func.func @transform_7(%arg0: i32, %arg1: memref<2xi32, #tpu.memory_space<smem>>) -> (i32, i32) {
    %c0_i32 = arith.constant 0 : i32
    %c0_i32_0 = arith.constant 0 : i32
    %c0_i32_1 = arith.constant 0 : i32
    return %c0_i32, %c0_i32_0 : i32, i32
  }
  func.func @transform_8(%arg0: i32, %arg1: memref<2xi32, #tpu.memory_space<smem>>) -> (i32, i32, i32) {
    %c0_i32 = arith.constant 0 : i32
    %c0_i32_0 = arith.constant 0 : i32
    %c0_i32_1 = arith.constant 0 : i32
    %c0_i32_2 = arith.constant 0 : i32
    return %c0_i32, %c0_i32_0, %c0_i32_1 : i32, i32, i32
  }
  func.func @transform_9(%arg0: i32, %arg1: memref<2xi32, #tpu.memory_space<smem>>) -> (i32, i32, i32) {
    %c0_i32 = arith.constant 0 : i32
    %c0_i32_0 = arith.constant 0 : i32
    %c0_i32_1 = arith.constant 0 : i32
    %c0_i32_2 = arith.constant 0 : i32
    return %c0_i32, %c0_i32_0, %c0_i32_1 : i32, i32, i32
  }
  func.func @transform_10(%arg0: i32, %arg1: memref<2xi32, #tpu.memory_space<smem>>) -> (i32, i32, i32) {
    %c0_i32 = arith.constant 0 : i32
    %c0_i32_0 = arith.constant 0 : i32
    %c0_i32_1 = arith.constant 0 : i32
    %c0_i32_2 = arith.constant 0 : i32
    return %c0_i32, %c0_i32_0, %c0_i32_1 : i32, i32, i32
  }
  func.func @transform_11(%arg0: i32, %arg1: memref<2xi32, #tpu.memory_space<smem>>) -> (i32, i32, i32) {
    %c0_i32 = arith.constant 0 : i32
    %c0_i32_0 = arith.constant 0 : i32
    %c0_i32_1 = arith.constant 0 : i32
    %c0_i32_2 = arith.constant 0 : i32
    return %c0_i32, %c0_i32_0, %c0_i32_1 : i32, i32, i32
  }
  func.func @transform_12(%arg0: i32, %arg1: memref<2xi32, #tpu.memory_space<smem>>) -> (i32, i32, i32) {
    %c0_i32 = arith.constant 0 : i32
    %c0_i32_0 = arith.constant 0 : i32
    %c0_i32_1 = arith.constant 0 : i32
    %c0_i32_2 = arith.constant 0 : i32
    return %c0_i32, %c0_i32_0, %c0_i32_1 : i32, i32, i32
  }
  func.func @transform_13(%arg0: i32, %arg1: memref<2xi32, #tpu.memory_space<smem>>) -> (i32, i32) {
    %c0_i32 = arith.constant 0 : i32
    %c0_i32_0 = arith.constant 0 : i32
    %c0_i32_1 = arith.constant 0 : i32
    return %c0_i32, %c0_i32_0 : i32, i32
  }
  func.func @transform_14(%arg0: i32, %arg1: memref<2xi32, #tpu.memory_space<smem>>) -> (i32, i32) {
    %c0_i32 = arith.constant 0 : i32
    %c0_i32_0 = arith.constant 0 : i32
    %c0_i32_1 = arith.constant 0 : i32
    return %c0_i32, %c0_i32_0 : i32, i32
  }
  func.func @transform_15(%arg0: i32, %arg1: memref<2xi32, #tpu.memory_space<smem>>) -> (i32, i32) {
    %c0_i32 = arith.constant 0 : i32
    %c0_i32_0 = arith.constant 0 : i32
    %c0_i32_1 = arith.constant 0 : i32
    return %c0_i32, %c0_i32_0 : i32, i32
  }
  func.func @transform_16(%arg0: i32, %arg1: memref<2xi32, #tpu.memory_space<smem>>) -> (i32, i32) {
    %c0_i32 = arith.constant 0 : i32
    %c0_i32_0 = arith.constant 0 : i32
    %c0_i32_1 = arith.constant 0 : i32
    return %c0_i32, %c0_i32_0 : i32, i32
  }
  func.func @transform_17(%arg0: i32, %arg1: memref<2xi32, #tpu.memory_space<smem>>) -> (i32, i32) {
    %c0_i32 = arith.constant 0 : i32
    %c0_i32_0 = arith.constant 0 : i32
    %c0_i32_1 = arith.constant 0 : i32
    return %c0_i32, %c0_i32_0 : i32, i32
  }
  func.func @transform_18(%arg0: i32, %arg1: memref<2xi32, #tpu.memory_space<smem>>) -> (i32, i32) {
    %c0_i32 = arith.constant 0 : i32
    %c0_i32_0 = arith.constant 0 : i32
    %c0_i32_1 = arith.constant 0 : i32
    return %c0_i32, %c0_i32_0 : i32, i32
  }
  func.func @transform_19(%arg0: i32, %arg1: memref<2xi32, #tpu.memory_space<smem>>) -> (i32, i32) {
    %c0_i32 = arith.constant 0 : i32
    %c0_i32_0 = arith.constant 0 : i32
    %c0_i32_1 = arith.constant 0 : i32
    return %c0_i32, %c0_i32_0 : i32, i32
  }
  func.func @transform_20(%arg0: i32, %arg1: memref<2xi32, #tpu.memory_space<smem>>) -> (i32, i32) {
    %c0_i32 = arith.constant 0 : i32
    %c0_i32_0 = arith.constant 0 : i32
    %c0_i32_1 = arith.constant 0 : i32
    return %c0_i32, %c0_i32_0 : i32, i32
  }
  func.func @transform_21(%arg0: i32, %arg1: memref<2xi32, #tpu.memory_space<smem>>) -> (i32, i32) {
    %c0_i32 = arith.constant 0 : i32
    %c0_i32_0 = arith.constant 0 : i32
    %c0_i32_1 = arith.constant 0 : i32
    return %c0_i32, %c0_i32_0 : i32, i32
  }
  func.func @transform_22(%arg0: i32, %arg1: memref<2xi32, #tpu.memory_space<smem>>) -> (i32, i32) {
    %c0_i32 = arith.constant 0 : i32
    %c0_i32_0 = arith.constant 0 : i32
    %c0_i32_1 = arith.constant 0 : i32
    return %c0_i32, %c0_i32_0 : i32, i32
  }
}

</mosaic_0001>

<llo_original>
// kernel: flick_forward.11
$region0: #{flick_forward.11}
  #allocation0 [shape = 'u32[]', space=smem, size = 0x4, offset = 0x4, fixed_abs, tag = 'smem constant byte address 0x4 - core index']
  #allocation1 [shape = 'u32[144,128]{1,0:T(1,128)}', space=vmem, size = 0x12000, scoped, tag = 'internal scratch']
  %s0 = inlined_call_operand.vmem [shape: bf16[16,32], index: 0, kind: input, shape index: {}]
  %s1 = inlined_call_operand.vmem [shape: bf16[32,64], index: 1, kind: input, shape index: {}]
  %s2 = inlined_call_operand.vmem [shape: f32[1,64], index: 2, kind: input, shape index: {}]
  %s3 = inlined_call_operand.hbm [shape: f32[16,64], index: 3, kind: output, shape index: {}]
  %s4 = sld [smem:[#allocation0]]
  $region22: #{flick_forward.11} parent=0
    _
  %s6 = ssub.s32 1, %s4
  %s7 = scalar_select 0, %s6, %s4
  $region1: #{flick_forward.11} parent=0
    #allocation2 [shape = 'u8[8192]{0}', space=vmem, size = 0x2000, scoped, tag = 'output window, operand 0, single buffered']
    #allocation3 [shape = 's32[1]{0}', space=sflag, size = 0x4, scoped, tag = 'scoped memory for flick_forward.11']
    %8 = vsyncpa [#allocation3], 0
    // Predicated region
    $region2: #{flick_forward.11} parent=1 // pred_check
      _
    $region3: #{flick_forward.11} parent=1 // pred_check_branch
      %10 = sbr.rel (0) target = $region5
    $region4: #{flick_forward.11} parent=1 // pred_region
      _
    $region5: #{flick_forward.11} parent=1 // pred_fallthru
      _
    // Predicated region
    $region6: #{flick_forward.11} parent=1 // pred_check
      _
    $region7: #{flick_forward.11} parent=1 // pred_check_branch
      %12 = sbr.rel (0) target = $region9
    $region8: #{flick_forward.11} parent=1 // pred_region
      _
    $region9: #{flick_forward.11} parent=1 // pred_fallthru
      _
    // Predicated region
    $region10: #{flick_forward.11} parent=1 // pred_check
      _
    $region11: #{flick_forward.11} parent=1 // pred_check_branch
      %14 = sbr.rel (0) target = $region13
    $region12: #{flick_forward.11} parent=1 // pred_region
      _
    $region13: #{flick_forward.11} parent=1 // pred_fallthru
      _
    %v16 = vld [vmem:[%s0] sm:$0xf]
    %v17 = vld [vmem:[%s0 + $0x4] sm:$0xf]
    %v18 = vld [vmem:[%s1] sm:$0xf]
    %v19 = vld [vmem:[%s1 + $0x4] sm:$0xf]
    %v20 = vld [vmem:[%s1 + $0x8] sm:$0xf]
    %v21 = vld [vmem:[%s1 + $0xc] sm:$0xf]
    %v22 = vld [vmem:[%s2] sm:$0x1]
    %v24 = vlaneseq
    %v25 = vshrl.u32 %v24, 7
    %v26 = vsub.s32 0, %v25
    %v27 = vrot.slane %v22, %v26
    %v31 = vunpack.c.l.b16 %v16
    %v32 = vunpack.c.l.b16 %v17
    %v33 = vpack.c.b16 %v32, %v31
    %v38 = vunpack.c.l.b16 %v18
    %v39 = vunpack.c.l.b16 %v19
    %v40 = vunpack.c.l.b16 %v20
    %v41 = vunpack.c.l.b16 %v21
    %v42 = vpack.c.b16 %v39, %v38
    %v43 = vpack.c.b16 %v41, %v40
    %vm46 = vcmask 261120
    %v48 = vsel %vm46, %v33, 0
    %50 = vmatprep.subr.bf16.mxu0 0
    %51 = vmatpush1.bf16.msra.mxu0 %v42
    %52 = vmatprep.subr.bf16.mxu0 0
    %53 = vmatpush1.bf16.msra.mxu0 %v43
    %54 = vmatprep.subr.bf16.mxu0 0
    %55 = vmatpush1.bf16.msra.mxu0 0
    %56 = vmatprep.subr.bf16.mxu0 0
    %57 = vmatpush1.bf16.msra.mxu0 0
    %58 = vmatprep.subr.bf16.mxu0 0
    %59 = vmatpush1.bf16.msra.mxu0 0
    %60 = vmatprep.subr.bf16.mxu0 0
    %61 = vmatpush1.bf16.msra.mxu0 0
    %62 = vmatprep.subr.bf16.mxu0 0
    %63 = vmatpush1.bf16.msra.mxu0 0
    %64 = vmatprep.subr.bf16.mxu0 0
    %65 = vmatpush1.bf16.msra.mxu0 0
    %66 = vmatprep.subr.bf16.mxu0 0
    %67 = vmatpush1.bf16.msra.mxu0 0
    %68 = vmatprep.subr.bf16.mxu0 0
    %69 = vmatpush1.bf16.msra.mxu0 0
    %70 = vmatprep.subr.bf16.mxu0 0
    %71 = vmatpush1.bf16.msra.mxu0 0
    %72 = vmatprep.subr.bf16.mxu0 0
    %73 = vmatpush1.bf16.msra.mxu0 0
    %74 = vmatprep.subr.bf16.mxu0 0
    %75 = vmatpush1.bf16.msra.mxu0 0
    %76 = vmatprep.subr.bf16.mxu0 0
    %77 = vmatpush1.bf16.msra.mxu0 0
    %78 = vmatprep.subr.bf16.mxu0 0
    %79 = vmatpush1.bf16.msra.mxu0 0
    %80 = vmatprep.subr.bf16.mxu0 0
    %81 = vmatpush1.bf16.msra.mxu0 0
    %82 = vmatprep.mubr.bf16.mxu0 0
    %83 = vmatmul.mubr.bf16.gmra.mrb[0].mxu0 %v48
    %v84 = vpop.f32.mrb[0].mxu0
    %v85 = vadd.f32 %v27, %v84
    %v86 = vpop.f32.mrb[0].mxu0
    %v87 = vpop.f32.mrb[0].mxu0
    %v88 = vadd.f32 %v27, %v87
    %v89 = vpop.f32.mrb[0].mxu0
    %90 = vdwg.mxu0
    %vm91 = vcmask 523264
    %92 = vst.msk [vmem:[#allocation2] sm:$0xff] %vm91, %v85
    %93 = vst.msk [vmem:[#allocation2 + $0x8] sm:$0xff] %vm91, %v88
    // Predicated region
    $region14: #{flick_forward.11} parent=1 // pred_check
      _
    $region15: #{flick_forward.11} parent=1 // pred_check_branch
      %95 = sbr.rel (0) target = $region17
    $region16: #{flick_forward.11} parent=1 // pred_region
      %s97 = ssub.s32 256, 256
      %98 = vsyncadd [#allocation3], %s97
      %s99 = sshll.u32 [#allocation2], 4
      %s100 = int_to_ptr.vmem [resolvable:$true] %s99
      %105 = dma.vmem_to_hbm [thread:$0]  %s100, 256, %s3, [#allocation3], 128, 128, 8
    $region17: #{flick_forward.11} parent=1 // pred_fallthru
      _
    // Predicated region
    $region18: #{flick_forward.11} parent=1 // pred_check
      _
    $region19: #{flick_forward.11} parent=1 // pred_check_branch
      %107 = sbr.rel (0) target = $region21
    $region20: #{flick_forward.11} parent=1 // pred_region
      %108 = dma.done [#allocation3], 256
    $region21: #{flick_forward.11} parent=1 // pred_fallthru
      _
    %109 = vsyncpa [#allocation3], 1

// kernel: flick_forward.6
$region0: #{flick_forward.6}
  #allocation0 [shape = 'u32[]', space=smem, size = 0x4, offset = 0x4, fixed_abs, tag = 'smem constant byte address 0x4 - core index']
  #allocation1 [shape = 'u32[144,128]{1,0:T(1,128)}', space=vmem, size = 0x12000, scoped, tag = 'internal scratch']
  %s0 = inlined_call_operand.vmem [shape: bf16[32,48], index: 0, kind: input, shape index: {}]
  %s1 = inlined_call_operand.vmem [shape: bf16[48,32], index: 1, kind: input, shape index: {}]
  %s2 = inlined_call_operand.vmem [shape: f32[1,32], index: 2, kind: input, shape index: {}]
  %s3 = inlined_call_operand.vmem [shape: bf16[16,32], index: 3, kind: input, shape index: {}]
  %s4 = inlined_call_operand.vmem [shape: bf16[32,32], index: 4, kind: output, shape index: {}]
  %s5 = sld [smem:[#allocation0]]
  $region26: #{flick_forward.6} parent=0
    _
  %s7 = ssub.s32 1, %s5
  %s8 = scalar_select 0, %s7, %s5
  // Predicated region
  $region2: #{flick_forward.6} parent=0 // pred_check
    _
  $region3: #{flick_forward.6} parent=0 // pred_check_branch
    %10 = sbr.rel (0) target = $region5
  $region4: #{flick_forward.6} parent=0 // pred_region
    _
  $region5: #{flick_forward.6} parent=0 // pred_fallthru
    _
  // Predicated region
  $region6: #{flick_forward.6} parent=0 // pred_check
    _
  $region7: #{flick_forward.6} parent=0 // pred_check_branch
    %12 = sbr.rel (0) target = $region9
  $region8: #{flick_forward.6} parent=0 // pred_region
    _
  $region9: #{flick_forward.6} parent=0 // pred_fallthru
    _
  // Predicated region
  $region10: #{flick_forward.6} parent=0 // pred_check
    _
  $region11: #{flick_forward.6} parent=0 // pred_check_branch
    %14 = sbr.rel (0) target = $region13
  $region12: #{flick_forward.6} parent=0 // pred_region
    _
  $region13: #{flick_forward.6} parent=0 // pred_fallthru
    _
  // Predicated region
  $region14: #{flick_forward.6} parent=0 // pred_check
    _
  $region15: #{flick_forward.6} parent=0 // pred_check_branch
    %16 = sbr.rel (0) target = $region17
  $region16: #{flick_forward.6} parent=0 // pred_region
    _
  $region17: #{flick_forward.6} parent=0 // pred_fallthru
    _
  %v18 = vld [vmem:[%s0] sm:$0xf]
  %v19 = vld [vmem:[%s0 + $0x4] sm:$0xf]
  %v20 = vld [vmem:[%s0 + $0x8] sm:$0xf]
  %v21 = vld [vmem:[%s0 + $0xc] sm:$0xf]
  %v22 = vld [vmem:[%s1] sm:$0xf]
  %v23 = vld [vmem:[%s1 + $0x4] sm:$0xf]
  %v24 = vld [vmem:[%s1 + $0x8] sm:$0xf]
  %v25 = vld [vmem:[%s1 + $0xc] sm:$0xf]
  %v26 = vld [vmem:[%s1 + $0x10] sm:$0xf]
  %v27 = vld [vmem:[%s1 + $0x14] sm:$0xf]
  %v28 = vld [vmem:[%s2] sm:$0x1]
  %v30 = vlaneseq
  %v31 = vshrl.u32 %v30, 7
  %v32 = vsub.s32 0, %v31
  %v33 = vrot.slane %v28, %v32
  %v39 = vunpack.c.l.b16 %v18
  %v40 = vunpack.c.l.b16 %v19
  %v41 = vunpack.c.l.b16 %v20
  %v42 = vunpack.c.l.b16 %v21
  %v43 = vpack.c.b16 %v40, %v39
  %v44 = vpack.c.b16 %v42, %v41
  %v51 = vunpack.c.l.b16 %v22
  %v52 = vunpack.c.l.b16 %v23
  %v53 = vunpack.c.l.b16 %v24
  %v54 = vunpack.c.l.b16 %v25
  %v55 = vunpack.c.l.b16 %v26
  %v56 = vunpack.c.l.b16 %v27
  %v57 = vpack.c.b16 %v52, %v51
  %v58 = vpack.c.b16 %v54, %v53
  %v59 = vpack.c.b16 %v56, %v55
  %vm63 = vcmask 392192
  %v65 = vsel %vm63, %v43, 0
  %v68 = vsel %vm63, %v44, 0
  %70 = vmatprep.subr.bf16.mxu0 0
  %71 = vmatpush1.bf16.msra.mxu0 %v57
  %72 = vmatprep.subr.bf16.mxu0 0
  %73 = vmatpush1.bf16.msra.mxu0 %v58
  %74 = vmatprep.subr.bf16.mxu0 0
  %75 = vmatpush1.bf16.msra.mxu0 %v59
  %76 = vmatprep.subr.bf16.mxu0 0
  %77 = vmatpush1.bf16.msra.mxu0 0
  %78 = vmatprep.subr.bf16.mxu0 0
  %79 = vmatpush1.bf16.msra.mxu0 0
  %80 = vmatprep.subr.bf16.mxu0 0
  %81 = vmatpush1.bf16.msra.mxu0 0
  %82 = vmatprep.subr.bf16.mxu0 0
  %83 = vmatpush1.bf16.msra.mxu0 0
  %84 = vmatprep.subr.bf16.mxu0 0
  %85 = vmatpush1.bf16.msra.mxu0 0
  %86 = vmatprep.subr.bf16.mxu0 0
  %87 = vmatpush1.bf16.msra.mxu0 0
  %88 = vmatprep.subr.bf16.mxu0 0
  %89 = vmatpush1.bf16.msra.mxu0 0
  %90 = vmatprep.subr.bf16.mxu0 0
  %91 = vmatpush1.bf16.msra.mxu0 0
  %92 = vmatprep.subr.bf16.mxu0 0
  %93 = vmatpush1.bf16.msra.mxu0 0
  %94 = vmatprep.subr.bf16.mxu0 0
  %95 = vmatpush1.bf16.msra.mxu0 0
  %96 = vmatprep.subr.bf16.mxu0 0
  %97 = vmatpush1.bf16.msra.mxu0 0
  %98 = vmatprep.subr.bf16.mxu0 0
  %99 = vmatpush1.bf16.msra.mxu0 0
  %100 = vmatprep.subr.bf16.mxu0 0
  %101 = vmatpush1.bf16.msra.mxu0 0
  %102 = vmatprep.mubr.bf16.mxu0 0
  %103 = vmatmul.mubr.bf16.gmra.mrb[0].mxu0 %v65
  %v104 = vpop.f32.mrb[0].mxu0
  %v105 = vadd.f32 %v33, %v104
  %v106 = vpop.f32.mrb[0].mxu0
  %v107 = vpop.f32.mrb[0].mxu0
  %v108 = vadd.f32 %v33, %v107
  %v109 = vpop.f32.mrb[0].mxu0
  %110 = vmatprep.mubr.bf16.mxu0 0
  %111 = vmatmul.mubr.bf16.gmra.mrb[0].mxu0 %v68
  %v112 = vpop.f32.mrb[0].mxu0
  %v113 = vadd.f32 %v33, %v112
  %v114 = vpop.f32.mrb[0].mxu0
  %v115 = vpop.f32.mrb[0].mxu0
  %v116 = vadd.f32 %v33, %v115
  %v117 = vpop.f32.mrb[0].mxu0
  %118 = vdwg.mxu0
  %v119 = vld [vmem:[%s3] sm:$0xf]
  %v120 = vld [vmem:[%s3 + $0x4] sm:$0xf]
  %v121 = vunpack.c.l.bf16 %v119
  %v122 = vunpack.c.l.bf16 %v120
  %v123 = vadd.f32 %v105, %v121
  %v124 = vadd.f32 %v108, %v122
  %v125 = vpack.c.bf16 %v124, %v123
  %v127 = vunpack.c.l.b16 %v125
  %v128 = vunpack.c.h.b16 %v125
  %v129 = vpack.c.b16 %v127, %v127
  %v130 = vpack.c.b16 %v128, %v128
  %vm133 = vcmask 257024
  %134 = vst.msk [vmem:[%s4] sm:$0xf] %vm133, %v129
  %135 = vst.msk [vmem:[%s4 + $0x4] sm:$0xf] %vm133, %v130
  %v136 = vadd.f32 %v113, %v121
  %v137 = vadd.f32 %v116, %v122
  %v138 = vpack.c.bf16 %v137, %v136
  %v140 = vunpack.c.l.b16 %v138
  %v141 = vunpack.c.h.b16 %v138
  %v142 = vpack.c.b16 %v140, %v140
  %v143 = vpack.c.b16 %v141, %v141
  %146 = vst.msk [vmem:[%s4 + $0x8] sm:$0xf] %vm133, %v142
  %147 = vst.msk [vmem:[%s4 + $0xc] sm:$0xf] %vm133, %v143
  // Predicated region
  $region18: #{flick_forward.6} parent=0 // pred_check
    _
  $region19: #{flick_forward.6} parent=0 // pred_check_branch
    %149 = sbr.rel (0) target = $region21
  $region20: #{flick_forward.6} parent=0 // pred_region
    _
  $region21: #{flick_forward.6} parent=0 // pred_fallthru
    _
  // Predicated region
  $region22: #{flick_forward.6} parent=0 // pred_check
    _
  $region23: #{flick_forward.6} parent=0 // pred_check_branch
    %151 = sbr.rel (0) target = $region25
  $region24: #{flick_forward.6} parent=0 // pred_region
    _
  $region25: #{flick_forward.6} parent=0 // pred_fallthru
    _

// kernel: flick_forward.7
$region0: #{flick_forward.7}
  #allocation0 [shape = 'u32[]', space=smem, size = 0x4, offset = 0x4, fixed_abs, tag = 'smem constant byte address 0x4 - core index']
  #allocation1 [shape = 'u32[144,128]{1,0:T(1,128)}', space=vmem, size = 0x12000, scoped, tag = 'internal scratch']
  #allocation2 [shape = 's32[1]{0}', space=sflag, size = 0x4, scoped, tag = 'scoped memory for flick_forward.7']
  #allocation3 [shape = 'u8[512]{0}', space=smem, size = 0x200, scoped, tag = 'prefetched SMEM operand 0']
  %s0 = inlined_call_operand.vmem [shape: s32[2], index: 0, kind: input, shape index: {}]
  %s1 = inlined_call_operand.vmem [shape: bf16[32,32], index: 1, kind: input, shape index: {}]
  %s2 = inlined_call_operand.vmem [shape: bf16[6,32,16], index: 2, kind: input, shape index: {}]
  %s3 = inlined_call_operand.vmem [shape: f32[6,1,16], index: 3, kind: input, shape index: {}]
  %s4 = inlined_call_operand.vmem [shape: bf16[2,16,32], index: 4, kind: input, shape index: {}]
  %s5 = inlined_call_operand.vmem [shape: f32[1,32], index: 5, kind: input, shape index: {}]
  %s6 = inlined_call_operand.vmem [shape: f32[1,32], index: 6, kind: input, shape index: {}]
  %s7 = inlined_call_operand.vmem [shape: f32[1,32], index: 7, kind: input, shape index: {}]
  %s8 = inlined_call_operand.vmem [shape: bf16[32,128], index: 8, kind: input, shape index: {}]
  %s9 = inlined_call_operand.vmem [shape: f32[1,128], index: 9, kind: input, shape index: {}]
  %s10 = inlined_call_operand.vmem [shape: bf16[128,32], index: 10, kind: input, shape index: {}]
  %s11 = inlined_call_operand.vmem [shape: f32[1,32], index: 11, kind: input, shape index: {}]
  %s12 = inlined_call_operand.vmem [shape: f32[1,32], index: 12, kind: input, shape index: {}]
  %s13 = inlined_call_operand.vmem [shape: f32[1,32], index: 13, kind: input, shape index: {}]
  %s14 = inlined_call_operand.vmem [shape: bf16[32,32], index: 14, kind: output, shape index: {}]
  %s15 = sld [smem:[#allocation0]]
  $region62: #{flick_forward.7} parent=0
    _
  %s17 = ssub.s32 1, %s15
  %s18 = scalar_select 0, %s17, %s15
  %s19 = sshll.u32 %s0, 4
  %s20 = int_to_ptr.vmem [resolvable:$true] %s19
  %22 = dma.vmem_to_smem %s20, 16, [#allocation3], [#allocation2]
  %23 = dma.done [#allocation2], 16
  %24 = sfence
  // Predicated region
  $region2: #{flick_forward.7} parent=0 // pred_check
    _
  $region3: #{flick_forward.7} parent=0 // pred_check_branch
    %26 = sbr.rel (0) target = $region5
  $region4: #{flick_forward.7} parent=0 // pred_region
    _
  $region5: #{flick_forward.7} parent=0 // pred_fallthru
    _
  // Predicated region
  $region6: #{flick_forward.7} parent=0 // pred_check
    _
  $region7: #{flick_forward.7} parent=0 // pred_check_branch
    %28 = sbr.rel (0) target = $region9
  $region8: #{flick_forward.7} parent=0 // pred_region
    _
  $region9: #{flick_forward.7} parent=0 // pred_fallthru
    _
  // Predicated region
  $region10: #{flick_forward.7} parent=0 // pred_check
    _
  $region11: #{flick_forward.7} parent=0 // pred_check_branch
    %30 = sbr.rel (0) target = $region13
  $region12: #{flick_forward.7} parent=0 // pred_region
    _
  $region13: #{flick_forward.7} parent=0 // pred_fallthru
    _
  // Predicated region
  $region14: #{flick_forward.7} parent=0 // pred_check
    _
  $region15: #{flick_forward.7} parent=0 // pred_check_branch
    %32 = sbr.rel (0) target = $region17
  $region16: #{flick_forward.7} parent=0 // pred_region
    _
  $region17: #{flick_forward.7} parent=0 // pred_fallthru
    _
  // Predicated region
  $region18: #{flick_forward.7} parent=0 // pred_check
    _
  $region19: #{flick_forward.7} parent=0 // pred_check_branch
    %34 = sbr.rel (0) target = $region21
  $region20: #{flick_forward.7} parent=0 // pred_region
    _
  $region21: #{flick_forward.7} parent=0 // pred_fallthru
    _
  // Predicated region
  $region22: #{flick_forward.7} parent=0 // pred_check
    _
  $region23: #{flick_forward.7} parent=0 // pred_check_branch
    %36 = sbr.rel (0) target = $region25
  $region24: #{flick_forward.7} parent=0 // pred_region
    _
  $region25: #{flick_forward.7} parent=0 // pred_fallthru
    _
  // Predicated region
  $region26: #{flick_forward.7} parent=0 // pred_check
    _
  $region27: #{flick_forward.7} parent=0 // pred_check_branch
    %38 = sbr.rel (0) target = $region29
  $region28: #{flick_forward.7} parent=0 // pred_region
    _
  $region29: #{flick_forward.7} parent=0 // pred_fallthru
    _
  // Predicated region
  $region30: #{flick_forward.7} parent=0 // pred_check
    _
  $region31: #{flick_forward.7} parent=0 // pred_check_branch
    %40 = sbr.rel (0) target = $region33
  $region32: #{flick_forward.7} parent=0 // pred_region
    _
  $region33: #{flick_forward.7} parent=0 // pred_fallthru
    _
  // Predicated region
  $region34: #{flick_forward.7} parent=0 // pred_check
    _
  $region35: #{flick_forward.7} parent=0 // pred_check_branch
    %42 = sbr.rel (0) target = $region37
  $region36: #{flick_forward.7} parent=0 // pred_region
    _
  $region37: #{flick_forward.7} parent=0 // pred_fallthru
    _
  // Predicated region
  $region38: #{flick_forward.7} parent=0 // pred_check
    _
  $region39: #{flick_forward.7} parent=0 // pred_check_branch
    %44 = sbr.rel (0) target = $region41
  $region40: #{flick_forward.7} parent=0 // pred_region
    _
  $region41: #{flick_forward.7} parent=0 // pred_fallthru
    _
  // Predicated region
  $region42: #{flick_forward.7} parent=0 // pred_check
    _
  $region43: #{flick_forward.7} parent=0 // pred_check_branch
    %46 = sbr.rel (0) target = $region45
  $region44: #{flick_forward.7} parent=0 // pred_region
    _
  $region45: #{flick_forward.7} parent=0 // pred_fallthru
    _
  // Predicated region
  $region46: #{flick_forward.7} parent=0 // pred_check
    _
  $region47: #{flick_forward.7} parent=0 // pred_check_branch
    %48 = sbr.rel (0) target = $region49
  $region48: #{flick_forward.7} parent=0 // pred_region
    _
  $region49: #{flick_forward.7} parent=0 // pred_fallthru
    _
  // Predicated region
  $region50: #{flick_forward.7} parent=0 // pred_check
    _
  $region51: #{flick_forward.7} parent=0 // pred_check_branch
    %50 = sbr.rel (0) target = $region53
  $region52: #{flick_forward.7} parent=0 // pred_region
    _
  $region53: #{flick_forward.7} parent=0 // pred_fallthru
    _
  %v52 = vld [vmem:[%s1] sm:$0xf]
  %v53 = vld [vmem:[%s1 + $0x4] sm:$0xf]
  %v54 = vld [vmem:[%s1 + $0x8] sm:$0xf]
  %v55 = vld [vmem:[%s1 + $0xc] sm:$0xf]
  %v56 = vld [vmem:[%s2] sm:$0xf]
  %v57 = vld [vmem:[%s2 + $0x4] sm:$0xf]
  %v58 = vld [vmem:[%s2 + $0x8] sm:$0xf]
  %v59 = vld [vmem:[%s2 + $0xc] sm:$0xf]
  %v60 = vld [vmem:[%s3] sm:$0x1]
  %v62 = vlaneseq
  %v63 = vshrl.u32 %v62, 7
  %v64 = vsub.s32 0, %v63
  %v65 = vrot.slane %v60, %v64
  %v71 = vunpack.c.l.b16 %v52
  %v72 = vunpack.c.l.b16 %v53
  %v73 = vunpack.c.l.b16 %v54
  %v74 = vunpack.c.l.b16 %v55
  %v75 = vpack.c.b16 %v72, %v71
  %v76 = vpack.c.b16 %v74, %v73
  %v81 = vunpack.c.l.b16 %v56
  %v82 = vunpack.c.l.b16 %v57
  %v83 = vunpack.c.l.b16 %v58
  %v84 = vunpack.c.l.b16 %v59
  %v85 = vpack.c.b16 %v82, %v81
  %v86 = vpack.c.b16 %v84, %v83
  %vm89 = vcmask 261120
  %v91 = vsel %vm89, %v75, 0
  %v94 = vsel %vm89, %v76, 0
  %96 = vmatprep.subr.bf16.mxu0 0
  %97 = vmatpush1.bf16.msra.mxu0 %v85
  %98 = vmatprep.subr.bf16.mxu0 0
  %99 = vmatpush1.bf16.msra.mxu0 %v86
  %100 = vmatprep.subr.bf16.mxu0 0
  %101 = vmatpush1.bf16.msra.mxu0 0
  %102 = vmatprep.subr.bf16.mxu0 0
  %103 = vmatpush1.bf16.msra.mxu0 0
  %104 = vmatprep.subr.bf16.mxu0 0
  %105 = vmatpush1.bf16.msra.mxu0 0
  %106 = vmatprep.subr.bf16.mxu0 0
  %107 = vmatpush1.bf16.msra.mxu0 0
  %108 = vmatprep.subr.bf16.mxu0 0
  %109 = vmatpush1.bf16.msra.mxu0 0
  %110 = vmatprep.subr.bf16.mxu0 0
  %111 = vmatpush1.bf16.msra.mxu0 0
  %112 = vmatprep.subr.bf16.mxu0 0
  %113 = vmatpush1.bf16.msra.mxu0 0
  %114 = vmatprep.subr.bf16.mxu0 0
  %115 = vmatpush1.bf16.msra.mxu0 0
  %116 = vmatprep.subr.bf16.mxu0 0
  %117 = vmatpush1.bf16.msra.mxu0 0
  %118 = vmatprep.subr.bf16.mxu0 0
  %119 = vmatpush1.bf16.msra.mxu0 0
  %120 = vmatprep.subr.bf16.mxu0 0
  %121 = vmatpush1.bf16.msra.mxu0 0
  %122 = vmatprep.subr.bf16.mxu0 0
  %123 = vmatpush1.bf16.msra.mxu0 0
  %124 = vmatprep.subr.bf16.mxu0 0
  %125 = vmatpush1.bf16.msra.mxu0 0
  %126 = vmatprep.subr.bf16.mxu0 0
  %127 = vmatpush1.bf16.msra.mxu0 0
  %128 = vmatprep.mubr.bf16.mxu0 0
  %129 = vmatmul.mubr.bf16.gmra.mrb[0].mxu0 %v91
  %v130 = vpop.f32.mrb[0].mxu0
  %v131 = vadd.f32 %v65, %v130
  %v132 = vpop.f32.mrb[0].mxu0
  %v133 = vpop.f32.mrb[0].mxu0
  %v134 = vadd.f32 %v65, %v133
  %v135 = vpop.f32.mrb[0].mxu0
  %136 = vmatprep.mubr.bf16.mxu0 0
  %137 = vmatmul.mubr.bf16.gmra.mrb[0].mxu0 %v94
  %v138 = vpop.f32.mrb[0].mxu0
  %v139 = vadd.f32 %v65, %v138
  %v140 = vpop.f32.mrb[0].mxu0
  %v141 = vpop.f32.mrb[0].mxu0
  %v142 = vadd.f32 %v65, %v141
  %v143 = vpop.f32.mrb[0].mxu0
  %144 = vdwg.mxu0
  %v145 = vpack.c.bf16 %v134, %v131
  %v146 = vpack.c.bf16 %v142, %v139
  %s147 = scalar_lea.vmem %s2, 32
  %v148 = vld [vmem:[%s147] sm:$0xf]
  %v149 = vld [vmem:[%s147 + $0x4] sm:$0xf]
  %v150 = vld [vmem:[%s147 + $0x8] sm:$0xf]
  %v151 = vld [vmem:[%s147 + $0xc] sm:$0xf]
  %s152 = scalar_lea.vmem %s3, 2
  %v153 = vld [vmem:[%s152] sm:$0x1]
  %v155 = vlaneseq
  %v156 = vshrl.u32 %v155, 7
  %v157 = vsub.s32 0, %v156
  %v158 = vrot.slane %v153, %v157
  %v164 = vunpack.c.l.b16 %v148
  %v165 = vunpack.c.l.b16 %v149
  %v166 = vunpack.c.l.b16 %v150
  %v167 = vunpack.c.l.b16 %v151
  %v168 = vpack.c.b16 %v165, %v164
  %v169 = vpack.c.b16 %v167, %v166
  %172 = vmatprep.subr.bf16.mxu0 0
  %173 = vmatpush1.bf16.msra.mxu0 %v168
  %174 = vmatprep.subr.bf16.mxu0 0
  %175 = vmatpush1.bf16.msra.mxu0 %v169
  %176 = vmatprep.subr.bf16.mxu0 0
  %177 = vmatpush1.bf16.msra.mxu0 0
  %178 = vmatprep.subr.bf16.mxu0 0
  %179 = vmatpush1.bf16.msra.mxu0 0
  %180 = vmatprep.subr.bf16.mxu0 0
  %181 = vmatpush1.bf16.msra.mxu0 0
  %182 = vmatprep.subr.bf16.mxu0 0
  %183 = vmatpush1.bf16.msra.mxu0 0
  %184 = vmatprep.subr.bf16.mxu0 0
  %185 = vmatpush1.bf16.msra.mxu0 0
  %186 = vmatprep.subr.bf16.mxu0 0
  %187 = vmatpush1.bf16.msra.mxu0 0
  %188 = vmatprep.subr.bf16.mxu0 0
  %189 = vmatpush1.bf16.msra.mxu0 0
  %190 = vmatprep.subr.bf16.mxu0 0
  %191 = vmatpush1.bf16.msra.mxu0 0
  %192 = vmatprep.subr.bf16.mxu0 0
  %193 = vmatpush1.bf16.msra.mxu0 0
  %194 = vmatprep.subr.bf16.mxu0 0
  %195 = vmatpush1.bf16.msra.mxu0 0
  %196 = vmatprep.subr.bf16.mxu0 0
  %197 = vmatpush1.bf16.msra.mxu0 0
  %198 = vmatprep.subr.bf16.mxu0 0
  %199 = vmatpush1.bf16.msra.mxu0 0
  %200 = vmatprep.subr.bf16.mxu0 0
  %201 = vmatpush1.bf16.msra.mxu0 0
  %202 = vmatprep.subr.bf16.mxu0 0
  %203 = vmatpush1.bf16.msra.mxu0 0
  %204 = vmatprep.mubr.bf16.mxu0 0
  %205 = vmatmul.mubr.bf16.gmra.mrb[0].mxu0 %v91
  %v206 = vpop.f32.mrb[0].mxu0
  %v207 = vadd.f32 %v158, %v206
  %v208 = vpop.f32.mrb[0].mxu0
  %v209 = vpop.f32.mrb[0].mxu0
  %v210 = vadd.f32 %v158, %v209
  %v211 = vpop.f32.mrb[0].mxu0
  %212 = vmatprep.mubr.bf16.mxu0 0
  %213 = vmatmul.mubr.bf16.gmra.mrb[0].mxu0 %v94
  %v214 = vpop.f32.mrb[0].mxu0
  %v215 = vadd.f32 %v158, %v214
  %v216 = vpop.f32.mrb[0].mxu0
  %v217 = vpop.f32.mrb[0].mxu0
  %v218 = vadd.f32 %v158, %v217
  %v219 = vpop.f32.mrb[0].mxu0
  %220 = vdwg.mxu0
  %v221 = vpack.c.bf16 %v210, %v207
  %v222 = vpack.c.bf16 %v218, %v215
  %s223 = scalar_lea.vmem %s2, 64
  %v224 = vld [vmem:[%s223] sm:$0xf]
  %v225 = vld [vmem:[%s223 + $0x4] sm:$0xf]
  %v226 = vld [vmem:[%s223 + $0x8] sm:$0xf]
  %v227 = vld [vmem:[%s223 + $0xc] sm:$0xf]
  %s228 = scalar_lea.vmem %s3, 4
  %v229 = vld [vmem:[%s228] sm:$0x1]
  %v231 = vlaneseq
  %v232 = vshrl.u32 %v231, 7
  %v233 = vsub.s32 0, %v232
  %v234 = vrot.slane %v229, %v233
  %v240 = vunpack.c.l.b16 %v224
  %v241 = vunpack.c.l.b16 %v225
  %v242 = vunpack.c.l.b16 %v226
  %v243 = vunpack.c.l.b16 %v227
  %v244 = vpack.c.b16 %v241, %v240
  %v245 = vpack.c.b16 %v243, %v242
  %248 = vmatprep.subr.bf16.mxu0 0
  %249 = vmatpush1.bf16.msra.mxu0 %v244
  %250 = vmatprep.subr.bf16.mxu0 0
  %251 = vmatpush1.bf16.msra.mxu0 %v245
  %252 = vmatprep.subr.bf16.mxu0 0
  %253 = vmatpush1.bf16.msra.mxu0 0
  %254 = vmatprep.subr.bf16.mxu0 0
  %255 = vmatpush1.bf16.msra.mxu0 0
  %256 = vmatprep.subr.bf16.mxu0 0
  %257 = vmatpush1.bf16.msra.mxu0 0
  %258 = vmatprep.subr.bf16.mxu0 0
  %259 = vmatpush1.bf16.msra.mxu0 0
  %260 = vmatprep.subr.bf16.mxu0 0
  %261 = vmatpush1.bf16.msra.mxu0 0
  %262 = vmatprep.subr.bf16.mxu0 0
  %263 = vmatpush1.bf16.msra.mxu0 0
  %264 = vmatprep.subr.bf16.mxu0 0
  %265 = vmatpush1.bf16.msra.mxu0 0
  %266 = vmatprep.subr.bf16.mxu0 0
  %267 = vmatpush1.bf16.msra.mxu0 0
  %268 = vmatprep.subr.bf16.mxu0 0
  %269 = vmatpush1.bf16.msra.mxu0 0
  %270 = vmatprep.subr.bf16.mxu0 0
  %271 = vmatpush1.bf16.msra.mxu0 0
  %272 = vmatprep.subr.bf16.mxu0 0
  %273 = vmatpush1.bf16.msra.mxu0 0
  %274 = vmatprep.subr.bf16.mxu0 0
  %275 = vmatpush1.bf16.msra.mxu0 0
  %276 = vmatprep.subr.bf16.mxu0 0
  %277 = vmatpush1.bf16.msra.mxu0 0
  %278 = vmatprep.subr.bf16.mxu0 0
  %279 = vmatpush1.bf16.msra.mxu0 0
  %280 = vmatprep.mubr.bf16.mxu0 0
  %281 = vmatmul.mubr.bf16.gmra.mrb[0].mxu0 %v91
  %v282 = vpop.f32.mrb[0].mxu0
  %v283 = vadd.f32 %v234, %v282
  %v284 = vpop.f32.mrb[0].mxu0
  %v285 = vpop.f32.mrb[0].mxu0
  %v286 = vadd.f32 %v234, %v285
  %v287 = vpop.f32.mrb[0].mxu0
  %288 = vmatprep.mubr.bf16.mxu0 0
  %289 = vmatmul.mubr.bf16.gmra.mrb[0].mxu0 %v94
  %v290 = vpop.f32.mrb[0].mxu0
  %v291 = vadd.f32 %v234, %v290
  %v292 = vpop.f32.mrb[0].mxu0
  %v293 = vpop.f32.mrb[0].mxu0
  %v294 = vadd.f32 %v234, %v293
  %v295 = vpop.f32.mrb[0].mxu0
  %296 = vdwg.mxu0
  %v297 = vpack.c.bf16 %v286, %v283
  %v298 = vpack.c.bf16 %v294, %v291
  %s299 = scalar_lea.vmem %s2, 16
  %v300 = vld [vmem:[%s299] sm:$0xf]
  %v301 = vld [vmem:[%s299 + $0x4] sm:$0xf]
  %v302 = vld [vmem:[%s299 + $0x8] sm:$0xf]
  %v303 = vld [vmem:[%s299 + $0xc] sm:$0xf]
  %s304 = scalar_lea.vmem %s3, 1
  %v305 = vld [vmem:[%s304] sm:$0x1]
  %v307 = vlaneseq
  %v308 = vshrl.u32 %v307, 7
  %v309 = vsub.s32 0, %v308
  %v310 = vrot.slane %v305, %v309
  %v316 = vunpack.c.l.b16 %v300
  %v317 = vunpack.c.l.b16 %v301
  %v318 = vunpack.c.l.b16 %v302
  %v319 = vunpack.c.l.b16 %v303
  %v320 = vpack.c.b16 %v317, %v316
  %v321 = vpack.c.b16 %v319, %v318
  %324 = vmatprep.subr.bf16.mxu0 0
  %325 = vmatpush1.bf16.msra.mxu0 %v320
  %326 = vmatprep.subr.bf16.mxu0 0
  %327 = vmatpush1.bf16.msra.mxu0 %v321
  %328 = vmatprep.subr.bf16.mxu0 0
  %329 = vmatpush1.bf16.msra.mxu0 0
  %330 = vmatprep.subr.bf16.mxu0 0
  %331 = vmatpush1.bf16.msra.mxu0 0
  %332 = vmatprep.subr.bf16.mxu0 0
  %333 = vmatpush1.bf16.msra.mxu0 0
  %334 = vmatprep.subr.bf16.mxu0 0
  %335 = vmatpush1.bf16.msra.mxu0 0
  %336 = vmatprep.subr.bf16.mxu0 0
  %337 = vmatpush1.bf16.msra.mxu0 0
  %338 = vmatprep.subr.bf16.mxu0 0
  %339 = vmatpush1.bf16.msra.mxu0 0
  %340 = vmatprep.subr.bf16.mxu0 0
  %341 = vmatpush1.bf16.msra.mxu0 0
  %342 = vmatprep.subr.bf16.mxu0 0
  %343 = vmatpush1.bf16.msra.mxu0 0
  %344 = vmatprep.subr.bf16.mxu0 0
  %345 = vmatpush1.bf16.msra.mxu0 0
  %346 = vmatprep.subr.bf16.mxu0 0
  %347 = vmatpush1.bf16.msra.mxu0 0
  %348 = vmatprep.subr.bf16.mxu0 0
  %349 = vmatpush1.bf16.msra.mxu0 0
  %350 = vmatprep.subr.bf16.mxu0 0
  %351 = vmatpush1.bf16.msra.mxu0 0
  %352 = vmatprep.subr.bf16.mxu0 0
  %353 = vmatpush1.bf16.msra.mxu0 0
  %354 = vmatprep.subr.bf16.mxu0 0
  %355 = vmatpush1.bf16.msra.mxu0 0
  %356 = vmatprep.mubr.bf16.mxu0 0
  %357 = vmatmul.mubr.bf16.gmra.mrb[0].mxu0 %v91
  %v358 = vpop.f32.mrb[0].mxu0
  %v359 = vadd.f32 %v310, %v358
  %v360 = vpop.f32.mrb[0].mxu0
  %v361 = vpop.f32.mrb[0].mxu0
  %v362 = vadd.f32 %v310, %v361
  %v363 = vpop.f32.mrb[0].mxu0
  %364 = vmatprep.mubr.bf16.mxu0 0
  %365 = vmatmul.mubr.bf16.gmra.mrb[0].mxu0 %v94
  %v366 = vpop.f32.mrb[0].mxu0
  %v367 = vadd.f32 %v310, %v366
  %v368 = vpop.f32.mrb[0].mxu0
  %v369 = vpop.f32.mrb[0].mxu0
  %v370 = vadd.f32 %v310, %v369
  %v371 = vpop.f32.mrb[0].mxu0
  %372 = vdwg.mxu0
  %v373 = vpack.c.bf16 %v362, %v359
  %v374 = vpack.c.bf16 %v370, %v367
  %s375 = scalar_lea.vmem %s2, 48
  %v376 = vld [vmem:[%s375] sm:$0xf]
  %v377 = vld [vmem:[%s375 + $0x4] sm:$0xf]
  %v378 = vld [vmem:[%s375 + $0x8] sm:$0xf]
  %v379 = vld [vmem:[%s375 + $0xc] sm:$0xf]
  %s380 = scalar_lea.vmem %s3, 3
  %v381 = vld [vmem:[%s380] sm:$0x1]
  %v383 = vlaneseq
  %v384 = vshrl.u32 %v383, 7
  %v385 = vsub.s32 0, %v384
  %v386 = vrot.slane %v381, %v385
  %v392 = vunpack.c.l.b16 %v376
  %v393 = vunpack.c.l.b16 %v377
  %v394 = vunpack.c.l.b16 %v378
  %v395 = vunpack.c.l.b16 %v379
  %v396 = vpack.c.b16 %v393, %v392
  %v397 = vpack.c.b16 %v395, %v394
  %400 = vmatprep.subr.bf16.mxu0 0
  %401 = vmatpush1.bf16.msra.mxu0 %v396
  %402 = vmatprep.subr.bf16.mxu0 0
  %403 = vmatpush1.bf16.msra.mxu0 %v397
  %404 = vmatprep.subr.bf16.mxu0 0
  %405 = vmatpush1.bf16.msra.mxu0 0
  %406 = vmatprep.subr.bf16.mxu0 0
  %407 = vmatpush1.bf16.msra.mxu0 0
  %408 = vmatprep.subr.bf16.mxu0 0
  %409 = vmatpush1.bf16.msra.mxu0 0
  %410 = vmatprep.subr.bf16.mxu0 0
  %411 = vmatpush1.bf16.msra.mxu0 0
  %412 = vmatprep.subr.bf16.mxu0 0
  %413 = vmatpush1.bf16.msra.mxu0 0
  %414 = vmatprep.subr.bf16.mxu0 0
  %415 = vmatpush1.bf16.msra.mxu0 0
  %416 = vmatprep.subr.bf16.mxu0 0
  %417 = vmatpush1.bf16.msra.mxu0 0
  %418 = vmatprep.subr.bf16.mxu0 0
  %419 = vmatpush1.bf16.msra.mxu0 0
  %420 = vmatprep.subr.bf16.mxu0 0
  %421 = vmatpush1.bf16.msra.mxu0 0
  %422 = vmatprep.subr.bf16.mxu0 0
  %423 = vmatpush1.bf16.msra.mxu0 0
  %424 = vmatprep.subr.bf16.mxu0 0
  %425 = vmatpush1.bf16.msra.mxu0 0
  %426 = vmatprep.subr.bf16.mxu0 0
  %427 = vmatpush1.bf16.msra.mxu0 0
  %428 = vmatprep.subr.bf16.mxu0 0
  %429 = vmatpush1.bf16.msra.mxu0 0
  %430 = vmatprep.subr.bf16.mxu0 0
  %431 = vmatpush1.bf16.msra.mxu0 0
  %432 = vmatprep.mubr.bf16.mxu0 0
  %433 = vmatmul.mubr.bf16.gmra.mrb[0].mxu0 %v91
  %v434 = vpop.f32.mrb[0].mxu0
  %v435 = vadd.f32 %v386, %v434
  %v436 = vpop.f32.mrb[0].mxu0
  %v437 = vpop.f32.mrb[0].mxu0
  %v438 = vadd.f32 %v386, %v437
  %v439 = vpop.f32.mrb[0].mxu0
  %440 = vmatprep.mubr.bf16.mxu0 0
  %441 = vmatmul.mubr.bf16.gmra.mrb[0].mxu0 %v94
  %v442 = vpop.f32.mrb[0].mxu0
  %v443 = vadd.f32 %v386, %v442
  %v444 = vpop.f32.mrb[0].mxu0
  %v445 = vpop.f32.mrb[0].mxu0
  %v446 = vadd.f32 %v386, %v445
  %v447 = vpop.f32.mrb[0].mxu0
  %448 = vdwg.mxu0
  %v449 = vpack.c.bf16 %v438, %v435
  %v450 = vpack.c.bf16 %v446, %v443
  %s451 = scalar_lea.vmem %s2, 80
  %v452 = vld [vmem:[%s451] sm:$0xf]
  %v453 = vld [vmem:[%s451 + $0x4] sm:$0xf]
  %v454 = vld [vmem:[%s451 + $0x8] sm:$0xf]
  %v455 = vld [vmem:[%s451 + $0xc] sm:$0xf]
  %s456 = scalar_lea.vmem %s3, 5
  %v457 = vld [vmem:[%s456] sm:$0x1]
  %v459 = vlaneseq
  %v460 = vshrl.u32 %v459, 7
  %v461 = vsub.s32 0, %v460
  %v462 = vrot.slane %v457, %v461
  %v468 = vunpack.c.l.b16 %v452
  %v469 = vunpack.c.l.b16 %v453
  %v470 = vunpack.c.l.b16 %v454
  %v471 = vunpack.c.l.b16 %v455
  %v472 = vpack.c.b16 %v469, %v468
  %v473 = vpack.c.b16 %v471, %v470
  %476 = vmatprep.subr.bf16.mxu0 0
  %477 = vmatpush1.bf16.msra.mxu0 %v472
  %478 = vmatprep.subr.bf16.mxu0 0
  %479 = vmatpush1.bf16.msra.mxu0 %v473
  %480 = vmatprep.subr.bf16.mxu0 0
  %481 = vmatpush1.bf16.msra.mxu0 0
  %482 = vmatprep.subr.bf16.mxu0 0
  %483 = vmatpush1.bf16.msra.mxu0 0
  %484 = vmatprep.subr.bf16.mxu0 0
  %485 = vmatpush1.bf16.msra.mxu0 0
  %486 = vmatprep.subr.bf16.mxu0 0
  %487 = vmatpush1.bf16.msra.mxu0 0
  %488 = vmatprep.subr.bf16.mxu0 0
  %489 = vmatpush1.bf16.msra.mxu0 0
  %490 = vmatprep.subr.bf16.mxu0 0
  %491 = vmatpush1.bf16.msra.mxu0 0
  %492 = vmatprep.subr.bf16.mxu0 0
  %493 = vmatpush1.bf16.msra.mxu0 0
  %494 = vmatprep.subr.bf16.mxu0 0
  %495 = vmatpush1.bf16.msra.mxu0 0
  %496 = vmatprep.subr.bf16.mxu0 0
  %497 = vmatpush1.bf16.msra.mxu0 0
  %498 = vmatprep.subr.bf16.mxu0 0
  %499 = vmatpush1.bf16.msra.mxu0 0
  %500 = vmatprep.subr.bf16.mxu0 0
  %501 = vmatpush1.bf16.msra.mxu0 0
  %502 = vmatprep.subr.bf16.mxu0 0
  %503 = vmatpush1.bf16.msra.mxu0 0
  %504 = vmatprep.subr.bf16.mxu0 0
  %505 = vmatpush1.bf16.msra.mxu0 0
  %506 = vmatprep.subr.bf16.mxu0 0
  %507 = vmatpush1.bf16.msra.mxu0 0
  %508 = vmatprep.mubr.bf16.mxu0 0
  %509 = vmatmul.mubr.bf16.gmra.mrb[0].mxu0 %v91
  %v510 = vpop.f32.mrb[0].mxu0
  %v511 = vadd.f32 %v462, %v510
  %v512 = vpop.f32.mrb[0].mxu0
  %v513 = vpop.f32.mrb[0].mxu0
  %v514 = vadd.f32 %v462, %v513
  %v515 = vpop.f32.mrb[0].mxu0
  %516 = vmatprep.mubr.bf16.mxu0 0
  %517 = vmatmul.mubr.bf16.gmra.mrb[0].mxu0 %v94
  %v518 = vpop.f32.mrb[0].mxu0
  %v519 = vadd.f32 %v462, %v518
  %v520 = vpop.f32.mrb[0].mxu0
  %v521 = vpop.f32.mrb[0].mxu0
  %v522 = vadd.f32 %v462, %v521
  %v523 = vpop.f32.mrb[0].mxu0
  %524 = vdwg.mxu0
  %v525 = vpack.c.bf16 %v514, %v511
  %v526 = vpack.c.bf16 %v522, %v519
  %v527 = vlaneseq
  %v528 = vand.u32 %v527, 127
  %s529 = sld [smem:[#allocation3]]
  %v530 = vstv %s529
  %vm531 = vcmp.ge.s32.totalorder %v528, %v530
  %vm532 = vcmask 130048
  %v534 = vsel %vm532, %v145, 0
  %v537 = vsel %vm532, %v221, 0
  %539 = vmatprep.subr.bf16.mxu0 0
  %540 = vmatpush1.bf16.xpose.msra.mxu0 %v537
  %541 = vmatprep.subr.bf16.mxu0 0
  %542 = vmatpush1.bf16.xpose.msra.mxu0 0
  %543 = vmatprep.subr.bf16.mxu0 0
  %544 = vmatpush1.bf16.xpose.msra.mxu0 0
  %545 = vmatprep.subr.bf16.mxu0 0
  %546 = vmatpush1.bf16.xpose.msra.mxu0 0
  %547 = vmatprep.subr.bf16.mxu0 0
  %548 = vmatpush1.bf16.xpose.msra.mxu0 0
  %549 = vmatprep.subr.bf16.mxu0 0
  %550 = vmatpush1.bf16.xpose.msra.mxu0 0
  %551 = vmatprep.subr.bf16.mxu0 0
  %552 = vmatpush1.bf16.xpose.msra.mxu0 0
  %553 = vmatprep.subr.bf16.mxu0 0
  %554 = vmatpush1.bf16.xpose.msra.mxu0 0
  %555 = vmatprep.subr.bf16.mxu0 0
  %556 = vmatpush1.bf16.xpose.msra.mxu0 0
  %557 = vmatprep.subr.bf16.mxu0 0
  %558 = vmatpush1.bf16.xpose.msra.mxu0 0
  %559 = vmatprep.subr.bf16.mxu0 0
  %560 = vmatpush1.bf16.xpose.msra.mxu0 0
  %561 = vmatprep.subr.bf16.mxu0 0
  %562 = vmatpush1.bf16.xpose.msra.mxu0 0
  %563 = vmatprep.subr.bf16.mxu0 0
  %564 = vmatpush1.bf16.xpose.msra.mxu0 0
  %565 = vmatprep.subr.bf16.mxu0 0
  %566 = vmatpush1.bf16.xpose.msra.mxu0 0
  %567 = vmatprep.subr.bf16.mxu0 0
  %568 = vmatpush1.bf16.xpose.msra.mxu0 0
  %569 = vmatprep.subr.bf16.mxu0 0
  %570 = vmatpush1.bf16.xpose.msra.mxu0 0
  %571 = vmatprep.mubr.bf16.mxu0 0
  %572 = vmatmul.mubr.bf16.gmra.mrb[0].mxu0 %v534
  %v573 = vpop.f32.mrb[0].mxu0
  %v574 = vadd.f32 0.0, %v573
  %v575 = vpop.f32.mrb[0].mxu0
  %v576 = vpop.f32.mrb[0].mxu0
  %v577 = vadd.f32 0.0, %v576
  %v578 = vpop.f32.mrb[0].mxu0
  %579 = vdwg.mxu0
  %v580 = vsel %vm531, -1e+09, %v574
  %v581 = vsel %vm531, -1e+09, %v577
  %v582 = vsel %vm532, %v580, -inf
  %583 = vmax.xlane.f32.xlu0 %v582
  %v584 = vpop.xlane.xlu0 %583
  %v585 = vsel %vm532, %v581, -inf
  %586 = vmax.xlane.f32.xlu0 %v585
  %v587 = vpop.xlane.xlu0 %586
  %v588 = vsub.f32 %v580, %v584
  %v589 = vsub.f32 %v581, %v587
  %v590 = vmul.f32 %v588, 1.442695
  %v591 = vpow.pop %v590
  %v592 = vmul.f32 %v589, 1.442695
  %v593 = vpow.pop %v592
  %v594 = vsel %vm532, %v591, 0.0
  %595 = vadd.xlane.f32.xlu0 %v594
  %v596 = vpop.xlane.xlu0 %595
  %v597 = vsel %vm532, %v593, 0.0
  %598 = vadd.xlane.f32.xlu0 %v597
  %v599 = vpop.xlane.xlu0 %598
  %v600 = vrcp.pop %v596
  %v601 = vrcp.pop %v599
  %v602 = vmul.f32 %v591, %v600
  %v603 = vmul.f32 %v593, %v601
  %v604 = vpack.c.bf16 %v603, %v602
  %v606 = vsel %vm532, %v604, 0
  %608 = vmatprep.subr.bf16.mxu0 0
  %609 = vmatpush1.bf16.msra.mxu0 %v297
  %610 = vmatprep.subr.bf16.mxu0 0
  %611 = vmatpush1.bf16.msra.mxu0 0
  %612 = vmatprep.subr.bf16.mxu0 0
  %613 = vmatpush1.bf16.msra.mxu0 0
  %614 = vmatprep.subr.bf16.mxu0 0
  %615 = vmatpush1.bf16.msra.mxu0 0
  %616 = vmatprep.subr.bf16.mxu0 0
  %617 = vmatpush1.bf16.msra.mxu0 0
  %618 = vmatprep.subr.bf16.mxu0 0
  %619 = vmatpush1.bf16.msra.mxu0 0
  %620 = vmatprep.subr.bf16.mxu0 0
  %621 = vmatpush1.bf16.msra.mxu0 0
  %622 = vmatprep.subr.bf16.mxu0 0
  %623 = vmatpush1.bf16.msra.mxu0 0
  %624 = vmatprep.subr.bf16.mxu0 0
  %625 = vmatpush1.bf16.msra.mxu0 0
  %626 = vmatprep.subr.bf16.mxu0 0
  %627 = vmatpush1.bf16.msra.mxu0 0
  %628 = vmatprep.subr.bf16.mxu0 0
  %629 = vmatpush1.bf16.msra.mxu0 0
  %630 = vmatprep.subr.bf16.mxu0 0
  %631 = vmatpush1.bf16.msra.mxu0 0
  %632 = vmatprep.subr.bf16.mxu0 0
  %633 = vmatpush1.bf16.msra.mxu0 0
  %634 = vmatprep.subr.bf16.mxu0 0
  %635 = vmatpush1.bf16.msra.mxu0 0
  %636 = vmatprep.subr.bf16.mxu0 0
  %637 = vmatpush1.bf16.msra.mxu0 0
  %638 = vmatprep.subr.bf16.mxu0 0
  %639 = vmatpush1.bf16.msra.mxu0 0
  %640 = vmatprep.mubr.bf16.mxu0 0
  %641 = vmatmul.mubr.bf16.gmra.mrb[0].mxu0 %v606
  %v642 = vpop.f32.mrb[0].mxu0
  %v643 = vadd.f32 0.0, %v642
  %v644 = vpop.f32.mrb[0].mxu0
  %v645 = vpop.f32.mrb[0].mxu0
  %v646 = vadd.f32 0.0, %v645
  %v647 = vpop.f32.mrb[0].mxu0
  %648 = vdwg.mxu0
  %v649 = vpack.c.bf16 %v646, %v643
  %v650 = vld [vmem:[%s4] sm:$0xf]
  %v651 = vld [vmem:[%s4 + $0x4] sm:$0xf]
  %v653 = vsel %vm532, %v373, 0
  %v656 = vsel %vm532, %v449, 0
  %658 = vmatprep.subr.bf16.mxu0 0
  %659 = vmatpush1.bf16.xpose.msra.mxu0 %v656
  %660 = vmatprep.subr.bf16.mxu0 0
  %661 = vmatpush1.bf16.xpose.msra.mxu0 0
  %662 = vmatprep.subr.bf16.mxu0 0
  %663 = vmatpush1.bf16.xpose.msra.mxu0 0
  %664 = vmatprep.subr.bf16.mxu0 0
  %665 = vmatpush1.bf16.xpose.msra.mxu0 0
  %666 = vmatprep.subr.bf16.mxu0 0
  %667 = vmatpush1.bf16.xpose.msra.mxu0 0
  %668 = vmatprep.subr.bf16.mxu0 0
  %669 = vmatpush1.bf16.xpose.msra.mxu0 0
  %670 = vmatprep.subr.bf16.mxu0 0
  %671 = vmatpush1.bf16.xpose.msra.mxu0 0
  %672 = vmatprep.subr.bf16.mxu0 0
  %673 = vmatpush1.bf16.xpose.msra.mxu0 0
  %674 = vmatprep.subr.bf16.mxu0 0
  %675 = vmatpush1.bf16.xpose.msra.mxu0 0
  %676 = vmatprep.subr.bf16.mxu0 0
  %677 = vmatpush1.bf16.xpose.msra.mxu0 0
  %678 = vmatprep.subr.bf16.mxu0 0
  %679 = vmatpush1.bf16.xpose.msra.mxu0 0
  %680 = vmatprep.subr.bf16.mxu0 0
  %681 = vmatpush1.bf16.xpose.msra.mxu0 0
  %682 = vmatprep.subr.bf16.mxu0 0
  %683 = vmatpush1.bf16.xpose.msra.mxu0 0
  %684 = vmatprep.subr.bf16.mxu0 0
  %685 = vmatpush1.bf16.xpose.msra.mxu0 0
  %686 = vmatprep.subr.bf16.mxu0 0
  %687 = vmatpush1.bf16.xpose.msra.mxu0 0
  %688 = vmatprep.subr.bf16.mxu0 0
  %689 = vmatpush1.bf16.xpose.msra.mxu0 0
  %690 = vmatprep.mubr.bf16.mxu0 0
  %691 = vmatmul.mubr.bf16.gmra.mrb[0].mxu0 %v653
  %v692 = vpop.f32.mrb[0].mxu0
  %v693 = vadd.f32 0.0, %v692
  %v694 = vpop.f32.mrb[0].mxu0
  %v695 = vpop.f32.mrb[0].mxu0
  %v696 = vadd.f32 0.0, %v695
  %v697 = vpop.f32.mrb[0].mxu0
  %698 = vdwg.mxu0
  %v699 = vsel %vm531, -1e+09, %v693
  %v700 = vsel %vm531, -1e+09, %v696
  %v701 = vsel %vm532, %v699, -inf
  %702 = vmax.xlane.f32.xlu0 %v701
  %v703 = vpop.xlane.xlu0 %702
  %v704 = vsel %vm532, %v700, -inf
  %705 = vmax.xlane.f32.xlu0 %v704
  %v706 = vpop.xlane.xlu0 %705
  %v707 = vsub.f32 %v699, %v703
  %v708 = vsub.f32 %v700, %v706
  %v709 = vmul.f32 %v707, 1.442695
  %v710 = vpow.pop %v709
  %v711 = vmul.f32 %v708, 1.442695
  %v712 = vpow.pop %v711
  %v713 = vsel %vm532, %v710, 0.0
  %714 = vadd.xlane.f32.xlu0 %v713
  %v715 = vpop.xlane.xlu0 %714
  %v716 = vsel %vm532, %v712, 0.0
  %717 = vadd.xlane.f32.xlu0 %v716
  %v718 = vpop.xlane.xlu0 %717
  %v719 = vrcp.pop %v715
  %v720 = vrcp.pop %v718
  %v721 = vmul.f32 %v710, %v719
  %v722 = vmul.f32 %v712, %v720
  %v723 = vpack.c.bf16 %v722, %v721
  %v725 = vsel %vm532, %v723, 0
  %727 = vmatprep.subr.bf16.mxu0 0
  %728 = vmatpush1.bf16.msra.mxu0 %v525
  %729 = vmatprep.subr.bf16.mxu0 0
  %730 = vmatpush1.bf16.msra.mxu0 0
  %731 = vmatprep.subr.bf16.mxu0 0
  %732 = vmatpush1.bf16.msra.mxu0 0
  %733 = vmatprep.subr.bf16.mxu0 0
  %734 = vmatpush1.bf16.msra.mxu0 0
  %735 = vmatprep.subr.bf16.mxu0 0
  %736 = vmatpush1.bf16.msra.mxu0 0
  %737 = vmatprep.subr.bf16.mxu0 0
  %738 = vmatpush1.bf16.msra.mxu0 0
  %739 = vmatprep.subr.bf16.mxu0 0
  %740 = vmatpush1.bf16.msra.mxu0 0
  %741 = vmatprep.subr.bf16.mxu0 0
  %742 = vmatpush1.bf16.msra.mxu0 0
  %743 = vmatprep.subr.bf16.mxu0 0
  %744 = vmatpush1.bf16.msra.mxu0 0
  %745 = vmatprep.subr.bf16.mxu0 0
  %746 = vmatpush1.bf16.msra.mxu0 0
  %747 = vmatprep.subr.bf16.mxu0 0
  %748 = vmatpush1.bf16.msra.mxu0 0
  %749 = vmatprep.subr.bf16.mxu0 0
  %750 = vmatpush1.bf16.msra.mxu0 0
  %751 = vmatprep.subr.bf16.mxu0 0
  %752 = vmatpush1.bf16.msra.mxu0 0
  %753 = vmatprep.subr.bf16.mxu0 0
  %754 = vmatpush1.bf16.msra.mxu0 0
  %755 = vmatprep.subr.bf16.mxu0 0
  %756 = vmatpush1.bf16.msra.mxu0 0
  %757 = vmatprep.subr.bf16.mxu0 0
  %758 = vmatpush1.bf16.msra.mxu0 0
  %759 = vmatprep.mubr.bf16.mxu0 0
  %760 = vmatmul.mubr.bf16.gmra.mrb[0].mxu0 %v725
  %v761 = vpop.f32.mrb[0].mxu0
  %v762 = vadd.f32 0.0, %v761
  %v763 = vpop.f32.mrb[0].mxu0
  %v764 = vpop.f32.mrb[0].mxu0
  %v765 = vadd.f32 0.0, %v764
  %v766 = vpop.f32.mrb[0].mxu0
  %767 = vdwg.mxu0
  %v768 = vpack.c.bf16 %v765, %v762
  %s769 = scalar_lea.vmem %s4, 8
  %v770 = vld [vmem:[%s769] sm:$0xf]
  %v771 = vld [vmem:[%s769 + $0x4] sm:$0xf]
  %v774 = vunpack.c.l.b16 %v770
  %v775 = vunpack.c.l.b16 %v771
  %v776 = vpack.c.b16 %v775, %v774
  %v779 = vsel %vm532, %v768, 0
  %781 = vmatprep.subr.bf16.mxu0 0
  %782 = vmatpush1.bf16.msra.mxu0 %v776
  %783 = vmatprep.subr.bf16.mxu0 0
  %784 = vmatpush1.bf16.msra.mxu0 0
  %785 = vmatprep.subr.bf16.mxu0 0
  %786 = vmatpush1.bf16.msra.mxu0 0
  %787 = vmatprep.subr.bf16.mxu0 0
  %788 = vmatpush1.bf16.msra.mxu0 0
  %789 = vmatprep.subr.bf16.mxu0 0
  %790 = vmatpush1.bf16.msra.mxu0 0
  %791 = vmatprep.subr.bf16.mxu0 0
  %792 = vmatpush1.bf16.msra.mxu0 0
  %793 = vmatprep.subr.bf16.mxu0 0
  %794 = vmatpush1.bf16.msra.mxu0 0
  %795 = vmatprep.subr.bf16.mxu0 0
  %796 = vmatpush1.bf16.msra.mxu0 0
  %797 = vmatprep.subr.bf16.mxu0 0
  %798 = vmatpush1.bf16.msra.mxu0 0
  %799 = vmatprep.subr.bf16.mxu0 0
  %800 = vmatpush1.bf16.msra.mxu0 0
  %801 = vmatprep.subr.bf16.mxu0 0
  %802 = vmatpush1.bf16.msra.mxu0 0
  %803 = vmatprep.subr.bf16.mxu0 0
  %804 = vmatpush1.bf16.msra.mxu0 0
  %805 = vmatprep.subr.bf16.mxu0 0
  %806 = vmatpush1.bf16.msra.mxu0 0
  %807 = vmatprep.subr.bf16.mxu0 0
  %808 = vmatpush1.bf16.msra.mxu0 0
  %809 = vmatprep.subr.bf16.mxu0 0
  %810 = vmatpush1.bf16.msra.mxu0 0
  %811 = vmatprep.subr.bf16.mxu0 0
  %812 = vmatpush1.bf16.msra.mxu0 0
  %813 = vmatprep.mubr.bf16.mxu0 0
  %814 = vmatmul.mubr.bf16.gmra.mrb[0].mxu0 %v779
  %v815 = vpop.f32.mrb[0].mxu0
  %v816 = vadd.f32 0.0, %v815
  %v817 = vpop.f32.mrb[0].mxu0
  %v818 = vpop.f32.mrb[0].mxu0
  %v819 = vadd.f32 0.0, %v818
  %v820 = vpop.f32.mrb[0].mxu0
  %821 = vdwg.mxu0
  %v824 = vunpack.c.l.b16 %v650
  %v825 = vunpack.c.l.b16 %v651
  %v826 = vpack.c.b16 %v825, %v824
  %v829 = vsel %vm532, %v649, 0
  %831 = vmatprep.subr.bf16.mxu0 0
  %832 = vmatpush1.bf16.msra.mxu0 %v826
  %833 = vmatprep.subr.bf16.mxu0 0
  %834 = vmatpush1.bf16.msra.mxu0 0
  %835 = vmatprep.subr.bf16.mxu0 0
  %836 = vmatpush1.bf16.msra.mxu0 0
  %837 = vmatprep.subr.bf16.mxu0 0
  %838 = vmatpush1.bf16.msra.mxu0 0
  %839 = vmatprep.subr.bf16.mxu0 0
  %840 = vmatpush1.bf16.msra.mxu0 0
  %841 = vmatprep.subr.bf16.mxu0 0
  %842 = vmatpush1.bf16.msra.mxu0 0
  %843 = vmatprep.subr.bf16.mxu0 0
  %844 = vmatpush1.bf16.msra.mxu0 0
  %845 = vmatprep.subr.bf16.mxu0 0
  %846 = vmatpush1.bf16.msra.mxu0 0
  %847 = vmatprep.subr.bf16.mxu0 0
  %848 = vmatpush1.bf16.msra.mxu0 0
  %849 = vmatprep.subr.bf16.mxu0 0
  %850 = vmatpush1.bf16.msra.mxu0 0
  %851 = vmatprep.subr.bf16.mxu0 0
  %852 = vmatpush1.bf16.msra.mxu0 0
  %853 = vmatprep.subr.bf16.mxu0 0
  %854 = vmatpush1.bf16.msra.mxu0 0
  %855 = vmatprep.subr.bf16.mxu0 0
  %856 = vmatpush1.bf16.msra.mxu0 0
  %857 = vmatprep.subr.bf16.mxu0 0
  %858 = vmatpush1.bf16.msra.mxu0 0
  %859 = vmatprep.subr.bf16.mxu0 0
  %860 = vmatpush1.bf16.msra.mxu0 0
  %861 = vmatprep.subr.bf16.mxu0 0
  %862 = vmatpush1.bf16.msra.mxu0 0
  %863 = vmatprep.mubr.bf16.mxu0 0
  %864 = vmatmul.mubr.bf16.gmra.mrb[0].mxu0 %v829
  %v865 = vpop.f32.mrb[0].mxu0
  %v866 = vadd.f32 %v816, %v865
  %v867 = vpop.f32.mrb[0].mxu0
  %v868 = vpop.f32.mrb[0].mxu0
  %v869 = vadd.f32 %v819, %v868
  %v870 = vpop.f32.mrb[0].mxu0
  %871 = vdwg.mxu0
  %s872 = sld [smem:[#allocation3 + $0x1]]
  %v873 = vstv %s872
  %vm874 = vcmp.ge.s32.totalorder %v528, %v873
  %v876 = vsel %vm532, %v146, 0
  %v879 = vsel %vm532, %v222, 0
  %881 = vmatprep.subr.bf16.mxu0 0
  %882 = vmatpush1.bf16.xpose.msra.mxu0 %v879
  %883 = vmatprep.subr.bf16.mxu0 0
  %884 = vmatpush1.bf16.xpose.msra.mxu0 0
  %885 = vmatprep.subr.bf16.mxu0 0
  %886 = vmatpush1.bf16.xpose.msra.mxu0 0
  %887 = vmatprep.subr.bf16.mxu0 0
  %888 = vmatpush1.bf16.xpose.msra.mxu0 0
  %889 = vmatprep.subr.bf16.mxu0 0
  %890 = vmatpush1.bf16.xpose.msra.mxu0 0
  %891 = vmatprep.subr.bf16.mxu0 0
  %892 = vmatpush1.bf16.xpose.msra.mxu0 0
  %893 = vmatprep.subr.bf16.mxu0 0
  %894 = vmatpush1.bf16.xpose.msra.mxu0 0
  %895 = vmatprep.subr.bf16.mxu0 0
  %896 = vmatpush1.bf16.xpose.msra.mxu0 0
  %897 = vmatprep.subr.bf16.mxu0 0
  %898 = vmatpush1.bf16.xpose.msra.mxu0 0
  %899 = vmatprep.subr.bf16.mxu0 0
  %900 = vmatpush1.bf16.xpose.msra.mxu0 0
  %901 = vmatprep.subr.bf16.mxu0 0
  %902 = vmatpush1.bf16.xpose.msra.mxu0 0
  %903 = vmatprep.subr.bf16.mxu0 0
  %904 = vmatpush1.bf16.xpose.msra.mxu0 0
  %905 = vmatprep.subr.bf16.mxu0 0
  %906 = vmatpush1.bf16.xpose.msra.mxu0 0
  %907 = vmatprep.subr.bf16.mxu0 0
  %908 = vmatpush1.bf16.xpose.msra.mxu0 0
  %909 = vmatprep.subr.bf16.mxu0 0
  %910 = vmatpush1.bf16.xpose.msra.mxu0 0
  %911 = vmatprep.subr.bf16.mxu0 0
  %912 = vmatpush1.bf16.xpose.msra.mxu0 0
  %913 = vmatprep.mubr.bf16.mxu0 0
  %914 = vmatmul.mubr.bf16.gmra.mrb[0].mxu0 %v876
  %v915 = vpop.f32.mrb[0].mxu0
  %v916 = vadd.f32 0.0, %v915
  %v917 = vpop.f32.mrb[0].mxu0
  %v918 = vpop.f32.mrb[0].mxu0
  %v919 = vadd.f32 0.0, %v918
  %v920 = vpop.f32.mrb[0].mxu0
  %921 = vdwg.mxu0
  %v922 = vsel %vm874, -1e+09, %v916
  %v923 = vsel %vm874, -1e+09, %v919
  %v924 = vsel %vm532, %v922, -inf
  %925 = vmax.xlane.f32.xlu0 %v924
  %v926 = vpop.xlane.xlu0 %925
  %v927 = vsel %vm532, %v923, -inf
  %928 = vmax.xlane.f32.xlu0 %v927
  %v929 = vpop.xlane.xlu0 %928
  %v930 = vsub.f32 %v922, %v926
  %v931 = vsub.f32 %v923, %v929
  %v932 = vmul.f32 %v930, 1.442695
  %v933 = vpow.pop %v932
  %v934 = vmul.f32 %v931, 1.442695
  %v935 = vpow.pop %v934
  %v936 = vsel %vm532, %v933, 0.0
  %937 = vadd.xlane.f32.xlu0 %v936
  %v938 = vpop.xlane.xlu0 %937
  %v939 = vsel %vm532, %v935, 0.0
  %940 = vadd.xlane.f32.xlu0 %v939
  %v941 = vpop.xlane.xlu0 %940
  %v942 = vrcp.pop %v938
  %v943 = vrcp.pop %v941
  %v944 = vmul.f32 %v933, %v942
  %v945 = vmul.f32 %v935, %v943
  %v946 = vpack.c.bf16 %v945, %v944
  %v948 = vsel %vm532, %v946, 0
  %950 = vmatprep.subr.bf16.mxu0 0
  %951 = vmatpush1.bf16.msra.mxu0 %v298
  %952 = vmatprep.subr.bf16.mxu0 0
  %953 = vmatpush1.bf16.msra.mxu0 0
  %954 = vmatprep.subr.bf16.mxu0 0
  %955 = vmatpush1.bf16.msra.mxu0 0
  %956 = vmatprep.subr.bf16.mxu0 0
  %957 = vmatpush1.bf16.msra.mxu0 0
  %958 = vmatprep.subr.bf16.mxu0 0
  %959 = vmatpush1.bf16.msra.mxu0 0
  %960 = vmatprep.subr.bf16.mxu0 0
  %961 = vmatpush1.bf16.msra.mxu0 0
  %962 = vmatprep.subr.bf16.mxu0 0
  %963 = vmatpush1.bf16.msra.mxu0 0
  %964 = vmatprep.subr.bf16.mxu0 0
  %965 = vmatpush1.bf16.msra.mxu0 0
  %966 = vmatprep.subr.bf16.mxu0 0
  %967 = vmatpush1.bf16.msra.mxu0 0
  %968 = vmatprep.subr.bf16.mxu0 0
  %969 = vmatpush1.bf16.msra.mxu0 0
  %970 = vmatprep.subr.bf16.mxu0 0
  %971 = vmatpush1.bf16.msra.mxu0 0
  %972 = vmatprep.subr.bf16.mxu0 0
  %973 = vmatpush1.bf16.msra.mxu0 0
  %974 = vmatprep.subr.bf16.mxu0 0
  %975 = vmatpush1.bf16.msra.mxu0 0
  %976 = vmatprep.subr.bf16.mxu0 0
  %977 = vmatpush1.bf16.msra.mxu0 0
  %978 = vmatprep.subr.bf16.mxu0 0
  %979 = vmatpush1.bf16.msra.mxu0 0
  %980 = vmatprep.subr.bf16.mxu0 0
  %981 = vmatpush1.bf16.msra.mxu0 0
  %982 = vmatprep.mubr.bf16.mxu0 0
  %983 = vmatmul.mubr.bf16.gmra.mrb[0].mxu0 %v948
  %v984 = vpop.f32.mrb[0].mxu0
  %v985 = vadd.f32 0.0, %v984
  %v986 = vpop.f32.mrb[0].mxu0
  %v987 = vpop.f32.mrb[0].mxu0
  %v988 = vadd.f32 0.0, %v987
  %v989 = vpop.f32.mrb[0].mxu0
  %990 = vdwg.mxu0
  %v991 = vpack.c.bf16 %v988, %v985
  %v993 = vsel %vm532, %v374, 0
  %v996 = vsel %vm532, %v450, 0
  %998 = vmatprep.subr.bf16.mxu0 0
  %999 = vmatpush1.bf16.xpose.msra.mxu0 %v996
  %1000 = vmatprep.subr.bf16.mxu0 0
  %1001 = vmatpush1.bf16.xpose.msra.mxu0 0
  %1002 = vmatprep.subr.bf16.mxu0 0
  %1003 = vmatpush1.bf16.xpose.msra.mxu0 0
  %1004 = vmatprep.subr.bf16.mxu0 0
  %1005 = vmatpush1.bf16.xpose.msra.mxu0 0
  %1006 = vmatprep.subr.bf16.mxu0 0
  %1007 = vmatpush1.bf16.xpose.msra.mxu0 0
  %1008 = vmatprep.subr.bf16.mxu0 0
  %1009 = vmatpush1.bf16.xpose.msra.mxu0 0
  %1010 = vmatprep.subr.bf16.mxu0 0
  %1011 = vmatpush1.bf16.xpose.msra.mxu0 0
  %1012 = vmatprep.subr.bf16.mxu0 0
  %1013 = vmatpush1.bf16.xpose.msra.mxu0 0
  %1014 = vmatprep.subr.bf16.mxu0 0
  %1015 = vmatpush1.bf16.xpose.msra.mxu0 0
  %1016 = vmatprep.subr.bf16.mxu0 0
  %1017 = vmatpush1.bf16.xpose.msra.mxu0 0
  %1018 = vmatprep.subr.bf16.mxu0 0
  %1019 = vmatpush1.bf16.xpose.msra.mxu0 0
  %1020 = vmatprep.subr.bf16.mxu0 0
  %1021 = vmatpush1.bf16.xpose.msra.mxu0 0
  %1022 = vmatprep.subr.bf16.mxu0 0
  %1023 = vmatpush1.bf16.xpose.msra.mxu0 0
  %1024 = vmatprep.subr.bf16.mxu0 0
  %1025 = vmatpush1.bf16.xpose.msra.mxu0 0
  %1026 = vmatprep.subr.bf16.mxu0 0
  %1027 = vmatpush1.bf16.xpose.msra.mxu0 0
  %1028 = vmatprep.subr.bf16.mxu0 0
  %1029 = vmatpush1.bf16.xpose.msra.mxu0 0
  %1030 = vmatprep.mubr.bf16.mxu0 0
  %1031 = vmatmul.mubr.bf16.gmra.mrb[0].mxu0 %v993
  %v1032 = vpop.f32.mrb[0].mxu0
  %v1033 = vadd.f32 0.0, %v1032
  %v1034 = vpop.f32.mrb[0].mxu0
  %v1035 = vpop.f32.mrb[0].mxu0
  %v1036 = vadd.f32 0.0, %v1035
  %v1037 = vpop.f32.mrb[0].mxu0
  %1038 = vdwg.mxu0
  %v1039 = vsel %vm874, -1e+09, %v1033
  %v1040 = vsel %vm874, -1e+09, %v1036
  %v1041 = vsel %vm532, %v1039, -inf
  %1042 = vmax.xlane.f32.xlu0 %v1041
  %v1043 = vpop.xlane.xlu0 %1042
  %v1044 = vsel %vm532, %v1040, -inf
  %1045 = vmax.xlane.f32.xlu0 %v1044
  %v1046 = vpop.xlane.xlu0 %1045
  %v1047 = vsub.f32 %v1039, %v1043
  %v1048 = vsub.f32 %v1040, %v1046
  %v1049 = vmul.f32 %v1047, 1.442695
  %v1050 = vpow.pop %v1049
  %v1051 = vmul.f32 %v1048, 1.442695
  %v1052 = vpow.pop %v1051
  %v1053 = vsel %vm532, %v1050, 0.0
  %1054 = vadd.xlane.f32.xlu0 %v1053
  %v1055 = vpop.xlane.xlu0 %1054
  %v1056 = vsel %vm532, %v1052, 0.0
  %1057 = vadd.xlane.f32.xlu0 %v1056
  %v1058 = vpop.xlane.xlu0 %1057
  %v1059 = vrcp.pop %v1055
  %v1060 = vrcp.pop %v1058
  %v1061 = vmul.f32 %v1050, %v1059
  %v1062 = vmul.f32 %v1052, %v1060
  %v1063 = vpack.c.bf16 %v1062, %v1061
  %v1065 = vsel %vm532, %v1063, 0
  %1067 = vmatprep.subr.bf16.mxu0 0
  %1068 = vmatpush1.bf16.msra.mxu0 %v526
  %1069 = vmatprep.subr.bf16.mxu0 0
  %1070 = vmatpush1.bf16.msra.mxu0 0
  %1071 = vmatprep.subr.bf16.mxu0 0
  %1072 = vmatpush1.bf16.msra.mxu0 0
  %1073 = vmatprep.subr.bf16.mxu0 0
  %1074 = vmatpush1.bf16.msra.mxu0 0
  %1075 = vmatprep.subr.bf16.mxu0 0
  %1076 = vmatpush1.bf16.msra.mxu0 0
  %1077 = vmatprep.subr.bf16.mxu0 0
  %1078 = vmatpush1.bf16.msra.mxu0 0
  %1079 = vmatprep.subr.bf16.mxu0 0
  %1080 = vmatpush1.bf16.msra.mxu0 0
  %1081 = vmatprep.subr.bf16.mxu0 0
  %1082 = vmatpush1.bf16.msra.mxu0 0
  %1083 = vmatprep.subr.bf16.mxu0 0
  %1084 = vmatpush1.bf16.msra.mxu0 0
  %1085 = vmatprep.subr.bf16.mxu0 0
  %1086 = vmatpush1.bf16.msra.mxu0 0
  %1087 = vmatprep.subr.bf16.mxu0 0
  %1088 = vmatpush1.bf16.msra.mxu0 0
  %1089 = vmatprep.subr.bf16.mxu0 0
  %1090 = vmatpush1.bf16.msra.mxu0 0
  %1091 = vmatprep.subr.bf16.mxu0 0
  %1092 = vmatpush1.bf16.msra.mxu0 0
  %1093 = vmatprep.subr.bf16.mxu0 0
  %1094 = vmatpush1.bf16.msra.mxu0 0
  %1095 = vmatprep.subr.bf16.mxu0 0
  %1096 = vmatpush1.bf16.msra.mxu0 0
  %1097 = vmatprep.subr.bf16.mxu0 0
  %1098 = vmatpush1.bf16.msra.mxu0 0
  %1099 = vmatprep.mubr.bf16.mxu0 0
  %1100 = vmatmul.mubr.bf16.gmra.mrb[0].mxu0 %v1065
  %v1101 = vpop.f32.mrb[0].mxu0
  %v1102 = vadd.f32 0.0, %v1101
  %v1103 = vpop.f32.mrb[0].mxu0
  %v1104 = vpop.f32.mrb[0].mxu0
  %v1105 = vadd.f32 0.0, %v1104
  %v1106 = vpop.f32.mrb[0].mxu0
  %1107 = vdwg.mxu0
  %v1108 = vpack.c.bf16 %v1105, %v1102
  %v1110 = vsel %vm532, %v1108, 0
  %1112 = vmatprep.subr.bf16.mxu0 0
  %1113 = vmatpush1.bf16.msra.mxu0 %v776
  %1114 = vmatprep.subr.bf16.mxu0 0
  %1115 = vmatpush1.bf16.msra.mxu0 0
  %1116 = vmatprep.subr.bf16.mxu0 0
  %1117 = vmatpush1.bf16.msra.mxu0 0
  %1118 = vmatprep.subr.bf16.mxu0 0
  %1119 = vmatpush1.bf16.msra.mxu0 0
  %1120 = vmatprep.subr.bf16.mxu0 0
  %1121 = vmatpush1.bf16.msra.mxu0 0
  %1122 = vmatprep.subr.bf16.mxu0 0
  %1123 = vmatpush1.bf16.msra.mxu0 0
  %1124 = vmatprep.subr.bf16.mxu0 0
  %1125 = vmatpush1.bf16.msra.mxu0 0
  %1126 = vmatprep.subr.bf16.mxu0 0
  %1127 = vmatpush1.bf16.msra.mxu0 0
  %1128 = vmatprep.subr.bf16.mxu0 0
  %1129 = vmatpush1.bf16.msra.mxu0 0
  %1130 = vmatprep.subr.bf16.mxu0 0
  %1131 = vmatpush1.bf16.msra.mxu0 0
  %1132 = vmatprep.subr.bf16.mxu0 0
  %1133 = vmatpush1.bf16.msra.mxu0 0
  %1134 = vmatprep.subr.bf16.mxu0 0
  %1135 = vmatpush1.bf16.msra.mxu0 0
  %1136 = vmatprep.subr.bf16.mxu0 0
  %1137 = vmatpush1.bf16.msra.mxu0 0
  %1138 = vmatprep.subr.bf16.mxu0 0
  %1139 = vmatpush1.bf16.msra.mxu0 0
  %1140 = vmatprep.subr.bf16.mxu0 0
  %1141 = vmatpush1.bf16.msra.mxu0 0
  %1142 = vmatprep.subr.bf16.mxu0 0
  %1143 = vmatpush1.bf16.msra.mxu0 0
  %1144 = vmatprep.mubr.bf16.mxu0 0
  %1145 = vmatmul.mubr.bf16.gmra.mrb[0].mxu0 %v1110
  %v1146 = vpop.f32.mrb[0].mxu0
  %v1147 = vadd.f32 0.0, %v1146
  %v1148 = vpop.f32.mrb[0].mxu0
  %v1149 = vpop.f32.mrb[0].mxu0
  %v1150 = vadd.f32 0.0, %v1149
  %v1151 = vpop.f32.mrb[0].mxu0
  %1152 = vdwg.mxu0
  %v1154 = vsel %vm532, %v991, 0
  %1156 = vmatprep.subr.bf16.mxu0 0
  %1157 = vmatpush1.bf16.msra.mxu0 %v826
  %1158 = vmatprep.subr.bf16.mxu0 0
  %1159 = vmatpush1.bf16.msra.mxu0 0
  %1160 = vmatprep.subr.bf16.mxu0 0
  %1161 = vmatpush1.bf16.msra.mxu0 0
  %1162 = vmatprep.subr.bf16.mxu0 0
  %1163 = vmatpush1.bf16.msra.mxu0 0
  %1164 = vmatprep.subr.bf16.mxu0 0
  %1165 = vmatpush1.bf16.msra.mxu0 0
  %1166 = vmatprep.subr.bf16.mxu0 0
  %1167 = vmatpush1.bf16.msra.mxu0 0
  %1168 = vmatprep.subr.bf16.mxu0 0
  %1169 = vmatpush1.bf16.msra.mxu0 0
  %1170 = vmatprep.subr.bf16.mxu0 0
  %1171 = vmatpush1.bf16.msra.mxu0 0
  %1172 = vmatprep.subr.bf16.mxu0 0
  %1173 = vmatpush1.bf16.msra.mxu0 0
  %1174 = vmatprep.subr.bf16.mxu0 0
  %1175 = vmatpush1.bf16.msra.mxu0 0
  %1176 = vmatprep.subr.bf16.mxu0 0
  %1177 = vmatpush1.bf16.msra.mxu0 0
  %1178 = vmatprep.subr.bf16.mxu0 0
  %1179 = vmatpush1.bf16.msra.mxu0 0
  %1180 = vmatprep.subr.bf16.mxu0 0
  %1181 = vmatpush1.bf16.msra.mxu0 0
  %1182 = vmatprep.subr.bf16.mxu0 0
  %1183 = vmatpush1.bf16.msra.mxu0 0
  %1184 = vmatprep.subr.bf16.mxu0 0
  %1185 = vmatpush1.bf16.msra.mxu0 0
  %1186 = vmatprep.subr.bf16.mxu0 0
  %1187 = vmatpush1.bf16.msra.mxu0 0
  %1188 = vmatprep.mubr.bf16.mxu0 0
  %1189 = vmatmul.mubr.bf16.gmra.mrb[0].mxu0 %v1154
  %v1190 = vpop.f32.mrb[0].mxu0
  %v1191 = vadd.f32 %v1147, %v1190
  %v1192 = vpop.f32.mrb[0].mxu0
  %v1193 = vpop.f32.mrb[0].mxu0
  %v1194 = vadd.f32 %v1150, %v1193
  %v1195 = vpop.f32.mrb[0].mxu0
  %1196 = vdwg.mxu0
  %v1197 = vld [vmem:[%s5] sm:$0x1]
  %v1199 = vlaneseq
  %v1200 = vshrl.u32 %v1199, 7
  %v1201 = vsub.s32 0, %v1200
  %v1202 = vrot.slane %v1197, %v1201
  %v1204 = vadd.f32 %v866, %v1202
  %v1205 = vadd.f32 %v869, %v1202
  %v1206 = vadd.f32 %v1191, %v1202
  %v1207 = vadd.f32 %v1194, %v1202
  %v1208 = vunpack.c.l.bf16 %v52
  %v1209 = vunpack.c.l.bf16 %v53
  %v1210 = vunpack.c.l.bf16 %v54
  %v1211 = vunpack.c.l.bf16 %v55
  %v1212 = vadd.f32 %v1208, %v1204
  %v1213 = vadd.f32 %v1209, %v1205
  %v1214 = vadd.f32 %v1210, %v1206
  %v1215 = vadd.f32 %v1211, %v1207
  %v1216 = vld [vmem:[%s6] sm:$0x1]
  %v1217 = vld [vmem:[%s7] sm:$0x1]
  %v1218 = vsel %vm89, %v1212, 0.0
  %1219 = vadd.xlane.f32.xlu0 %v1218
  %v1220 = vpop.xlane.xlu0 %1219
  %v1221 = vsel %vm89, %v1213, 0.0
  %1222 = vadd.xlane.f32.xlu0 %v1221
  %v1223 = vpop.xlane.xlu0 %1222
  %v1224 = vsel %vm89, %v1214, 0.0
  %1225 = vadd.xlane.f32.xlu0 %v1224
  %v1226 = vpop.xlane.xlu0 %1225
  %v1227 = vsel %vm89, %v1215, 0.0
  %1228 = vadd.xlane.f32.xlu0 %v1227
  %v1229 = vpop.xlane.xlu0 %1228
  %v1230 = vrcp.pop 32.0
  %v1231 = vmul.f32 %v1220, %v1230
  %v1232 = vmul.f32 %v1223, %v1230
  %v1233 = vmul.f32 %v1226, %v1230
  %v1234 = vmul.f32 %v1229, %v1230
  %v1235 = vsub.f32 %v1212, %v1231
  %v1236 = vsub.f32 %v1213, %v1232
  %v1237 = vsub.f32 %v1214, %v1233
  %v1238 = vsub.f32 %v1215, %v1234
  %v1239 = vmul.f32 %v1235, %v1235
  %v1240 = vmul.f32 %v1236, %v1236
  %v1241 = vmul.f32 %v1237, %v1237
  %v1242 = vmul.f32 %v1238, %v1238
  %v1243 = vsel %vm89, %v1239, 0.0
  %1244 = vadd.xlane.f32.xlu0 %v1243
  %v1245 = vpop.xlane.xlu0 %1244
  %v1246 = vsel %vm89, %v1240, 0.0
  %1247 = vadd.xlane.f32.xlu0 %v1246
  %v1248 = vpop.xlane.xlu0 %1247
  %v1249 = vsel %vm89, %v1241, 0.0
  %1250 = vadd.xlane.f32.xlu0 %v1249
  %v1251 = vpop.xlane.xlu0 %1250
  %v1252 = vsel %vm89, %v1242, 0.0
  %1253 = vadd.xlane.f32.xlu0 %v1252
  %v1254 = vpop.xlane.xlu0 %1253
  %v1255 = vmul.f32 %v1245, %v1230
  %v1256 = vmul.f32 %v1248, %v1230
  %v1257 = vmul.f32 %v1251, %v1230
  %v1258 = vmul.f32 %v1254, %v1230
  %v1259 = vadd.f32 %v1255, 1e-05
  %v1260 = vadd.f32 %v1256, 1e-05
  %v1261 = vadd.f32 %v1257, 1e-05
  %v1262 = vadd.f32 %v1258, 1e-05
  %v1263 = vrsqrt.pop %v1259
  %v1264 = vrsqrt.pop %v1260
  %v1265 = vrsqrt.pop %v1261
  %v1266 = vrsqrt.pop %v1262
  %v1267 = vmul.f32 %v1235, %v1263
  %v1268 = vmul.f32 %v1236, %v1264
  %v1269 = vmul.f32 %v1237, %v1265
  %v1270 = vmul.f32 %v1238, %v1266
  %v1272 = vlaneseq
  %v1273 = vshrl.u32 %v1272, 7
  %v1274 = vsub.s32 0, %v1273
  %v1275 = vrot.slane %v1216, %v1274
  %v1277 = vmul.f32 %v1267, %v1275
  %v1278 = vmul.f32 %v1268, %v1275
  %v1279 = vmul.f32 %v1269, %v1275
  %v1280 = vmul.f32 %v1270, %v1275
  %v1282 = vlaneseq
  %v1283 = vshrl.u32 %v1282, 7
  %v1284 = vsub.s32 0, %v1283
  %v1285 = vrot.slane %v1217, %v1284
  %v1287 = vadd.f32 %v1277, %v1285
  %v1288 = vadd.f32 %v1278, %v1285
  %v1289 = vadd.f32 %v1279, %v1285
  %v1290 = vadd.f32 %v1280, %v1285
  %v1291 = vpack.c.bf16 %v1288, %v1287
  %v1292 = vpack.c.bf16 %v1290, %v1289
  %v1293 = vld [vmem:[%s8] sm:$0xf]
  %v1294 = vld [vmem:[%s8 + $0x4] sm:$0xf]
  %v1295 = vld [vmem:[%s8 + $0x8] sm:$0xf]
  %v1296 = vld [vmem:[%s8 + $0xc] sm:$0xf]
  %v1297 = vld [vmem:[%s9] sm:$0x1]
  %v1299 = vlaneseq
  %v1300 = vshrl.u32 %v1299, 7
  %v1301 = vsub.s32 0, %v1300
  %v1302 = vrot.slane %v1297, %v1301
  %v1308 = vunpack.c.l.b16 %v1293
  %v1309 = vunpack.c.l.b16 %v1294
  %v1310 = vunpack.c.l.b16 %v1295
  %v1311 = vunpack.c.l.b16 %v1296
  %v1312 = vpack.c.b16 %v1309, %v1308
  %v1313 = vpack.c.b16 %v1311, %v1310
  %v1317 = vsel %vm89, %v1291, 0
  %v1320 = vsel %vm89, %v1292, 0
  %1322 = vmatprep.subr.bf16.mxu0 0
  %1323 = vmatpush1.bf16.msra.mxu0 %v1312
  %1324 = vmatprep.subr.bf16.mxu0 0
  %1325 = vmatpush1.bf16.msra.mxu0 %v1313
  %1326 = vmatprep.subr.bf16.mxu0 0
  %1327 = vmatpush1.bf16.msra.mxu0 0
  %1328 = vmatprep.subr.bf16.mxu0 0
  %1329 = vmatpush1.bf16.msra.mxu0 0
  %1330 = vmatprep.subr.bf16.mxu0 0
  %1331 = vmatpush1.bf16.msra.mxu0 0
  %1332 = vmatprep.subr.bf16.mxu0 0
  %1333 = vmatpush1.bf16.msra.mxu0 0
  %1334 = vmatprep.subr.bf16.mxu0 0
  %1335 = vmatpush1.bf16.msra.mxu0 0
  %1336 = vmatprep.subr.bf16.mxu0 0
  %1337 = vmatpush1.bf16.msra.mxu0 0
  %1338 = vmatprep.subr.bf16.mxu0 0
  %1339 = vmatpush1.bf16.msra.mxu0 0
  %1340 = vmatprep.subr.bf16.mxu0 0
  %1341 = vmatpush1.bf16.msra.mxu0 0
  %1342 = vmatprep.subr.bf16.mxu0 0
  %1343 = vmatpush1.bf16.msra.mxu0 0
  %1344 = vmatprep.subr.bf16.mxu0 0
  %1345 = vmatpush1.bf16.msra.mxu0 0
  %1346 = vmatprep.subr.bf16.mxu0 0
  %1347 = vmatpush1.bf16.msra.mxu0 0
  %1348 = vmatprep.subr.bf16.mxu0 0
  %1349 = vmatpush1.bf16.msra.mxu0 0
  %1350 = vmatprep.subr.bf16.mxu0 0
  %1351 = vmatpush1.bf16.msra.mxu0 0
  %1352 = vmatprep.subr.bf16.mxu0 0
  %1353 = vmatpush1.bf16.msra.mxu0 0
  %1354 = vmatprep.mubr.bf16.mxu0 0
  %1355 = vmatmul.mubr.bf16.gmra.mrb[0].mxu0 %v1317
  %v1356 = vpop.f32.mrb[0].mxu0
  %v1357 = vadd.f32 %v1302, %v1356
  %v1358 = vpop.f32.mrb[0].mxu0
  %v1359 = vpop.f32.mrb[0].mxu0
  %v1360 = vadd.f32 %v1302, %v1359
  %v1361 = vpop.f32.mrb[0].mxu0
  %1362 = vmatprep.mubr.bf16.mxu0 0
  %1363 = vmatmul.mubr.bf16.gmra.mrb[0].mxu0 %v1320
  %v1364 = vpop.f32.mrb[0].mxu0
  %v1365 = vadd.f32 %v1302, %v1364
  %v1366 = vpop.f32.mrb[0].mxu0
  %v1367 = vpop.f32.mrb[0].mxu0
  %v1368 = vadd.f32 %v1302, %v1367
  %v1369 = vpop.f32.mrb[0].mxu0
  %1370 = vdwg.mxu0
  %v1371 = vmax.f32 %v1357, 0.0
  %v1372 = vmax.f32 %v1360, 0.0
  %v1373 = vmax.f32 %v1365, 0.0
  %v1374 = vmax.f32 %v1368, 0.0
  %v1375 = vpack.c.bf16 %v1372, %v1371
  %v1376 = vpack.c.bf16 %v1374, %v1373
  %v1377 = vld [vmem:[%s10] sm:$0xf]
  %v1378 = vld [vmem:[%s10 + $0x4] sm:$0xf]
  %v1379 = vld [vmem:[%s10 + $0x8] sm:$0xf]
  %v1380 = vld [vmem:[%s10 + $0xc] sm:$0xf]
  %v1381 = vld [vmem:[%s10 + $0x10] sm:$0xf]
  %v1382 = vld [vmem:[%s10 + $0x14] sm:$0xf]
  %v1383 = vld [vmem:[%s10 + $0x18] sm:$0xf]
  %v1384 = vld [vmem:[%s10 + $0x1c] sm:$0xf]
  %v1385 = vld [vmem:[%s10 + $0x20] sm:$0xf]
  %v1386 = vld [vmem:[%s10 + $0x24] sm:$0xf]
  %v1387 = vld [vmem:[%s10 + $0x28] sm:$0xf]
  %v1388 = vld [vmem:[%s10 + $0x2c] sm:$0xf]
  %v1389 = vld [vmem:[%s10 + $0x30] sm:$0xf]
  %v1390 = vld [vmem:[%s10 + $0x34] sm:$0xf]
  %v1391 = vld [vmem:[%s10 + $0x38] sm:$0xf]
  %v1392 = vld [vmem:[%s10 + $0x3c] sm:$0xf]
  %v1393 = vld [vmem:[%s11] sm:$0x1]
  %v1395 = vlaneseq
  %v1396 = vshrl.u32 %v1395, 7
  %v1397 = vsub.s32 0, %v1396
  %v1398 = vrot.slane %v1393, %v1397
  %v1416 = vunpack.c.l.b16 %v1377
  %v1417 = vunpack.c.l.b16 %v1378
  %v1418 = vunpack.c.l.b16 %v1379
  %v1419 = vunpack.c.l.b16 %v1380
  %v1420 = vunpack.c.l.b16 %v1381
  %v1421 = vunpack.c.l.b16 %v1382
  %v1422 = vunpack.c.l.b16 %v1383
  %v1423 = vunpack.c.l.b16 %v1384
  %v1424 = vunpack.c.l.b16 %v1385
  %v1425 = vunpack.c.l.b16 %v1386
  %v1426 = vunpack.c.l.b16 %v1387
  %v1427 = vunpack.c.l.b16 %v1388
  %v1428 = vunpack.c.l.b16 %v1389
  %v1429 = vunpack.c.l.b16 %v1390
  %v1430 = vunpack.c.l.b16 %v1391
  %v1431 = vunpack.c.l.b16 %v1392
  %v1432 = vpack.c.b16 %v1417, %v1416
  %v1433 = vpack.c.b16 %v1419, %v1418
  %v1434 = vpack.c.b16 %v1421, %v1420
  %v1435 = vpack.c.b16 %v1423, %v1422
  %v1436 = vpack.c.b16 %v1425, %v1424
  %v1437 = vpack.c.b16 %v1427, %v1426
  %v1438 = vpack.c.b16 %v1429, %v1428
  %v1439 = vpack.c.b16 %v1431, %v1430
  %1448 = vmatprep.subr.bf16.mxu0 0
  %1449 = vmatpush1.bf16.msra.mxu0 %v1432
  %1450 = vmatprep.subr.bf16.mxu0 0
  %1451 = vmatpush1.bf16.msra.mxu0 %v1433
  %1452 = vmatprep.subr.bf16.mxu0 0
  %1453 = vmatpush1.bf16.msra.mxu0 %v1434
  %1454 = vmatprep.subr.bf16.mxu0 0
  %1455 = vmatpush1.bf16.msra.mxu0 %v1435
  %1456 = vmatprep.subr.bf16.mxu0 0
  %1457 = vmatpush1.bf16.msra.mxu0 %v1436
  %1458 = vmatprep.subr.bf16.mxu0 0
  %1459 = vmatpush1.bf16.msra.mxu0 %v1437
  %1460 = vmatprep.subr.bf16.mxu0 0
  %1461 = vmatpush1.bf16.msra.mxu0 %v1438
  %1462 = vmatprep.subr.bf16.mxu0 0
  %1463 = vmatpush1.bf16.msra.mxu0 %v1439
  %1464 = vmatprep.subr.bf16.mxu0 0
  %1465 = vmatpush1.bf16.msra.mxu0 0
  %1466 = vmatprep.subr.bf16.mxu0 0
  %1467 = vmatpush1.bf16.msra.mxu0 0
  %1468 = vmatprep.subr.bf16.mxu0 0
  %1469 = vmatpush1.bf16.msra.mxu0 0
  %1470 = vmatprep.subr.bf16.mxu0 0
  %1471 = vmatpush1.bf16.msra.mxu0 0
  %1472 = vmatprep.subr.bf16.mxu0 0
  %1473 = vmatpush1.bf16.msra.mxu0 0
  %1474 = vmatprep.subr.bf16.mxu0 0
  %1475 = vmatpush1.bf16.msra.mxu0 0
  %1476 = vmatprep.subr.bf16.mxu0 0
  %1477 = vmatpush1.bf16.msra.mxu0 0
  %1478 = vmatprep.subr.bf16.mxu0 0
  %1479 = vmatpush1.bf16.msra.mxu0 0
  %1480 = vmatprep.mubr.bf16.mxu0 0
  %1481 = vmatmul.mubr.bf16.gmra.mrb[0].mxu0 %v1375
  %v1482 = vpop.f32.mrb[0].mxu0
  %v1483 = vadd.f32 %v1398, %v1482
  %v1484 = vpop.f32.mrb[0].mxu0
  %v1485 = vpop.f32.mrb[0].mxu0
  %v1486 = vadd.f32 %v1398, %v1485
  %v1487 = vpop.f32.mrb[0].mxu0
  %1488 = vmatprep.mubr.bf16.mxu0 0
  %1489 = vmatmul.mubr.bf16.gmra.mrb[0].mxu0 %v1376
  %v1490 = vpop.f32.mrb[0].mxu0
  %v1491 = vadd.f32 %v1398, %v1490
  %v1492 = vpop.f32.mrb[0].mxu0
  %v1493 = vpop.f32.mrb[0].mxu0
  %v1494 = vadd.f32 %v1398, %v1493
  %v1495 = vpop.f32.mrb[0].mxu0
  %1496 = vdwg.mxu0
  %v1497 = vadd.f32 %v1287, %v1483
  %v1498 = vadd.f32 %v1288, %v1486
  %v1499 = vadd.f32 %v1289, %v1491
  %v1500 = vadd.f32 %v1290, %v1494
  %v1501 = vld [vmem:[%s12] sm:$0x1]
  %v1502 = vld [vmem:[%s13] sm:$0x1]
  %v1503 = vsel %vm89, %v1497, 0.0
  %1504 = vadd.xlane.f32.xlu0 %v1503
  %v1505 = vpop.xlane.xlu0 %1504
  %v1506 = vsel %vm89, %v1498, 0.0
  %1507 = vadd.xlane.f32.xlu0 %v1506
  %v1508 = vpop.xlane.xlu0 %1507
  %v1509 = vsel %vm89, %v1499, 0.0
  %1510 = vadd.xlane.f32.xlu0 %v1509
  %v1511 = vpop.xlane.xlu0 %1510
  %v1512 = vsel %vm89, %v1500, 0.0
  %1513 = vadd.xlane.f32.xlu0 %v1512
  %v1514 = vpop.xlane.xlu0 %1513
  %v1515 = vmul.f32 %v1505, %v1230
  %v1516 = vmul.f32 %v1508, %v1230
  %v1517 = vmul.f32 %v1511, %v1230
  %v1518 = vmul.f32 %v1514, %v1230
  %v1519 = vsub.f32 %v1497, %v1515
  %v1520 = vsub.f32 %v1498, %v1516
  %v1521 = vsub.f32 %v1499, %v1517
  %v1522 = vsub.f32 %v1500, %v1518
  %v1523 = vmul.f32 %v1519, %v1519
  %v1524 = vmul.f32 %v1520, %v1520
  %v1525 = vmul.f32 %v1521, %v1521
  %v1526 = vmul.f32 %v1522, %v1522
  %v1527 = vsel %vm89, %v1523, 0.0
  %1528 = vadd.xlane.f32.xlu0 %v1527
  %v1529 = vpop.xlane.xlu0 %1528
  %v1530 = vsel %vm89, %v1524, 0.0
  %1531 = vadd.xlane.f32.xlu0 %v1530
  %v1532 = vpop.xlane.xlu0 %1531
  %v1533 = vsel %vm89, %v1525, 0.0
  %1534 = vadd.xlane.f32.xlu0 %v1533
  %v1535 = vpop.xlane.xlu0 %1534
  %v1536 = vsel %vm89, %v1526, 0.0
  %1537 = vadd.xlane.f32.xlu0 %v1536
  %v1538 = vpop.xlane.xlu0 %1537
  %v1539 = vmul.f32 %v1529, %v1230
  %v1540 = vmul.f32 %v1532, %v1230
  %v1541 = vmul.f32 %v1535, %v1230
  %v1542 = vmul.f32 %v1538, %v1230
  %v1543 = vadd.f32 %v1539, 1e-05
  %v1544 = vadd.f32 %v1540, 1e-05
  %v1545 = vadd.f32 %v1541, 1e-05
  %v1546 = vadd.f32 %v1542, 1e-05
  %v1547 = vrsqrt.pop %v1543
  %v1548 = vrsqrt.pop %v1544
  %v1549 = vrsqrt.pop %v1545
  %v1550 = vrsqrt.pop %v1546
  %v1551 = vmul.f32 %v1519, %v1547
  %v1552 = vmul.f32 %v1520, %v1548
  %v1553 = vmul.f32 %v1521, %v1549
  %v1554 = vmul.f32 %v1522, %v1550
  %v1556 = vlaneseq
  %v1557 = vshrl.u32 %v1556, 7
  %v1558 = vsub.s32 0, %v1557
  %v1559 = vrot.slane %v1501, %v1558
  %v1561 = vmul.f32 %v1551, %v1559
  %v1562 = vmul.f32 %v1552, %v1559
  %v1563 = vmul.f32 %v1553, %v1559
  %v1564 = vmul.f32 %v1554, %v1559
  %v1566 = vlaneseq
  %v1567 = vshrl.u32 %v1566, 7
  %v1568 = vsub.s32 0, %v1567
  %v1569 = vrot.slane %v1502, %v1568
  %v1571 = vadd.f32 %v1561, %v1569
  %v1572 = vadd.f32 %v1562, %v1569
  %v1573 = vadd.f32 %v1563, %v1569
  %v1574 = vadd.f32 %v1564, %v1569
  %v1575 = vpack.c.bf16 %v1572, %v1571
  %v1576 = vpack.c.bf16 %v1574, %v1573
  %v1579 = vunpack.c.l.b16 %v1575
  %v1580 = vunpack.c.h.b16 %v1575
  %v1581 = vunpack.c.l.b16 %v1576
  %v1582 = vunpack.c.h.b16 %v1576
  %v1583 = vpack.c.b16 %v1579, %v1579
  %v1584 = vpack.c.b16 %v1580, %v1580
  %v1585 = vpack.c.b16 %v1581, %v1581
  %v1586 = vpack.c.b16 %v1582, %v1582
  %vm1591 = vcmask 257024
  %1592 = vst.msk [vmem:[%s14] sm:$0xf] %vm1591, %v1583
  %1593 = vst.msk [vmem:[%s14 + $0x4] sm:$0xf] %vm1591, %v1584
  %1594 = vst.msk [vmem:[%s14 + $0x8] sm:$0xf] %vm1591, %v1585
  %1595 = vst.msk [vmem:[%s14 + $0xc] sm:$0xf] %vm1591, %v1586
  // Predicated region
  $region54: #{flick_forward.7} parent=0 // pred_check
    _
  $region55: #{flick_forward.7} parent=0 // pred_check_branch
    %1597 = sbr.rel (0) target = $region57
  $region56: #{flick_forward.7} parent=0 // pred_region
    _
  $region57: #{flick_forward.7} parent=0 // pred_fallthru
    _
  // Predicated region
  $region58: #{flick_forward.7} parent=0 // pred_check
    _
  $region59: #{flick_forward.7} parent=0 // pred_check_branch
    %1599 = sbr.rel (0) target = $region61
  $region60: #{flick_forward.7} parent=0 // pred_region
    _
  $region61: #{flick_forward.7} parent=0 // pred_fallthru
    _

// kernel: flick_forward.9
$region0: #{flick_forward.9}
  #allocation0 [shape = 'u32[]', space=smem, size = 0x4, offset = 0x4, fixed_abs, tag = 'smem constant byte address 0x4 - core index']
  #allocation1 [shape = 'u32[144,128]{1,0:T(1,128)}', space=vmem, size = 0x12000, scoped, tag = 'internal scratch']
  #allocation2 [shape = 's32[1]{0}', space=sflag, size = 0x4, scoped, tag = 'scoped memory for flick_forward.9']
  #allocation3 [shape = 'u8[512]{0}', space=smem, size = 0x200, scoped, tag = 'prefetched SMEM operand 0']
  %s0 = inlined_call_operand.vmem [shape: s32[2], index: 0, kind: input, shape index: {}]
  %s1 = inlined_call_operand.vmem [shape: bf16[16,32], index: 1, kind: input, shape index: {}]
  %s2 = inlined_call_operand.vmem [shape: bf16[32,32], index: 2, kind: input, shape index: {}]
  %s3 = inlined_call_operand.vmem [shape: bf16[6,32,16], index: 3, kind: input, shape index: {}]
  %s4 = inlined_call_operand.vmem [shape: f32[6,1,16], index: 4, kind: input, shape index: {}]
  %s5 = inlined_call_operand.vmem [shape: bf16[2,16,32], index: 5, kind: input, shape index: {}]
  %s6 = inlined_call_operand.vmem [shape: f32[1,32], index: 6, kind: input, shape index: {}]
  %s7 = inlined_call_operand.vmem [shape: f32[1,32], index: 7, kind: input, shape index: {}]
  %s8 = inlined_call_operand.vmem [shape: f32[1,32], index: 8, kind: input, shape index: {}]
  %s9 = inlined_call_operand.vmem [shape: bf16[2,32,16], index: 9, kind: input, shape index: {}]
  %s10 = inlined_call_operand.vmem [shape: f32[2,1,16], index: 10, kind: input, shape index: {}]
  %s11 = inlined_call_operand.vmem [shape: bf16[4,32,16], index: 11, kind: input, shape index: {}]
  %s12 = inlined_call_operand.vmem [shape: f32[4,1,16], index: 12, kind: input, shape index: {}]
  %s13 = inlined_call_operand.vmem [shape: bf16[2,16,32], index: 13, kind: input, shape index: {}]
  %s14 = inlined_call_operand.vmem [shape: f32[1,32], index: 14, kind: input, shape index: {}]
  %s15 = inlined_call_operand.vmem [shape: f32[1,32], index: 15, kind: input, shape index: {}]
  %s16 = inlined_call_operand.vmem [shape: f32[1,32], index: 16, kind: input, shape index: {}]
  %s17 = inlined_call_operand.vmem [shape: bf16[32,128], index: 17, kind: input, shape index: {}]
  %s18 = inlined_call_operand.vmem [shape: f32[1,128], index: 18, kind: input, shape index: {}]
  %s19 = inlined_call_operand.vmem [shape: bf16[128,32], index: 19, kind: input, shape index: {}]
  %s20 = inlined_call_operand.vmem [shape: f32[1,32], index: 20, kind: input, shape index: {}]
  %s21 = inlined_call_operand.vmem [shape: f32[1,32], index: 21, kind: input, shape index: {}]
  %s22 = inlined_call_operand.vmem [shape: f32[1,32], index: 22, kind: input, shape index: {}]
  %s23 = inlined_call_operand.vmem [shape: bf16[16,32], index: 23, kind: output, shape index: {}]
  %s24 = sld [smem:[#allocation0]]
  $region98: #{flick_forward.9} parent=0
    _
  %s26 = ssub.s32 1, %s24
  %s27 = scalar_select 0, %s26, %s24
  %s28 = sshll.u32 %s0, 4
  %s29 = int_to_ptr.vmem [resolvable:$true] %s28
  %31 = dma.vmem_to_smem %s29, 16, [#allocation3], [#allocation2]
  %32 = dma.done [#allocation2], 16
  %33 = sfence
  // Predicated region
  $region2: #{flick_forward.9} parent=0 // pred_check
    _
  $region3: #{flick_forward.9} parent=0 // pred_check_branch
    %35 = sbr.rel (0) target = $region5
  $region4: #{flick_forward.9} parent=0 // pred_region
    _
  $region5: #{flick_forward.9} parent=0 // pred_fallthru
    _
  // Predicated region
  $region6: #{flick_forward.9} parent=0 // pred_check
    _
  $region7: #{flick_forward.9} parent=0 // pred_check_branch
    %37 = sbr.rel (0) target = $region9
  $region8: #{flick_forward.9} parent=0 // pred_region
    _
  $region9: #{flick_forward.9} parent=0 // pred_fallthru
    _
  // Predicated region
  $region10: #{flick_forward.9} parent=0 // pred_check
    _
  $region11: #{flick_forward.9} parent=0 // pred_check_branch
    %39 = sbr.rel (0) target = $region13
  $region12: #{flick_forward.9} parent=0 // pred_region
    _
  $region13: #{flick_forward.9} parent=0 // pred_fallthru
    _
  // Predicated region
  $region14: #{flick_forward.9} parent=0 // pred_check
    _
  $region15: #{flick_forward.9} parent=0 // pred_check_branch
    %41 = sbr.rel (0) target = $region17
  $region16: #{flick_forward.9} parent=0 // pred_region
    _
  $region17: #{flick_forward.9} parent=0 // pred_fallthru
    _
  // Predicated region
  $region18: #{flick_forward.9} parent=0 // pred_check
    _
  $region19: #{flick_forward.9} parent=0 // pred_check_branch
    %43 = sbr.rel (0) target = $region21
  $region20: #{flick_forward.9} parent=0 // pred_region
    _
  $region21: #{flick_forward.9} parent=0 // pred_fallthru
    _
  // Predicated region
  $region22: #{flick_forward.9} parent=0 // pred_check
    _
  $region23: #{flick_forward.9} parent=0 // pred_check_branch
    %45 = sbr.rel (0) target = $region25
  $region24: #{flick_forward.9} parent=0 // pred_region
    _
  $region25: #{flick_forward.9} parent=0 // pred_fallthru
    _
  // Predicated region
  $region26: #{flick_forward.9} parent=0 // pred_check
    _
  $region27: #{flick_forward.9} parent=0 // pred_check_branch
    %47 = sbr.rel (0) target = $region29
  $region28: #{flick_forward.9} parent=0 // pred_region
    _
  $region29: #{flick_forward.9} parent=0 // pred_fallthru
    _
  // Predicated region
  $region30: #{flick_forward.9} parent=0 // pred_check
    _
  $region31: #{flick_forward.9} parent=0 // pred_check_branch
    %49 = sbr.rel (0) target = $region33
  $region32: #{flick_forward.9} parent=0 // pred_region
    _
  $region33: #{flick_forward.9} parent=0 // pred_fallthru
    _
  // Predicated region
  $region34: #{flick_forward.9} parent=0 // pred_check
    _
  $region35: #{flick_forward.9} parent=0 // pred_check_branch
    %51 = sbr.rel (0) target = $region37
  $region36: #{flick_forward.9} parent=0 // pred_region
    _
  $region37: #{flick_forward.9} parent=0 // pred_fallthru
    _
  // Predicated region
  $region38: #{flick_forward.9} parent=0 // pred_check
    _
  $region39: #{flick_forward.9} parent=0 // pred_check_branch
    %53 = sbr.rel (0) target = $region41
  $region40: #{flick_forward.9} parent=0 // pred_region
    _
  $region41: #{flick_forward.9} parent=0 // pred_fallthru
    _
  // Predicated region
  $region42: #{flick_forward.9} parent=0 // pred_check
    _
  $region43: #{flick_forward.9} parent=0 // pred_check_branch
    %55 = sbr.rel (0) target = $region45
  $region44: #{flick_forward.9} parent=0 // pred_region
    _
  $region45: #{flick_forward.9} parent=0 // pred_fallthru
    _
  // Predicated region
  $region46: #{flick_forward.9} parent=0 // pred_check
    _
  $region47: #{flick_forward.9} parent=0 // pred_check_branch
    %57 = sbr.rel (0) target = $region49
  $region48: #{flick_forward.9} parent=0 // pred_region
    _
  $region49: #{flick_forward.9} parent=0 // pred_fallthru
    _
  // Predicated region
  $region50: #{flick_forward.9} parent=0 // pred_check
    _
  $region51: #{flick_forward.9} parent=0 // pred_check_branch
    %59 = sbr.rel (0) target = $region53
  $region52: #{flick_forward.9} parent=0 // pred_region
    _
  $region53: #{flick_forward.9} parent=0 // pred_fallthru
    _
  // Predicated region
  $region54: #{flick_forward.9} parent=0 // pred_check
    _
  $region55: #{flick_forward.9} parent=0 // pred_check_branch
    %61 = sbr.rel (0) target = $region57
  $region56: #{flick_forward.9} parent=0 // pred_region
    _
  $region57: #{flick_forward.9} parent=0 // pred_fallthru
    _
  // Predicated region
  $region58: #{flick_forward.9} parent=0 // pred_check
    _
  $region59: #{flick_forward.9} parent=0 // pred_check_branch
    %63 = sbr.rel (0) target = $region61
  $region60: #{flick_forward.9} parent=0 // pred_region
    _
  $region61: #{flick_forward.9} parent=0 // pred_fallthru
    _
  // Predicated region
  $region62: #{flick_forward.9} parent=0 // pred_check
    _
  $region63: #{flick_forward.9} parent=0 // pred_check_branch
    %65 = sbr.rel (0) target = $region65
  $region64: #{flick_forward.9} parent=0 // pred_region
    _
  $region65: #{flick_forward.9} parent=0 // pred_fallthru
    _
  // Predicated region
  $region66: #{flick_forward.9} parent=0 // pred_check
    _
  $region67: #{flick_forward.9} parent=0 // pred_check_branch
    %67 = sbr.rel (0) target = $region69
  $region68: #{flick_forward.9} parent=0 // pred_region
    _
  $region69: #{flick_forward.9} parent=0 // pred_fallthru
    _
  // Predicated region
  $region70: #{flick_forward.9} parent=0 // pred_check
    _
  $region71: #{flick_forward.9} parent=0 // pred_check_branch
    %69 = sbr.rel (0) target = $region73
  $region72: #{flick_forward.9} parent=0 // pred_region
    _
  $region73: #{flick_forward.9} parent=0 // pred_fallthru
    _
  // Predicated region
  $region74: #{flick_forward.9} parent=0 // pred_check
    _
  $region75: #{flick_forward.9} parent=0 // pred_check_branch
    %71 = sbr.rel (0) target = $region77
  $region76: #{flick_forward.9} parent=0 // pred_region
    _
  $region77: #{flick_forward.9} parent=0 // pred_fallthru
    _
  // Predicated region
  $region78: #{flick_forward.9} parent=0 // pred_check
    _
  $region79: #{flick_forward.9} parent=0 // pred_check_branch
    %73 = sbr.rel (0) target = $region81
  $region80: #{flick_forward.9} parent=0 // pred_region
    _
  $region81: #{flick_forward.9} parent=0 // pred_fallthru
    _
  // Predicated region
  $region82: #{flick_forward.9} parent=0 // pred_check
    _
  $region83: #{flick_forward.9} parent=0 // pred_check_branch
    %75 = sbr.rel (0) target = $region85
  $region84: #{flick_forward.9} parent=0 // pred_region
    _
  $region85: #{flick_forward.9} parent=0 // pred_fallthru
    _
  // Predicated region
  $region86: #{flick_forward.9} parent=0 // pred_check
    _
  $region87: #{flick_forward.9} parent=0 // pred_check_branch
    %77 = sbr.rel (0) target = $region89
  $region88: #{flick_forward.9} parent=0 // pred_region
    _
  $region89: #{flick_forward.9} parent=0 // pred_fallthru
    _
  %v79 = vld [vmem:[%s1] sm:$0xf]
  %v80 = vld [vmem:[%s1 + $0x4] sm:$0xf]
  %v81 = vld [vmem:[%s2] sm:$0xf]
  %v82 = vld [vmem:[%s2 + $0x4] sm:$0xf]
  %v83 = vld [vmem:[%s2 + $0x8] sm:$0xf]
  %v84 = vld [vmem:[%s2 + $0xc] sm:$0xf]
  %v85 = vld [vmem:[%s3] sm:$0xf]
  %v86 = vld [vmem:[%s3 + $0x4] sm:$0xf]
  %v87 = vld [vmem:[%s3 + $0x8] sm:$0xf]
  %v88 = vld [vmem:[%s3 + $0xc] sm:$0xf]
  %v89 = vld [vmem:[%s4] sm:$0x1]
  %v91 = vlaneseq
  %v92 = vshrl.u32 %v91, 7
  %v93 = vsub.s32 0, %v92
  %v94 = vrot.slane %v89, %v93
  %v98 = vunpack.c.l.b16 %v79
  %v99 = vunpack.c.l.b16 %v80
  %v100 = vpack.c.b16 %v99, %v98
  %v105 = vunpack.c.l.b16 %v85
  %v106 = vunpack.c.l.b16 %v86
  %v107 = vunpack.c.l.b16 %v87
  %v108 = vunpack.c.l.b16 %v88
  %v109 = vpack.c.b16 %v106, %v105
  %v110 = vpack.c.b16 %v108, %v107
  %vm113 = vcmask 261120
  %v115 = vsel %vm113, %v100, 0
  %117 = vmatprep.subr.bf16.mxu0 0
  %118 = vmatpush1.bf16.msra.mxu0 %v109
  %119 = vmatprep.subr.bf16.mxu0 0
  %120 = vmatpush1.bf16.msra.mxu0 %v110
  %121 = vmatprep.subr.bf16.mxu0 0
  %122 = vmatpush1.bf16.msra.mxu0 0
  %123 = vmatprep.subr.bf16.mxu0 0
  %124 = vmatpush1.bf16.msra.mxu0 0
  %125 = vmatprep.subr.bf16.mxu0 0
  %126 = vmatpush1.bf16.msra.mxu0 0
  %127 = vmatprep.subr.bf16.mxu0 0
  %128 = vmatpush1.bf16.msra.mxu0 0
  %129 = vmatprep.subr.bf16.mxu0 0
  %130 = vmatpush1.bf16.msra.mxu0 0
  %131 = vmatprep.subr.bf16.mxu0 0
  %132 = vmatpush1.bf16.msra.mxu0 0
  %133 = vmatprep.subr.bf16.mxu0 0
  %134 = vmatpush1.bf16.msra.mxu0 0
  %135 = vmatprep.subr.bf16.mxu0 0
  %136 = vmatpush1.bf16.msra.mxu0 0
  %137 = vmatprep.subr.bf16.mxu0 0
  %138 = vmatpush1.bf16.msra.mxu0 0
  %139 = vmatprep.subr.bf16.mxu0 0
  %140 = vmatpush1.bf16.msra.mxu0 0
  %141 = vmatprep.subr.bf16.mxu0 0
  %142 = vmatpush1.bf16.msra.mxu0 0
  %143 = vmatprep.subr.bf16.mxu0 0
  %144 = vmatpush1.bf16.msra.mxu0 0
  %145 = vmatprep.subr.bf16.mxu0 0
  %146 = vmatpush1.bf16.msra.mxu0 0
  %147 = vmatprep.subr.bf16.mxu0 0
  %148 = vmatpush1.bf16.msra.mxu0 0
  %149 = vmatprep.mubr.bf16.mxu0 0
  %150 = vmatmul.mubr.bf16.gmra.mrb[0].mxu0 %v115
  %v151 = vpop.f32.mrb[0].mxu0
  %v152 = vadd.f32 %v94, %v151
  %v153 = vpop.f32.mrb[0].mxu0
  %v154 = vpop.f32.mrb[0].mxu0
  %v155 = vadd.f32 %v94, %v154
  %v156 = vpop.f32.mrb[0].mxu0
  %157 = vdwg.mxu0
  %v158 = vpack.c.bf16 %v155, %v152
  %s159 = scalar_lea.vmem %s3, 32
  %v160 = vld [vmem:[%s159] sm:$0xf]
  %v161 = vld [vmem:[%s159 + $0x4] sm:$0xf]
  %v162 = vld [vmem:[%s159 + $0x8] sm:$0xf]
  %v163 = vld [vmem:[%s159 + $0xc] sm:$0xf]
  %s164 = scalar_lea.vmem %s4, 2
  %v165 = vld [vmem:[%s164] sm:$0x1]
  %v167 = vlaneseq
  %v168 = vshrl.u32 %v167, 7
  %v169 = vsub.s32 0, %v168
  %v170 = vrot.slane %v165, %v169
  %v176 = vunpack.c.l.b16 %v160
  %v177 = vunpack.c.l.b16 %v161
  %v178 = vunpack.c.l.b16 %v162
  %v179 = vunpack.c.l.b16 %v163
  %v180 = vpack.c.b16 %v177, %v176
  %v181 = vpack.c.b16 %v179, %v178
  %184 = vmatprep.subr.bf16.mxu0 0
  %185 = vmatpush1.bf16.msra.mxu0 %v180
  %186 = vmatprep.subr.bf16.mxu0 0
  %187 = vmatpush1.bf16.msra.mxu0 %v181
  %188 = vmatprep.subr.bf16.mxu0 0
  %189 = vmatpush1.bf16.msra.mxu0 0
  %190 = vmatprep.subr.bf16.mxu0 0
  %191 = vmatpush1.bf16.msra.mxu0 0
  %192 = vmatprep.subr.bf16.mxu0 0
  %193 = vmatpush1.bf16.msra.mxu0 0
  %194 = vmatprep.subr.bf16.mxu0 0
  %195 = vmatpush1.bf16.msra.mxu0 0
  %196 = vmatprep.subr.bf16.mxu0 0
  %197 = vmatpush1.bf16.msra.mxu0 0
  %198 = vmatprep.subr.bf16.mxu0 0
  %199 = vmatpush1.bf16.msra.mxu0 0
  %200 = vmatprep.subr.bf16.mxu0 0
  %201 = vmatpush1.bf16.msra.mxu0 0
  %202 = vmatprep.subr.bf16.mxu0 0
  %203 = vmatpush1.bf16.msra.mxu0 0
  %204 = vmatprep.subr.bf16.mxu0 0
  %205 = vmatpush1.bf16.msra.mxu0 0
  %206 = vmatprep.subr.bf16.mxu0 0
  %207 = vmatpush1.bf16.msra.mxu0 0
  %208 = vmatprep.subr.bf16.mxu0 0
  %209 = vmatpush1.bf16.msra.mxu0 0
  %210 = vmatprep.subr.bf16.mxu0 0
  %211 = vmatpush1.bf16.msra.mxu0 0
  %212 = vmatprep.subr.bf16.mxu0 0
  %213 = vmatpush1.bf16.msra.mxu0 0
  %214 = vmatprep.subr.bf16.mxu0 0
  %215 = vmatpush1.bf16.msra.mxu0 0
  %216 = vmatprep.mubr.bf16.mxu0 0
  %217 = vmatmul.mubr.bf16.gmra.mrb[0].mxu0 %v115
  %v218 = vpop.f32.mrb[0].mxu0
  %v219 = vadd.f32 %v170, %v218
  %v220 = vpop.f32.mrb[0].mxu0
  %v221 = vpop.f32.mrb[0].mxu0
  %v222 = vadd.f32 %v170, %v221
  %v223 = vpop.f32.mrb[0].mxu0
  %224 = vdwg.mxu0
  %v225 = vpack.c.bf16 %v222, %v219
  %s226 = scalar_lea.vmem %s3, 64
  %v227 = vld [vmem:[%s226] sm:$0xf]
  %v228 = vld [vmem:[%s226 + $0x4] sm:$0xf]
  %v229 = vld [vmem:[%s226 + $0x8] sm:$0xf]
  %v230 = vld [vmem:[%s226 + $0xc] sm:$0xf]
  %s231 = scalar_lea.vmem %s4, 4
  %v232 = vld [vmem:[%s231] sm:$0x1]
  %v234 = vlaneseq
  %v235 = vshrl.u32 %v234, 7
  %v236 = vsub.s32 0, %v235
  %v237 = vrot.slane %v232, %v236
  %v243 = vunpack.c.l.b16 %v227
  %v244 = vunpack.c.l.b16 %v228
  %v245 = vunpack.c.l.b16 %v229
  %v246 = vunpack.c.l.b16 %v230
  %v247 = vpack.c.b16 %v244, %v243
  %v248 = vpack.c.b16 %v246, %v245
  %251 = vmatprep.subr.bf16.mxu0 0
  %252 = vmatpush1.bf16.msra.mxu0 %v247
  %253 = vmatprep.subr.bf16.mxu0 0
  %254 = vmatpush1.bf16.msra.mxu0 %v248
  %255 = vmatprep.subr.bf16.mxu0 0
  %256 = vmatpush1.bf16.msra.mxu0 0
  %257 = vmatprep.subr.bf16.mxu0 0
  %258 = vmatpush1.bf16.msra.mxu0 0
  %259 = vmatprep.subr.bf16.mxu0 0
  %260 = vmatpush1.bf16.msra.mxu0 0
  %261 = vmatprep.subr.bf16.mxu0 0
  %262 = vmatpush1.bf16.msra.mxu0 0
  %263 = vmatprep.subr.bf16.mxu0 0
  %264 = vmatpush1.bf16.msra.mxu0 0
  %265 = vmatprep.subr.bf16.mxu0 0
  %266 = vmatpush1.bf16.msra.mxu0 0
  %267 = vmatprep.subr.bf16.mxu0 0
  %268 = vmatpush1.bf16.msra.mxu0 0
  %269 = vmatprep.subr.bf16.mxu0 0
  %270 = vmatpush1.bf16.msra.mxu0 0
  %271 = vmatprep.subr.bf16.mxu0 0
  %272 = vmatpush1.bf16.msra.mxu0 0
  %273 = vmatprep.subr.bf16.mxu0 0
  %274 = vmatpush1.bf16.msra.mxu0 0
  %275 = vmatprep.subr.bf16.mxu0 0
  %276 = vmatpush1.bf16.msra.mxu0 0
  %277 = vmatprep.subr.bf16.mxu0 0
  %278 = vmatpush1.bf16.msra.mxu0 0
  %279 = vmatprep.subr.bf16.mxu0 0
  %280 = vmatpush1.bf16.msra.mxu0 0
  %281 = vmatprep.subr.bf16.mxu0 0
  %282 = vmatpush1.bf16.msra.mxu0 0
  %283 = vmatprep.mubr.bf16.mxu0 0
  %284 = vmatmul.mubr.bf16.gmra.mrb[0].mxu0 %v115
  %v285 = vpop.f32.mrb[0].mxu0
  %v286 = vadd.f32 %v237, %v285
  %v287 = vpop.f32.mrb[0].mxu0
  %v288 = vpop.f32.mrb[0].mxu0
  %v289 = vadd.f32 %v237, %v288
  %v290 = vpop.f32.mrb[0].mxu0
  %291 = vdwg.mxu0
  %v292 = vpack.c.bf16 %v289, %v286
  %s293 = scalar_lea.vmem %s3, 16
  %v294 = vld [vmem:[%s293] sm:$0xf]
  %v295 = vld [vmem:[%s293 + $0x4] sm:$0xf]
  %v296 = vld [vmem:[%s293 + $0x8] sm:$0xf]
  %v297 = vld [vmem:[%s293 + $0xc] sm:$0xf]
  %s298 = scalar_lea.vmem %s4, 1
  %v299 = vld [vmem:[%s298] sm:$0x1]
  %v301 = vlaneseq
  %v302 = vshrl.u32 %v301, 7
  %v303 = vsub.s32 0, %v302
  %v304 = vrot.slane %v299, %v303
  %v310 = vunpack.c.l.b16 %v294
  %v311 = vunpack.c.l.b16 %v295
  %v312 = vunpack.c.l.b16 %v296
  %v313 = vunpack.c.l.b16 %v297
  %v314 = vpack.c.b16 %v311, %v310
  %v315 = vpack.c.b16 %v313, %v312
  %318 = vmatprep.subr.bf16.mxu0 0
  %319 = vmatpush1.bf16.msra.mxu0 %v314
  %320 = vmatprep.subr.bf16.mxu0 0
  %321 = vmatpush1.bf16.msra.mxu0 %v315
  %322 = vmatprep.subr.bf16.mxu0 0
  %323 = vmatpush1.bf16.msra.mxu0 0
  %324 = vmatprep.subr.bf16.mxu0 0
  %325 = vmatpush1.bf16.msra.mxu0 0
  %326 = vmatprep.subr.bf16.mxu0 0
  %327 = vmatpush1.bf16.msra.mxu0 0
  %328 = vmatprep.subr.bf16.mxu0 0
  %329 = vmatpush1.bf16.msra.mxu0 0
  %330 = vmatprep.subr.bf16.mxu0 0
  %331 = vmatpush1.bf16.msra.mxu0 0
  %332 = vmatprep.subr.bf16.mxu0 0
  %333 = vmatpush1.bf16.msra.mxu0 0
  %334 = vmatprep.subr.bf16.mxu0 0
  %335 = vmatpush1.bf16.msra.mxu0 0
  %336 = vmatprep.subr.bf16.mxu0 0
  %337 = vmatpush1.bf16.msra.mxu0 0
  %338 = vmatprep.subr.bf16.mxu0 0
  %339 = vmatpush1.bf16.msra.mxu0 0
  %340 = vmatprep.subr.bf16.mxu0 0
  %341 = vmatpush1.bf16.msra.mxu0 0
  %342 = vmatprep.subr.bf16.mxu0 0
  %343 = vmatpush1.bf16.msra.mxu0 0
  %344 = vmatprep.subr.bf16.mxu0 0
  %345 = vmatpush1.bf16.msra.mxu0 0
  %346 = vmatprep.subr.bf16.mxu0 0
  %347 = vmatpush1.bf16.msra.mxu0 0
  %348 = vmatprep.subr.bf16.mxu0 0
  %349 = vmatpush1.bf16.msra.mxu0 0
  %350 = vmatprep.mubr.bf16.mxu0 0
  %351 = vmatmul.mubr.bf16.gmra.mrb[0].mxu0 %v115
  %v352 = vpop.f32.mrb[0].mxu0
  %v353 = vadd.f32 %v304, %v352
  %v354 = vpop.f32.mrb[0].mxu0
  %v355 = vpop.f32.mrb[0].mxu0
  %v356 = vadd.f32 %v304, %v355
  %v357 = vpop.f32.mrb[0].mxu0
  %358 = vdwg.mxu0
  %v359 = vpack.c.bf16 %v356, %v353
  %s360 = scalar_lea.vmem %s3, 48
  %v361 = vld [vmem:[%s360] sm:$0xf]
  %v362 = vld [vmem:[%s360 + $0x4] sm:$0xf]
  %v363 = vld [vmem:[%s360 + $0x8] sm:$0xf]
  %v364 = vld [vmem:[%s360 + $0xc] sm:$0xf]
  %s365 = scalar_lea.vmem %s4, 3
  %v366 = vld [vmem:[%s365] sm:$0x1]
  %v368 = vlaneseq
  %v369 = vshrl.u32 %v368, 7
  %v370 = vsub.s32 0, %v369
  %v371 = vrot.slane %v366, %v370
  %v377 = vunpack.c.l.b16 %v361
  %v378 = vunpack.c.l.b16 %v362
  %v379 = vunpack.c.l.b16 %v363
  %v380 = vunpack.c.l.b16 %v364
  %v381 = vpack.c.b16 %v378, %v377
  %v382 = vpack.c.b16 %v380, %v379
  %385 = vmatprep.subr.bf16.mxu0 0
  %386 = vmatpush1.bf16.msra.mxu0 %v381
  %387 = vmatprep.subr.bf16.mxu0 0
  %388 = vmatpush1.bf16.msra.mxu0 %v382
  %389 = vmatprep.subr.bf16.mxu0 0
  %390 = vmatpush1.bf16.msra.mxu0 0
  %391 = vmatprep.subr.bf16.mxu0 0
  %392 = vmatpush1.bf16.msra.mxu0 0
  %393 = vmatprep.subr.bf16.mxu0 0
  %394 = vmatpush1.bf16.msra.mxu0 0
  %395 = vmatprep.subr.bf16.mxu0 0
  %396 = vmatpush1.bf16.msra.mxu0 0
  %397 = vmatprep.subr.bf16.mxu0 0
  %398 = vmatpush1.bf16.msra.mxu0 0
  %399 = vmatprep.subr.bf16.mxu0 0
  %400 = vmatpush1.bf16.msra.mxu0 0
  %401 = vmatprep.subr.bf16.mxu0 0
  %402 = vmatpush1.bf16.msra.mxu0 0
  %403 = vmatprep.subr.bf16.mxu0 0
  %404 = vmatpush1.bf16.msra.mxu0 0
  %405 = vmatprep.subr.bf16.mxu0 0
  %406 = vmatpush1.bf16.msra.mxu0 0
  %407 = vmatprep.subr.bf16.mxu0 0
  %408 = vmatpush1.bf16.msra.mxu0 0
  %409 = vmatprep.subr.bf16.mxu0 0
  %410 = vmatpush1.bf16.msra.mxu0 0
  %411 = vmatprep.subr.bf16.mxu0 0
  %412 = vmatpush1.bf16.msra.mxu0 0
  %413 = vmatprep.subr.bf16.mxu0 0
  %414 = vmatpush1.bf16.msra.mxu0 0
  %415 = vmatprep.subr.bf16.mxu0 0
  %416 = vmatpush1.bf16.msra.mxu0 0
  %417 = vmatprep.mubr.bf16.mxu0 0
  %418 = vmatmul.mubr.bf16.gmra.mrb[0].mxu0 %v115
  %v419 = vpop.f32.mrb[0].mxu0
  %v420 = vadd.f32 %v371, %v419
  %v421 = vpop.f32.mrb[0].mxu0
  %v422 = vpop.f32.mrb[0].mxu0
  %v423 = vadd.f32 %v371, %v422
  %v424 = vpop.f32.mrb[0].mxu0
  %425 = vdwg.mxu0
  %v426 = vpack.c.bf16 %v423, %v420
  %s427 = scalar_lea.vmem %s3, 80
  %v428 = vld [vmem:[%s427] sm:$0xf]
  %v429 = vld [vmem:[%s427 + $0x4] sm:$0xf]
  %v430 = vld [vmem:[%s427 + $0x8] sm:$0xf]
  %v431 = vld [vmem:[%s427 + $0xc] sm:$0xf]
  %s432 = scalar_lea.vmem %s4, 5
  %v433 = vld [vmem:[%s432] sm:$0x1]
  %v435 = vlaneseq
  %v436 = vshrl.u32 %v435, 7
  %v437 = vsub.s32 0, %v436
  %v438 = vrot.slane %v433, %v437
  %v444 = vunpack.c.l.b16 %v428
  %v445 = vunpack.c.l.b16 %v429
  %v446 = vunpack.c.l.b16 %v430
  %v447 = vunpack.c.l.b16 %v431
  %v448 = vpack.c.b16 %v445, %v444
  %v449 = vpack.c.b16 %v447, %v446
  %452 = vmatprep.subr.bf16.mxu0 0
  %453 = vmatpush1.bf16.msra.mxu0 %v448
  %454 = vmatprep.subr.bf16.mxu0 0
  %455 = vmatpush1.bf16.msra.mxu0 %v449
  %456 = vmatprep.subr.bf16.mxu0 0
  %457 = vmatpush1.bf16.msra.mxu0 0
  %458 = vmatprep.subr.bf16.mxu0 0
  %459 = vmatpush1.bf16.msra.mxu0 0
  %460 = vmatprep.subr.bf16.mxu0 0
  %461 = vmatpush1.bf16.msra.mxu0 0
  %462 = vmatprep.subr.bf16.mxu0 0
  %463 = vmatpush1.bf16.msra.mxu0 0
  %464 = vmatprep.subr.bf16.mxu0 0
  %465 = vmatpush1.bf16.msra.mxu0 0
  %466 = vmatprep.subr.bf16.mxu0 0
  %467 = vmatpush1.bf16.msra.mxu0 0
  %468 = vmatprep.subr.bf16.mxu0 0
  %469 = vmatpush1.bf16.msra.mxu0 0
  %470 = vmatprep.subr.bf16.mxu0 0
  %471 = vmatpush1.bf16.msra.mxu0 0
  %472 = vmatprep.subr.bf16.mxu0 0
  %473 = vmatpush1.bf16.msra.mxu0 0
  %474 = vmatprep.subr.bf16.mxu0 0
  %475 = vmatpush1.bf16.msra.mxu0 0
  %476 = vmatprep.subr.bf16.mxu0 0
  %477 = vmatpush1.bf16.msra.mxu0 0
  %478 = vmatprep.subr.bf16.mxu0 0
  %479 = vmatpush1.bf16.msra.mxu0 0
  %480 = vmatprep.subr.bf16.mxu0 0
  %481 = vmatpush1.bf16.msra.mxu0 0
  %482 = vmatprep.subr.bf16.mxu0 0
  %483 = vmatpush1.bf16.msra.mxu0 0
  %484 = vmatprep.mubr.bf16.mxu0 0
  %485 = vmatmul.mubr.bf16.gmra.mrb[0].mxu0 %v115
  %v486 = vpop.f32.mrb[0].mxu0
  %v487 = vadd.f32 %v438, %v486
  %v488 = vpop.f32.mrb[0].mxu0
  %v489 = vpop.f32.mrb[0].mxu0
  %v490 = vadd.f32 %v438, %v489
  %v491 = vpop.f32.mrb[0].mxu0
  %492 = vdwg.mxu0
  %v493 = vpack.c.bf16 %v490, %v487
  %v494 = vlaneseq
  %v495 = vand.u32 %v494, 127
  %v496 = vlaneseq
  %v497 = vshrl.u32 %v496, 7
  %vm498 = vcmp.gt.s32.totalorder %v495, %v497
  %vm499 = vcmask 130048
  %v501 = vsel %vm499, %v158, 0
  %v504 = vsel %vm499, %v225, 0
  %506 = vmatprep.subr.bf16.mxu0 0
  %507 = vmatpush1.bf16.xpose.msra.mxu0 %v504
  %508 = vmatprep.subr.bf16.mxu0 0
  %509 = vmatpush1.bf16.xpose.msra.mxu0 0
  %510 = vmatprep.subr.bf16.mxu0 0
  %511 = vmatpush1.bf16.xpose.msra.mxu0 0
  %512 = vmatprep.subr.bf16.mxu0 0
  %513 = vmatpush1.bf16.xpose.msra.mxu0 0
  %514 = vmatprep.subr.bf16.mxu0 0
  %515 = vmatpush1.bf16.xpose.msra.mxu0 0
  %516 = vmatprep.subr.bf16.mxu0 0
  %517 = vmatpush1.bf16.xpose.msra.mxu0 0
  %518 = vmatprep.subr.bf16.mxu0 0
  %519 = vmatpush1.bf16.xpose.msra.mxu0 0
  %520 = vmatprep.subr.bf16.mxu0 0
  %521 = vmatpush1.bf16.xpose.msra.mxu0 0
  %522 = vmatprep.subr.bf16.mxu0 0
  %523 = vmatpush1.bf16.xpose.msra.mxu0 0
  %524 = vmatprep.subr.bf16.mxu0 0
  %525 = vmatpush1.bf16.xpose.msra.mxu0 0
  %526 = vmatprep.subr.bf16.mxu0 0
  %527 = vmatpush1.bf16.xpose.msra.mxu0 0
  %528 = vmatprep.subr.bf16.mxu0 0
  %529 = vmatpush1.bf16.xpose.msra.mxu0 0
  %530 = vmatprep.subr.bf16.mxu0 0
  %531 = vmatpush1.bf16.xpose.msra.mxu0 0
  %532 = vmatprep.subr.bf16.mxu0 0
  %533 = vmatpush1.bf16.xpose.msra.mxu0 0
  %534 = vmatprep.subr.bf16.mxu0 0
  %535 = vmatpush1.bf16.xpose.msra.mxu0 0
  %536 = vmatprep.subr.bf16.mxu0 0
  %537 = vmatpush1.bf16.xpose.msra.mxu0 0
  %538 = vmatprep.mubr.bf16.mxu0 0
  %539 = vmatmul.mubr.bf16.gmra.mrb[0].mxu0 %v501
  %v540 = vpop.f32.mrb[0].mxu0
  %v541 = vadd.f32 0.0, %v540
  %v542 = vpop.f32.mrb[0].mxu0
  %v543 = vpop.f32.mrb[0].mxu0
  %v544 = vpop.f32.mrb[0].mxu0
  %545 = vdwg.mxu0
  %v546 = vsel %vm498, -1e+09, %v541
  %vm547 = vcmask 64512
  %v548 = vsel %vm547, %v546, -inf
  %549 = vmax.xlane.f32.xlu0 %v548
  %v550 = vpop.xlane.xlu0 %549
  %v551 = vsub.f32 %v546, %v550
  %v552 = vmul.f32 %v551, 1.442695
  %v553 = vpow.pop %v552
  %v554 = vsel %vm547, %v553, 0.0
  %555 = vadd.xlane.f32.xlu0 %v554
  %v556 = vpop.xlane.xlu0 %555
  %v557 = vrcp.pop %v556
  %v558 = vmul.f32 %v553, %v557
  %v559 = vpack.c.bf16 %v558, %v558
  %v561 = vsel %vm547, %v559, 0
  %vm563 = vcmask 1043456
  %v565 = vsel %vm563, %v292, 0
  %567 = vmatprep.subr.bf16.mxu0 0
  %568 = vmatpush1.bf16.msra.mxu0 %v565
  %569 = vmatprep.subr.bf16.mxu0 0
  %570 = vmatpush1.bf16.msra.mxu0 0
  %571 = vmatprep.subr.bf16.mxu0 0
  %572 = vmatpush1.bf16.msra.mxu0 0
  %573 = vmatprep.subr.bf16.mxu0 0
  %574 = vmatpush1.bf16.msra.mxu0 0
  %575 = vmatprep.subr.bf16.mxu0 0
  %576 = vmatpush1.bf16.msra.mxu0 0
  %577 = vmatprep.subr.bf16.mxu0 0
  %578 = vmatpush1.bf16.msra.mxu0 0
  %579 = vmatprep.subr.bf16.mxu0 0
  %580 = vmatpush1.bf16.msra.mxu0 0
  %581 = vmatprep.subr.bf16.mxu0 0
  %582 = vmatpush1.bf16.msra.mxu0 0
  %583 = vmatprep.subr.bf16.mxu0 0
  %584 = vmatpush1.bf16.msra.mxu0 0
  %585 = vmatprep.subr.bf16.mxu0 0
  %586 = vmatpush1.bf16.msra.mxu0 0
  %587 = vmatprep.subr.bf16.mxu0 0
  %588 = vmatpush1.bf16.msra.mxu0 0
  %589 = vmatprep.subr.bf16.mxu0 0
  %590 = vmatpush1.bf16.msra.mxu0 0
  %591 = vmatprep.subr.bf16.mxu0 0
  %592 = vmatpush1.bf16.msra.mxu0 0
  %593 = vmatprep.subr.bf16.mxu0 0
  %594 = vmatpush1.bf16.msra.mxu0 0
  %595 = vmatprep.subr.bf16.mxu0 0
  %596 = vmatpush1.bf16.msra.mxu0 0
  %597 = vmatprep.subr.bf16.mxu0 0
  %598 = vmatpush1.bf16.msra.mxu0 0
  %599 = vmatprep.mubr.bf16.mxu0 0
  %600 = vmatmul.mubr.bf16.gmra.mrb[0].mxu0 %v561
  %v601 = vpop.f32.mrb[0].mxu0
  %v602 = vadd.f32 0.0, %v601
  %v603 = vpop.f32.mrb[0].mxu0
  %v604 = vpop.f32.mrb[0].mxu0
  %v605 = vpop.f32.mrb[0].mxu0
  %606 = vdwg.mxu0
  %v607 = vpack.c.bf16 %v602, %v602
  %v608 = vld [vmem:[%s5] sm:$0xf]
  %v609 = vld [vmem:[%s5 + $0x4] sm:$0xf]
  %v611 = vsel %vm499, %v359, 0
  %v614 = vsel %vm499, %v426, 0
  %616 = vmatprep.subr.bf16.mxu0 0
  %617 = vmatpush1.bf16.xpose.msra.mxu0 %v614
  %618 = vmatprep.subr.bf16.mxu0 0
  %619 = vmatpush1.bf16.xpose.msra.mxu0 0
  %620 = vmatprep.subr.bf16.mxu0 0
  %621 = vmatpush1.bf16.xpose.msra.mxu0 0
  %622 = vmatprep.subr.bf16.mxu0 0
  %623 = vmatpush1.bf16.xpose.msra.mxu0 0
  %624 = vmatprep.subr.bf16.mxu0 0
  %625 = vmatpush1.bf16.xpose.msra.mxu0 0
  %626 = vmatprep.subr.bf16.mxu0 0
  %627 = vmatpush1.bf16.xpose.msra.mxu0 0
  %628 = vmatprep.subr.bf16.mxu0 0
  %629 = vmatpush1.bf16.xpose.msra.mxu0 0
  %630 = vmatprep.subr.bf16.mxu0 0
  %631 = vmatpush1.bf16.xpose.msra.mxu0 0
  %632 = vmatprep.subr.bf16.mxu0 0
  %633 = vmatpush1.bf16.xpose.msra.mxu0 0
  %634 = vmatprep.subr.bf16.mxu0 0
  %635 = vmatpush1.bf16.xpose.msra.mxu0 0
  %636 = vmatprep.subr.bf16.mxu0 0
  %637 = vmatpush1.bf16.xpose.msra.mxu0 0
  %638 = vmatprep.subr.bf16.mxu0 0
  %639 = vmatpush1.bf16.xpose.msra.mxu0 0
  %640 = vmatprep.subr.bf16.mxu0 0
  %641 = vmatpush1.bf16.xpose.msra.mxu0 0
  %642 = vmatprep.subr.bf16.mxu0 0
  %643 = vmatpush1.bf16.xpose.msra.mxu0 0
  %644 = vmatprep.subr.bf16.mxu0 0
  %645 = vmatpush1.bf16.xpose.msra.mxu0 0
  %646 = vmatprep.subr.bf16.mxu0 0
  %647 = vmatpush1.bf16.xpose.msra.mxu0 0
  %648 = vmatprep.mubr.bf16.mxu0 0
  %649 = vmatmul.mubr.bf16.gmra.mrb[0].mxu0 %v611
  %v650 = vpop.f32.mrb[0].mxu0
  %v651 = vadd.f32 0.0, %v650
  %v652 = vpop.f32.mrb[0].mxu0
  %v653 = vpop.f32.mrb[0].mxu0
  %v654 = vpop.f32.mrb[0].mxu0
  %655 = vdwg.mxu0
  %v656 = vsel %vm498, -1e+09, %v651
  %v657 = vsel %vm547, %v656, -inf
  %658 = vmax.xlane.f32.xlu0 %v657
  %v659 = vpop.xlane.xlu0 %658
  %v660 = vsub.f32 %v656, %v659
  %v661 = vmul.f32 %v660, 1.442695
  %v662 = vpow.pop %v661
  %v663 = vsel %vm547, %v662, 0.0
  %664 = vadd.xlane.f32.xlu0 %v663
  %v665 = vpop.xlane.xlu0 %664
  %v666 = vrcp.pop %v665
  %v667 = vmul.f32 %v662, %v666
  %v668 = vpack.c.bf16 %v667, %v667
  %v670 = vsel %vm547, %v668, 0
  %v673 = vsel %vm563, %v493, 0
  %675 = vmatprep.subr.bf16.mxu0 0
  %676 = vmatpush1.bf16.msra.mxu0 %v673
  %677 = vmatprep.subr.bf16.mxu0 0
  %678 = vmatpush1.bf16.msra.mxu0 0
  %679 = vmatprep.subr.bf16.mxu0 0
  %680 = vmatpush1.bf16.msra.mxu0 0
  %681 = vmatprep.subr.bf16.mxu0 0
  %682 = vmatpush1.bf16.msra.mxu0 0
  %683 = vmatprep.subr.bf16.mxu0 0
  %684 = vmatpush1.bf16.msra.mxu0 0
  %685 = vmatprep.subr.bf16.mxu0 0
  %686 = vmatpush1.bf16.msra.mxu0 0
  %687 = vmatprep.subr.bf16.mxu0 0
  %688 = vmatpush1.bf16.msra.mxu0 0
  %689 = vmatprep.subr.bf16.mxu0 0
  %690 = vmatpush1.bf16.msra.mxu0 0
  %691 = vmatprep.subr.bf16.mxu0 0
  %692 = vmatpush1.bf16.msra.mxu0 0
  %693 = vmatprep.subr.bf16.mxu0 0
  %694 = vmatpush1.bf16.msra.mxu0 0
  %695 = vmatprep.subr.bf16.mxu0 0
  %696 = vmatpush1.bf16.msra.mxu0 0
  %697 = vmatprep.subr.bf16.mxu0 0
  %698 = vmatpush1.bf16.msra.mxu0 0
  %699 = vmatprep.subr.bf16.mxu0 0
  %700 = vmatpush1.bf16.msra.mxu0 0
  %701 = vmatprep.subr.bf16.mxu0 0
  %702 = vmatpush1.bf16.msra.mxu0 0
  %703 = vmatprep.subr.bf16.mxu0 0
  %704 = vmatpush1.bf16.msra.mxu0 0
  %705 = vmatprep.subr.bf16.mxu0 0
  %706 = vmatpush1.bf16.msra.mxu0 0
  %707 = vmatprep.mubr.bf16.mxu0 0
  %708 = vmatmul.mubr.bf16.gmra.mrb[0].mxu0 %v670
  %v709 = vpop.f32.mrb[0].mxu0
  %v710 = vadd.f32 0.0, %v709
  %v711 = vpop.f32.mrb[0].mxu0
  %v712 = vpop.f32.mrb[0].mxu0
  %v713 = vpop.f32.mrb[0].mxu0
  %714 = vdwg.mxu0
  %v715 = vpack.c.bf16 %v710, %v710
  %s716 = scalar_lea.vmem %s5, 8
  %v717 = vld [vmem:[%s716] sm:$0xf]
  %v718 = vld [vmem:[%s716 + $0x4] sm:$0xf]
  %v721 = vunpack.c.l.b16 %v717
  %v722 = vunpack.c.l.b16 %v718
  %v723 = vpack.c.b16 %v722, %v721
  %v726 = vsel %vm499, %v715, 0
  %728 = vmatprep.subr.bf16.mxu0 0
  %729 = vmatpush1.bf16.msra.mxu0 %v723
  %730 = vmatprep.subr.bf16.mxu0 0
  %731 = vmatpush1.bf16.msra.mxu0 0
  %732 = vmatprep.subr.bf16.mxu0 0
  %733 = vmatpush1.bf16.msra.mxu0 0
  %734 = vmatprep.subr.bf16.mxu0 0
  %735 = vmatpush1.bf16.msra.mxu0 0
  %736 = vmatprep.subr.bf16.mxu0 0
  %737 = vmatpush1.bf16.msra.mxu0 0
  %738 = vmatprep.subr.bf16.mxu0 0
  %739 = vmatpush1.bf16.msra.mxu0 0
  %740 = vmatprep.subr.bf16.mxu0 0
  %741 = vmatpush1.bf16.msra.mxu0 0
  %742 = vmatprep.subr.bf16.mxu0 0
  %743 = vmatpush1.bf16.msra.mxu0 0
  %744 = vmatprep.subr.bf16.mxu0 0
  %745 = vmatpush1.bf16.msra.mxu0 0
  %746 = vmatprep.subr.bf16.mxu0 0
  %747 = vmatpush1.bf16.msra.mxu0 0
  %748 = vmatprep.subr.bf16.mxu0 0
  %749 = vmatpush1.bf16.msra.mxu0 0
  %750 = vmatprep.subr.bf16.mxu0 0
  %751 = vmatpush1.bf16.msra.mxu0 0
  %752 = vmatprep.subr.bf16.mxu0 0
  %753 = vmatpush1.bf16.msra.mxu0 0
  %754 = vmatprep.subr.bf16.mxu0 0
  %755 = vmatpush1.bf16.msra.mxu0 0
  %756 = vmatprep.subr.bf16.mxu0 0
  %757 = vmatpush1.bf16.msra.mxu0 0
  %758 = vmatprep.subr.bf16.mxu0 0
  %759 = vmatpush1.bf16.msra.mxu0 0
  %760 = vmatprep.mubr.bf16.mxu0 0
  %761 = vmatmul.mubr.bf16.gmra.mrb[0].mxu0 %v726
  %v762 = vpop.f32.mrb[0].mxu0
  %v763 = vadd.f32 0.0, %v762
  %v764 = vpop.f32.mrb[0].mxu0
  %v765 = vpop.f32.mrb[0].mxu0
  %v766 = vpop.f32.mrb[0].mxu0
  %767 = vdwg.mxu0
  %v770 = vunpack.c.l.b16 %v608
  %v771 = vunpack.c.l.b16 %v609
  %v772 = vpack.c.b16 %v771, %v770
  %v775 = vsel %vm499, %v607, 0
  %777 = vmatprep.subr.bf16.mxu0 0
  %778 = vmatpush1.bf16.msra.mxu0 %v772
  %779 = vmatprep.subr.bf16.mxu0 0
  %780 = vmatpush1.bf16.msra.mxu0 0
  %781 = vmatprep.subr.bf16.mxu0 0
  %782 = vmatpush1.bf16.msra.mxu0 0
  %783 = vmatprep.subr.bf16.mxu0 0
  %784 = vmatpush1.bf16.msra.mxu0 0
  %785 = vmatprep.subr.bf16.mxu0 0
  %786 = vmatpush1.bf16.msra.mxu0 0
  %787 = vmatprep.subr.bf16.mxu0 0
  %788 = vmatpush1.bf16.msra.mxu0 0
  %789 = vmatprep.subr.bf16.mxu0 0
  %790 = vmatpush1.bf16.msra.mxu0 0
  %791 = vmatprep.subr.bf16.mxu0 0
  %792 = vmatpush1.bf16.msra.mxu0 0
  %793 = vmatprep.subr.bf16.mxu0 0
  %794 = vmatpush1.bf16.msra.mxu0 0
  %795 = vmatprep.subr.bf16.mxu0 0
  %796 = vmatpush1.bf16.msra.mxu0 0
  %797 = vmatprep.subr.bf16.mxu0 0
  %798 = vmatpush1.bf16.msra.mxu0 0
  %799 = vmatprep.subr.bf16.mxu0 0
  %800 = vmatpush1.bf16.msra.mxu0 0
  %801 = vmatprep.subr.bf16.mxu0 0
  %802 = vmatpush1.bf16.msra.mxu0 0
  %803 = vmatprep.subr.bf16.mxu0 0
  %804 = vmatpush1.bf16.msra.mxu0 0
  %805 = vmatprep.subr.bf16.mxu0 0
  %806 = vmatpush1.bf16.msra.mxu0 0
  %807 = vmatprep.subr.bf16.mxu0 0
  %808 = vmatpush1.bf16.msra.mxu0 0
  %809 = vmatprep.mubr.bf16.mxu0 0
  %810 = vmatmul.mubr.bf16.gmra.mrb[0].mxu0 %v775
  %v811 = vpop.f32.mrb[0].mxu0
  %v812 = vadd.f32 %v763, %v811
  %v813 = vpop.f32.mrb[0].mxu0
  %v814 = vpop.f32.mrb[0].mxu0
  %v815 = vpop.f32.mrb[0].mxu0
  %816 = vdwg.mxu0
  %v818 = vrot.slane %v158, 4
  %v820 = vrot.slane %v225, 4
  %v822 = vsel %vm499, %v818, 0
  %v825 = vsel %vm499, %v820, 0
  %827 = vmatprep.subr.bf16.mxu0 0
  %828 = vmatpush1.bf16.xpose.msra.mxu0 %v825
  %829 = vmatprep.subr.bf16.mxu0 0
  %830 = vmatpush1.bf16.xpose.msra.mxu0 0
  %831 = vmatprep.subr.bf16.mxu0 0
  %832 = vmatpush1.bf16.xpose.msra.mxu0 0
  %833 = vmatprep.subr.bf16.mxu0 0
  %834 = vmatpush1.bf16.xpose.msra.mxu0 0
  %835 = vmatprep.subr.bf16.mxu0 0
  %836 = vmatpush1.bf16.xpose.msra.mxu0 0
  %837 = vmatprep.subr.bf16.mxu0 0
  %838 = vmatpush1.bf16.xpose.msra.mxu0 0
  %839 = vmatprep.subr.bf16.mxu0 0
  %840 = vmatpush1.bf16.xpose.msra.mxu0 0
  %841 = vmatprep.subr.bf16.mxu0 0
  %842 = vmatpush1.bf16.xpose.msra.mxu0 0
  %843 = vmatprep.subr.bf16.mxu0 0
  %844 = vmatpush1.bf16.xpose.msra.mxu0 0
  %845 = vmatprep.subr.bf16.mxu0 0
  %846 = vmatpush1.bf16.xpose.msra.mxu0 0
  %847 = vmatprep.subr.bf16.mxu0 0
  %848 = vmatpush1.bf16.xpose.msra.mxu0 0
  %849 = vmatprep.subr.bf16.mxu0 0
  %850 = vmatpush1.bf16.xpose.msra.mxu0 0
  %851 = vmatprep.subr.bf16.mxu0 0
  %852 = vmatpush1.bf16.xpose.msra.mxu0 0
  %853 = vmatprep.subr.bf16.mxu0 0
  %854 = vmatpush1.bf16.xpose.msra.mxu0 0
  %855 = vmatprep.subr.bf16.mxu0 0
  %856 = vmatpush1.bf16.xpose.msra.mxu0 0
  %857 = vmatprep.subr.bf16.mxu0 0
  %858 = vmatpush1.bf16.xpose.msra.mxu0 0
  %859 = vmatprep.mubr.bf16.mxu0 0
  %860 = vmatmul.mubr.bf16.gmra.mrb[0].mxu0 %v822
  %v861 = vpop.f32.mrb[0].mxu0
  %v862 = vadd.f32 0.0, %v861
  %v863 = vpop.f32.mrb[0].mxu0
  %v864 = vpop.f32.mrb[0].mxu0
  %v865 = vpop.f32.mrb[0].mxu0
  %866 = vdwg.mxu0
  %v867 = vsel %vm498, -1e+09, %v862
  %v868 = vsel %vm547, %v867, -inf
  %869 = vmax.xlane.f32.xlu0 %v868
  %v870 = vpop.xlane.xlu0 %869
  %v871 = vsub.f32 %v867, %v870
  %v872 = vmul.f32 %v871, 1.442695
  %v873 = vpow.pop %v872
  %v874 = vsel %vm547, %v873, 0.0
  %875 = vadd.xlane.f32.xlu0 %v874
  %v876 = vpop.xlane.xlu0 %875
  %v877 = vrcp.pop %v876
  %v878 = vmul.f32 %v873, %v877
  %v879 = vpack.c.bf16 %v878, %v878
  %v881 = vrot.slane %v292, 4
  %v883 = vsel %vm547, %v879, 0
  %v886 = vsel %vm563, %v881, 0
  %888 = vmatprep.subr.bf16.mxu0 0
  %889 = vmatpush1.bf16.msra.mxu0 %v886
  %890 = vmatprep.subr.bf16.mxu0 0
  %891 = vmatpush1.bf16.msra.mxu0 0
  %892 = vmatprep.subr.bf16.mxu0 0
  %893 = vmatpush1.bf16.msra.mxu0 0
  %894 = vmatprep.subr.bf16.mxu0 0
  %895 = vmatpush1.bf16.msra.mxu0 0
  %896 = vmatprep.subr.bf16.mxu0 0
  %897 = vmatpush1.bf16.msra.mxu0 0
  %898 = vmatprep.subr.bf16.mxu0 0
  %899 = vmatpush1.bf16.msra.mxu0 0
  %900 = vmatprep.subr.bf16.mxu0 0
  %901 = vmatpush1.bf16.msra.mxu0 0
  %902 = vmatprep.subr.bf16.mxu0 0
  %903 = vmatpush1.bf16.msra.mxu0 0
  %904 = vmatprep.subr.bf16.mxu0 0
  %905 = vmatpush1.bf16.msra.mxu0 0
  %906 = vmatprep.subr.bf16.mxu0 0
  %907 = vmatpush1.bf16.msra.mxu0 0
  %908 = vmatprep.subr.bf16.mxu0 0
  %909 = vmatpush1.bf16.msra.mxu0 0
  %910 = vmatprep.subr.bf16.mxu0 0
  %911 = vmatpush1.bf16.msra.mxu0 0
  %912 = vmatprep.subr.bf16.mxu0 0
  %913 = vmatpush1.bf16.msra.mxu0 0
  %914 = vmatprep.subr.bf16.mxu0 0
  %915 = vmatpush1.bf16.msra.mxu0 0
  %916 = vmatprep.subr.bf16.mxu0 0
  %917 = vmatpush1.bf16.msra.mxu0 0
  %918 = vmatprep.subr.bf16.mxu0 0
  %919 = vmatpush1.bf16.msra.mxu0 0
  %920 = vmatprep.mubr.bf16.mxu0 0
  %921 = vmatmul.mubr.bf16.gmra.mrb[0].mxu0 %v883
  %v922 = vpop.f32.mrb[0].mxu0
  %v923 = vadd.f32 0.0, %v922
  %v924 = vpop.f32.mrb[0].mxu0
  %v925 = vpop.f32.mrb[0].mxu0
  %v926 = vpop.f32.mrb[0].mxu0
  %927 = vdwg.mxu0
  %v928 = vpack.c.bf16 %v923, %v923
  %v930 = vrot.slane %v359, 4
  %v932 = vrot.slane %v426, 4
  %v934 = vsel %vm499, %v930, 0
  %v937 = vsel %vm499, %v932, 0
  %939 = vmatprep.subr.bf16.mxu0 0
  %940 = vmatpush1.bf16.xpose.msra.mxu0 %v937
  %941 = vmatprep.subr.bf16.mxu0 0
  %942 = vmatpush1.bf16.xpose.msra.mxu0 0
  %943 = vmatprep.subr.bf16.mxu0 0
  %944 = vmatpush1.bf16.xpose.msra.mxu0 0
  %945 = vmatprep.subr.bf16.mxu0 0
  %946 = vmatpush1.bf16.xpose.msra.mxu0 0
  %947 = vmatprep.subr.bf16.mxu0 0
  %948 = vmatpush1.bf16.xpose.msra.mxu0 0
  %949 = vmatprep.subr.bf16.mxu0 0
  %950 = vmatpush1.bf16.xpose.msra.mxu0 0
  %951 = vmatprep.subr.bf16.mxu0 0
  %952 = vmatpush1.bf16.xpose.msra.mxu0 0
  %953 = vmatprep.subr.bf16.mxu0 0
  %954 = vmatpush1.bf16.xpose.msra.mxu0 0
  %955 = vmatprep.subr.bf16.mxu0 0
  %956 = vmatpush1.bf16.xpose.msra.mxu0 0
  %957 = vmatprep.subr.bf16.mxu0 0
  %958 = vmatpush1.bf16.xpose.msra.mxu0 0
  %959 = vmatprep.subr.bf16.mxu0 0
  %960 = vmatpush1.bf16.xpose.msra.mxu0 0
  %961 = vmatprep.subr.bf16.mxu0 0
  %962 = vmatpush1.bf16.xpose.msra.mxu0 0
  %963 = vmatprep.subr.bf16.mxu0 0
  %964 = vmatpush1.bf16.xpose.msra.mxu0 0
  %965 = vmatprep.subr.bf16.mxu0 0
  %966 = vmatpush1.bf16.xpose.msra.mxu0 0
  %967 = vmatprep.subr.bf16.mxu0 0
  %968 = vmatpush1.bf16.xpose.msra.mxu0 0
  %969 = vmatprep.subr.bf16.mxu0 0
  %970 = vmatpush1.bf16.xpose.msra.mxu0 0
  %971 = vmatprep.mubr.bf16.mxu0 0
  %972 = vmatmul.mubr.bf16.gmra.mrb[0].mxu0 %v934
  %v973 = vpop.f32.mrb[0].mxu0
  %v974 = vadd.f32 0.0, %v973
  %v975 = vpop.f32.mrb[0].mxu0
  %v976 = vpop.f32.mrb[0].mxu0
  %v977 = vpop.f32.mrb[0].mxu0
  %978 = vdwg.mxu0
  %v979 = vsel %vm498, -1e+09, %v974
  %v980 = vsel %vm547, %v979, -inf
  %981 = vmax.xlane.f32.xlu0 %v980
  %v982 = vpop.xlane.xlu0 %981
  %v983 = vsub.f32 %v979, %v982
  %v984 = vmul.f32 %v983, 1.442695
  %v985 = vpow.pop %v984
  %v986 = vsel %vm547, %v985, 0.0
  %987 = vadd.xlane.f32.xlu0 %v986
  %v988 = vpop.xlane.xlu0 %987
  %v989 = vrcp.pop %v988
  %v990 = vmul.f32 %v985, %v989
  %v991 = vpack.c.bf16 %v990, %v990
  %v993 = vrot.slane %v493, 4
  %v995 = vsel %vm547, %v991, 0
  %v998 = vsel %vm563, %v993, 0
  %1000 = vmatprep.subr.bf16.mxu0 0
  %1001 = vmatpush1.bf16.msra.mxu0 %v998
  %1002 = vmatprep.subr.bf16.mxu0 0
  %1003 = vmatpush1.bf16.msra.mxu0 0
  %1004 = vmatprep.subr.bf16.mxu0 0
  %1005 = vmatpush1.bf16.msra.mxu0 0
  %1006 = vmatprep.subr.bf16.mxu0 0
  %1007 = vmatpush1.bf16.msra.mxu0 0
  %1008 = vmatprep.subr.bf16.mxu0 0
  %1009 = vmatpush1.bf16.msra.mxu0 0
  %1010 = vmatprep.subr.bf16.mxu0 0
  %1011 = vmatpush1.bf16.msra.mxu0 0
  %1012 = vmatprep.subr.bf16.mxu0 0
  %1013 = vmatpush1.bf16.msra.mxu0 0
  %1014 = vmatprep.subr.bf16.mxu0 0
  %1015 = vmatpush1.bf16.msra.mxu0 0
  %1016 = vmatprep.subr.bf16.mxu0 0
  %1017 = vmatpush1.bf16.msra.mxu0 0
  %1018 = vmatprep.subr.bf16.mxu0 0
  %1019 = vmatpush1.bf16.msra.mxu0 0
  %1020 = vmatprep.subr.bf16.mxu0 0
  %1021 = vmatpush1.bf16.msra.mxu0 0
  %1022 = vmatprep.subr.bf16.mxu0 0
  %1023 = vmatpush1.bf16.msra.mxu0 0
  %1024 = vmatprep.subr.bf16.mxu0 0
  %1025 = vmatpush1.bf16.msra.mxu0 0
  %1026 = vmatprep.subr.bf16.mxu0 0
  %1027 = vmatpush1.bf16.msra.mxu0 0
  %1028 = vmatprep.subr.bf16.mxu0 0
  %1029 = vmatpush1.bf16.msra.mxu0 0
  %1030 = vmatprep.subr.bf16.mxu0 0
  %1031 = vmatpush1.bf16.msra.mxu0 0
  %1032 = vmatprep.mubr.bf16.mxu0 0
  %1033 = vmatmul.mubr.bf16.gmra.mrb[0].mxu0 %v995
  %v1034 = vpop.f32.mrb[0].mxu0
  %v1035 = vadd.f32 0.0, %v1034
  %v1036 = vpop.f32.mrb[0].mxu0
  %v1037 = vpop.f32.mrb[0].mxu0
  %v1038 = vpop.f32.mrb[0].mxu0
  %1039 = vdwg.mxu0
  %v1040 = vpack.c.bf16 %v1035, %v1035
  %v1042 = vsel %vm499, %v1040, 0
  %1044 = vmatprep.subr.bf16.mxu0 0
  %1045 = vmatpush1.bf16.msra.mxu0 %v723
  %1046 = vmatprep.subr.bf16.mxu0 0
  %1047 = vmatpush1.bf16.msra.mxu0 0
  %1048 = vmatprep.subr.bf16.mxu0 0
  %1049 = vmatpush1.bf16.msra.mxu0 0
  %1050 = vmatprep.subr.bf16.mxu0 0
  %1051 = vmatpush1.bf16.msra.mxu0 0
  %1052 = vmatprep.subr.bf16.mxu0 0
  %1053 = vmatpush1.bf16.msra.mxu0 0
  %1054 = vmatprep.subr.bf16.mxu0 0
  %1055 = vmatpush1.bf16.msra.mxu0 0
  %1056 = vmatprep.subr.bf16.mxu0 0
  %1057 = vmatpush1.bf16.msra.mxu0 0
  %1058 = vmatprep.subr.bf16.mxu0 0
  %1059 = vmatpush1.bf16.msra.mxu0 0
  %1060 = vmatprep.subr.bf16.mxu0 0
  %1061 = vmatpush1.bf16.msra.mxu0 0
  %1062 = vmatprep.subr.bf16.mxu0 0
  %1063 = vmatpush1.bf16.msra.mxu0 0
  %1064 = vmatprep.subr.bf16.mxu0 0
  %1065 = vmatpush1.bf16.msra.mxu0 0
  %1066 = vmatprep.subr.bf16.mxu0 0
  %1067 = vmatpush1.bf16.msra.mxu0 0
  %1068 = vmatprep.subr.bf16.mxu0 0
  %1069 = vmatpush1.bf16.msra.mxu0 0
  %1070 = vmatprep.subr.bf16.mxu0 0
  %1071 = vmatpush1.bf16.msra.mxu0 0
  %1072 = vmatprep.subr.bf16.mxu0 0
  %1073 = vmatpush1.bf16.msra.mxu0 0
  %1074 = vmatprep.subr.bf16.mxu0 0
  %1075 = vmatpush1.bf16.msra.mxu0 0
  %1076 = vmatprep.mubr.bf16.mxu0 0
  %1077 = vmatmul.mubr.bf16.gmra.mrb[0].mxu0 %v1042
  %v1078 = vpop.f32.mrb[0].mxu0
  %v1079 = vadd.f32 0.0, %v1078
  %v1080 = vpop.f32.mrb[0].mxu0
  %v1081 = vpop.f32.mrb[0].mxu0
  %v1082 = vpop.f32.mrb[0].mxu0
  %1083 = vdwg.mxu0
  %v1085 = vsel %vm499, %v928, 0
  %1087 = vmatprep.subr.bf16.mxu0 0
  %1088 = vmatpush1.bf16.msra.mxu0 %v772
  %1089 = vmatprep.subr.bf16.mxu0 0
  %1090 = vmatpush1.bf16.msra.mxu0 0
  %1091 = vmatprep.subr.bf16.mxu0 0
  %1092 = vmatpush1.bf16.msra.mxu0 0
  %1093 = vmatprep.subr.bf16.mxu0 0
  %1094 = vmatpush1.bf16.msra.mxu0 0
  %1095 = vmatprep.subr.bf16.mxu0 0
  %1096 = vmatpush1.bf16.msra.mxu0 0
  %1097 = vmatprep.subr.bf16.mxu0 0
  %1098 = vmatpush1.bf16.msra.mxu0 0
  %1099 = vmatprep.subr.bf16.mxu0 0
  %1100 = vmatpush1.bf16.msra.mxu0 0
  %1101 = vmatprep.subr.bf16.mxu0 0
  %1102 = vmatpush1.bf16.msra.mxu0 0
  %1103 = vmatprep.subr.bf16.mxu0 0
  %1104 = vmatpush1.bf16.msra.mxu0 0
  %1105 = vmatprep.subr.bf16.mxu0 0
  %1106 = vmatpush1.bf16.msra.mxu0 0
  %1107 = vmatprep.subr.bf16.mxu0 0
  %1108 = vmatpush1.bf16.msra.mxu0 0
  %1109 = vmatprep.subr.bf16.mxu0 0
  %1110 = vmatpush1.bf16.msra.mxu0 0
  %1111 = vmatprep.subr.bf16.mxu0 0
  %1112 = vmatpush1.bf16.msra.mxu0 0
  %1113 = vmatprep.subr.bf16.mxu0 0
  %1114 = vmatpush1.bf16.msra.mxu0 0
  %1115 = vmatprep.subr.bf16.mxu0 0
  %1116 = vmatpush1.bf16.msra.mxu0 0
  %1117 = vmatprep.subr.bf16.mxu0 0
  %1118 = vmatpush1.bf16.msra.mxu0 0
  %1119 = vmatprep.mubr.bf16.mxu0 0
  %1120 = vmatmul.mubr.bf16.gmra.mrb[0].mxu0 %v1085
  %v1121 = vpop.f32.mrb[0].mxu0
  %v1122 = vadd.f32 %v1079, %v1121
  %v1123 = vpop.f32.mrb[0].mxu0
  %v1124 = vpop.f32.mrb[0].mxu0
  %v1125 = vpop.f32.mrb[0].mxu0
  %1126 = vdwg.mxu0
  %v1127 = vld [vmem:[%s6] sm:$0x1]
  %v1129 = vlaneseq
  %v1130 = vshrl.u32 %v1129, 7
  %v1131 = vsub.s32 0, %v1130
  %v1132 = vrot.slane %v1127, %v1131
  %v1134 = vadd.f32 %v812, %v1132
  %v1135 = vadd.f32 %v1122, %v1132
  %v1136 = vunpack.c.l.bf16 %v79
  %v1137 = vunpack.c.l.bf16 %v80
  %v1138 = vadd.f32 %v1136, %v1134
  %v1139 = vadd.f32 %v1137, %v1135
  %v1140 = vld [vmem:[%s7] sm:$0x1]
  %v1141 = vld [vmem:[%s8] sm:$0x1]
  %v1142 = vsel %vm113, %v1138, 0.0
  %1143 = vadd.xlane.f32.xlu0 %v1142
  %v1144 = vpop.xlane.xlu0 %1143
  %v1145 = vsel %vm113, %v1139, 0.0
  %1146 = vadd.xlane.f32.xlu0 %v1145
  %v1147 = vpop.xlane.xlu0 %1146
  %v1148 = vrcp.pop 32.0
  %v1149 = vmul.f32 %v1144, %v1148
  %v1150 = vmul.f32 %v1147, %v1148
  %v1151 = vsub.f32 %v1138, %v1149
  %v1152 = vsub.f32 %v1139, %v1150
  %v1153 = vmul.f32 %v1151, %v1151
  %v1154 = vmul.f32 %v1152, %v1152
  %v1155 = vsel %vm113, %v1153, 0.0
  %1156 = vadd.xlane.f32.xlu0 %v1155
  %v1157 = vpop.xlane.xlu0 %1156
  %v1158 = vsel %vm113, %v1154, 0.0
  %1159 = vadd.xlane.f32.xlu0 %v1158
  %v1160 = vpop.xlane.xlu0 %1159
  %v1161 = vmul.f32 %v1157, %v1148
  %v1162 = vmul.f32 %v1160, %v1148
  %v1163 = vadd.f32 %v1161, 1e-05
  %v1164 = vadd.f32 %v1162, 1e-05
  %v1165 = vrsqrt.pop %v1163
  %v1166 = vrsqrt.pop %v1164
  %v1167 = vmul.f32 %v1151, %v1165
  %v1168 = vmul.f32 %v1152, %v1166
  %v1170 = vlaneseq
  %v1171 = vshrl.u32 %v1170, 7
  %v1172 = vsub.s32 0, %v1171
  %v1173 = vrot.slane %v1140, %v1172
  %v1175 = vmul.f32 %v1167, %v1173
  %v1176 = vmul.f32 %v1168, %v1173
  %v1178 = vlaneseq
  %v1179 = vshrl.u32 %v1178, 7
  %v1180 = vsub.s32 0, %v1179
  %v1181 = vrot.slane %v1141, %v1180
  %v1183 = vadd.f32 %v1175, %v1181
  %v1184 = vadd.f32 %v1176, %v1181
  %v1185 = vpack.c.bf16 %v1184, %v1183
  %v1186 = vld [vmem:[%s9] sm:$0xf]
  %v1187 = vld [vmem:[%s9 + $0x4] sm:$0xf]
  %v1188 = vld [vmem:[%s9 + $0x8] sm:$0xf]
  %v1189 = vld [vmem:[%s9 + $0xc] sm:$0xf]
  %v1190 = vld [vmem:[%s10] sm:$0x1]
  %v1192 = vlaneseq
  %v1193 = vshrl.u32 %v1192, 7
  %v1194 = vsub.s32 0, %v1193
  %v1195 = vrot.slane %v1190, %v1194
  %v1201 = vunpack.c.l.b16 %v1186
  %v1202 = vunpack.c.l.b16 %v1187
  %v1203 = vunpack.c.l.b16 %v1188
  %v1204 = vunpack.c.l.b16 %v1189
  %v1205 = vpack.c.b16 %v1202, %v1201
  %v1206 = vpack.c.b16 %v1204, %v1203
  %v1210 = vsel %vm113, %v1185, 0
  %1212 = vmatprep.subr.bf16.mxu0 0
  %1213 = vmatpush1.bf16.msra.mxu0 %v1205
  %1214 = vmatprep.subr.bf16.mxu0 0
  %1215 = vmatpush1.bf16.msra.mxu0 %v1206
  %1216 = vmatprep.subr.bf16.mxu0 0
  %1217 = vmatpush1.bf16.msra.mxu0 0
  %1218 = vmatprep.subr.bf16.mxu0 0
  %1219 = vmatpush1.bf16.msra.mxu0 0
  %1220 = vmatprep.subr.bf16.mxu0 0
  %1221 = vmatpush1.bf16.msra.mxu0 0
  %1222 = vmatprep.subr.bf16.mxu0 0
  %1223 = vmatpush1.bf16.msra.mxu0 0
  %1224 = vmatprep.subr.bf16.mxu0 0
  %1225 = vmatpush1.bf16.msra.mxu0 0
  %1226 = vmatprep.subr.bf16.mxu0 0
  %1227 = vmatpush1.bf16.msra.mxu0 0
  %1228 = vmatprep.subr.bf16.mxu0 0
  %1229 = vmatpush1.bf16.msra.mxu0 0
  %1230 = vmatprep.subr.bf16.mxu0 0
  %1231 = vmatpush1.bf16.msra.mxu0 0
  %1232 = vmatprep.subr.bf16.mxu0 0
  %1233 = vmatpush1.bf16.msra.mxu0 0
  %1234 = vmatprep.subr.bf16.mxu0 0
  %1235 = vmatpush1.bf16.msra.mxu0 0
  %1236 = vmatprep.subr.bf16.mxu0 0
  %1237 = vmatpush1.bf16.msra.mxu0 0
  %1238 = vmatprep.subr.bf16.mxu0 0
  %1239 = vmatpush1.bf16.msra.mxu0 0
  %1240 = vmatprep.subr.bf16.mxu0 0
  %1241 = vmatpush1.bf16.msra.mxu0 0
  %1242 = vmatprep.subr.bf16.mxu0 0
  %1243 = vmatpush1.bf16.msra.mxu0 0
  %1244 = vmatprep.mubr.bf16.mxu0 0
  %1245 = vmatmul.mubr.bf16.gmra.mrb[0].mxu0 %v1210
  %v1246 = vpop.f32.mrb[0].mxu0
  %v1247 = vadd.f32 %v1195, %v1246
  %v1248 = vpop.f32.mrb[0].mxu0
  %v1249 = vpop.f32.mrb[0].mxu0
  %v1250 = vadd.f32 %v1195, %v1249
  %v1251 = vpop.f32.mrb[0].mxu0
  %1252 = vdwg.mxu0
  %v1253 = vpack.c.bf16 %v1250, %v1247
  %v1254 = vld [vmem:[%s11] sm:$0xf]
  %v1255 = vld [vmem:[%s11 + $0x4] sm:$0xf]
  %v1256 = vld [vmem:[%s11 + $0x8] sm:$0xf]
  %v1257 = vld [vmem:[%s11 + $0xc] sm:$0xf]
  %v1258 = vld [vmem:[%s12] sm:$0x1]
  %v1260 = vlaneseq
  %v1261 = vshrl.u32 %v1260, 7
  %v1262 = vsub.s32 0, %v1261
  %v1263 = vrot.slane %v1258, %v1262
  %v1269 = vunpack.c.l.b16 %v81
  %v1270 = vunpack.c.l.b16 %v82
  %v1271 = vunpack.c.l.b16 %v83
  %v1272 = vunpack.c.l.b16 %v84
  %v1273 = vpack.c.b16 %v1270, %v1269
  %v1274 = vpack.c.b16 %v1272, %v1271
  %v1279 = vunpack.c.l.b16 %v1254
  %v1280 = vunpack.c.l.b16 %v1255
  %v1281 = vunpack.c.l.b16 %v1256
  %v1282 = vunpack.c.l.b16 %v1257
  %v1283 = vpack.c.b16 %v1280, %v1279
  %v1284 = vpack.c.b16 %v1282, %v1281
  %v1288 = vsel %vm113, %v1273, 0
  %v1291 = vsel %vm113, %v1274, 0
  %1293 = vmatprep.subr.bf16.mxu0 0
  %1294 = vmatpush1.bf16.msra.mxu0 %v1283
  %1295 = vmatprep.subr.bf16.mxu0 0
  %1296 = vmatpush1.bf16.msra.mxu0 %v1284
  %1297 = vmatprep.subr.bf16.mxu0 0
  %1298 = vmatpush1.bf16.msra.mxu0 0
  %1299 = vmatprep.subr.bf16.mxu0 0
  %1300 = vmatpush1.bf16.msra.mxu0 0
  %1301 = vmatprep.subr.bf16.mxu0 0
  %1302 = vmatpush1.bf16.msra.mxu0 0
  %1303 = vmatprep.subr.bf16.mxu0 0
  %1304 = vmatpush1.bf16.msra.mxu0 0
  %1305 = vmatprep.subr.bf16.mxu0 0
  %1306 = vmatpush1.bf16.msra.mxu0 0
  %1307 = vmatprep.subr.bf16.mxu0 0
  %1308 = vmatpush1.bf16.msra.mxu0 0
  %1309 = vmatprep.subr.bf16.mxu0 0
  %1310 = vmatpush1.bf16.msra.mxu0 0
  %1311 = vmatprep.subr.bf16.mxu0 0
  %1312 = vmatpush1.bf16.msra.mxu0 0
  %1313 = vmatprep.subr.bf16.mxu0 0
  %1314 = vmatpush1.bf16.msra.mxu0 0
  %1315 = vmatprep.subr.bf16.mxu0 0
  %1316 = vmatpush1.bf16.msra.mxu0 0
  %1317 = vmatprep.subr.bf16.mxu0 0
  %1318 = vmatpush1.bf16.msra.mxu0 0
  %1319 = vmatprep.subr.bf16.mxu0 0
  %1320 = vmatpush1.bf16.msra.mxu0 0
  %1321 = vmatprep.subr.bf16.mxu0 0
  %1322 = vmatpush1.bf16.msra.mxu0 0
  %1323 = vmatprep.subr.bf16.mxu0 0
  %1324 = vmatpush1.bf16.msra.mxu0 0
  %1325 = vmatprep.mubr.bf16.mxu0 0
  %1326 = vmatmul.mubr.bf16.gmra.mrb[0].mxu0 %v1288
  %v1327 = vpop.f32.mrb[0].mxu0
  %v1328 = vadd.f32 %v1263, %v1327
  %v1329 = vpop.f32.mrb[0].mxu0
  %v1330 = vpop.f32.mrb[0].mxu0
  %v1331 = vadd.f32 %v1263, %v1330
  %v1332 = vpop.f32.mrb[0].mxu0
  %1333 = vmatprep.mubr.bf16.mxu0 0
  %1334 = vmatmul.mubr.bf16.gmra.mrb[0].mxu0 %v1291
  %v1335 = vpop.f32.mrb[0].mxu0
  %v1336 = vadd.f32 %v1263, %v1335
  %v1337 = vpop.f32.mrb[0].mxu0
  %v1338 = vpop.f32.mrb[0].mxu0
  %v1339 = vadd.f32 %v1263, %v1338
  %v1340 = vpop.f32.mrb[0].mxu0
  %1341 = vdwg.mxu0
  %v1342 = vpack.c.bf16 %v1331, %v1328
  %v1343 = vpack.c.bf16 %v1339, %v1336
  %s1344 = scalar_lea.vmem %s11, 32
  %v1345 = vld [vmem:[%s1344] sm:$0xf]
  %v1346 = vld [vmem:[%s1344 + $0x4] sm:$0xf]
  %v1347 = vld [vmem:[%s1344 + $0x8] sm:$0xf]
  %v1348 = vld [vmem:[%s1344 + $0xc] sm:$0xf]
  %s1349 = scalar_lea.vmem %s12, 2
  %v1350 = vld [vmem:[%s1349] sm:$0x1]
  %v1352 = vlaneseq
  %v1353 = vshrl.u32 %v1352, 7
  %v1354 = vsub.s32 0, %v1353
  %v1355 = vrot.slane %v1350, %v1354
  %v1361 = vunpack.c.l.b16 %v1345
  %v1362 = vunpack.c.l.b16 %v1346
  %v1363 = vunpack.c.l.b16 %v1347
  %v1364 = vunpack.c.l.b16 %v1348
  %v1365 = vpack.c.b16 %v1362, %v1361
  %v1366 = vpack.c.b16 %v1364, %v1363
  %1369 = vmatprep.subr.bf16.mxu0 0
  %1370 = vmatpush1.bf16.msra.mxu0 %v1365
  %1371 = vmatprep.subr.bf16.mxu0 0
  %1372 = vmatpush1.bf16.msra.mxu0 %v1366
  %1373 = vmatprep.subr.bf16.mxu0 0
  %1374 = vmatpush1.bf16.msra.mxu0 0
  %1375 = vmatprep.subr.bf16.mxu0 0
  %1376 = vmatpush1.bf16.msra.mxu0 0
  %1377 = vmatprep.subr.bf16.mxu0 0
  %1378 = vmatpush1.bf16.msra.mxu0 0
  %1379 = vmatprep.subr.bf16.mxu0 0
  %1380 = vmatpush1.bf16.msra.mxu0 0
  %1381 = vmatprep.subr.bf16.mxu0 0
  %1382 = vmatpush1.bf16.msra.mxu0 0
  %1383 = vmatprep.subr.bf16.mxu0 0
  %1384 = vmatpush1.bf16.msra.mxu0 0
  %1385 = vmatprep.subr.bf16.mxu0 0
  %1386 = vmatpush1.bf16.msra.mxu0 0
  %1387 = vmatprep.subr.bf16.mxu0 0
  %1388 = vmatpush1.bf16.msra.mxu0 0
  %1389 = vmatprep.subr.bf16.mxu0 0
  %1390 = vmatpush1.bf16.msra.mxu0 0
  %1391 = vmatprep.subr.bf16.mxu0 0
  %1392 = vmatpush1.bf16.msra.mxu0 0
  %1393 = vmatprep.subr.bf16.mxu0 0
  %1394 = vmatpush1.bf16.msra.mxu0 0
  %1395 = vmatprep.subr.bf16.mxu0 0
  %1396 = vmatpush1.bf16.msra.mxu0 0
  %1397 = vmatprep.subr.bf16.mxu0 0
  %1398 = vmatpush1.bf16.msra.mxu0 0
  %1399 = vmatprep.subr.bf16.mxu0 0
  %1400 = vmatpush1.bf16.msra.mxu0 0
  %1401 = vmatprep.mubr.bf16.mxu0 0
  %1402 = vmatmul.mubr.bf16.gmra.mrb[0].mxu0 %v1288
  %v1403 = vpop.f32.mrb[0].mxu0
  %v1404 = vadd.f32 %v1355, %v1403
  %v1405 = vpop.f32.mrb[0].mxu0
  %v1406 = vpop.f32.mrb[0].mxu0
  %v1407 = vadd.f32 %v1355, %v1406
  %v1408 = vpop.f32.mrb[0].mxu0
  %1409 = vmatprep.mubr.bf16.mxu0 0
  %1410 = vmatmul.mubr.bf16.gmra.mrb[0].mxu0 %v1291
  %v1411 = vpop.f32.mrb[0].mxu0
  %v1412 = vadd.f32 %v1355, %v1411
  %v1413 = vpop.f32.mrb[0].mxu0
  %v1414 = vpop.f32.mrb[0].mxu0
  %v1415 = vadd.f32 %v1355, %v1414
  %v1416 = vpop.f32.mrb[0].mxu0
  %1417 = vdwg.mxu0
  %v1418 = vpack.c.bf16 %v1407, %v1404
  %v1419 = vpack.c.bf16 %v1415, %v1412
  %s1420 = scalar_lea.vmem %s9, 16
  %v1421 = vld [vmem:[%s1420] sm:$0xf]
  %v1422 = vld [vmem:[%s1420 + $0x4] sm:$0xf]
  %v1423 = vld [vmem:[%s1420 + $0x8] sm:$0xf]
  %v1424 = vld [vmem:[%s1420 + $0xc] sm:$0xf]
  %s1425 = scalar_lea.vmem %s10, 1
  %v1426 = vld [vmem:[%s1425] sm:$0x1]
  %v1428 = vlaneseq
  %v1429 = vshrl.u32 %v1428, 7
  %v1430 = vsub.s32 0, %v1429
  %v1431 = vrot.slane %v1426, %v1430
  %v1437 = vunpack.c.l.b16 %v1421
  %v1438 = vunpack.c.l.b16 %v1422
  %v1439 = vunpack.c.l.b16 %v1423
  %v1440 = vunpack.c.l.b16 %v1424
  %v1441 = vpack.c.b16 %v1438, %v1437
  %v1442 = vpack.c.b16 %v1440, %v1439
  %1445 = vmatprep.subr.bf16.mxu0 0
  %1446 = vmatpush1.bf16.msra.mxu0 %v1441
  %1447 = vmatprep.subr.bf16.mxu0 0
  %1448 = vmatpush1.bf16.msra.mxu0 %v1442
  %1449 = vmatprep.subr.bf16.mxu0 0
  %1450 = vmatpush1.bf16.msra.mxu0 0
  %1451 = vmatprep.subr.bf16.mxu0 0
  %1452 = vmatpush1.bf16.msra.mxu0 0
  %1453 = vmatprep.subr.bf16.mxu0 0
  %1454 = vmatpush1.bf16.msra.mxu0 0
  %1455 = vmatprep.subr.bf16.mxu0 0
  %1456 = vmatpush1.bf16.msra.mxu0 0
  %1457 = vmatprep.subr.bf16.mxu0 0
  %1458 = vmatpush1.bf16.msra.mxu0 0
  %1459 = vmatprep.subr.bf16.mxu0 0
  %1460 = vmatpush1.bf16.msra.mxu0 0
  %1461 = vmatprep.subr.bf16.mxu0 0
  %1462 = vmatpush1.bf16.msra.mxu0 0
  %1463 = vmatprep.subr.bf16.mxu0 0
  %1464 = vmatpush1.bf16.msra.mxu0 0
  %1465 = vmatprep.subr.bf16.mxu0 0
  %1466 = vmatpush1.bf16.msra.mxu0 0
  %1467 = vmatprep.subr.bf16.mxu0 0
  %1468 = vmatpush1.bf16.msra.mxu0 0
  %1469 = vmatprep.subr.bf16.mxu0 0
  %1470 = vmatpush1.bf16.msra.mxu0 0
  %1471 = vmatprep.subr.bf16.mxu0 0
  %1472 = vmatpush1.bf16.msra.mxu0 0
  %1473 = vmatprep.subr.bf16.mxu0 0
  %1474 = vmatpush1.bf16.msra.mxu0 0
  %1475 = vmatprep.subr.bf16.mxu0 0
  %1476 = vmatpush1.bf16.msra.mxu0 0
  %1477 = vmatprep.mubr.bf16.mxu0 0
  %1478 = vmatmul.mubr.bf16.gmra.mrb[0].mxu0 %v1210
  %v1479 = vpop.f32.mrb[0].mxu0
  %v1480 = vadd.f32 %v1431, %v1479
  %v1481 = vpop.f32.mrb[0].mxu0
  %v1482 = vpop.f32.mrb[0].mxu0
  %v1483 = vadd.f32 %v1431, %v1482
  %v1484 = vpop.f32.mrb[0].mxu0
  %1485 = vdwg.mxu0
  %v1486 = vpack.c.bf16 %v1483, %v1480
  %s1487 = scalar_lea.vmem %s11, 16
  %v1488 = vld [vmem:[%s1487] sm:$0xf]
  %v1489 = vld [vmem:[%s1487 + $0x4] sm:$0xf]
  %v1490 = vld [vmem:[%s1487 + $0x8] sm:$0xf]
  %v1491 = vld [vmem:[%s1487 + $0xc] sm:$0xf]
  %s1492 = scalar_lea.vmem %s12, 1
  %v1493 = vld [vmem:[%s1492] sm:$0x1]
  %v1495 = vlaneseq
  %v1496 = vshrl.u32 %v1495, 7
  %v1497 = vsub.s32 0, %v1496
  %v1498 = vrot.slane %v1493, %v1497
  %v1504 = vunpack.c.l.b16 %v1488
  %v1505 = vunpack.c.l.b16 %v1489
  %v1506 = vunpack.c.l.b16 %v1490
  %v1507 = vunpack.c.l.b16 %v1491
  %v1508 = vpack.c.b16 %v1505, %v1504
  %v1509 = vpack.c.b16 %v1507, %v1506
  %1512 = vmatprep.subr.bf16.mxu0 0
  %1513 = vmatpush1.bf16.msra.mxu0 %v1508
  %1514 = vmatprep.subr.bf16.mxu0 0
  %1515 = vmatpush1.bf16.msra.mxu0 %v1509
  %1516 = vmatprep.subr.bf16.mxu0 0
  %1517 = vmatpush1.bf16.msra.mxu0 0
  %1518 = vmatprep.subr.bf16.mxu0 0
  %1519 = vmatpush1.bf16.msra.mxu0 0
  %1520 = vmatprep.subr.bf16.mxu0 0
  %1521 = vmatpush1.bf16.msra.mxu0 0
  %1522 = vmatprep.subr.bf16.mxu0 0
  %1523 = vmatpush1.bf16.msra.mxu0 0
  %1524 = vmatprep.subr.bf16.mxu0 0
  %1525 = vmatpush1.bf16.msra.mxu0 0
  %1526 = vmatprep.subr.bf16.mxu0 0
  %1527 = vmatpush1.bf16.msra.mxu0 0
  %1528 = vmatprep.subr.bf16.mxu0 0
  %1529 = vmatpush1.bf16.msra.mxu0 0
  %1530 = vmatprep.subr.bf16.mxu0 0
  %1531 = vmatpush1.bf16.msra.mxu0 0
  %1532 = vmatprep.subr.bf16.mxu0 0
  %1533 = vmatpush1.bf16.msra.mxu0 0
  %1534 = vmatprep.subr.bf16.mxu0 0
  %1535 = vmatpush1.bf16.msra.mxu0 0
  %1536 = vmatprep.subr.bf16.mxu0 0
  %1537 = vmatpush1.bf16.msra.mxu0 0
  %1538 = vmatprep.subr.bf16.mxu0 0
  %1539 = vmatpush1.bf16.msra.mxu0 0
  %1540 = vmatprep.subr.bf16.mxu0 0
  %1541 = vmatpush1.bf16.msra.mxu0 0
  %1542 = vmatprep.subr.bf16.mxu0 0
  %1543 = vmatpush1.bf16.msra.mxu0 0
  %1544 = vmatprep.mubr.bf16.mxu0 0
  %1545 = vmatmul.mubr.bf16.gmra.mrb[0].mxu0 %v1288
  %v1546 = vpop.f32.mrb[0].mxu0
  %v1547 = vadd.f32 %v1498, %v1546
  %v1548 = vpop.f32.mrb[0].mxu0
  %v1549 = vpop.f32.mrb[0].mxu0
  %v1550 = vadd.f32 %v1498, %v1549
  %v1551 = vpop.f32.mrb[0].mxu0
  %1552 = vmatprep.mubr.bf16.mxu0 0
  %1553 = vmatmul.mubr.bf16.gmra.mrb[0].mxu0 %v1291
  %v1554 = vpop.f32.mrb[0].mxu0
  %v1555 = vadd.f32 %v1498, %v1554
  %v1556 = vpop.f32.mrb[0].mxu0
  %v1557 = vpop.f32.mrb[0].mxu0
  %v1558 = vadd.f32 %v1498, %v1557
  %v1559 = vpop.f32.mrb[0].mxu0
  %1560 = vdwg.mxu0
  %v1561 = vpack.c.bf16 %v1550, %v1547
  %v1562 = vpack.c.bf16 %v1558, %v1555
  %s1563 = scalar_lea.vmem %s11, 48
  %v1564 = vld [vmem:[%s1563] sm:$0xf]
  %v1565 = vld [vmem:[%s1563 + $0x4] sm:$0xf]
  %v1566 = vld [vmem:[%s1563 + $0x8] sm:$0xf]
  %v1567 = vld [vmem:[%s1563 + $0xc] sm:$0xf]
  %s1568 = scalar_lea.vmem %s12, 3
  %v1569 = vld [vmem:[%s1568] sm:$0x1]
  %v1571 = vlaneseq
  %v1572 = vshrl.u32 %v1571, 7
  %v1573 = vsub.s32 0, %v1572
  %v1574 = vrot.slane %v1569, %v1573
  %v1580 = vunpack.c.l.b16 %v1564
  %v1581 = vunpack.c.l.b16 %v1565
  %v1582 = vunpack.c.l.b16 %v1566
  %v1583 = vunpack.c.l.b16 %v1567
  %v1584 = vpack.c.b16 %v1581, %v1580
  %v1585 = vpack.c.b16 %v1583, %v1582
  %1588 = vmatprep.subr.bf16.mxu0 0
  %1589 = vmatpush1.bf16.msra.mxu0 %v1584
  %1590 = vmatprep.subr.bf16.mxu0 0
  %1591 = vmatpush1.bf16.msra.mxu0 %v1585
  %1592 = vmatprep.subr.bf16.mxu0 0
  %1593 = vmatpush1.bf16.msra.mxu0 0
  %1594 = vmatprep.subr.bf16.mxu0 0
  %1595 = vmatpush1.bf16.msra.mxu0 0
  %1596 = vmatprep.subr.bf16.mxu0 0
  %1597 = vmatpush1.bf16.msra.mxu0 0
  %1598 = vmatprep.subr.bf16.mxu0 0
  %1599 = vmatpush1.bf16.msra.mxu0 0
  %1600 = vmatprep.subr.bf16.mxu0 0
  %1601 = vmatpush1.bf16.msra.mxu0 0
  %1602 = vmatprep.subr.bf16.mxu0 0
  %1603 = vmatpush1.bf16.msra.mxu0 0
  %1604 = vmatprep.subr.bf16.mxu0 0
  %1605 = vmatpush1.bf16.msra.mxu0 0
  %1606 = vmatprep.subr.bf16.mxu0 0
  %1607 = vmatpush1.bf16.msra.mxu0 0
  %1608 = vmatprep.subr.bf16.mxu0 0
  %1609 = vmatpush1.bf16.msra.mxu0 0
  %1610 = vmatprep.subr.bf16.mxu0 0
  %1611 = vmatpush1.bf16.msra.mxu0 0
  %1612 = vmatprep.subr.bf16.mxu0 0
  %1613 = vmatpush1.bf16.msra.mxu0 0
  %1614 = vmatprep.subr.bf16.mxu0 0
  %1615 = vmatpush1.bf16.msra.mxu0 0
  %1616 = vmatprep.subr.bf16.mxu0 0
  %1617 = vmatpush1.bf16.msra.mxu0 0
  %1618 = vmatprep.subr.bf16.mxu0 0
  %1619 = vmatpush1.bf16.msra.mxu0 0
  %1620 = vmatprep.mubr.bf16.mxu0 0
  %1621 = vmatmul.mubr.bf16.gmra.mrb[0].mxu0 %v1288
  %v1622 = vpop.f32.mrb[0].mxu0
  %v1623 = vadd.f32 %v1574, %v1622
  %v1624 = vpop.f32.mrb[0].mxu0
  %v1625 = vpop.f32.mrb[0].mxu0
  %v1626 = vadd.f32 %v1574, %v1625
  %v1627 = vpop.f32.mrb[0].mxu0
  %1628 = vmatprep.mubr.bf16.mxu0 0
  %1629 = vmatmul.mubr.bf16.gmra.mrb[0].mxu0 %v1291
  %v1630 = vpop.f32.mrb[0].mxu0
  %v1631 = vadd.f32 %v1574, %v1630
  %v1632 = vpop.f32.mrb[0].mxu0
  %v1633 = vpop.f32.mrb[0].mxu0
  %v1634 = vadd.f32 %v1574, %v1633
  %v1635 = vpop.f32.mrb[0].mxu0
  %1636 = vdwg.mxu0
  %v1637 = vpack.c.bf16 %v1626, %v1623
  %v1638 = vpack.c.bf16 %v1634, %v1631
  %s1639 = sld [smem:[#allocation3]]
  %v1640 = vstv %s1639
  %vm1641 = vcmp.ge.s32.totalorder %v495, %v1640
  %v1643 = vsel %vm499, %v1253, 0
  %v1646 = vsel %vm499, %v1342, 0
  %1648 = vmatprep.subr.bf16.mxu0 0
  %1649 = vmatpush1.bf16.xpose.msra.mxu0 %v1646
  %1650 = vmatprep.subr.bf16.mxu0 0
  %1651 = vmatpush1.bf16.xpose.msra.mxu0 0
  %1652 = vmatprep.subr.bf16.mxu0 0
  %1653 = vmatpush1.bf16.xpose.msra.mxu0 0
  %1654 = vmatprep.subr.bf16.mxu0 0
  %1655 = vmatpush1.bf16.xpose.msra.mxu0 0
  %1656 = vmatprep.subr.bf16.mxu0 0
  %1657 = vmatpush1.bf16.xpose.msra.mxu0 0
  %1658 = vmatprep.subr.bf16.mxu0 0
  %1659 = vmatpush1.bf16.xpose.msra.mxu0 0
  %1660 = vmatprep.subr.bf16.mxu0 0
  %1661 = vmatpush1.bf16.xpose.msra.mxu0 0
  %1662 = vmatprep.subr.bf16.mxu0 0
  %1663 = vmatpush1.bf16.xpose.msra.mxu0 0
  %1664 = vmatprep.subr.bf16.mxu0 0
  %1665 = vmatpush1.bf16.xpose.msra.mxu0 0
  %1666 = vmatprep.subr.bf16.mxu0 0
  %1667 = vmatpush1.bf16.xpose.msra.mxu0 0
  %1668 = vmatprep.subr.bf16.mxu0 0
  %1669 = vmatpush1.bf16.xpose.msra.mxu0 0
  %1670 = vmatprep.subr.bf16.mxu0 0
  %1671 = vmatpush1.bf16.xpose.msra.mxu0 0
  %1672 = vmatprep.subr.bf16.mxu0 0
  %1673 = vmatpush1.bf16.xpose.msra.mxu0 0
  %1674 = vmatprep.subr.bf16.mxu0 0
  %1675 = vmatpush1.bf16.xpose.msra.mxu0 0
  %1676 = vmatprep.subr.bf16.mxu0 0
  %1677 = vmatpush1.bf16.xpose.msra.mxu0 0
  %1678 = vmatprep.subr.bf16.mxu0 0
  %1679 = vmatpush1.bf16.xpose.msra.mxu0 0
  %1680 = vmatprep.mubr.bf16.mxu0 0
  %1681 = vmatmul.mubr.bf16.gmra.mrb[0].mxu0 %v1643
  %v1682 = vpop.f32.mrb[0].mxu0
  %v1683 = vadd.f32 0.0, %v1682
  %v1684 = vpop.f32.mrb[0].mxu0
  %v1685 = vpop.f32.mrb[0].mxu0
  %v1686 = vpop.f32.mrb[0].mxu0
  %1687 = vdwg.mxu0
  %v1688 = vsel %vm1641, -1e+09, %v1683
  %v1689 = vsel %vm499, %v1688, -inf
  %1690 = vmax.xlane.f32.xlu0 %v1689
  %v1691 = vpop.xlane.xlu0 %1690
  %v1692 = vsub.f32 %v1688, %v1691
  %v1693 = vmul.f32 %v1692, 1.442695
  %v1694 = vpow.pop %v1693
  %v1695 = vsel %vm499, %v1694, 0.0
  %1696 = vadd.xlane.f32.xlu0 %v1695
  %v1697 = vpop.xlane.xlu0 %1696
  %v1698 = vrcp.pop %v1697
  %v1699 = vmul.f32 %v1694, %v1698
  %v1700 = vpack.c.bf16 %v1699, %v1699
  %v1702 = vsel %vm499, %v1700, 0
  %1704 = vmatprep.subr.bf16.mxu0 0
  %1705 = vmatpush1.bf16.msra.mxu0 %v1418
  %1706 = vmatprep.subr.bf16.mxu0 0
  %1707 = vmatpush1.bf16.msra.mxu0 0
  %1708 = vmatprep.subr.bf16.mxu0 0
  %1709 = vmatpush1.bf16.msra.mxu0 0
  %1710 = vmatprep.subr.bf16.mxu0 0
  %1711 = vmatpush1.bf16.msra.mxu0 0
  %1712 = vmatprep.subr.bf16.mxu0 0
  %1713 = vmatpush1.bf16.msra.mxu0 0
  %1714 = vmatprep.subr.bf16.mxu0 0
  %1715 = vmatpush1.bf16.msra.mxu0 0
  %1716 = vmatprep.subr.bf16.mxu0 0
  %1717 = vmatpush1.bf16.msra.mxu0 0
  %1718 = vmatprep.subr.bf16.mxu0 0
  %1719 = vmatpush1.bf16.msra.mxu0 0
  %1720 = vmatprep.subr.bf16.mxu0 0
  %1721 = vmatpush1.bf16.msra.mxu0 0
  %1722 = vmatprep.subr.bf16.mxu0 0
  %1723 = vmatpush1.bf16.msra.mxu0 0
  %1724 = vmatprep.subr.bf16.mxu0 0
  %1725 = vmatpush1.bf16.msra.mxu0 0
  %1726 = vmatprep.subr.bf16.mxu0 0
  %1727 = vmatpush1.bf16.msra.mxu0 0
  %1728 = vmatprep.subr.bf16.mxu0 0
  %1729 = vmatpush1.bf16.msra.mxu0 0
  %1730 = vmatprep.subr.bf16.mxu0 0
  %1731 = vmatpush1.bf16.msra.mxu0 0
  %1732 = vmatprep.subr.bf16.mxu0 0
  %1733 = vmatpush1.bf16.msra.mxu0 0
  %1734 = vmatprep.subr.bf16.mxu0 0
  %1735 = vmatpush1.bf16.msra.mxu0 0
  %1736 = vmatprep.mubr.bf16.mxu0 0
  %1737 = vmatmul.mubr.bf16.gmra.mrb[0].mxu0 %v1702
  %v1738 = vpop.f32.mrb[0].mxu0
  %v1739 = vadd.f32 0.0, %v1738
  %v1740 = vpop.f32.mrb[0].mxu0
  %v1741 = vpop.f32.mrb[0].mxu0
  %v1742 = vpop.f32.mrb[0].mxu0
  %1743 = vdwg.mxu0
  %v1744 = vpack.c.bf16 %v1739, %v1739
  %v1745 = vld [vmem:[%s13] sm:$0xf]
  %v1746 = vld [vmem:[%s13 + $0x4] sm:$0xf]
  %v1748 = vsel %vm499, %v1486, 0
  %v1751 = vsel %vm499, %v1561, 0
  %1753 = vmatprep.subr.bf16.mxu0 0
  %1754 = vmatpush1.bf16.xpose.msra.mxu0 %v1751
  %1755 = vmatprep.subr.bf16.mxu0 0
  %1756 = vmatpush1.bf16.xpose.msra.mxu0 0
  %1757 = vmatprep.subr.bf16.mxu0 0
  %1758 = vmatpush1.bf16.xpose.msra.mxu0 0
  %1759 = vmatprep.subr.bf16.mxu0 0
  %1760 = vmatpush1.bf16.xpose.msra.mxu0 0
  %1761 = vmatprep.subr.bf16.mxu0 0
  %1762 = vmatpush1.bf16.xpose.msra.mxu0 0
  %1763 = vmatprep.subr.bf16.mxu0 0
  %1764 = vmatpush1.bf16.xpose.msra.mxu0 0
  %1765 = vmatprep.subr.bf16.mxu0 0
  %1766 = vmatpush1.bf16.xpose.msra.mxu0 0
  %1767 = vmatprep.subr.bf16.mxu0 0
  %1768 = vmatpush1.bf16.xpose.msra.mxu0 0
  %1769 = vmatprep.subr.bf16.mxu0 0
  %1770 = vmatpush1.bf16.xpose.msra.mxu0 0
  %1771 = vmatprep.subr.bf16.mxu0 0
  %1772 = vmatpush1.bf16.xpose.msra.mxu0 0
  %1773 = vmatprep.subr.bf16.mxu0 0
  %1774 = vmatpush1.bf16.xpose.msra.mxu0 0
  %1775 = vmatprep.subr.bf16.mxu0 0
  %1776 = vmatpush1.bf16.xpose.msra.mxu0 0
  %1777 = vmatprep.subr.bf16.mxu0 0
  %1778 = vmatpush1.bf16.xpose.msra.mxu0 0
  %1779 = vmatprep.subr.bf16.mxu0 0
  %1780 = vmatpush1.bf16.xpose.msra.mxu0 0
  %1781 = vmatprep.subr.bf16.mxu0 0
  %1782 = vmatpush1.bf16.xpose.msra.mxu0 0
  %1783 = vmatprep.subr.bf16.mxu0 0
  %1784 = vmatpush1.bf16.xpose.msra.mxu0 0
  %1785 = vmatprep.mubr.bf16.mxu0 0
  %1786 = vmatmul.mubr.bf16.gmra.mrb[0].mxu0 %v1748
  %v1787 = vpop.f32.mrb[0].mxu0
  %v1788 = vadd.f32 0.0, %v1787
  %v1789 = vpop.f32.mrb[0].mxu0
  %v1790 = vpop.f32.mrb[0].mxu0
  %v1791 = vpop.f32.mrb[0].mxu0
  %1792 = vdwg.mxu0
  %v1793 = vsel %vm1641, -1e+09, %v1788
  %v1794 = vsel %vm499, %v1793, -inf
  %1795 = vmax.xlane.f32.xlu0 %v1794
  %v1796 = vpop.xlane.xlu0 %1795
  %v1797 = vsub.f32 %v1793, %v1796
  %v1798 = vmul.f32 %v1797, 1.442695
  %v1799 = vpow.pop %v1798
  %v1800 = vsel %vm499, %v1799, 0.0
  %1801 = vadd.xlane.f32.xlu0 %v1800
  %v1802 = vpop.xlane.xlu0 %1801
  %v1803 = vrcp.pop %v1802
  %v1804 = vmul.f32 %v1799, %v1803
  %v1805 = vpack.c.bf16 %v1804, %v1804
  %v1807 = vsel %vm499, %v1805, 0
  %1809 = vmatprep.subr.bf16.mxu0 0
  %1810 = vmatpush1.bf16.msra.mxu0 %v1637
  %1811 = vmatprep.subr.bf16.mxu0 0
  %1812 = vmatpush1.bf16.msra.mxu0 0
  %1813 = vmatprep.subr.bf16.mxu0 0
  %1814 = vmatpush1.bf16.msra.mxu0 0
  %1815 = vmatprep.subr.bf16.mxu0 0
  %1816 = vmatpush1.bf16.msra.mxu0 0
  %1817 = vmatprep.subr.bf16.mxu0 0
  %1818 = vmatpush1.bf16.msra.mxu0 0
  %1819 = vmatprep.subr.bf16.mxu0 0
  %1820 = vmatpush1.bf16.msra.mxu0 0
  %1821 = vmatprep.subr.bf16.mxu0 0
  %1822 = vmatpush1.bf16.msra.mxu0 0
  %1823 = vmatprep.subr.bf16.mxu0 0
  %1824 = vmatpush1.bf16.msra.mxu0 0
  %1825 = vmatprep.subr.bf16.mxu0 0
  %1826 = vmatpush1.bf16.msra.mxu0 0
  %1827 = vmatprep.subr.bf16.mxu0 0
  %1828 = vmatpush1.bf16.msra.mxu0 0
  %1829 = vmatprep.subr.bf16.mxu0 0
  %1830 = vmatpush1.bf16.msra.mxu0 0
  %1831 = vmatprep.subr.bf16.mxu0 0
  %1832 = vmatpush1.bf16.msra.mxu0 0
  %1833 = vmatprep.subr.bf16.mxu0 0
  %1834 = vmatpush1.bf16.msra.mxu0 0
  %1835 = vmatprep.subr.bf16.mxu0 0
  %1836 = vmatpush1.bf16.msra.mxu0 0
  %1837 = vmatprep.subr.bf16.mxu0 0
  %1838 = vmatpush1.bf16.msra.mxu0 0
  %1839 = vmatprep.subr.bf16.mxu0 0
  %1840 = vmatpush1.bf16.msra.mxu0 0
  %1841 = vmatprep.mubr.bf16.mxu0 0
  %1842 = vmatmul.mubr.bf16.gmra.mrb[0].mxu0 %v1807
  %v1843 = vpop.f32.mrb[0].mxu0
  %v1844 = vadd.f32 0.0, %v1843
  %v1845 = vpop.f32.mrb[0].mxu0
  %v1846 = vpop.f32.mrb[0].mxu0
  %v1847 = vpop.f32.mrb[0].mxu0
  %1848 = vdwg.mxu0
  %v1849 = vpack.c.bf16 %v1844, %v1844
  %s1850 = scalar_lea.vmem %s13, 8
  %v1851 = vld [vmem:[%s1850] sm:$0xf]
  %v1852 = vld [vmem:[%s1850 + $0x4] sm:$0xf]
  %v1855 = vunpack.c.l.b16 %v1851
  %v1856 = vunpack.c.l.b16 %v1852
  %v1857 = vpack.c.b16 %v1856, %v1855
  %v1860 = vsel %vm499, %v1849, 0
  %1862 = vmatprep.subr.bf16.mxu0 0
  %1863 = vmatpush1.bf16.msra.mxu0 %v1857
  %1864 = vmatprep.subr.bf16.mxu0 0
  %1865 = vmatpush1.bf16.msra.mxu0 0
  %1866 = vmatprep.subr.bf16.mxu0 0
  %1867 = vmatpush1.bf16.msra.mxu0 0
  %1868 = vmatprep.subr.bf16.mxu0 0
  %1869 = vmatpush1.bf16.msra.mxu0 0
  %1870 = vmatprep.subr.bf16.mxu0 0
  %1871 = vmatpush1.bf16.msra.mxu0 0
  %1872 = vmatprep.subr.bf16.mxu0 0
  %1873 = vmatpush1.bf16.msra.mxu0 0
  %1874 = vmatprep.subr.bf16.mxu0 0
  %1875 = vmatpush1.bf16.msra.mxu0 0
  %1876 = vmatprep.subr.bf16.mxu0 0
  %1877 = vmatpush1.bf16.msra.mxu0 0
  %1878 = vmatprep.subr.bf16.mxu0 0
  %1879 = vmatpush1.bf16.msra.mxu0 0
  %1880 = vmatprep.subr.bf16.mxu0 0
  %1881 = vmatpush1.bf16.msra.mxu0 0
  %1882 = vmatprep.subr.bf16.mxu0 0
  %1883 = vmatpush1.bf16.msra.mxu0 0
  %1884 = vmatprep.subr.bf16.mxu0 0
  %1885 = vmatpush1.bf16.msra.mxu0 0
  %1886 = vmatprep.subr.bf16.mxu0 0
  %1887 = vmatpush1.bf16.msra.mxu0 0
  %1888 = vmatprep.subr.bf16.mxu0 0
  %1889 = vmatpush1.bf16.msra.mxu0 0
  %1890 = vmatprep.subr.bf16.mxu0 0
  %1891 = vmatpush1.bf16.msra.mxu0 0
  %1892 = vmatprep.subr.bf16.mxu0 0
  %1893 = vmatpush1.bf16.msra.mxu0 0
  %1894 = vmatprep.mubr.bf16.mxu0 0
  %1895 = vmatmul.mubr.bf16.gmra.mrb[0].mxu0 %v1860
  %v1896 = vpop.f32.mrb[0].mxu0
  %v1897 = vadd.f32 0.0, %v1896
  %v1898 = vpop.f32.mrb[0].mxu0
  %v1899 = vpop.f32.mrb[0].mxu0
  %v1900 = vpop.f32.mrb[0].mxu0
  %1901 = vdwg.mxu0
  %v1904 = vunpack.c.l.b16 %v1745
  %v1905 = vunpack.c.l.b16 %v1746
  %v1906 = vpack.c.b16 %v1905, %v1904
  %v1909 = vsel %vm499, %v1744, 0
  %1911 = vmatprep.subr.bf16.mxu0 0
  %1912 = vmatpush1.bf16.msra.mxu0 %v1906
  %1913 = vmatprep.subr.bf16.mxu0 0
  %1914 = vmatpush1.bf16.msra.mxu0 0
  %1915 = vmatprep.subr.bf16.mxu0 0
  %1916 = vmatpush1.bf16.msra.mxu0 0
  %1917 = vmatprep.subr.bf16.mxu0 0
  %1918 = vmatpush1.bf16.msra.mxu0 0
  %1919 = vmatprep.subr.bf16.mxu0 0
  %1920 = vmatpush1.bf16.msra.mxu0 0
  %1921 = vmatprep.subr.bf16.mxu0 0
  %1922 = vmatpush1.bf16.msra.mxu0 0
  %1923 = vmatprep.subr.bf16.mxu0 0
  %1924 = vmatpush1.bf16.msra.mxu0 0
  %1925 = vmatprep.subr.bf16.mxu0 0
  %1926 = vmatpush1.bf16.msra.mxu0 0
  %1927 = vmatprep.subr.bf16.mxu0 0
  %1928 = vmatpush1.bf16.msra.mxu0 0
  %1929 = vmatprep.subr.bf16.mxu0 0
  %1930 = vmatpush1.bf16.msra.mxu0 0
  %1931 = vmatprep.subr.bf16.mxu0 0
  %1932 = vmatpush1.bf16.msra.mxu0 0
  %1933 = vmatprep.subr.bf16.mxu0 0
  %1934 = vmatpush1.bf16.msra.mxu0 0
  %1935 = vmatprep.subr.bf16.mxu0 0
  %1936 = vmatpush1.bf16.msra.mxu0 0
  %1937 = vmatprep.subr.bf16.mxu0 0
  %1938 = vmatpush1.bf16.msra.mxu0 0
  %1939 = vmatprep.subr.bf16.mxu0 0
  %1940 = vmatpush1.bf16.msra.mxu0 0
  %1941 = vmatprep.subr.bf16.mxu0 0
  %1942 = vmatpush1.bf16.msra.mxu0 0
  %1943 = vmatprep.mubr.bf16.mxu0 0
  %1944 = vmatmul.mubr.bf16.gmra.mrb[0].mxu0 %v1909
  %v1945 = vpop.f32.mrb[0].mxu0
  %v1946 = vadd.f32 %v1897, %v1945
  %v1947 = vpop.f32.mrb[0].mxu0
  %v1948 = vpop.f32.mrb[0].mxu0
  %v1949 = vpop.f32.mrb[0].mxu0
  %1950 = vdwg.mxu0
  %s1951 = sld [smem:[#allocation3 + $0x1]]
  %v1952 = vstv %s1951
  %vm1953 = vcmp.ge.s32.totalorder %v495, %v1952
  %v1955 = vrot.slane %v1253, 4
  %v1957 = vsel %vm499, %v1955, 0
  %v1960 = vsel %vm499, %v1343, 0
  %1962 = vmatprep.subr.bf16.mxu0 0
  %1963 = vmatpush1.bf16.xpose.msra.mxu0 %v1960
  %1964 = vmatprep.subr.bf16.mxu0 0
  %1965 = vmatpush1.bf16.xpose.msra.mxu0 0
  %1966 = vmatprep.subr.bf16.mxu0 0
  %1967 = vmatpush1.bf16.xpose.msra.mxu0 0
  %1968 = vmatprep.subr.bf16.mxu0 0
  %1969 = vmatpush1.bf16.xpose.msra.mxu0 0
  %1970 = vmatprep.subr.bf16.mxu0 0
  %1971 = vmatpush1.bf16.xpose.msra.mxu0 0
  %1972 = vmatprep.subr.bf16.mxu0 0
  %1973 = vmatpush1.bf16.xpose.msra.mxu0 0
  %1974 = vmatprep.subr.bf16.mxu0 0
  %1975 = vmatpush1.bf16.xpose.msra.mxu0 0
  %1976 = vmatprep.subr.bf16.mxu0 0
  %1977 = vmatpush1.bf16.xpose.msra.mxu0 0
  %1978 = vmatprep.subr.bf16.mxu0 0
  %1979 = vmatpush1.bf16.xpose.msra.mxu0 0
  %1980 = vmatprep.subr.bf16.mxu0 0
  %1981 = vmatpush1.bf16.xpose.msra.mxu0 0
  %1982 = vmatprep.subr.bf16.mxu0 0
  %1983 = vmatpush1.bf16.xpose.msra.mxu0 0
  %1984 = vmatprep.subr.bf16.mxu0 0
  %1985 = vmatpush1.bf16.xpose.msra.mxu0 0
  %1986 = vmatprep.subr.bf16.mxu0 0
  %1987 = vmatpush1.bf16.xpose.msra.mxu0 0
  %1988 = vmatprep.subr.bf16.mxu0 0
  %1989 = vmatpush1.bf16.xpose.msra.mxu0 0
  %1990 = vmatprep.subr.bf16.mxu0 0
  %1991 = vmatpush1.bf16.xpose.msra.mxu0 0
  %1992 = vmatprep.subr.bf16.mxu0 0
  %1993 = vmatpush1.bf16.xpose.msra.mxu0 0
  %1994 = vmatprep.mubr.bf16.mxu0 0
  %1995 = vmatmul.mubr.bf16.gmra.mrb[0].mxu0 %v1957
  %v1996 = vpop.f32.mrb[0].mxu0
  %v1997 = vadd.f32 0.0, %v1996
  %v1998 = vpop.f32.mrb[0].mxu0
  %v1999 = vpop.f32.mrb[0].mxu0
  %v2000 = vpop.f32.mrb[0].mxu0
  %2001 = vdwg.mxu0
  %v2002 = vsel %vm1953, -1e+09, %v1997
  %v2003 = vsel %vm499, %v2002, -inf
  %2004 = vmax.xlane.f32.xlu0 %v2003
  %v2005 = vpop.xlane.xlu0 %2004
  %v2006 = vsub.f32 %v2002, %v2005
  %v2007 = vmul.f32 %v2006, 1.442695
  %v2008 = vpow.pop %v2007
  %v2009 = vsel %vm499, %v2008, 0.0
  %2010 = vadd.xlane.f32.xlu0 %v2009
  %v2011 = vpop.xlane.xlu0 %2010
  %v2012 = vrcp.pop %v2011
  %v2013 = vmul.f32 %v2008, %v2012
  %v2014 = vpack.c.bf16 %v2013, %v2013
  %v2016 = vsel %vm499, %v2014, 0
  %2018 = vmatprep.subr.bf16.mxu0 0
  %2019 = vmatpush1.bf16.msra.mxu0 %v1419
  %2020 = vmatprep.subr.bf16.mxu0 0
  %2021 = vmatpush1.bf16.msra.mxu0 0
  %2022 = vmatprep.subr.bf16.mxu0 0
  %2023 = vmatpush1.bf16.msra.mxu0 0
  %2024 = vmatprep.subr.bf16.mxu0 0
  %2025 = vmatpush1.bf16.msra.mxu0 0
  %2026 = vmatprep.subr.bf16.mxu0 0
  %2027 = vmatpush1.bf16.msra.mxu0 0
  %2028 = vmatprep.subr.bf16.mxu0 0
  %2029 = vmatpush1.bf16.msra.mxu0 0
  %2030 = vmatprep.subr.bf16.mxu0 0
  %2031 = vmatpush1.bf16.msra.mxu0 0
  %2032 = vmatprep.subr.bf16.mxu0 0
  %2033 = vmatpush1.bf16.msra.mxu0 0
  %2034 = vmatprep.subr.bf16.mxu0 0
  %2035 = vmatpush1.bf16.msra.mxu0 0
  %2036 = vmatprep.subr.bf16.mxu0 0
  %2037 = vmatpush1.bf16.msra.mxu0 0
  %2038 = vmatprep.subr.bf16.mxu0 0
  %2039 = vmatpush1.bf16.msra.mxu0 0
  %2040 = vmatprep.subr.bf16.mxu0 0
  %2041 = vmatpush1.bf16.msra.mxu0 0
  %2042 = vmatprep.subr.bf16.mxu0 0
  %2043 = vmatpush1.bf16.msra.mxu0 0
  %2044 = vmatprep.subr.bf16.mxu0 0
  %2045 = vmatpush1.bf16.msra.mxu0 0
  %2046 = vmatprep.subr.bf16.mxu0 0
  %2047 = vmatpush1.bf16.msra.mxu0 0
  %2048 = vmatprep.subr.bf16.mxu0 0
  %2049 = vmatpush1.bf16.msra.mxu0 0
  %2050 = vmatprep.mubr.bf16.mxu0 0
  %2051 = vmatmul.mubr.bf16.gmra.mrb[0].mxu0 %v2016
  %v2052 = vpop.f32.mrb[0].mxu0
  %v2053 = vadd.f32 0.0, %v2052
  %v2054 = vpop.f32.mrb[0].mxu0
  %v2055 = vpop.f32.mrb[0].mxu0
  %v2056 = vpop.f32.mrb[0].mxu0
  %2057 = vdwg.mxu0
  %v2058 = vpack.c.bf16 %v2053, %v2053
  %v2060 = vrot.slane %v1486, 4
  %v2062 = vsel %vm499, %v2060, 0
  %v2065 = vsel %vm499, %v1562, 0
  %2067 = vmatprep.subr.bf16.mxu0 0
  %2068 = vmatpush1.bf16.xpose.msra.mxu0 %v2065
  %2069 = vmatprep.subr.bf16.mxu0 0
  %2070 = vmatpush1.bf16.xpose.msra.mxu0 0
  %2071 = vmatprep.subr.bf16.mxu0 0
  %2072 = vmatpush1.bf16.xpose.msra.mxu0 0
  %2073 = vmatprep.subr.bf16.mxu0 0
  %2074 = vmatpush1.bf16.xpose.msra.mxu0 0
  %2075 = vmatprep.subr.bf16.mxu0 0
  %2076 = vmatpush1.bf16.xpose.msra.mxu0 0
  %2077 = vmatprep.subr.bf16.mxu0 0
  %2078 = vmatpush1.bf16.xpose.msra.mxu0 0
  %2079 = vmatprep.subr.bf16.mxu0 0
  %2080 = vmatpush1.bf16.xpose.msra.mxu0 0
  %2081 = vmatprep.subr.bf16.mxu0 0
  %2082 = vmatpush1.bf16.xpose.msra.mxu0 0
  %2083 = vmatprep.subr.bf16.mxu0 0
  %2084 = vmatpush1.bf16.xpose.msra.mxu0 0
  %2085 = vmatprep.subr.bf16.mxu0 0
  %2086 = vmatpush1.bf16.xpose.msra.mxu0 0
  %2087 = vmatprep.subr.bf16.mxu0 0
  %2088 = vmatpush1.bf16.xpose.msra.mxu0 0
  %2089 = vmatprep.subr.bf16.mxu0 0
  %2090 = vmatpush1.bf16.xpose.msra.mxu0 0
  %2091 = vmatprep.subr.bf16.mxu0 0
  %2092 = vmatpush1.bf16.xpose.msra.mxu0 0
  %2093 = vmatprep.subr.bf16.mxu0 0
  %2094 = vmatpush1.bf16.xpose.msra.mxu0 0
  %2095 = vmatprep.subr.bf16.mxu0 0
  %2096 = vmatpush1.bf16.xpose.msra.mxu0 0
  %2097 = vmatprep.subr.bf16.mxu0 0
  %2098 = vmatpush1.bf16.xpose.msra.mxu0 0
  %2099 = vmatprep.mubr.bf16.mxu0 0
  %2100 = vmatmul.mubr.bf16.gmra.mrb[0].mxu0 %v2062
  %v2101 = vpop.f32.mrb[0].mxu0
  %v2102 = vadd.f32 0.0, %v2101
  %v2103 = vpop.f32.mrb[0].mxu0
  %v2104 = vpop.f32.mrb[0].mxu0
  %v2105 = vpop.f32.mrb[0].mxu0
  %2106 = vdwg.mxu0
  %v2107 = vsel %vm1953, -1e+09, %v2102
  %v2108 = vsel %vm499, %v2107, -inf
  %2109 = vmax.xlane.f32.xlu0 %v2108
  %v2110 = vpop.xlane.xlu0 %2109
  %v2111 = vsub.f32 %v2107, %v2110
  %v2112 = vmul.f32 %v2111, 1.442695
  %v2113 = vpow.pop %v2112
  %v2114 = vsel %vm499, %v2113, 0.0
  %2115 = vadd.xlane.f32.xlu0 %v2114
  %v2116 = vpop.xlane.xlu0 %2115
  %v2117 = vrcp.pop %v2116
  %v2118 = vmul.f32 %v2113, %v2117
  %v2119 = vpack.c.bf16 %v2118, %v2118
  %v2121 = vsel %vm499, %v2119, 0
  %2123 = vmatprep.subr.bf16.mxu0 0
  %2124 = vmatpush1.bf16.msra.mxu0 %v1638
  %2125 = vmatprep.subr.bf16.mxu0 0
  %2126 = vmatpush1.bf16.msra.mxu0 0
  %2127 = vmatprep.subr.bf16.mxu0 0
  %2128 = vmatpush1.bf16.msra.mxu0 0
  %2129 = vmatprep.subr.bf16.mxu0 0
  %2130 = vmatpush1.bf16.msra.mxu0 0
  %2131 = vmatprep.subr.bf16.mxu0 0
  %2132 = vmatpush1.bf16.msra.mxu0 0
  %2133 = vmatprep.subr.bf16.mxu0 0
  %2134 = vmatpush1.bf16.msra.mxu0 0
  %2135 = vmatprep.subr.bf16.mxu0 0
  %2136 = vmatpush1.bf16.msra.mxu0 0
  %2137 = vmatprep.subr.bf16.mxu0 0
  %2138 = vmatpush1.bf16.msra.mxu0 0
  %2139 = vmatprep.subr.bf16.mxu0 0
  %2140 = vmatpush1.bf16.msra.mxu0 0
  %2141 = vmatprep.subr.bf16.mxu0 0
  %2142 = vmatpush1.bf16.msra.mxu0 0
  %2143 = vmatprep.subr.bf16.mxu0 0
  %2144 = vmatpush1.bf16.msra.mxu0 0
  %2145 = vmatprep.subr.bf16.mxu0 0
  %2146 = vmatpush1.bf16.msra.mxu0 0
  %2147 = vmatprep.subr.bf16.mxu0 0
  %2148 = vmatpush1.bf16.msra.mxu0 0
  %2149 = vmatprep.subr.bf16.mxu0 0
  %2150 = vmatpush1.bf16.msra.mxu0 0
  %2151 = vmatprep.subr.bf16.mxu0 0
  %2152 = vmatpush1.bf16.msra.mxu0 0
  %2153 = vmatprep.subr.bf16.mxu0 0
  %2154 = vmatpush1.bf16.msra.mxu0 0
  %2155 = vmatprep.mubr.bf16.mxu0 0
  %2156 = vmatmul.mubr.bf16.gmra.mrb[0].mxu0 %v2121
  %v2157 = vpop.f32.mrb[0].mxu0
  %v2158 = vadd.f32 0.0, %v2157
  %v2159 = vpop.f32.mrb[0].mxu0
  %v2160 = vpop.f32.mrb[0].mxu0
  %v2161 = vpop.f32.mrb[0].mxu0
  %2162 = vdwg.mxu0
  %v2163 = vpack.c.bf16 %v2158, %v2158
  %v2165 = vsel %vm499, %v2163, 0
  %2167 = vmatprep.subr.bf16.mxu0 0
  %2168 = vmatpush1.bf16.msra.mxu0 %v1857
  %2169 = vmatprep.subr.bf16.mxu0 0
  %2170 = vmatpush1.bf16.msra.mxu0 0
  %2171 = vmatprep.subr.bf16.mxu0 0
  %2172 = vmatpush1.bf16.msra.mxu0 0
  %2173 = vmatprep.subr.bf16.mxu0 0
  %2174 = vmatpush1.bf16.msra.mxu0 0
  %2175 = vmatprep.subr.bf16.mxu0 0
  %2176 = vmatpush1.bf16.msra.mxu0 0
  %2177 = vmatprep.subr.bf16.mxu0 0
  %2178 = vmatpush1.bf16.msra.mxu0 0
  %2179 = vmatprep.subr.bf16.mxu0 0
  %2180 = vmatpush1.bf16.msra.mxu0 0
  %2181 = vmatprep.subr.bf16.mxu0 0
  %2182 = vmatpush1.bf16.msra.mxu0 0
  %2183 = vmatprep.subr.bf16.mxu0 0
  %2184 = vmatpush1.bf16.msra.mxu0 0
  %2185 = vmatprep.subr.bf16.mxu0 0
  %2186 = vmatpush1.bf16.msra.mxu0 0
  %2187 = vmatprep.subr.bf16.mxu0 0
  %2188 = vmatpush1.bf16.msra.mxu0 0
  %2189 = vmatprep.subr.bf16.mxu0 0
  %2190 = vmatpush1.bf16.msra.mxu0 0
  %2191 = vmatprep.subr.bf16.mxu0 0
  %2192 = vmatpush1.bf16.msra.mxu0 0
  %2193 = vmatprep.subr.bf16.mxu0 0
  %2194 = vmatpush1.bf16.msra.mxu0 0
  %2195 = vmatprep.subr.bf16.mxu0 0
  %2196 = vmatpush1.bf16.msra.mxu0 0
  %2197 = vmatprep.subr.bf16.mxu0 0
  %2198 = vmatpush1.bf16.msra.mxu0 0
  %2199 = vmatprep.mubr.bf16.mxu0 0
  %2200 = vmatmul.mubr.bf16.gmra.mrb[0].mxu0 %v2165
  %v2201 = vpop.f32.mrb[0].mxu0
  %v2202 = vadd.f32 0.0, %v2201
  %v2203 = vpop.f32.mrb[0].mxu0
  %v2204 = vpop.f32.mrb[0].mxu0
  %v2205 = vpop.f32.mrb[0].mxu0
  %2206 = vdwg.mxu0
  %v2208 = vsel %vm499, %v2058, 0
  %2210 = vmatprep.subr.bf16.mxu0 0
  %2211 = vmatpush1.bf16.msra.mxu0 %v1906
  %2212 = vmatprep.subr.bf16.mxu0 0
  %2213 = vmatpush1.bf16.msra.mxu0 0
  %2214 = vmatprep.subr.bf16.mxu0 0
  %2215 = vmatpush1.bf16.msra.mxu0 0
  %2216 = vmatprep.subr.bf16.mxu0 0
  %2217 = vmatpush1.bf16.msra.mxu0 0
  %2218 = vmatprep.subr.bf16.mxu0 0
  %2219 = vmatpush1.bf16.msra.mxu0 0
  %2220 = vmatprep.subr.bf16.mxu0 0
  %2221 = vmatpush1.bf16.msra.mxu0 0
  %2222 = vmatprep.subr.bf16.mxu0 0
  %2223 = vmatpush1.bf16.msra.mxu0 0
  %2224 = vmatprep.subr.bf16.mxu0 0
  %2225 = vmatpush1.bf16.msra.mxu0 0
  %2226 = vmatprep.subr.bf16.mxu0 0
  %2227 = vmatpush1.bf16.msra.mxu0 0
  %2228 = vmatprep.subr.bf16.mxu0 0
  %2229 = vmatpush1.bf16.msra.mxu0 0
  %2230 = vmatprep.subr.bf16.mxu0 0
  %2231 = vmatpush1.bf16.msra.mxu0 0
  %2232 = vmatprep.subr.bf16.mxu0 0
  %2233 = vmatpush1.bf16.msra.mxu0 0
  %2234 = vmatprep.subr.bf16.mxu0 0
  %2235 = vmatpush1.bf16.msra.mxu0 0
  %2236 = vmatprep.subr.bf16.mxu0 0
  %2237 = vmatpush1.bf16.msra.mxu0 0
  %2238 = vmatprep.subr.bf16.mxu0 0
  %2239 = vmatpush1.bf16.msra.mxu0 0
  %2240 = vmatprep.subr.bf16.mxu0 0
  %2241 = vmatpush1.bf16.msra.mxu0 0
  %2242 = vmatprep.mubr.bf16.mxu0 0
  %2243 = vmatmul.mubr.bf16.gmra.mrb[0].mxu0 %v2208
  %v2244 = vpop.f32.mrb[0].mxu0
  %v2245 = vadd.f32 %v2202, %v2244
  %v2246 = vpop.f32.mrb[0].mxu0
  %v2247 = vpop.f32.mrb[0].mxu0
  %v2248 = vpop.f32.mrb[0].mxu0
  %2249 = vdwg.mxu0
  %v2250 = vld [vmem:[%s14] sm:$0x1]
  %v2252 = vlaneseq
  %v2253 = vshrl.u32 %v2252, 7
  %v2254 = vsub.s32 0, %v2253
  %v2255 = vrot.slane %v2250, %v2254
  %v2257 = vadd.f32 %v1946, %v2255
  %v2258 = vadd.f32 %v2245, %v2255
  %v2259 = vadd.f32 %v1183, %v2257
  %v2260 = vadd.f32 %v1184, %v2258
  %v2261 = vld [vmem:[%s15] sm:$0x1]
  %v2262 = vld [vmem:[%s16] sm:$0x1]
  %v2263 = vsel %vm113, %v2259, 0.0
  %2264 = vadd.xlane.f32.xlu0 %v2263
  %v2265 = vpop.xlane.xlu0 %2264
  %v2266 = vsel %vm113, %v2260, 0.0
  %2267 = vadd.xlane.f32.xlu0 %v2266
  %v2268 = vpop.xlane.xlu0 %2267
  %v2269 = vmul.f32 %v2265, %v1148
  %v2270 = vmul.f32 %v2268, %v1148
  %v2271 = vsub.f32 %v2259, %v2269
  %v2272 = vsub.f32 %v2260, %v2270
  %v2273 = vmul.f32 %v2271, %v2271
  %v2274 = vmul.f32 %v2272, %v2272
  %v2275 = vsel %vm113, %v2273, 0.0
  %2276 = vadd.xlane.f32.xlu0 %v2275
  %v2277 = vpop.xlane.xlu0 %2276
  %v2278 = vsel %vm113, %v2274, 0.0
  %2279 = vadd.xlane.f32.xlu0 %v2278
  %v2280 = vpop.xlane.xlu0 %2279
  %v2281 = vmul.f32 %v2277, %v1148
  %v2282 = vmul.f32 %v2280, %v1148
  %v2283 = vadd.f32 %v2281, 1e-05
  %v2284 = vadd.f32 %v2282, 1e-05
  %v2285 = vrsqrt.pop %v2283
  %v2286 = vrsqrt.pop %v2284
  %v2287 = vmul.f32 %v2271, %v2285
  %v2288 = vmul.f32 %v2272, %v2286
  %v2290 = vlaneseq
  %v2291 = vshrl.u32 %v2290, 7
  %v2292 = vsub.s32 0, %v2291
  %v2293 = vrot.slane %v2261, %v2292
  %v2295 = vmul.f32 %v2287, %v2293
  %v2296 = vmul.f32 %v2288, %v2293
  %v2298 = vlaneseq
  %v2299 = vshrl.u32 %v2298, 7
  %v2300 = vsub.s32 0, %v2299
  %v2301 = vrot.slane %v2262, %v2300
  %v2303 = vadd.f32 %v2295, %v2301
  %v2304 = vadd.f32 %v2296, %v2301
  %v2305 = vpack.c.bf16 %v2304, %v2303
  %v2306 = vld [vmem:[%s17] sm:$0xf]
  %v2307 = vld [vmem:[%s17 + $0x4] sm:$0xf]
  %v2308 = vld [vmem:[%s17 + $0x8] sm:$0xf]
  %v2309 = vld [vmem:[%s17 + $0xc] sm:$0xf]
  %v2310 = vld [vmem:[%s18] sm:$0x1]
  %v2312 = vlaneseq
  %v2313 = vshrl.u32 %v2312, 7
  %v2314 = vsub.s32 0, %v2313
  %v2315 = vrot.slane %v2310, %v2314
  %v2321 = vunpack.c.l.b16 %v2306
  %v2322 = vunpack.c.l.b16 %v2307
  %v2323 = vunpack.c.l.b16 %v2308
  %v2324 = vunpack.c.l.b16 %v2309
  %v2325 = vpack.c.b16 %v2322, %v2321
  %v2326 = vpack.c.b16 %v2324, %v2323
  %v2330 = vsel %vm113, %v2305, 0
  %2332 = vmatprep.subr.bf16.mxu0 0
  %2333 = vmatpush1.bf16.msra.mxu0 %v2325
  %2334 = vmatprep.subr.bf16.mxu0 0
  %2335 = vmatpush1.bf16.msra.mxu0 %v2326
  %2336 = vmatprep.subr.bf16.mxu0 0
  %2337 = vmatpush1.bf16.msra.mxu0 0
  %2338 = vmatprep.subr.bf16.mxu0 0
  %2339 = vmatpush1.bf16.msra.mxu0 0
  %2340 = vmatprep.subr.bf16.mxu0 0
  %2341 = vmatpush1.bf16.msra.mxu0 0
  %2342 = vmatprep.subr.bf16.mxu0 0
  %2343 = vmatpush1.bf16.msra.mxu0 0
  %2344 = vmatprep.subr.bf16.mxu0 0
  %2345 = vmatpush1.bf16.msra.mxu0 0
  %2346 = vmatprep.subr.bf16.mxu0 0
  %2347 = vmatpush1.bf16.msra.mxu0 0
  %2348 = vmatprep.subr.bf16.mxu0 0
  %2349 = vmatpush1.bf16.msra.mxu0 0
  %2350 = vmatprep.subr.bf16.mxu0 0
  %2351 = vmatpush1.bf16.msra.mxu0 0
  %2352 = vmatprep.subr.bf16.mxu0 0
  %2353 = vmatpush1.bf16.msra.mxu0 0
  %2354 = vmatprep.subr.bf16.mxu0 0
  %2355 = vmatpush1.bf16.msra.mxu0 0
  %2356 = vmatprep.subr.bf16.mxu0 0
  %2357 = vmatpush1.bf16.msra.mxu0 0
  %2358 = vmatprep.subr.bf16.mxu0 0
  %2359 = vmatpush1.bf16.msra.mxu0 0
  %2360 = vmatprep.subr.bf16.mxu0 0
  %2361 = vmatpush1.bf16.msra.mxu0 0
  %2362 = vmatprep.subr.bf16.mxu0 0
  %2363 = vmatpush1.bf16.msra.mxu0 0
  %2364 = vmatprep.mubr.bf16.mxu0 0
  %2365 = vmatmul.mubr.bf16.gmra.mrb[0].mxu0 %v2330
  %v2366 = vpop.f32.mrb[0].mxu0
  %v2367 = vadd.f32 %v2315, %v2366
  %v2368 = vpop.f32.mrb[0].mxu0
  %v2369 = vpop.f32.mrb[0].mxu0
  %v2370 = vadd.f32 %v2315, %v2369
  %v2371 = vpop.f32.mrb[0].mxu0
  %2372 = vdwg.mxu0
  %v2373 = vmax.f32 %v2367, 0.0
  %v2374 = vmax.f32 %v2370, 0.0
  %v2375 = vpack.c.bf16 %v2374, %v2373
  %v2376 = vld [vmem:[%s19] sm:$0xf]
  %v2377 = vld [vmem:[%s19 + $0x4] sm:$0xf]
  %v2378 = vld [vmem:[%s19 + $0x8] sm:$0xf]
  %v2379 = vld [vmem:[%s19 + $0xc] sm:$0xf]
  %v2380 = vld [vmem:[%s19 + $0x10] sm:$0xf]
  %v2381 = vld [vmem:[%s19 + $0x14] sm:$0xf]
  %v2382 = vld [vmem:[%s19 + $0x18] sm:$0xf]
  %v2383 = vld [vmem:[%s19 + $0x1c] sm:$0xf]
  %v2384 = vld [vmem:[%s19 + $0x20] sm:$0xf]
  %v2385 = vld [vmem:[%s19 + $0x24] sm:$0xf]
  %v2386 = vld [vmem:[%s19 + $0x28] sm:$0xf]
  %v2387 = vld [vmem:[%s19 + $0x2c] sm:$0xf]
  %v2388 = vld [vmem:[%s19 + $0x30] sm:$0xf]
  %v2389 = vld [vmem:[%s19 + $0x34] sm:$0xf]
  %v2390 = vld [vmem:[%s19 + $0x38] sm:$0xf]
  %v2391 = vld [vmem:[%s19 + $0x3c] sm:$0xf]
  %v2392 = vld [vmem:[%s20] sm:$0x1]
  %v2394 = vlaneseq
  %v2395 = vshrl.u32 %v2394, 7
  %v2396 = vsub.s32 0, %v2395
  %v2397 = vrot.slane %v2392, %v2396
  %v2415 = vunpack.c.l.b16 %v2376
  %v2416 = vunpack.c.l.b16 %v2377
  %v2417 = vunpack.c.l.b16 %v2378
  %v2418 = vunpack.c.l.b16 %v2379
  %v2419 = vunpack.c.l.b16 %v2380
  %v2420 = vunpack.c.l.b16 %v2381
  %v2421 = vunpack.c.l.b16 %v2382
  %v2422 = vunpack.c.l.b16 %v2383
  %v2423 = vunpack.c.l.b16 %v2384
  %v2424 = vunpack.c.l.b16 %v2385
  %v2425 = vunpack.c.l.b16 %v2386
  %v2426 = vunpack.c.l.b16 %v2387
  %v2427 = vunpack.c.l.b16 %v2388
  %v2428 = vunpack.c.l.b16 %v2389
  %v2429 = vunpack.c.l.b16 %v2390
  %v2430 = vunpack.c.l.b16 %v2391
  %v2431 = vpack.c.b16 %v2416, %v2415
  %v2432 = vpack.c.b16 %v2418, %v2417
  %v2433 = vpack.c.b16 %v2420, %v2419
  %v2434 = vpack.c.b16 %v2422, %v2421
  %v2435 = vpack.c.b16 %v2424, %v2423
  %v2436 = vpack.c.b16 %v2426, %v2425
  %v2437 = vpack.c.b16 %v2428, %v2427
  %v2438 = vpack.c.b16 %v2430, %v2429
  %2447 = vmatprep.subr.bf16.mxu0 0
  %2448 = vmatpush1.bf16.msra.mxu0 %v2431
  %2449 = vmatprep.subr.bf16.mxu0 0
  %2450 = vmatpush1.bf16.msra.mxu0 %v2432
  %2451 = vmatprep.subr.bf16.mxu0 0
  %2452 = vmatpush1.bf16.msra.mxu0 %v2433
  %2453 = vmatprep.subr.bf16.mxu0 0
  %2454 = vmatpush1.bf16.msra.mxu0 %v2434
  %2455 = vmatprep.subr.bf16.mxu0 0
  %2456 = vmatpush1.bf16.msra.mxu0 %v2435
  %2457 = vmatprep.subr.bf16.mxu0 0
  %2458 = vmatpush1.bf16.msra.mxu0 %v2436
  %2459 = vmatprep.subr.bf16.mxu0 0
  %2460 = vmatpush1.bf16.msra.mxu0 %v2437
  %2461 = vmatprep.subr.bf16.mxu0 0
  %2462 = vmatpush1.bf16.msra.mxu0 %v2438
  %2463 = vmatprep.subr.bf16.mxu0 0
  %2464 = vmatpush1.bf16.msra.mxu0 0
  %2465 = vmatprep.subr.bf16.mxu0 0
  %2466 = vmatpush1.bf16.msra.mxu0 0
  %2467 = vmatprep.subr.bf16.mxu0 0
  %2468 = vmatpush1.bf16.msra.mxu0 0
  %2469 = vmatprep.subr.bf16.mxu0 0
  %2470 = vmatpush1.bf16.msra.mxu0 0
  %2471 = vmatprep.subr.bf16.mxu0 0
  %2472 = vmatpush1.bf16.msra.mxu0 0
  %2473 = vmatprep.subr.bf16.mxu0 0
  %2474 = vmatpush1.bf16.msra.mxu0 0
  %2475 = vmatprep.subr.bf16.mxu0 0
  %2476 = vmatpush1.bf16.msra.mxu0 0
  %2477 = vmatprep.subr.bf16.mxu0 0
  %2478 = vmatpush1.bf16.msra.mxu0 0
  %2479 = vmatprep.mubr.bf16.mxu0 0
  %2480 = vmatmul.mubr.bf16.gmra.mrb[0].mxu0 %v2375
  %v2481 = vpop.f32.mrb[0].mxu0
  %v2482 = vadd.f32 %v2397, %v2481
  %v2483 = vpop.f32.mrb[0].mxu0
  %v2484 = vpop.f32.mrb[0].mxu0
  %v2485 = vadd.f32 %v2397, %v2484
  %v2486 = vpop.f32.mrb[0].mxu0
  %2487 = vdwg.mxu0
  %v2488 = vadd.f32 %v2303, %v2482
  %v2489 = vadd.f32 %v2304, %v2485
  %v2490 = vld [vmem:[%s21] sm:$0x1]
  %v2491 = vld [vmem:[%s22] sm:$0x1]
  %v2492 = vsel %vm113, %v2488, 0.0
  %2493 = vadd.xlane.f32.xlu0 %v2492
  %v2494 = vpop.xlane.xlu0 %2493
  %v2495 = vsel %vm113, %v2489, 0.0
  %2496 = vadd.xlane.f32.xlu0 %v2495
  %v2497 = vpop.xlane.xlu0 %2496
  %v2498 = vmul.f32 %v2494, %v1148
  %v2499 = vmul.f32 %v2497, %v1148
  %v2500 = vsub.f32 %v2488, %v2498
  %v2501 = vsub.f32 %v2489, %v2499
  %v2502 = vmul.f32 %v2500, %v2500
  %v2503 = vmul.f32 %v2501, %v2501
  %v2504 = vsel %vm113, %v2502, 0.0
  %2505 = vadd.xlane.f32.xlu0 %v2504
  %v2506 = vpop.xlane.xlu0 %2505
  %v2507 = vsel %vm113, %v2503, 0.0
  %2508 = vadd.xlane.f32.xlu0 %v2507
  %v2509 = vpop.xlane.xlu0 %2508
  %v2510 = vmul.f32 %v2506, %v1148
  %v2511 = vmul.f32 %v2509, %v1148
  %v2512 = vadd.f32 %v2510, 1e-05
  %v2513 = vadd.f32 %v2511, 1e-05
  %v2514 = vrsqrt.pop %v2512
  %v2515 = vrsqrt.pop %v2513
  %v2516 = vmul.f32 %v2500, %v2514
  %v2517 = vmul.f32 %v2501, %v2515
  %v2519 = vlaneseq
  %v2520 = vshrl.u32 %v2519, 7
  %v2521 = vsub.s32 0, %v2520
  %v2522 = vrot.slane %v2490, %v2521
  %v2524 = vmul.f32 %v2516, %v2522
  %v2525 = vmul.f32 %v2517, %v2522
  %v2527 = vlaneseq
  %v2528 = vshrl.u32 %v2527, 7
  %v2529 = vsub.s32 0, %v2528
  %v2530 = vrot.slane %v2491, %v2529
  %v2532 = vadd.f32 %v2524, %v2530
  %v2533 = vadd.f32 %v2525, %v2530
  %v2534 = vpack.c.bf16 %v2533, %v2532
  %v2536 = vunpack.c.l.b16 %v2534
  %v2537 = vunpack.c.h.b16 %v2534
  %v2538 = vpack.c.b16 %v2536, %v2536
  %v2539 = vpack.c.b16 %v2537, %v2537
  %vm2542 = vcmask 257024
  %2543 = vst.msk [vmem:[%s23] sm:$0xf] %vm2542, %v2538
  %2544 = vst.msk [vmem:[%s23 + $0x4] sm:$0xf] %vm2542, %v2539
  // Predicated region
  $region90: #{flick_forward.9} parent=0 // pred_check
    _
  $region91: #{flick_forward.9} parent=0 // pred_check_branch
    %2546 = sbr.rel (0) target = $region93
  $region92: #{flick_forward.9} parent=0 // pred_region
    _
  $region93: #{flick_forward.9} parent=0 // pred_fallthru
    _
  // Predicated region
  $region94: #{flick_forward.9} parent=0 // pred_check
    _
  $region95: #{flick_forward.9} parent=0 // pred_check_branch
    %2548 = sbr.rel (0) target = $region97
  $region96: #{flick_forward.9} parent=0 // pred_region
    _
  $region97: #{flick_forward.9} parent=0 // pred_fallthru
    _

</llo_original>
